<compile_context>
chip_gen: v7x
topology: tpu7x:2x2x1
jax: 0.10.0
libtpu: 0.0.40
codegen_flags: <defaults>
</compile_context>

<pallas_src>
import jax
import jax.numpy as jnp
from jax import lax
from jax.experimental import pallas as pl
from jax.experimental.pallas import tpu as pltpu

LEAKY_SLOPE = 0.01   # nn.LeakyReLU default
EPS = 1e-5
EMBEDDING_SIZE = 32  # stands in for config['embedding_size']

# (kernel_size, pad_left, pad_right) per conv block; channels: n_mels->32->64->128->E
_BLOCKS = ((32, 16, 15), (16, 8, 7), (8, 4, 3), (8, 4, 3))


def _im2col_conv(pad_ref, st_ref, w_ref, b_ref, K, T):
    """One conv block as a single MXU matmul over an im2col-stacked buffer.

    pad_ref : (B_blk, C_in, T+K-1)  zero-halo padded activations
    st_ref  : (>= C_in*K, B_blk*T)  scratch for the stacked (im2col) matrix
    w_ref   : (C_out, K*C_in)       2D weight, column index = k*C_in + c
    b_ref   : (C_out, 1)            bias
    returns : (C_out, B_blk*T)      LeakyReLU(conv + bias), f32
    """
    Bb, C_in, _ = pad_ref.shape
    CK = C_in * K
    # stacked[k*C_in + c, b*T + t] = pad[b, c, k + t]
    for b in range(Bb):              # static unroll (B_blk is small)
        for k in range(K):           # static unroll
            st_ref[k * C_in:(k + 1) * C_in, b * T:(b + 1) * T] = pad_ref[b, :, k:k + T]
    acc = jnp.dot(w_ref[...], st_ref[0:CK, :], preferred_element_type=jnp.float32)
    acc = acc + b_ref[...]           # (C_out, 1) broadcasts over lanes
    return jnp.where(acc >= 0, acc, LEAKY_SLOPE * acc)


def _fill_pad(pad_ref, act, left, right, T):
    """Write a (C, B_blk*T) activation into a (B_blk, C, T+K-1) padded buffer."""
    Bb, C, _ = pad_ref.shape
    pad_ref[:, :, 0:left] = jnp.zeros((Bb, C, left), jnp.float32)
    pad_ref[:, :, left + T:left + T + right] = jnp.zeros((Bb, C, right), jnp.float32)
    for b in range(Bb):
        pad_ref[b, :, left:left + T] = act[:, b * T:(b + 1) * T]


def emotion_encoder_kernel(x_ref,
                           w1_ref, b1_ref, w2_ref, b2_ref,
                           w3_ref, b3_ref, w4_ref, b4_ref,
                           o_ref,
                           pad0, pad1, pad2, pad3, st_ref):
    Bb, C0, T = x_ref.shape
    (K1, l1, r1), (K2, l2, r2), (K3, l3, r3), (K4, l4, r4) = _BLOCKS

    # ---- block 1: ConstantPad1d(16, 15) + Conv1d(n_mels -> 32, K=32) + LeakyReLU
    pad0[:, :, 0:l1] = jnp.zeros((Bb, C0, l1), jnp.float32)
    pad0[:, :, l1 + T:l1 + T + r1] = jnp.zeros((Bb, C0, r1), jnp.float32)
    pad0[:, :, l1:l1 + T] = x_ref[...]
    a1 = _im2col_conv(pad0, st_ref, w1_ref, b1_ref, K1, T)        # (32, Bb*T)

    # ---- block 2: ConstantPad1d(8, 7) + Conv1d(32 -> 64, K=16) + LeakyReLU
    _fill_pad(pad1, a1, l2, r2, T)
    a2 = _im2col_conv(pad1, st_ref, w2_ref, b2_ref, K2, T)        # (64, Bb*T)

    # ---- block 3: ConstantPad1d(4, 3) + Conv1d(64 -> 128, K=8) + LeakyReLU
    _fill_pad(pad2, a2, l3, r3, T)
    a3 = _im2col_conv(pad2, st_ref, w3_ref, b3_ref, K3, T)        # (128, Bb*T)

    # ---- block 4: ConstantPad1d(4, 3) + Conv1d(128 -> E, K=8) + LeakyReLU
    _fill_pad(pad3, a3, l4, r4, T)
    a4 = _im2col_conv(pad3, st_ref, w4_ref, b4_ref, K4, T)        # (E, Bb*T)

    # ---- MaxPool1d(kernel_size=128): with T == 128, one full-time max per element
    pooled = jnp.concatenate(
        [jnp.max(a4[:, b * T:(b + 1) * T], axis=-1, keepdims=True) for b in range(Bb)],
        axis=-1)                                                  # (E, Bb)

    # ---- L2 normalize over embedding dim (torch.norm(dim=1) after .view, eps after sqrt)
    ss = jnp.sum(pooled * pooled, axis=0, keepdims=True)          # (1, Bb)
    inv = pl.reciprocal(jnp.sqrt(ss) + EPS, approx=True)
    o_ref[...] = pooled * inv


def _weights_2d(w):
    """(C_out, C_in, K) -> (C_out, K*C_in) with column index = k*C_in + c."""
    co, ci, k = w.shape
    return jnp.transpose(w, (0, 2, 1)).reshape(co, k * ci)


def emotion_encoder_forward(x, params, *, block_b=8):
    """x: (B, n_mels, 128) f32  ->  (B, E) L2-normalized embeddings."""
    B, C0, T = x.shape
    # TODO(synk): general T (multiple of 128) would need per-window maxpool and the
    # scrambled .view(-1, E) semantics; this kernel covers the T == 128 case.
    assert T == 128, "kernel implements MaxPool1d(128) with a single window"
    w1, b1, w2, b2, w3, b3, w4, b4 = params
    E = w4.shape[0]

    w1f, w2f, w3f, w4f = (_weights_2d(w) for w in (w1, w2, w3, w4))

    Bb = max(1, min(block_b, B))
    B_pad = ((B + Bb - 1) // Bb) * Bb
    if B_pad != B:
        x = jnp.concatenate([x, jnp.zeros((B_pad - B, C0, T), x.dtype)], axis=0)
    NB = B_pad // Bb

    ck_max = max(C0 * _BLOCKS[0][0], 32 * _BLOCKS[1][0],
                 64 * _BLOCKS[2][0], 128 * _BLOCKS[3][0])

    def replicated(a):
        return pl.BlockSpec(a.shape, lambda i: (0,) * a.ndim)

    out = pl.pallas_call(
        emotion_encoder_kernel,
        out_shape=jax.ShapeDtypeStruct((NB, E, Bb), jnp.float32),
        grid_spec=pltpu.PrefetchScalarGridSpec(
            num_scalar_prefetch=0,
            grid=(NB,),
            in_specs=[
                pl.BlockSpec((Bb, C0, T), lambda i: (i, 0, 0)),
                replicated(w1f), replicated(b1),
                replicated(w2f), replicated(b2),
                replicated(w3f), replicated(b3),
                replicated(w4f), replicated(b4),
            ],
            out_specs=pl.BlockSpec((None, E, Bb), lambda i: (i, 0, 0)),
            scratch_shapes=[
                pltpu.VMEM((Bb, C0, T + _BLOCKS[0][0] - 1), jnp.float32),   # pad0
                pltpu.VMEM((Bb, 32, T + _BLOCKS[1][0] - 1), jnp.float32),   # pad1
                pltpu.VMEM((Bb, 64, T + _BLOCKS[2][0] - 1), jnp.float32),   # pad2
                pltpu.VMEM((Bb, 128, T + _BLOCKS[3][0] - 1), jnp.float32),  # pad3
                pltpu.VMEM((ck_max, Bb * T), jnp.float32),                  # im2col
            ],
        ),
        compiler_params=pltpu.CompilerParams(
            dimension_semantics=("parallel",)),
    )(x, w1f, b1, w2f, b2, w3f, b3, w4f, b4)

    # (NB, E, Bb) -> (B_pad, E), matching torch: (B, E, 1).view(-1, E)
    embeds = jnp.transpose(out, (0, 2, 1)).reshape(B_pad, E)
    return embeds[:B]


def init_params(key, n_mels, emb):
    """Deterministic kaiming_normal_-style init (fan_in, gain=sqrt(2)), zero bias."""
    specs = [(32, n_mels, 32), (64, 32, 16), (128, 64, 8), (emb, 128, 8)]
    params = []
    for (co, ci, k) in specs:
        key, sub = jax.random.split(key)
        std = (2.0 / (ci * k)) ** 0.5
        params.append(std * jax.random.normal(sub, (co, ci, k), jnp.float32))
        params.append(jnp.zeros((co, 1), jnp.float32))
    return params


def reference_forward(x, params):
    """Pure-JAX reference (lax.conv) for correctness checking."""
    w1, b1, w2, b2, w3, b3, w4, b4 = params

    def block(h, w, b, K):
        if (K - 1) % 2 == 0:
            pl_, pr_ = (K - 1) // 2, (K - 1) // 2
        else:
            pl_, pr_ = K // 2, K // 2 - 1
        out = lax.conv_general_dilated(
            h, w, window_strides=(1,), padding=[(pl_, pr_)],
            dimension_numbers=('NCH', 'OIH', 'NCH'))
        out = out + b.reshape(1, -1, 1)
        return jnp.where(out >= 0, out, LEAKY_SLOPE * out)

    h = block(x, w1, b1, 32)
    h = block(h, w2, b2, 16)
    h = block(h, w3, b3, 8)
    h = block(h, w4, b4, 8)
    pooled = jnp.max(h, axis=-1)                                # MaxPool1d(128), T=128
    return pooled / (jnp.linalg.norm(pooled, axis=1, keepdims=True) + EPS)


if __name__ == "__main__":
    key = jax.random.PRNGKey(0)
    kx, kp = jax.random.split(key)

    B, n_mels, T = 2, 8, 128
    x = jax.random.normal(kx, (B, n_mels, T), jnp.float32)
    params = init_params(kp, n_mels, EMBEDDING_SIZE)

    embeds = emotion_encoder_forward(x, params)
    jax.block_until_ready(embeds)

    ref = reference_forward(x, params)
    assert embeds.shape == (B, EMBEDDING_SIZE)
    assert jnp.allclose(embeds, ref, rtol=1e-3, atol=1e-4), (
        float(jnp.max(jnp.abs(embeds - ref))))

    print("KERNEL_OK")
</pallas_src>

<mosaic_0001>
module attributes {stable_mosaic.version = 11 : i64} {
  func.func @emotion_encoder_kernel(%arg0: i32, %arg1: memref<2x8x128xf32, #tpu.memory_space<vmem>>, %arg2: memref<32x256xf32, #tpu.memory_space<vmem>>, %arg3: memref<32x1xf32, #tpu.memory_space<vmem>>, %arg4: memref<64x512xf32, #tpu.memory_space<vmem>>, %arg5: memref<64x1xf32, #tpu.memory_space<vmem>>, %arg6: memref<128x512xf32, #tpu.memory_space<vmem>>, %arg7: memref<128x1xf32, #tpu.memory_space<vmem>>, %arg8: memref<32x1024xf32, #tpu.memory_space<vmem>>, %arg9: memref<32x1xf32, #tpu.memory_space<vmem>>, %arg10: memref<1x32x2xf32, #tpu.memory_space<vmem>>, %arg11: memref<2x8x159xf32, #tpu.memory_space<vmem>>, %arg12: memref<2x32x143xf32, #tpu.memory_space<vmem>>, %arg13: memref<2x64x135xf32, #tpu.memory_space<vmem>>, %arg14: memref<2x128x135xf32, #tpu.memory_space<vmem>>, %arg15: memref<1024x256xf32, #tpu.memory_space<vmem>>) attributes {dimension_semantics = [#tpu.dimension_semantics<parallel>], iteration_bounds = array<i64: 1>, scalar_prefetch = 0 : i64, scratch_operands = 5 : i64, tpu.core_type = #tpu.core_type<tc>, window_params = [{transform_indices = @transform_0, window_bounds = array<i64: 2, 8, 128>}, {pipeline_mode = #tpu.pipeline_mode<synchronous>, transform_indices = @transform_1, window_bounds = array<i64: 32, 256>}, {pipeline_mode = #tpu.pipeline_mode<synchronous>, transform_indices = @transform_2, window_bounds = array<i64: 32, 1>}, {pipeline_mode = #tpu.pipeline_mode<synchronous>, transform_indices = @transform_3, window_bounds = array<i64: 64, 512>}, {pipeline_mode = #tpu.pipeline_mode<synchronous>, transform_indices = @transform_4, window_bounds = array<i64: 64, 1>}, {pipeline_mode = #tpu.pipeline_mode<synchronous>, transform_indices = @transform_5, window_bounds = array<i64: 128, 512>}, {pipeline_mode = #tpu.pipeline_mode<synchronous>, transform_indices = @transform_6, window_bounds = array<i64: 128, 1>}, {pipeline_mode = #tpu.pipeline_mode<synchronous>, transform_indices = @transform_7, window_bounds = array<i64: 32, 1024>}, {pipeline_mode = #tpu.pipeline_mode<synchronous>, transform_indices = @transform_8, window_bounds = array<i64: 32, 1>}, {transform_indices = @transform_9, window_bounds = array<i64: 1, 32, 2>}]} {
    %cst = arith.constant 0.000000e+00 : f32
    %0 = vector.broadcast %cst : f32 to vector<2x8x16xf32>
    %c0 = arith.constant 0 : index
    %c0_0 = arith.constant 0 : index
    %c0_1 = arith.constant 0 : index
    %1 = vector.load %arg11[%c0, %c0_0, %c0_1] : memref<2x8x159xf32, #tpu.memory_space<vmem>>, vector<2x8x16xf32>
    tpu.vector_store %arg11[%c0, %c0_0, %c0_1], %0 {strides = array<i32>} : memref<2x8x159xf32, #tpu.memory_space<vmem>>, vector<2x8x16xf32>,
    %cst_2 = arith.constant 0.000000e+00 : f32
    %2 = vector.broadcast %cst_2 : f32 to vector<2x8x15xf32>
    %c0_3 = arith.constant 0 : index
    %c0_4 = arith.constant 0 : index
    %c144 = arith.constant 144 : index
    %3 = vector.load %arg11[%c0_3, %c0_4, %c144] : memref<2x8x159xf32, #tpu.memory_space<vmem>>, vector<2x8x15xf32>
    tpu.vector_store %arg11[%c0_3, %c0_4, %c144], %2 {strides = array<i32>} : memref<2x8x159xf32, #tpu.memory_space<vmem>>, vector<2x8x15xf32>,
    %c0_5 = arith.constant 0 : index
    %c0_6 = arith.constant 0 : index
    %c0_7 = arith.constant 0 : index
    %4 = vector.load %arg1[%c0_5, %c0_6, %c0_7] : memref<2x8x128xf32, #tpu.memory_space<vmem>>, vector<2x8x128xf32>
    %c0_8 = arith.constant 0 : index
    %c0_9 = arith.constant 0 : index
    %c16 = arith.constant 16 : index
    %5 = vector.load %arg11[%c0_8, %c0_9, %c16] : memref<2x8x159xf32, #tpu.memory_space<vmem>>, vector<2x8x128xf32>
    tpu.vector_store %arg11[%c0_8, %c0_9, %c16], %4 {strides = array<i32>} : memref<2x8x159xf32, #tpu.memory_space<vmem>>, vector<2x8x128xf32>,
    %c0_10 = arith.constant 0 : index
    %c0_11 = arith.constant 0 : index
    %c0_12 = arith.constant 0 : index
    %6 = vector.load %arg11[%c0_10, %c0_11, %c0_12] : memref<2x8x159xf32, #tpu.memory_space<vmem>>, vector<1x8x128xf32>
    %7 = vector.shape_cast %6 : vector<1x8x128xf32> to vector<8x128xf32>
    %c0_13 = arith.constant 0 : index
    %c0_14 = arith.constant 0 : index
    %8 = vector.load %arg15[%c0_13, %c0_14] : memref<1024x256xf32, #tpu.memory_space<vmem>>, vector<8x128xf32>
    tpu.vector_store %arg15[%c0_13, %c0_14], %7 {strides = array<i32>} : memref<1024x256xf32, #tpu.memory_space<vmem>>, vector<8x128xf32>,
    %c0_15 = arith.constant 0 : index
    %c0_16 = arith.constant 0 : index
    %c1 = arith.constant 1 : index
    %9 = vector.load %arg11[%c0_15, %c0_16, %c1] : memref<2x8x159xf32, #tpu.memory_space<vmem>>, vector<1x8x128xf32>
    %10 = vector.shape_cast %9 : vector<1x8x128xf32> to vector<8x128xf32>
    %c8 = arith.constant 8 : index
    %c0_17 = arith.constant 0 : index
    %11 = vector.load %arg15[%c8, %c0_17] : memref<1024x256xf32, #tpu.memory_space<vmem>>, vector<8x128xf32>
    tpu.vector_store %arg15[%c8, %c0_17], %10 {strides = array<i32>} : memref<1024x256xf32, #tpu.memory_space<vmem>>, vector<8x128xf32>,
    %c0_18 = arith.constant 0 : index
    %c0_19 = arith.constant 0 : index
    %c2 = arith.constant 2 : index
    %12 = vector.load %arg11[%c0_18, %c0_19, %c2] : memref<2x8x159xf32, #tpu.memory_space<vmem>>, vector<1x8x128xf32>
    %13 = vector.shape_cast %12 : vector<1x8x128xf32> to vector<8x128xf32>
    %c16_20 = arith.constant 16 : index
    %c0_21 = arith.constant 0 : index
    %14 = vector.load %arg15[%c16_20, %c0_21] : memref<1024x256xf32, #tpu.memory_space<vmem>>, vector<8x128xf32>
    tpu.vector_store %arg15[%c16_20, %c0_21], %13 {strides = array<i32>} : memref<1024x256xf32, #tpu.memory_space<vmem>>, vector<8x128xf32>,
    %c0_22 = arith.constant 0 : index
    %c0_23 = arith.constant 0 : index
    %c3 = arith.constant 3 : index
    %15 = vector.load %arg11[%c0_22, %c0_23, %c3] : memref<2x8x159xf32, #tpu.memory_space<vmem>>, vector<1x8x128xf32>
    %16 = vector.shape_cast %15 : vector<1x8x128xf32> to vector<8x128xf32>
    %c24 = arith.constant 24 : index
    %c0_24 = arith.constant 0 : index
    %17 = vector.load %arg15[%c24, %c0_24] : memref<1024x256xf32, #tpu.memory_space<vmem>>, vector<8x128xf32>
    tpu.vector_store %arg15[%c24, %c0_24], %16 {strides = array<i32>} : memref<1024x256xf32, #tpu.memory_space<vmem>>, vector<8x128xf32>,
    %c0_25 = arith.constant 0 : index
    %c0_26 = arith.constant 0 : index
    %c4 = arith.constant 4 : index
    %18 = vector.load %arg11[%c0_25, %c0_26, %c4] : memref<2x8x159xf32, #tpu.memory_space<vmem>>, vector<1x8x128xf32>
    %19 = vector.shape_cast %18 : vector<1x8x128xf32> to vector<8x128xf32>
    %c32 = arith.constant 32 : index
    %c0_27 = arith.constant 0 : index
    %20 = vector.load %arg15[%c32, %c0_27] : memref<1024x256xf32, #tpu.memory_space<vmem>>, vector<8x128xf32>
    tpu.vector_store %arg15[%c32, %c0_27], %19 {strides = array<i32>} : memref<1024x256xf32, #tpu.memory_space<vmem>>, vector<8x128xf32>,
    %c0_28 = arith.constant 0 : index
    %c0_29 = arith.constant 0 : index
    %c5 = arith.constant 5 : index
    %21 = vector.load %arg11[%c0_28, %c0_29, %c5] : memref<2x8x159xf32, #tpu.memory_space<vmem>>, vector<1x8x128xf32>
    %22 = vector.shape_cast %21 : vector<1x8x128xf32> to vector<8x128xf32>
    %c40 = arith.constant 40 : index
    %c0_30 = arith.constant 0 : index
    %23 = vector.load %arg15[%c40, %c0_30] : memref<1024x256xf32, #tpu.memory_space<vmem>>, vector<8x128xf32>
    tpu.vector_store %arg15[%c40, %c0_30], %22 {strides = array<i32>} : memref<1024x256xf32, #tpu.memory_space<vmem>>, vector<8x128xf32>,
    %c0_31 = arith.constant 0 : index
    %c0_32 = arith.constant 0 : index
    %c6 = arith.constant 6 : index
    %24 = vector.load %arg11[%c0_31, %c0_32, %c6] : memref<2x8x159xf32, #tpu.memory_space<vmem>>, vector<1x8x128xf32>
    %25 = vector.shape_cast %24 : vector<1x8x128xf32> to vector<8x128xf32>
    %c48 = arith.constant 48 : index
    %c0_33 = arith.constant 0 : index
    %26 = vector.load %arg15[%c48, %c0_33] : memref<1024x256xf32, #tpu.memory_space<vmem>>, vector<8x128xf32>
    tpu.vector_store %arg15[%c48, %c0_33], %25 {strides = array<i32>} : memref<1024x256xf32, #tpu.memory_space<vmem>>, vector<8x128xf32>,
    %c0_34 = arith.constant 0 : index
    %c0_35 = arith.constant 0 : index
    %c7 = arith.constant 7 : index
    %27 = vector.load %arg11[%c0_34, %c0_35, %c7] : memref<2x8x159xf32, #tpu.memory_space<vmem>>, vector<1x8x128xf32>
    %28 = vector.shape_cast %27 : vector<1x8x128xf32> to vector<8x128xf32>
    %c56 = arith.constant 56 : index
    %c0_36 = arith.constant 0 : index
    %29 = vector.load %arg15[%c56, %c0_36] : memref<1024x256xf32, #tpu.memory_space<vmem>>, vector<8x128xf32>
    tpu.vector_store %arg15[%c56, %c0_36], %28 {strides = array<i32>} : memref<1024x256xf32, #tpu.memory_space<vmem>>, vector<8x128xf32>,
    %c0_37 = arith.constant 0 : index
    %c0_38 = arith.constant 0 : index
    %c8_39 = arith.constant 8 : index
    %30 = vector.load %arg11[%c0_37, %c0_38, %c8_39] : memref<2x8x159xf32, #tpu.memory_space<vmem>>, vector<1x8x128xf32>
    %31 = vector.shape_cast %30 : vector<1x8x128xf32> to vector<8x128xf32>
    %c64 = arith.constant 64 : index
    %c0_40 = arith.constant 0 : index
    %32 = vector.load %arg15[%c64, %c0_40] : memref<1024x256xf32, #tpu.memory_space<vmem>>, vector<8x128xf32>
    tpu.vector_store %arg15[%c64, %c0_40], %31 {strides = array<i32>} : memref<1024x256xf32, #tpu.memory_space<vmem>>, vector<8x128xf32>,
    %c0_41 = arith.constant 0 : index
    %c0_42 = arith.constant 0 : index
    %c9 = arith.constant 9 : index
    %33 = vector.load %arg11[%c0_41, %c0_42, %c9] : memref<2x8x159xf32, #tpu.memory_space<vmem>>, vector<1x8x128xf32>
    %34 = vector.shape_cast %33 : vector<1x8x128xf32> to vector<8x128xf32>
    %c72 = arith.constant 72 : index
    %c0_43 = arith.constant 0 : index
    %35 = vector.load %arg15[%c72, %c0_43] : memref<1024x256xf32, #tpu.memory_space<vmem>>, vector<8x128xf32>
    tpu.vector_store %arg15[%c72, %c0_43], %34 {strides = array<i32>} : memref<1024x256xf32, #tpu.memory_space<vmem>>, vector<8x128xf32>,
    %c0_44 = arith.constant 0 : index
    %c0_45 = arith.constant 0 : index
    %c10 = arith.constant 10 : index
    %36 = vector.load %arg11[%c0_44, %c0_45, %c10] : memref<2x8x159xf32, #tpu.memory_space<vmem>>, vector<1x8x128xf32>
    %37 = vector.shape_cast %36 : vector<1x8x128xf32> to vector<8x128xf32>
    %c80 = arith.constant 80 : index
    %c0_46 = arith.constant 0 : index
    %38 = vector.load %arg15[%c80, %c0_46] : memref<1024x256xf32, #tpu.memory_space<vmem>>, vector<8x128xf32>
    tpu.vector_store %arg15[%c80, %c0_46], %37 {strides = array<i32>} : memref<1024x256xf32, #tpu.memory_space<vmem>>, vector<8x128xf32>,
    %c0_47 = arith.constant 0 : index
    %c0_48 = arith.constant 0 : index
    %c11 = arith.constant 11 : index
    %39 = vector.load %arg11[%c0_47, %c0_48, %c11] : memref<2x8x159xf32, #tpu.memory_space<vmem>>, vector<1x8x128xf32>
    %40 = vector.shape_cast %39 : vector<1x8x128xf32> to vector<8x128xf32>
    %c88 = arith.constant 88 : index
    %c0_49 = arith.constant 0 : index
    %41 = vector.load %arg15[%c88, %c0_49] : memref<1024x256xf32, #tpu.memory_space<vmem>>, vector<8x128xf32>
    tpu.vector_store %arg15[%c88, %c0_49], %40 {strides = array<i32>} : memref<1024x256xf32, #tpu.memory_space<vmem>>, vector<8x128xf32>,
    %c0_50 = arith.constant 0 : index
    %c0_51 = arith.constant 0 : index
    %c12 = arith.constant 12 : index
    %42 = vector.load %arg11[%c0_50, %c0_51, %c12] : memref<2x8x159xf32, #tpu.memory_space<vmem>>, vector<1x8x128xf32>
    %43 = vector.shape_cast %42 : vector<1x8x128xf32> to vector<8x128xf32>
    %c96 = arith.constant 96 : index
    %c0_52 = arith.constant 0 : index
    %44 = vector.load %arg15[%c96, %c0_52] : memref<1024x256xf32, #tpu.memory_space<vmem>>, vector<8x128xf32>
    tpu.vector_store %arg15[%c96, %c0_52], %43 {strides = array<i32>} : memref<1024x256xf32, #tpu.memory_space<vmem>>, vector<8x128xf32>,
    %c0_53 = arith.constant 0 : index
    %c0_54 = arith.constant 0 : index
    %c13 = arith.constant 13 : index
    %45 = vector.load %arg11[%c0_53, %c0_54, %c13] : memref<2x8x159xf32, #tpu.memory_space<vmem>>, vector<1x8x128xf32>
    %46 = vector.shape_cast %45 : vector<1x8x128xf32> to vector<8x128xf32>
    %c104 = arith.constant 104 : index
    %c0_55 = arith.constant 0 : index
    %47 = vector.load %arg15[%c104, %c0_55] : memref<1024x256xf32, #tpu.memory_space<vmem>>, vector<8x128xf32>
    tpu.vector_store %arg15[%c104, %c0_55], %46 {strides = array<i32>} : memref<1024x256xf32, #tpu.memory_space<vmem>>, vector<8x128xf32>,
    %c0_56 = arith.constant 0 : index
    %c0_57 = arith.constant 0 : index
    %c14 = arith.constant 14 : index
    %48 = vector.load %arg11[%c0_56, %c0_57, %c14] : memref<2x8x159xf32, #tpu.memory_space<vmem>>, vector<1x8x128xf32>
    %49 = vector.shape_cast %48 : vector<1x8x128xf32> to vector<8x128xf32>
    %c112 = arith.constant 112 : index
    %c0_58 = arith.constant 0 : index
    %50 = vector.load %arg15[%c112, %c0_58] : memref<1024x256xf32, #tpu.memory_space<vmem>>, vector<8x128xf32>
    tpu.vector_store %arg15[%c112, %c0_58], %49 {strides = array<i32>} : memref<1024x256xf32, #tpu.memory_space<vmem>>, vector<8x128xf32>,
    %c0_59 = arith.constant 0 : index
    %c0_60 = arith.constant 0 : index
    %c15 = arith.constant 15 : index
    %51 = vector.load %arg11[%c0_59, %c0_60, %c15] : memref<2x8x159xf32, #tpu.memory_space<vmem>>, vector<1x8x128xf32>
    %52 = vector.shape_cast %51 : vector<1x8x128xf32> to vector<8x128xf32>
    %c120 = arith.constant 120 : index
    %c0_61 = arith.constant 0 : index
    %53 = vector.load %arg15[%c120, %c0_61] : memref<1024x256xf32, #tpu.memory_space<vmem>>, vector<8x128xf32>
    tpu.vector_store %arg15[%c120, %c0_61], %52 {strides = array<i32>} : memref<1024x256xf32, #tpu.memory_space<vmem>>, vector<8x128xf32>,
    %c0_62 = arith.constant 0 : index
    %c0_63 = arith.constant 0 : index
    %c16_64 = arith.constant 16 : index
    %54 = vector.load %arg11[%c0_62, %c0_63, %c16_64] : memref<2x8x159xf32, #tpu.memory_space<vmem>>, vector<1x8x128xf32>
    %55 = vector.shape_cast %54 : vector<1x8x128xf32> to vector<8x128xf32>
    %c128 = arith.constant 128 : index
    %c0_65 = arith.constant 0 : index
    %56 = vector.load %arg15[%c128, %c0_65] : memref<1024x256xf32, #tpu.memory_space<vmem>>, vector<8x128xf32>
    tpu.vector_store %arg15[%c128, %c0_65], %55 {strides = array<i32>} : memref<1024x256xf32, #tpu.memory_space<vmem>>, vector<8x128xf32>,
    %c0_66 = arith.constant 0 : index
    %c0_67 = arith.constant 0 : index
    %c17 = arith.constant 17 : index
    %57 = vector.load %arg11[%c0_66, %c0_67, %c17] : memref<2x8x159xf32, #tpu.memory_space<vmem>>, vector<1x8x128xf32>
    %58 = vector.shape_cast %57 : vector<1x8x128xf32> to vector<8x128xf32>
    %c136 = arith.constant 136 : index
    %c0_68 = arith.constant 0 : index
    %59 = vector.load %arg15[%c136, %c0_68] : memref<1024x256xf32, #tpu.memory_space<vmem>>, vector<8x128xf32>
    tpu.vector_store %arg15[%c136, %c0_68], %58 {strides = array<i32>} : memref<1024x256xf32, #tpu.memory_space<vmem>>, vector<8x128xf32>,
    %c0_69 = arith.constant 0 : index
    %c0_70 = arith.constant 0 : index
    %c18 = arith.constant 18 : index
    %60 = vector.load %arg11[%c0_69, %c0_70, %c18] : memref<2x8x159xf32, #tpu.memory_space<vmem>>, vector<1x8x128xf32>
    %61 = vector.shape_cast %60 : vector<1x8x128xf32> to vector<8x128xf32>
    %c144_71 = arith.constant 144 : index
    %c0_72 = arith.constant 0 : index
    %62 = vector.load %arg15[%c144_71, %c0_72] : memref<1024x256xf32, #tpu.memory_space<vmem>>, vector<8x128xf32>
    tpu.vector_store %arg15[%c144_71, %c0_72], %61 {strides = array<i32>} : memref<1024x256xf32, #tpu.memory_space<vmem>>, vector<8x128xf32>,
    %c0_73 = arith.constant 0 : index
    %c0_74 = arith.constant 0 : index
    %c19 = arith.constant 19 : index
    %63 = vector.load %arg11[%c0_73, %c0_74, %c19] : memref<2x8x159xf32, #tpu.memory_space<vmem>>, vector<1x8x128xf32>
    %64 = vector.shape_cast %63 : vector<1x8x128xf32> to vector<8x128xf32>
    %c152 = arith.constant 152 : index
    %c0_75 = arith.constant 0 : index
    %65 = vector.load %arg15[%c152, %c0_75] : memref<1024x256xf32, #tpu.memory_space<vmem>>, vector<8x128xf32>
    tpu.vector_store %arg15[%c152, %c0_75], %64 {strides = array<i32>} : memref<1024x256xf32, #tpu.memory_space<vmem>>, vector<8x128xf32>,
    %c0_76 = arith.constant 0 : index
    %c0_77 = arith.constant 0 : index
    %c20 = arith.constant 20 : index
    %66 = vector.load %arg11[%c0_76, %c0_77, %c20] : memref<2x8x159xf32, #tpu.memory_space<vmem>>, vector<1x8x128xf32>
    %67 = vector.shape_cast %66 : vector<1x8x128xf32> to vector<8x128xf32>
    %c160 = arith.constant 160 : index
    %c0_78 = arith.constant 0 : index
    %68 = vector.load %arg15[%c160, %c0_78] : memref<1024x256xf32, #tpu.memory_space<vmem>>, vector<8x128xf32>
    tpu.vector_store %arg15[%c160, %c0_78], %67 {strides = array<i32>} : memref<1024x256xf32, #tpu.memory_space<vmem>>, vector<8x128xf32>,
    %c0_79 = arith.constant 0 : index
    %c0_80 = arith.constant 0 : index
    %c21 = arith.constant 21 : index
    %69 = vector.load %arg11[%c0_79, %c0_80, %c21] : memref<2x8x159xf32, #tpu.memory_space<vmem>>, vector<1x8x128xf32>
    %70 = vector.shape_cast %69 : vector<1x8x128xf32> to vector<8x128xf32>
    %c168 = arith.constant 168 : index
    %c0_81 = arith.constant 0 : index
    %71 = vector.load %arg15[%c168, %c0_81] : memref<1024x256xf32, #tpu.memory_space<vmem>>, vector<8x128xf32>
    tpu.vector_store %arg15[%c168, %c0_81], %70 {strides = array<i32>} : memref<1024x256xf32, #tpu.memory_space<vmem>>, vector<8x128xf32>,
    %c0_82 = arith.constant 0 : index
    %c0_83 = arith.constant 0 : index
    %c22 = arith.constant 22 : index
    %72 = vector.load %arg11[%c0_82, %c0_83, %c22] : memref<2x8x159xf32, #tpu.memory_space<vmem>>, vector<1x8x128xf32>
    %73 = vector.shape_cast %72 : vector<1x8x128xf32> to vector<8x128xf32>
    %c176 = arith.constant 176 : index
    %c0_84 = arith.constant 0 : index
    %74 = vector.load %arg15[%c176, %c0_84] : memref<1024x256xf32, #tpu.memory_space<vmem>>, vector<8x128xf32>
    tpu.vector_store %arg15[%c176, %c0_84], %73 {strides = array<i32>} : memref<1024x256xf32, #tpu.memory_space<vmem>>, vector<8x128xf32>,
    %c0_85 = arith.constant 0 : index
    %c0_86 = arith.constant 0 : index
    %c23 = arith.constant 23 : index
    %75 = vector.load %arg11[%c0_85, %c0_86, %c23] : memref<2x8x159xf32, #tpu.memory_space<vmem>>, vector<1x8x128xf32>
    %76 = vector.shape_cast %75 : vector<1x8x128xf32> to vector<8x128xf32>
    %c184 = arith.constant 184 : index
    %c0_87 = arith.constant 0 : index
    %77 = vector.load %arg15[%c184, %c0_87] : memref<1024x256xf32, #tpu.memory_space<vmem>>, vector<8x128xf32>
    tpu.vector_store %arg15[%c184, %c0_87], %76 {strides = array<i32>} : memref<1024x256xf32, #tpu.memory_space<vmem>>, vector<8x128xf32>,
    %c0_88 = arith.constant 0 : index
    %c0_89 = arith.constant 0 : index
    %c24_90 = arith.constant 24 : index
    %78 = vector.load %arg11[%c0_88, %c0_89, %c24_90] : memref<2x8x159xf32, #tpu.memory_space<vmem>>, vector<1x8x128xf32>
    %79 = vector.shape_cast %78 : vector<1x8x128xf32> to vector<8x128xf32>
    %c192 = arith.constant 192 : index
    %c0_91 = arith.constant 0 : index
    %80 = vector.load %arg15[%c192, %c0_91] : memref<1024x256xf32, #tpu.memory_space<vmem>>, vector<8x128xf32>
    tpu.vector_store %arg15[%c192, %c0_91], %79 {strides = array<i32>} : memref<1024x256xf32, #tpu.memory_space<vmem>>, vector<8x128xf32>,
    %c0_92 = arith.constant 0 : index
    %c0_93 = arith.constant 0 : index
    %c25 = arith.constant 25 : index
    %81 = vector.load %arg11[%c0_92, %c0_93, %c25] : memref<2x8x159xf32, #tpu.memory_space<vmem>>, vector<1x8x128xf32>
    %82 = vector.shape_cast %81 : vector<1x8x128xf32> to vector<8x128xf32>
    %c200 = arith.constant 200 : index
    %c0_94 = arith.constant 0 : index
    %83 = vector.load %arg15[%c200, %c0_94] : memref<1024x256xf32, #tpu.memory_space<vmem>>, vector<8x128xf32>
    tpu.vector_store %arg15[%c200, %c0_94], %82 {strides = array<i32>} : memref<1024x256xf32, #tpu.memory_space<vmem>>, vector<8x128xf32>,
    %c0_95 = arith.constant 0 : index
    %c0_96 = arith.constant 0 : index
    %c26 = arith.constant 26 : index
    %84 = vector.load %arg11[%c0_95, %c0_96, %c26] : memref<2x8x159xf32, #tpu.memory_space<vmem>>, vector<1x8x128xf32>
    %85 = vector.shape_cast %84 : vector<1x8x128xf32> to vector<8x128xf32>
    %c208 = arith.constant 208 : index
    %c0_97 = arith.constant 0 : index
    %86 = vector.load %arg15[%c208, %c0_97] : memref<1024x256xf32, #tpu.memory_space<vmem>>, vector<8x128xf32>
    tpu.vector_store %arg15[%c208, %c0_97], %85 {strides = array<i32>} : memref<1024x256xf32, #tpu.memory_space<vmem>>, vector<8x128xf32>,
    %c0_98 = arith.constant 0 : index
    %c0_99 = arith.constant 0 : index
    %c27 = arith.constant 27 : index
    %87 = vector.load %arg11[%c0_98, %c0_99, %c27] : memref<2x8x159xf32, #tpu.memory_space<vmem>>, vector<1x8x128xf32>
    %88 = vector.shape_cast %87 : vector<1x8x128xf32> to vector<8x128xf32>
    %c216 = arith.constant 216 : index
    %c0_100 = arith.constant 0 : index
    %89 = vector.load %arg15[%c216, %c0_100] : memref<1024x256xf32, #tpu.memory_space<vmem>>, vector<8x128xf32>
    tpu.vector_store %arg15[%c216, %c0_100], %88 {strides = array<i32>} : memref<1024x256xf32, #tpu.memory_space<vmem>>, vector<8x128xf32>,
    %c0_101 = arith.constant 0 : index
    %c0_102 = arith.constant 0 : index
    %c28 = arith.constant 28 : index
    %90 = vector.load %arg11[%c0_101, %c0_102, %c28] : memref<2x8x159xf32, #tpu.memory_space<vmem>>, vector<1x8x128xf32>
    %91 = vector.shape_cast %90 : vector<1x8x128xf32> to vector<8x128xf32>
    %c224 = arith.constant 224 : index
    %c0_103 = arith.constant 0 : index
    %92 = vector.load %arg15[%c224, %c0_103] : memref<1024x256xf32, #tpu.memory_space<vmem>>, vector<8x128xf32>
    tpu.vector_store %arg15[%c224, %c0_103], %91 {strides = array<i32>} : memref<1024x256xf32, #tpu.memory_space<vmem>>, vector<8x128xf32>,
    %c0_104 = arith.constant 0 : index
    %c0_105 = arith.constant 0 : index
    %c29 = arith.constant 29 : index
    %93 = vector.load %arg11[%c0_104, %c0_105, %c29] : memref<2x8x159xf32, #tpu.memory_space<vmem>>, vector<1x8x128xf32>
    %94 = vector.shape_cast %93 : vector<1x8x128xf32> to vector<8x128xf32>
    %c232 = arith.constant 232 : index
    %c0_106 = arith.constant 0 : index
    %95 = vector.load %arg15[%c232, %c0_106] : memref<1024x256xf32, #tpu.memory_space<vmem>>, vector<8x128xf32>
    tpu.vector_store %arg15[%c232, %c0_106], %94 {strides = array<i32>} : memref<1024x256xf32, #tpu.memory_space<vmem>>, vector<8x128xf32>,
    %c0_107 = arith.constant 0 : index
    %c0_108 = arith.constant 0 : index
    %c30 = arith.constant 30 : index
    %96 = vector.load %arg11[%c0_107, %c0_108, %c30] : memref<2x8x159xf32, #tpu.memory_space<vmem>>, vector<1x8x128xf32>
    %97 = vector.shape_cast %96 : vector<1x8x128xf32> to vector<8x128xf32>
    %c240 = arith.constant 240 : index
    %c0_109 = arith.constant 0 : index
    %98 = vector.load %arg15[%c240, %c0_109] : memref<1024x256xf32, #tpu.memory_space<vmem>>, vector<8x128xf32>
    tpu.vector_store %arg15[%c240, %c0_109], %97 {strides = array<i32>} : memref<1024x256xf32, #tpu.memory_space<vmem>>, vector<8x128xf32>,
    %c0_110 = arith.constant 0 : index
    %c0_111 = arith.constant 0 : index
    %c31 = arith.constant 31 : index
    %99 = vector.load %arg11[%c0_110, %c0_111, %c31] : memref<2x8x159xf32, #tpu.memory_space<vmem>>, vector<1x8x128xf32>
    %100 = vector.shape_cast %99 : vector<1x8x128xf32> to vector<8x128xf32>
    %c248 = arith.constant 248 : index
    %c0_112 = arith.constant 0 : index
    %101 = vector.load %arg15[%c248, %c0_112] : memref<1024x256xf32, #tpu.memory_space<vmem>>, vector<8x128xf32>
    tpu.vector_store %arg15[%c248, %c0_112], %100 {strides = array<i32>} : memref<1024x256xf32, #tpu.memory_space<vmem>>, vector<8x128xf32>,
    %c1_113 = arith.constant 1 : index
    %c0_114 = arith.constant 0 : index
    %c0_115 = arith.constant 0 : index
    %102 = vector.load %arg11[%c1_113, %c0_114, %c0_115] : memref<2x8x159xf32, #tpu.memory_space<vmem>>, vector<1x8x128xf32>
    %103 = vector.shape_cast %102 : vector<1x8x128xf32> to vector<8x128xf32>
    %c0_116 = arith.constant 0 : index
    %c128_117 = arith.constant 128 : index
    %104 = vector.load %arg15[%c0_116, %c128_117] : memref<1024x256xf32, #tpu.memory_space<vmem>>, vector<8x128xf32>
    tpu.vector_store %arg15[%c0_116, %c128_117], %103 {strides = array<i32>} : memref<1024x256xf32, #tpu.memory_space<vmem>>, vector<8x128xf32>,
    %c1_118 = arith.constant 1 : index
    %c0_119 = arith.constant 0 : index
    %c1_120 = arith.constant 1 : index
    %105 = vector.load %arg11[%c1_118, %c0_119, %c1_120] : memref<2x8x159xf32, #tpu.memory_space<vmem>>, vector<1x8x128xf32>
    %106 = vector.shape_cast %105 : vector<1x8x128xf32> to vector<8x128xf32>
    %c8_121 = arith.constant 8 : index
    %c128_122 = arith.constant 128 : index
    %107 = vector.load %arg15[%c8_121, %c128_122] : memref<1024x256xf32, #tpu.memory_space<vmem>>, vector<8x128xf32>
    tpu.vector_store %arg15[%c8_121, %c128_122], %106 {strides = array<i32>} : memref<1024x256xf32, #tpu.memory_space<vmem>>, vector<8x128xf32>,
    %c1_123 = arith.constant 1 : index
    %c0_124 = arith.constant 0 : index
    %c2_125 = arith.constant 2 : index
    %108 = vector.load %arg11[%c1_123, %c0_124, %c2_125] : memref<2x8x159xf32, #tpu.memory_space<vmem>>, vector<1x8x128xf32>
    %109 = vector.shape_cast %108 : vector<1x8x128xf32> to vector<8x128xf32>
    %c16_126 = arith.constant 16 : index
    %c128_127 = arith.constant 128 : index
    %110 = vector.load %arg15[%c16_126, %c128_127] : memref<1024x256xf32, #tpu.memory_space<vmem>>, vector<8x128xf32>
    tpu.vector_store %arg15[%c16_126, %c128_127], %109 {strides = array<i32>} : memref<1024x256xf32, #tpu.memory_space<vmem>>, vector<8x128xf32>,
    %c1_128 = arith.constant 1 : index
    %c0_129 = arith.constant 0 : index
    %c3_130 = arith.constant 3 : index
    %111 = vector.load %arg11[%c1_128, %c0_129, %c3_130] : memref<2x8x159xf32, #tpu.memory_space<vmem>>, vector<1x8x128xf32>
    %112 = vector.shape_cast %111 : vector<1x8x128xf32> to vector<8x128xf32>
    %c24_131 = arith.constant 24 : index
    %c128_132 = arith.constant 128 : index
    %113 = vector.load %arg15[%c24_131, %c128_132] : memref<1024x256xf32, #tpu.memory_space<vmem>>, vector<8x128xf32>
    tpu.vector_store %arg15[%c24_131, %c128_132], %112 {strides = array<i32>} : memref<1024x256xf32, #tpu.memory_space<vmem>>, vector<8x128xf32>,
    %c1_133 = arith.constant 1 : index
    %c0_134 = arith.constant 0 : index
    %c4_135 = arith.constant 4 : index
    %114 = vector.load %arg11[%c1_133, %c0_134, %c4_135] : memref<2x8x159xf32, #tpu.memory_space<vmem>>, vector<1x8x128xf32>
    %115 = vector.shape_cast %114 : vector<1x8x128xf32> to vector<8x128xf32>
    %c32_136 = arith.constant 32 : index
    %c128_137 = arith.constant 128 : index
    %116 = vector.load %arg15[%c32_136, %c128_137] : memref<1024x256xf32, #tpu.memory_space<vmem>>, vector<8x128xf32>
    tpu.vector_store %arg15[%c32_136, %c128_137], %115 {strides = array<i32>} : memref<1024x256xf32, #tpu.memory_space<vmem>>, vector<8x128xf32>,
    %c1_138 = arith.constant 1 : index
    %c0_139 = arith.constant 0 : index
    %c5_140 = arith.constant 5 : index
    %117 = vector.load %arg11[%c1_138, %c0_139, %c5_140] : memref<2x8x159xf32, #tpu.memory_space<vmem>>, vector<1x8x128xf32>
    %118 = vector.shape_cast %117 : vector<1x8x128xf32> to vector<8x128xf32>
    %c40_141 = arith.constant 40 : index
    %c128_142 = arith.constant 128 : index
    %119 = vector.load %arg15[%c40_141, %c128_142] : memref<1024x256xf32, #tpu.memory_space<vmem>>, vector<8x128xf32>
    tpu.vector_store %arg15[%c40_141, %c128_142], %118 {strides = array<i32>} : memref<1024x256xf32, #tpu.memory_space<vmem>>, vector<8x128xf32>,
    %c1_143 = arith.constant 1 : index
    %c0_144 = arith.constant 0 : index
    %c6_145 = arith.constant 6 : index
    %120 = vector.load %arg11[%c1_143, %c0_144, %c6_145] : memref<2x8x159xf32, #tpu.memory_space<vmem>>, vector<1x8x128xf32>
    %121 = vector.shape_cast %120 : vector<1x8x128xf32> to vector<8x128xf32>
    %c48_146 = arith.constant 48 : index
    %c128_147 = arith.constant 128 : index
    %122 = vector.load %arg15[%c48_146, %c128_147] : memref<1024x256xf32, #tpu.memory_space<vmem>>, vector<8x128xf32>
    tpu.vector_store %arg15[%c48_146, %c128_147], %121 {strides = array<i32>} : memref<1024x256xf32, #tpu.memory_space<vmem>>, vector<8x128xf32>,
    %c1_148 = arith.constant 1 : index
    %c0_149 = arith.constant 0 : index
    %c7_150 = arith.constant 7 : index
    %123 = vector.load %arg11[%c1_148, %c0_149, %c7_150] : memref<2x8x159xf32, #tpu.memory_space<vmem>>, vector<1x8x128xf32>
    %124 = vector.shape_cast %123 : vector<1x8x128xf32> to vector<8x128xf32>
    %c56_151 = arith.constant 56 : index
    %c128_152 = arith.constant 128 : index
    %125 = vector.load %arg15[%c56_151, %c128_152] : memref<1024x256xf32, #tpu.memory_space<vmem>>, vector<8x128xf32>
    tpu.vector_store %arg15[%c56_151, %c128_152], %124 {strides = array<i32>} : memref<1024x256xf32, #tpu.memory_space<vmem>>, vector<8x128xf32>,
    %c1_153 = arith.constant 1 : index
    %c0_154 = arith.constant 0 : index
    %c8_155 = arith.constant 8 : index
    %126 = vector.load %arg11[%c1_153, %c0_154, %c8_155] : memref<2x8x159xf32, #tpu.memory_space<vmem>>, vector<1x8x128xf32>
    %127 = vector.shape_cast %126 : vector<1x8x128xf32> to vector<8x128xf32>
    %c64_156 = arith.constant 64 : index
    %c128_157 = arith.constant 128 : index
    %128 = vector.load %arg15[%c64_156, %c128_157] : memref<1024x256xf32, #tpu.memory_space<vmem>>, vector<8x128xf32>
    tpu.vector_store %arg15[%c64_156, %c128_157], %127 {strides = array<i32>} : memref<1024x256xf32, #tpu.memory_space<vmem>>, vector<8x128xf32>,
    %c1_158 = arith.constant 1 : index
    %c0_159 = arith.constant 0 : index
    %c9_160 = arith.constant 9 : index
    %129 = vector.load %arg11[%c1_158, %c0_159, %c9_160] : memref<2x8x159xf32, #tpu.memory_space<vmem>>, vector<1x8x128xf32>
    %130 = vector.shape_cast %129 : vector<1x8x128xf32> to vector<8x128xf32>
    %c72_161 = arith.constant 72 : index
    %c128_162 = arith.constant 128 : index
    %131 = vector.load %arg15[%c72_161, %c128_162] : memref<1024x256xf32, #tpu.memory_space<vmem>>, vector<8x128xf32>
    tpu.vector_store %arg15[%c72_161, %c128_162], %130 {strides = array<i32>} : memref<1024x256xf32, #tpu.memory_space<vmem>>, vector<8x128xf32>,
    %c1_163 = arith.constant 1 : index
    %c0_164 = arith.constant 0 : index
    %c10_165 = arith.constant 10 : index
    %132 = vector.load %arg11[%c1_163, %c0_164, %c10_165] : memref<2x8x159xf32, #tpu.memory_space<vmem>>, vector<1x8x128xf32>
    %133 = vector.shape_cast %132 : vector<1x8x128xf32> to vector<8x128xf32>
    %c80_166 = arith.constant 80 : index
    %c128_167 = arith.constant 128 : index
    %134 = vector.load %arg15[%c80_166, %c128_167] : memref<1024x256xf32, #tpu.memory_space<vmem>>, vector<8x128xf32>
    tpu.vector_store %arg15[%c80_166, %c128_167], %133 {strides = array<i32>} : memref<1024x256xf32, #tpu.memory_space<vmem>>, vector<8x128xf32>,
    %c1_168 = arith.constant 1 : index
    %c0_169 = arith.constant 0 : index
    %c11_170 = arith.constant 11 : index
    %135 = vector.load %arg11[%c1_168, %c0_169, %c11_170] : memref<2x8x159xf32, #tpu.memory_space<vmem>>, vector<1x8x128xf32>
    %136 = vector.shape_cast %135 : vector<1x8x128xf32> to vector<8x128xf32>
    %c88_171 = arith.constant 88 : index
    %c128_172 = arith.constant 128 : index
    %137 = vector.load %arg15[%c88_171, %c128_172] : memref<1024x256xf32, #tpu.memory_space<vmem>>, vector<8x128xf32>
    tpu.vector_store %arg15[%c88_171, %c128_172], %136 {strides = array<i32>} : memref<1024x256xf32, #tpu.memory_space<vmem>>, vector<8x128xf32>,
    %c1_173 = arith.constant 1 : index
    %c0_174 = arith.constant 0 : index
    %c12_175 = arith.constant 12 : index
    %138 = vector.load %arg11[%c1_173, %c0_174, %c12_175] : memref<2x8x159xf32, #tpu.memory_space<vmem>>, vector<1x8x128xf32>
    %139 = vector.shape_cast %138 : vector<1x8x128xf32> to vector<8x128xf32>
    %c96_176 = arith.constant 96 : index
    %c128_177 = arith.constant 128 : index
    %140 = vector.load %arg15[%c96_176, %c128_177] : memref<1024x256xf32, #tpu.memory_space<vmem>>, vector<8x128xf32>
    tpu.vector_store %arg15[%c96_176, %c128_177], %139 {strides = array<i32>} : memref<1024x256xf32, #tpu.memory_space<vmem>>, vector<8x128xf32>,
    %c1_178 = arith.constant 1 : index
    %c0_179 = arith.constant 0 : index
    %c13_180 = arith.constant 13 : index
    %141 = vector.load %arg11[%c1_178, %c0_179, %c13_180] : memref<2x8x159xf32, #tpu.memory_space<vmem>>, vector<1x8x128xf32>
    %142 = vector.shape_cast %141 : vector<1x8x128xf32> to vector<8x128xf32>
    %c104_181 = arith.constant 104 : index
    %c128_182 = arith.constant 128 : index
    %143 = vector.load %arg15[%c104_181, %c128_182] : memref<1024x256xf32, #tpu.memory_space<vmem>>, vector<8x128xf32>
    tpu.vector_store %arg15[%c104_181, %c128_182], %142 {strides = array<i32>} : memref<1024x256xf32, #tpu.memory_space<vmem>>, vector<8x128xf32>,
    %c1_183 = arith.constant 1 : index
    %c0_184 = arith.constant 0 : index
    %c14_185 = arith.constant 14 : index
    %144 = vector.load %arg11[%c1_183, %c0_184, %c14_185] : memref<2x8x159xf32, #tpu.memory_space<vmem>>, vector<1x8x128xf32>
    %145 = vector.shape_cast %144 : vector<1x8x128xf32> to vector<8x128xf32>
    %c112_186 = arith.constant 112 : index
    %c128_187 = arith.constant 128 : index
    %146 = vector.load %arg15[%c112_186, %c128_187] : memref<1024x256xf32, #tpu.memory_space<vmem>>, vector<8x128xf32>
    tpu.vector_store %arg15[%c112_186, %c128_187], %145 {strides = array<i32>} : memref<1024x256xf32, #tpu.memory_space<vmem>>, vector<8x128xf32>,
    %c1_188 = arith.constant 1 : index
    %c0_189 = arith.constant 0 : index
    %c15_190 = arith.constant 15 : index
    %147 = vector.load %arg11[%c1_188, %c0_189, %c15_190] : memref<2x8x159xf32, #tpu.memory_space<vmem>>, vector<1x8x128xf32>
    %148 = vector.shape_cast %147 : vector<1x8x128xf32> to vector<8x128xf32>
    %c120_191 = arith.constant 120 : index
    %c128_192 = arith.constant 128 : index
    %149 = vector.load %arg15[%c120_191, %c128_192] : memref<1024x256xf32, #tpu.memory_space<vmem>>, vector<8x128xf32>
    tpu.vector_store %arg15[%c120_191, %c128_192], %148 {strides = array<i32>} : memref<1024x256xf32, #tpu.memory_space<vmem>>, vector<8x128xf32>,
    %c1_193 = arith.constant 1 : index
    %c0_194 = arith.constant 0 : index
    %c16_195 = arith.constant 16 : index
    %150 = vector.load %arg11[%c1_193, %c0_194, %c16_195] : memref<2x8x159xf32, #tpu.memory_space<vmem>>, vector<1x8x128xf32>
    %151 = vector.shape_cast %150 : vector<1x8x128xf32> to vector<8x128xf32>
    %c128_196 = arith.constant 128 : index
    %c128_197 = arith.constant 128 : index
    %152 = vector.load %arg15[%c128_196, %c128_197] : memref<1024x256xf32, #tpu.memory_space<vmem>>, vector<8x128xf32>
    tpu.vector_store %arg15[%c128_196, %c128_197], %151 {strides = array<i32>} : memref<1024x256xf32, #tpu.memory_space<vmem>>, vector<8x128xf32>,
    %c1_198 = arith.constant 1 : index
    %c0_199 = arith.constant 0 : index
    %c17_200 = arith.constant 17 : index
    %153 = vector.load %arg11[%c1_198, %c0_199, %c17_200] : memref<2x8x159xf32, #tpu.memory_space<vmem>>, vector<1x8x128xf32>
    %154 = vector.shape_cast %153 : vector<1x8x128xf32> to vector<8x128xf32>
    %c136_201 = arith.constant 136 : index
    %c128_202 = arith.constant 128 : index
    %155 = vector.load %arg15[%c136_201, %c128_202] : memref<1024x256xf32, #tpu.memory_space<vmem>>, vector<8x128xf32>
    tpu.vector_store %arg15[%c136_201, %c128_202], %154 {strides = array<i32>} : memref<1024x256xf32, #tpu.memory_space<vmem>>, vector<8x128xf32>,
    %c1_203 = arith.constant 1 : index
    %c0_204 = arith.constant 0 : index
    %c18_205 = arith.constant 18 : index
    %156 = vector.load %arg11[%c1_203, %c0_204, %c18_205] : memref<2x8x159xf32, #tpu.memory_space<vmem>>, vector<1x8x128xf32>
    %157 = vector.shape_cast %156 : vector<1x8x128xf32> to vector<8x128xf32>
    %c144_206 = arith.constant 144 : index
    %c128_207 = arith.constant 128 : index
    %158 = vector.load %arg15[%c144_206, %c128_207] : memref<1024x256xf32, #tpu.memory_space<vmem>>, vector<8x128xf32>
    tpu.vector_store %arg15[%c144_206, %c128_207], %157 {strides = array<i32>} : memref<1024x256xf32, #tpu.memory_space<vmem>>, vector<8x128xf32>,
    %c1_208 = arith.constant 1 : index
    %c0_209 = arith.constant 0 : index
    %c19_210 = arith.constant 19 : index
    %159 = vector.load %arg11[%c1_208, %c0_209, %c19_210] : memref<2x8x159xf32, #tpu.memory_space<vmem>>, vector<1x8x128xf32>
    %160 = vector.shape_cast %159 : vector<1x8x128xf32> to vector<8x128xf32>
    %c152_211 = arith.constant 152 : index
    %c128_212 = arith.constant 128 : index
    %161 = vector.load %arg15[%c152_211, %c128_212] : memref<1024x256xf32, #tpu.memory_space<vmem>>, vector<8x128xf32>
    tpu.vector_store %arg15[%c152_211, %c128_212], %160 {strides = array<i32>} : memref<1024x256xf32, #tpu.memory_space<vmem>>, vector<8x128xf32>,
    %c1_213 = arith.constant 1 : index
    %c0_214 = arith.constant 0 : index
    %c20_215 = arith.constant 20 : index
    %162 = vector.load %arg11[%c1_213, %c0_214, %c20_215] : memref<2x8x159xf32, #tpu.memory_space<vmem>>, vector<1x8x128xf32>
    %163 = vector.shape_cast %162 : vector<1x8x128xf32> to vector<8x128xf32>
    %c160_216 = arith.constant 160 : index
    %c128_217 = arith.constant 128 : index
    %164 = vector.load %arg15[%c160_216, %c128_217] : memref<1024x256xf32, #tpu.memory_space<vmem>>, vector<8x128xf32>
    tpu.vector_store %arg15[%c160_216, %c128_217], %163 {strides = array<i32>} : memref<1024x256xf32, #tpu.memory_space<vmem>>, vector<8x128xf32>,
    %c1_218 = arith.constant 1 : index
    %c0_219 = arith.constant 0 : index
    %c21_220 = arith.constant 21 : index
    %165 = vector.load %arg11[%c1_218, %c0_219, %c21_220] : memref<2x8x159xf32, #tpu.memory_space<vmem>>, vector<1x8x128xf32>
    %166 = vector.shape_cast %165 : vector<1x8x128xf32> to vector<8x128xf32>
    %c168_221 = arith.constant 168 : index
    %c128_222 = arith.constant 128 : index
    %167 = vector.load %arg15[%c168_221, %c128_222] : memref<1024x256xf32, #tpu.memory_space<vmem>>, vector<8x128xf32>
    tpu.vector_store %arg15[%c168_221, %c128_222], %166 {strides = array<i32>} : memref<1024x256xf32, #tpu.memory_space<vmem>>, vector<8x128xf32>,
    %c1_223 = arith.constant 1 : index
    %c0_224 = arith.constant 0 : index
    %c22_225 = arith.constant 22 : index
    %168 = vector.load %arg11[%c1_223, %c0_224, %c22_225] : memref<2x8x159xf32, #tpu.memory_space<vmem>>, vector<1x8x128xf32>
    %169 = vector.shape_cast %168 : vector<1x8x128xf32> to vector<8x128xf32>
    %c176_226 = arith.constant 176 : index
    %c128_227 = arith.constant 128 : index
    %170 = vector.load %arg15[%c176_226, %c128_227] : memref<1024x256xf32, #tpu.memory_space<vmem>>, vector<8x128xf32>
    tpu.vector_store %arg15[%c176_226, %c128_227], %169 {strides = array<i32>} : memref<1024x256xf32, #tpu.memory_space<vmem>>, vector<8x128xf32>,
    %c1_228 = arith.constant 1 : index
    %c0_229 = arith.constant 0 : index
    %c23_230 = arith.constant 23 : index
    %171 = vector.load %arg11[%c1_228, %c0_229, %c23_230] : memref<2x8x159xf32, #tpu.memory_space<vmem>>, vector<1x8x128xf32>
    %172 = vector.shape_cast %171 : vector<1x8x128xf32> to vector<8x128xf32>
    %c184_231 = arith.constant 184 : index
    %c128_232 = arith.constant 128 : index
    %173 = vector.load %arg15[%c184_231, %c128_232] : memref<1024x256xf32, #tpu.memory_space<vmem>>, vector<8x128xf32>
    tpu.vector_store %arg15[%c184_231, %c128_232], %172 {strides = array<i32>} : memref<1024x256xf32, #tpu.memory_space<vmem>>, vector<8x128xf32>,
    %c1_233 = arith.constant 1 : index
    %c0_234 = arith.constant 0 : index
    %c24_235 = arith.constant 24 : index
    %174 = vector.load %arg11[%c1_233, %c0_234, %c24_235] : memref<2x8x159xf32, #tpu.memory_space<vmem>>, vector<1x8x128xf32>
    %175 = vector.shape_cast %174 : vector<1x8x128xf32> to vector<8x128xf32>
    %c192_236 = arith.constant 192 : index
    %c128_237 = arith.constant 128 : index
    %176 = vector.load %arg15[%c192_236, %c128_237] : memref<1024x256xf32, #tpu.memory_space<vmem>>, vector<8x128xf32>
    tpu.vector_store %arg15[%c192_236, %c128_237], %175 {strides = array<i32>} : memref<1024x256xf32, #tpu.memory_space<vmem>>, vector<8x128xf32>,
    %c1_238 = arith.constant 1 : index
    %c0_239 = arith.constant 0 : index
    %c25_240 = arith.constant 25 : index
    %177 = vector.load %arg11[%c1_238, %c0_239, %c25_240] : memref<2x8x159xf32, #tpu.memory_space<vmem>>, vector<1x8x128xf32>
    %178 = vector.shape_cast %177 : vector<1x8x128xf32> to vector<8x128xf32>
    %c200_241 = arith.constant 200 : index
    %c128_242 = arith.constant 128 : index
    %179 = vector.load %arg15[%c200_241, %c128_242] : memref<1024x256xf32, #tpu.memory_space<vmem>>, vector<8x128xf32>
    tpu.vector_store %arg15[%c200_241, %c128_242], %178 {strides = array<i32>} : memref<1024x256xf32, #tpu.memory_space<vmem>>, vector<8x128xf32>,
    %c1_243 = arith.constant 1 : index
    %c0_244 = arith.constant 0 : index
    %c26_245 = arith.constant 26 : index
    %180 = vector.load %arg11[%c1_243, %c0_244, %c26_245] : memref<2x8x159xf32, #tpu.memory_space<vmem>>, vector<1x8x128xf32>
    %181 = vector.shape_cast %180 : vector<1x8x128xf32> to vector<8x128xf32>
    %c208_246 = arith.constant 208 : index
    %c128_247 = arith.constant 128 : index
    %182 = vector.load %arg15[%c208_246, %c128_247] : memref<1024x256xf32, #tpu.memory_space<vmem>>, vector<8x128xf32>
    tpu.vector_store %arg15[%c208_246, %c128_247], %181 {strides = array<i32>} : memref<1024x256xf32, #tpu.memory_space<vmem>>, vector<8x128xf32>,
    %c1_248 = arith.constant 1 : index
    %c0_249 = arith.constant 0 : index
    %c27_250 = arith.constant 27 : index
    %183 = vector.load %arg11[%c1_248, %c0_249, %c27_250] : memref<2x8x159xf32, #tpu.memory_space<vmem>>, vector<1x8x128xf32>
    %184 = vector.shape_cast %183 : vector<1x8x128xf32> to vector<8x128xf32>
    %c216_251 = arith.constant 216 : index
    %c128_252 = arith.constant 128 : index
    %185 = vector.load %arg15[%c216_251, %c128_252] : memref<1024x256xf32, #tpu.memory_space<vmem>>, vector<8x128xf32>
    tpu.vector_store %arg15[%c216_251, %c128_252], %184 {strides = array<i32>} : memref<1024x256xf32, #tpu.memory_space<vmem>>, vector<8x128xf32>,
    %c1_253 = arith.constant 1 : index
    %c0_254 = arith.constant 0 : index
    %c28_255 = arith.constant 28 : index
    %186 = vector.load %arg11[%c1_253, %c0_254, %c28_255] : memref<2x8x159xf32, #tpu.memory_space<vmem>>, vector<1x8x128xf32>
    %187 = vector.shape_cast %186 : vector<1x8x128xf32> to vector<8x128xf32>
    %c224_256 = arith.constant 224 : index
    %c128_257 = arith.constant 128 : index
    %188 = vector.load %arg15[%c224_256, %c128_257] : memref<1024x256xf32, #tpu.memory_space<vmem>>, vector<8x128xf32>
    tpu.vector_store %arg15[%c224_256, %c128_257], %187 {strides = array<i32>} : memref<1024x256xf32, #tpu.memory_space<vmem>>, vector<8x128xf32>,
    %c1_258 = arith.constant 1 : index
    %c0_259 = arith.constant 0 : index
    %c29_260 = arith.constant 29 : index
    %189 = vector.load %arg11[%c1_258, %c0_259, %c29_260] : memref<2x8x159xf32, #tpu.memory_space<vmem>>, vector<1x8x128xf32>
    %190 = vector.shape_cast %189 : vector<1x8x128xf32> to vector<8x128xf32>
    %c232_261 = arith.constant 232 : index
    %c128_262 = arith.constant 128 : index
    %191 = vector.load %arg15[%c232_261, %c128_262] : memref<1024x256xf32, #tpu.memory_space<vmem>>, vector<8x128xf32>
    tpu.vector_store %arg15[%c232_261, %c128_262], %190 {strides = array<i32>} : memref<1024x256xf32, #tpu.memory_space<vmem>>, vector<8x128xf32>,
    %c1_263 = arith.constant 1 : index
    %c0_264 = arith.constant 0 : index
    %c30_265 = arith.constant 30 : index
    %192 = vector.load %arg11[%c1_263, %c0_264, %c30_265] : memref<2x8x159xf32, #tpu.memory_space<vmem>>, vector<1x8x128xf32>
    %193 = vector.shape_cast %192 : vector<1x8x128xf32> to vector<8x128xf32>
    %c240_266 = arith.constant 240 : index
    %c128_267 = arith.constant 128 : index
    %194 = vector.load %arg15[%c240_266, %c128_267] : memref<1024x256xf32, #tpu.memory_space<vmem>>, vector<8x128xf32>
    tpu.vector_store %arg15[%c240_266, %c128_267], %193 {strides = array<i32>} : memref<1024x256xf32, #tpu.memory_space<vmem>>, vector<8x128xf32>,
    %c1_268 = arith.constant 1 : index
    %c0_269 = arith.constant 0 : index
    %c31_270 = arith.constant 31 : index
    %195 = vector.load %arg11[%c1_268, %c0_269, %c31_270] : memref<2x8x159xf32, #tpu.memory_space<vmem>>, vector<1x8x128xf32>
    %196 = vector.shape_cast %195 : vector<1x8x128xf32> to vector<8x128xf32>
    %c248_271 = arith.constant 248 : index
    %c128_272 = arith.constant 128 : index
    %197 = vector.load %arg15[%c248_271, %c128_272] : memref<1024x256xf32, #tpu.memory_space<vmem>>, vector<8x128xf32>
    tpu.vector_store %arg15[%c248_271, %c128_272], %196 {strides = array<i32>} : memref<1024x256xf32, #tpu.memory_space<vmem>>, vector<8x128xf32>,
    %c0_273 = arith.constant 0 : index
    %c0_274 = arith.constant 0 : index
    %198 = vector.load %arg2[%c0_273, %c0_274] : memref<32x256xf32, #tpu.memory_space<vmem>>, vector<32x256xf32>
    %c0_275 = arith.constant 0 : index
    %c0_276 = arith.constant 0 : index
    %199 = vector.load %arg15[%c0_275, %c0_276] : memref<1024x256xf32, #tpu.memory_space<vmem>>, vector<256x256xf32>
    %cst_277 = arith.constant dense<0.000000e+00> : vector<32x256xf32>
    %200 = tpu.matmul %198, %199, %cst_277 {dimension_numbers = #tpu.dot_dimension_numbers<[1], [0], [0], [1], [0, 0, 1, 1], [], []>} : vector<32x256xf32>, vector<256x256xf32>, vector<32x256xf32> -> vector<32x256xf32>
    %c0_278 = arith.constant 0 : index
    %c0_279 = arith.constant 0 : index
    %201 = vector.load %arg3[%c0_278, %c0_279] : memref<32x1xf32, #tpu.memory_space<vmem>>, vector<32x1xf32>
    %202 = vector.broadcast %201 : vector<32x1xf32> to vector<32x256xf32>
    %203 = arith.addf %200, %202 : vector<32x256xf32>
    %cst_280 = arith.constant 0.000000e+00 : f32
    %204 = vector.broadcast %cst_280 : f32 to vector<32x256xf32>
    %205 = arith.cmpf oge, %203, %204 : vector<32x256xf32>
    %cst_281 = arith.constant 0.00999999977 : f32
    %206 = vector.broadcast %cst_281 : f32 to vector<32x256xf32>
    %207 = arith.mulf %206, %203 : vector<32x256xf32>
    %208 = arith.select %205, %203, %207 : vector<32x256xi1>, vector<32x256xf32>
    %cst_282 = arith.constant 0.000000e+00 : f32
    %209 = vector.broadcast %cst_282 : f32 to vector<2x32x8xf32>
    %c0_283 = arith.constant 0 : index
    %c0_284 = arith.constant 0 : index
    %c0_285 = arith.constant 0 : index
    %210 = vector.load %arg12[%c0_283, %c0_284, %c0_285] : memref<2x32x143xf32, #tpu.memory_space<vmem>>, vector<2x32x8xf32>
    tpu.vector_store %arg12[%c0_283, %c0_284, %c0_285], %209 {strides = array<i32>} : memref<2x32x143xf32, #tpu.memory_space<vmem>>, vector<2x32x8xf32>,
    %cst_286 = arith.constant 0.000000e+00 : f32
    %211 = vector.broadcast %cst_286 : f32 to vector<2x32x7xf32>
    %c0_287 = arith.constant 0 : index
    %c0_288 = arith.constant 0 : index
    %c136_289 = arith.constant 136 : index
    %212 = vector.load %arg12[%c0_287, %c0_288, %c136_289] : memref<2x32x143xf32, #tpu.memory_space<vmem>>, vector<2x32x7xf32>
    tpu.vector_store %arg12[%c0_287, %c0_288, %c136_289], %211 {strides = array<i32>} : memref<2x32x143xf32, #tpu.memory_space<vmem>>, vector<2x32x7xf32>,
    %213 = vector.extract_strided_slice %208 {offsets = [0, 0], sizes = [32, 128], strides = [1, 1]} : vector<32x256xf32> to vector<32x128xf32>
    %c0_290 = arith.constant 0 : index
    %c0_291 = arith.constant 0 : index
    %c8_292 = arith.constant 8 : index
    %214 = vector.load %arg12[%c0_290, %c0_291, %c8_292] : memref<2x32x143xf32, #tpu.memory_space<vmem>>, vector<1x32x128xf32>
    %215 = vector.shape_cast %214 : vector<1x32x128xf32> to vector<32x128xf32>
    %216 = vector.shape_cast %213 : vector<32x128xf32> to vector<1x32x128xf32>
    tpu.vector_store %arg12[%c0_290, %c0_291, %c8_292], %216 {strides = array<i32>} : memref<2x32x143xf32, #tpu.memory_space<vmem>>, vector<1x32x128xf32>,
    %217 = vector.extract_strided_slice %208 {offsets = [0, 128], sizes = [32, 128], strides = [1, 1]} : vector<32x256xf32> to vector<32x128xf32>
    %c1_293 = arith.constant 1 : index
    %c0_294 = arith.constant 0 : index
    %c8_295 = arith.constant 8 : index
    %218 = vector.load %arg12[%c1_293, %c0_294, %c8_295] : memref<2x32x143xf32, #tpu.memory_space<vmem>>, vector<1x32x128xf32>
    %219 = vector.shape_cast %218 : vector<1x32x128xf32> to vector<32x128xf32>
    %220 = vector.shape_cast %217 : vector<32x128xf32> to vector<1x32x128xf32>
    tpu.vector_store %arg12[%c1_293, %c0_294, %c8_295], %220 {strides = array<i32>} : memref<2x32x143xf32, #tpu.memory_space<vmem>>, vector<1x32x128xf32>,
    %c0_296 = arith.constant 0 : index
    %c0_297 = arith.constant 0 : index
    %c0_298 = arith.constant 0 : index
    %221 = vector.load %arg12[%c0_296, %c0_297, %c0_298] : memref<2x32x143xf32, #tpu.memory_space<vmem>>, vector<1x32x128xf32>
    %222 = vector.shape_cast %221 : vector<1x32x128xf32> to vector<32x128xf32>
    %c0_299 = arith.constant 0 : index
    %c0_300 = arith.constant 0 : index
    %223 = vector.load %arg15[%c0_299, %c0_300] : memref<1024x256xf32, #tpu.memory_space<vmem>>, vector<32x128xf32>
    tpu.vector_store %arg15[%c0_299, %c0_300], %222 {strides = array<i32>} : memref<1024x256xf32, #tpu.memory_space<vmem>>, vector<32x128xf32>,
    %c0_301 = arith.constant 0 : index
    %c0_302 = arith.constant 0 : index
    %c1_303 = arith.constant 1 : index
    %224 = vector.load %arg12[%c0_301, %c0_302, %c1_303] : memref<2x32x143xf32, #tpu.memory_space<vmem>>, vector<1x32x128xf32>
    %225 = vector.shape_cast %224 : vector<1x32x128xf32> to vector<32x128xf32>
    %c32_304 = arith.constant 32 : index
    %c0_305 = arith.constant 0 : index
    %226 = vector.load %arg15[%c32_304, %c0_305] : memref<1024x256xf32, #tpu.memory_space<vmem>>, vector<32x128xf32>
    tpu.vector_store %arg15[%c32_304, %c0_305], %225 {strides = array<i32>} : memref<1024x256xf32, #tpu.memory_space<vmem>>, vector<32x128xf32>,
    %c0_306 = arith.constant 0 : index
    %c0_307 = arith.constant 0 : index
    %c2_308 = arith.constant 2 : index
    %227 = vector.load %arg12[%c0_306, %c0_307, %c2_308] : memref<2x32x143xf32, #tpu.memory_space<vmem>>, vector<1x32x128xf32>
    %228 = vector.shape_cast %227 : vector<1x32x128xf32> to vector<32x128xf32>
    %c64_309 = arith.constant 64 : index
    %c0_310 = arith.constant 0 : index
    %229 = vector.load %arg15[%c64_309, %c0_310] : memref<1024x256xf32, #tpu.memory_space<vmem>>, vector<32x128xf32>
    tpu.vector_store %arg15[%c64_309, %c0_310], %228 {strides = array<i32>} : memref<1024x256xf32, #tpu.memory_space<vmem>>, vector<32x128xf32>,
    %c0_311 = arith.constant 0 : index
    %c0_312 = arith.constant 0 : index
    %c3_313 = arith.constant 3 : index
    %230 = vector.load %arg12[%c0_311, %c0_312, %c3_313] : memref<2x32x143xf32, #tpu.memory_space<vmem>>, vector<1x32x128xf32>
    %231 = vector.shape_cast %230 : vector<1x32x128xf32> to vector<32x128xf32>
    %c96_314 = arith.constant 96 : index
    %c0_315 = arith.constant 0 : index
    %232 = vector.load %arg15[%c96_314, %c0_315] : memref<1024x256xf32, #tpu.memory_space<vmem>>, vector<32x128xf32>
    tpu.vector_store %arg15[%c96_314, %c0_315], %231 {strides = array<i32>} : memref<1024x256xf32, #tpu.memory_space<vmem>>, vector<32x128xf32>,
    %c0_316 = arith.constant 0 : index
    %c0_317 = arith.constant 0 : index
    %c4_318 = arith.constant 4 : index
    %233 = vector.load %arg12[%c0_316, %c0_317, %c4_318] : memref<2x32x143xf32, #tpu.memory_space<vmem>>, vector<1x32x128xf32>
    %234 = vector.shape_cast %233 : vector<1x32x128xf32> to vector<32x128xf32>
    %c128_319 = arith.constant 128 : index
    %c0_320 = arith.constant 0 : index
    %235 = vector.load %arg15[%c128_319, %c0_320] : memref<1024x256xf32, #tpu.memory_space<vmem>>, vector<32x128xf32>
    tpu.vector_store %arg15[%c128_319, %c0_320], %234 {strides = array<i32>} : memref<1024x256xf32, #tpu.memory_space<vmem>>, vector<32x128xf32>,
    %c0_321 = arith.constant 0 : index
    %c0_322 = arith.constant 0 : index
    %c5_323 = arith.constant 5 : index
    %236 = vector.load %arg12[%c0_321, %c0_322, %c5_323] : memref<2x32x143xf32, #tpu.memory_space<vmem>>, vector<1x32x128xf32>
    %237 = vector.shape_cast %236 : vector<1x32x128xf32> to vector<32x128xf32>
    %c160_324 = arith.constant 160 : index
    %c0_325 = arith.constant 0 : index
    %238 = vector.load %arg15[%c160_324, %c0_325] : memref<1024x256xf32, #tpu.memory_space<vmem>>, vector<32x128xf32>
    tpu.vector_store %arg15[%c160_324, %c0_325], %237 {strides = array<i32>} : memref<1024x256xf32, #tpu.memory_space<vmem>>, vector<32x128xf32>,
    %c0_326 = arith.constant 0 : index
    %c0_327 = arith.constant 0 : index
    %c6_328 = arith.constant 6 : index
    %239 = vector.load %arg12[%c0_326, %c0_327, %c6_328] : memref<2x32x143xf32, #tpu.memory_space<vmem>>, vector<1x32x128xf32>
    %240 = vector.shape_cast %239 : vector<1x32x128xf32> to vector<32x128xf32>
    %c192_329 = arith.constant 192 : index
    %c0_330 = arith.constant 0 : index
    %241 = vector.load %arg15[%c192_329, %c0_330] : memref<1024x256xf32, #tpu.memory_space<vmem>>, vector<32x128xf32>
    tpu.vector_store %arg15[%c192_329, %c0_330], %240 {strides = array<i32>} : memref<1024x256xf32, #tpu.memory_space<vmem>>, vector<32x128xf32>,
    %c0_331 = arith.constant 0 : index
    %c0_332 = arith.constant 0 : index
    %c7_333 = arith.constant 7 : index
    %242 = vector.load %arg12[%c0_331, %c0_332, %c7_333] : memref<2x32x143xf32, #tpu.memory_space<vmem>>, vector<1x32x128xf32>
    %243 = vector.shape_cast %242 : vector<1x32x128xf32> to vector<32x128xf32>
    %c224_334 = arith.constant 224 : index
    %c0_335 = arith.constant 0 : index
    %244 = vector.load %arg15[%c224_334, %c0_335] : memref<1024x256xf32, #tpu.memory_space<vmem>>, vector<32x128xf32>
    tpu.vector_store %arg15[%c224_334, %c0_335], %243 {strides = array<i32>} : memref<1024x256xf32, #tpu.memory_space<vmem>>, vector<32x128xf32>,
    %c0_336 = arith.constant 0 : index
    %c0_337 = arith.constant 0 : index
    %c8_338 = arith.constant 8 : index
    %245 = vector.load %arg12[%c0_336, %c0_337, %c8_338] : memref<2x32x143xf32, #tpu.memory_space<vmem>>, vector<1x32x128xf32>
    %246 = vector.shape_cast %245 : vector<1x32x128xf32> to vector<32x128xf32>
    %c256 = arith.constant 256 : index
    %c0_339 = arith.constant 0 : index
    %247 = vector.load %arg15[%c256, %c0_339] : memref<1024x256xf32, #tpu.memory_space<vmem>>, vector<32x128xf32>
    tpu.vector_store %arg15[%c256, %c0_339], %246 {strides = array<i32>} : memref<1024x256xf32, #tpu.memory_space<vmem>>, vector<32x128xf32>,
    %c0_340 = arith.constant 0 : index
    %c0_341 = arith.constant 0 : index
    %c9_342 = arith.constant 9 : index
    %248 = vector.load %arg12[%c0_340, %c0_341, %c9_342] : memref<2x32x143xf32, #tpu.memory_space<vmem>>, vector<1x32x128xf32>
    %249 = vector.shape_cast %248 : vector<1x32x128xf32> to vector<32x128xf32>
    %c288 = arith.constant 288 : index
    %c0_343 = arith.constant 0 : index
    %250 = vector.load %arg15[%c288, %c0_343] : memref<1024x256xf32, #tpu.memory_space<vmem>>, vector<32x128xf32>
    tpu.vector_store %arg15[%c288, %c0_343], %249 {strides = array<i32>} : memref<1024x256xf32, #tpu.memory_space<vmem>>, vector<32x128xf32>,
    %c0_344 = arith.constant 0 : index
    %c0_345 = arith.constant 0 : index
    %c10_346 = arith.constant 10 : index
    %251 = vector.load %arg12[%c0_344, %c0_345, %c10_346] : memref<2x32x143xf32, #tpu.memory_space<vmem>>, vector<1x32x128xf32>
    %252 = vector.shape_cast %251 : vector<1x32x128xf32> to vector<32x128xf32>
    %c320 = arith.constant 320 : index
    %c0_347 = arith.constant 0 : index
    %253 = vector.load %arg15[%c320, %c0_347] : memref<1024x256xf32, #tpu.memory_space<vmem>>, vector<32x128xf32>
    tpu.vector_store %arg15[%c320, %c0_347], %252 {strides = array<i32>} : memref<1024x256xf32, #tpu.memory_space<vmem>>, vector<32x128xf32>,
    %c0_348 = arith.constant 0 : index
    %c0_349 = arith.constant 0 : index
    %c11_350 = arith.constant 11 : index
    %254 = vector.load %arg12[%c0_348, %c0_349, %c11_350] : memref<2x32x143xf32, #tpu.memory_space<vmem>>, vector<1x32x128xf32>
    %255 = vector.shape_cast %254 : vector<1x32x128xf32> to vector<32x128xf32>
    %c352 = arith.constant 352 : index
    %c0_351 = arith.constant 0 : index
    %256 = vector.load %arg15[%c352, %c0_351] : memref<1024x256xf32, #tpu.memory_space<vmem>>, vector<32x128xf32>
    tpu.vector_store %arg15[%c352, %c0_351], %255 {strides = array<i32>} : memref<1024x256xf32, #tpu.memory_space<vmem>>, vector<32x128xf32>,
    %c0_352 = arith.constant 0 : index
    %c0_353 = arith.constant 0 : index
    %c12_354 = arith.constant 12 : index
    %257 = vector.load %arg12[%c0_352, %c0_353, %c12_354] : memref<2x32x143xf32, #tpu.memory_space<vmem>>, vector<1x32x128xf32>
    %258 = vector.shape_cast %257 : vector<1x32x128xf32> to vector<32x128xf32>
    %c384 = arith.constant 384 : index
    %c0_355 = arith.constant 0 : index
    %259 = vector.load %arg15[%c384, %c0_355] : memref<1024x256xf32, #tpu.memory_space<vmem>>, vector<32x128xf32>
    tpu.vector_store %arg15[%c384, %c0_355], %258 {strides = array<i32>} : memref<1024x256xf32, #tpu.memory_space<vmem>>, vector<32x128xf32>,
    %c0_356 = arith.constant 0 : index
    %c0_357 = arith.constant 0 : index
    %c13_358 = arith.constant 13 : index
    %260 = vector.load %arg12[%c0_356, %c0_357, %c13_358] : memref<2x32x143xf32, #tpu.memory_space<vmem>>, vector<1x32x128xf32>
    %261 = vector.shape_cast %260 : vector<1x32x128xf32> to vector<32x128xf32>
    %c416 = arith.constant 416 : index
    %c0_359 = arith.constant 0 : index
    %262 = vector.load %arg15[%c416, %c0_359] : memref<1024x256xf32, #tpu.memory_space<vmem>>, vector<32x128xf32>
    tpu.vector_store %arg15[%c416, %c0_359], %261 {strides = array<i32>} : memref<1024x256xf32, #tpu.memory_space<vmem>>, vector<32x128xf32>,
    %c0_360 = arith.constant 0 : index
    %c0_361 = arith.constant 0 : index
    %c14_362 = arith.constant 14 : index
    %263 = vector.load %arg12[%c0_360, %c0_361, %c14_362] : memref<2x32x143xf32, #tpu.memory_space<vmem>>, vector<1x32x128xf32>
    %264 = vector.shape_cast %263 : vector<1x32x128xf32> to vector<32x128xf32>
    %c448 = arith.constant 448 : index
    %c0_363 = arith.constant 0 : index
    %265 = vector.load %arg15[%c448, %c0_363] : memref<1024x256xf32, #tpu.memory_space<vmem>>, vector<32x128xf32>
    tpu.vector_store %arg15[%c448, %c0_363], %264 {strides = array<i32>} : memref<1024x256xf32, #tpu.memory_space<vmem>>, vector<32x128xf32>,
    %c0_364 = arith.constant 0 : index
    %c0_365 = arith.constant 0 : index
    %c15_366 = arith.constant 15 : index
    %266 = vector.load %arg12[%c0_364, %c0_365, %c15_366] : memref<2x32x143xf32, #tpu.memory_space<vmem>>, vector<1x32x128xf32>
    %267 = vector.shape_cast %266 : vector<1x32x128xf32> to vector<32x128xf32>
    %c480 = arith.constant 480 : index
    %c0_367 = arith.constant 0 : index
    %268 = vector.load %arg15[%c480, %c0_367] : memref<1024x256xf32, #tpu.memory_space<vmem>>, vector<32x128xf32>
    tpu.vector_store %arg15[%c480, %c0_367], %267 {strides = array<i32>} : memref<1024x256xf32, #tpu.memory_space<vmem>>, vector<32x128xf32>,
    %c1_368 = arith.constant 1 : index
    %c0_369 = arith.constant 0 : index
    %c0_370 = arith.constant 0 : index
    %269 = vector.load %arg12[%c1_368, %c0_369, %c0_370] : memref<2x32x143xf32, #tpu.memory_space<vmem>>, vector<1x32x128xf32>
    %270 = vector.shape_cast %269 : vector<1x32x128xf32> to vector<32x128xf32>
    %c0_371 = arith.constant 0 : index
    %c128_372 = arith.constant 128 : index
    %271 = vector.load %arg15[%c0_371, %c128_372] : memref<1024x256xf32, #tpu.memory_space<vmem>>, vector<32x128xf32>
    tpu.vector_store %arg15[%c0_371, %c128_372], %270 {strides = array<i32>} : memref<1024x256xf32, #tpu.memory_space<vmem>>, vector<32x128xf32>,
    %c1_373 = arith.constant 1 : index
    %c0_374 = arith.constant 0 : index
    %c1_375 = arith.constant 1 : index
    %272 = vector.load %arg12[%c1_373, %c0_374, %c1_375] : memref<2x32x143xf32, #tpu.memory_space<vmem>>, vector<1x32x128xf32>
    %273 = vector.shape_cast %272 : vector<1x32x128xf32> to vector<32x128xf32>
    %c32_376 = arith.constant 32 : index
    %c128_377 = arith.constant 128 : index
    %274 = vector.load %arg15[%c32_376, %c128_377] : memref<1024x256xf32, #tpu.memory_space<vmem>>, vector<32x128xf32>
    tpu.vector_store %arg15[%c32_376, %c128_377], %273 {strides = array<i32>} : memref<1024x256xf32, #tpu.memory_space<vmem>>, vector<32x128xf32>,
    %c1_378 = arith.constant 1 : index
    %c0_379 = arith.constant 0 : index
    %c2_380 = arith.constant 2 : index
    %275 = vector.load %arg12[%c1_378, %c0_379, %c2_380] : memref<2x32x143xf32, #tpu.memory_space<vmem>>, vector<1x32x128xf32>
    %276 = vector.shape_cast %275 : vector<1x32x128xf32> to vector<32x128xf32>
    %c64_381 = arith.constant 64 : index
    %c128_382 = arith.constant 128 : index
    %277 = vector.load %arg15[%c64_381, %c128_382] : memref<1024x256xf32, #tpu.memory_space<vmem>>, vector<32x128xf32>
    tpu.vector_store %arg15[%c64_381, %c128_382], %276 {strides = array<i32>} : memref<1024x256xf32, #tpu.memory_space<vmem>>, vector<32x128xf32>,
    %c1_383 = arith.constant 1 : index
    %c0_384 = arith.constant 0 : index
    %c3_385 = arith.constant 3 : index
    %278 = vector.load %arg12[%c1_383, %c0_384, %c3_385] : memref<2x32x143xf32, #tpu.memory_space<vmem>>, vector<1x32x128xf32>
    %279 = vector.shape_cast %278 : vector<1x32x128xf32> to vector<32x128xf32>
    %c96_386 = arith.constant 96 : index
    %c128_387 = arith.constant 128 : index
    %280 = vector.load %arg15[%c96_386, %c128_387] : memref<1024x256xf32, #tpu.memory_space<vmem>>, vector<32x128xf32>
    tpu.vector_store %arg15[%c96_386, %c128_387], %279 {strides = array<i32>} : memref<1024x256xf32, #tpu.memory_space<vmem>>, vector<32x128xf32>,
    %c1_388 = arith.constant 1 : index
    %c0_389 = arith.constant 0 : index
    %c4_390 = arith.constant 4 : index
    %281 = vector.load %arg12[%c1_388, %c0_389, %c4_390] : memref<2x32x143xf32, #tpu.memory_space<vmem>>, vector<1x32x128xf32>
    %282 = vector.shape_cast %281 : vector<1x32x128xf32> to vector<32x128xf32>
    %c128_391 = arith.constant 128 : index
    %c128_392 = arith.constant 128 : index
    %283 = vector.load %arg15[%c128_391, %c128_392] : memref<1024x256xf32, #tpu.memory_space<vmem>>, vector<32x128xf32>
    tpu.vector_store %arg15[%c128_391, %c128_392], %282 {strides = array<i32>} : memref<1024x256xf32, #tpu.memory_space<vmem>>, vector<32x128xf32>,
    %c1_393 = arith.constant 1 : index
    %c0_394 = arith.constant 0 : index
    %c5_395 = arith.constant 5 : index
    %284 = vector.load %arg12[%c1_393, %c0_394, %c5_395] : memref<2x32x143xf32, #tpu.memory_space<vmem>>, vector<1x32x128xf32>
    %285 = vector.shape_cast %284 : vector<1x32x128xf32> to vector<32x128xf32>
    %c160_396 = arith.constant 160 : index
    %c128_397 = arith.constant 128 : index
    %286 = vector.load %arg15[%c160_396, %c128_397] : memref<1024x256xf32, #tpu.memory_space<vmem>>, vector<32x128xf32>
    tpu.vector_store %arg15[%c160_396, %c128_397], %285 {strides = array<i32>} : memref<1024x256xf32, #tpu.memory_space<vmem>>, vector<32x128xf32>,
    %c1_398 = arith.constant 1 : index
    %c0_399 = arith.constant 0 : index
    %c6_400 = arith.constant 6 : index
    %287 = vector.load %arg12[%c1_398, %c0_399, %c6_400] : memref<2x32x143xf32, #tpu.memory_space<vmem>>, vector<1x32x128xf32>
    %288 = vector.shape_cast %287 : vector<1x32x128xf32> to vector<32x128xf32>
    %c192_401 = arith.constant 192 : index
    %c128_402 = arith.constant 128 : index
    %289 = vector.load %arg15[%c192_401, %c128_402] : memref<1024x256xf32, #tpu.memory_space<vmem>>, vector<32x128xf32>
    tpu.vector_store %arg15[%c192_401, %c128_402], %288 {strides = array<i32>} : memref<1024x256xf32, #tpu.memory_space<vmem>>, vector<32x128xf32>,
    %c1_403 = arith.constant 1 : index
    %c0_404 = arith.constant 0 : index
    %c7_405 = arith.constant 7 : index
    %290 = vector.load %arg12[%c1_403, %c0_404, %c7_405] : memref<2x32x143xf32, #tpu.memory_space<vmem>>, vector<1x32x128xf32>
    %291 = vector.shape_cast %290 : vector<1x32x128xf32> to vector<32x128xf32>
    %c224_406 = arith.constant 224 : index
    %c128_407 = arith.constant 128 : index
    %292 = vector.load %arg15[%c224_406, %c128_407] : memref<1024x256xf32, #tpu.memory_space<vmem>>, vector<32x128xf32>
    tpu.vector_store %arg15[%c224_406, %c128_407], %291 {strides = array<i32>} : memref<1024x256xf32, #tpu.memory_space<vmem>>, vector<32x128xf32>,
    %c1_408 = arith.constant 1 : index
    %c0_409 = arith.constant 0 : index
    %c8_410 = arith.constant 8 : index
    %293 = vector.load %arg12[%c1_408, %c0_409, %c8_410] : memref<2x32x143xf32, #tpu.memory_space<vmem>>, vector<1x32x128xf32>
    %294 = vector.shape_cast %293 : vector<1x32x128xf32> to vector<32x128xf32>
    %c256_411 = arith.constant 256 : index
    %c128_412 = arith.constant 128 : index
    %295 = vector.load %arg15[%c256_411, %c128_412] : memref<1024x256xf32, #tpu.memory_space<vmem>>, vector<32x128xf32>
    tpu.vector_store %arg15[%c256_411, %c128_412], %294 {strides = array<i32>} : memref<1024x256xf32, #tpu.memory_space<vmem>>, vector<32x128xf32>,
    %c1_413 = arith.constant 1 : index
    %c0_414 = arith.constant 0 : index
    %c9_415 = arith.constant 9 : index
    %296 = vector.load %arg12[%c1_413, %c0_414, %c9_415] : memref<2x32x143xf32, #tpu.memory_space<vmem>>, vector<1x32x128xf32>
    %297 = vector.shape_cast %296 : vector<1x32x128xf32> to vector<32x128xf32>
    %c288_416 = arith.constant 288 : index
    %c128_417 = arith.constant 128 : index
    %298 = vector.load %arg15[%c288_416, %c128_417] : memref<1024x256xf32, #tpu.memory_space<vmem>>, vector<32x128xf32>
    tpu.vector_store %arg15[%c288_416, %c128_417], %297 {strides = array<i32>} : memref<1024x256xf32, #tpu.memory_space<vmem>>, vector<32x128xf32>,
    %c1_418 = arith.constant 1 : index
    %c0_419 = arith.constant 0 : index
    %c10_420 = arith.constant 10 : index
    %299 = vector.load %arg12[%c1_418, %c0_419, %c10_420] : memref<2x32x143xf32, #tpu.memory_space<vmem>>, vector<1x32x128xf32>
    %300 = vector.shape_cast %299 : vector<1x32x128xf32> to vector<32x128xf32>
    %c320_421 = arith.constant 320 : index
    %c128_422 = arith.constant 128 : index
    %301 = vector.load %arg15[%c320_421, %c128_422] : memref<1024x256xf32, #tpu.memory_space<vmem>>, vector<32x128xf32>
    tpu.vector_store %arg15[%c320_421, %c128_422], %300 {strides = array<i32>} : memref<1024x256xf32, #tpu.memory_space<vmem>>, vector<32x128xf32>,
    %c1_423 = arith.constant 1 : index
    %c0_424 = arith.constant 0 : index
    %c11_425 = arith.constant 11 : index
    %302 = vector.load %arg12[%c1_423, %c0_424, %c11_425] : memref<2x32x143xf32, #tpu.memory_space<vmem>>, vector<1x32x128xf32>
    %303 = vector.shape_cast %302 : vector<1x32x128xf32> to vector<32x128xf32>
    %c352_426 = arith.constant 352 : index
    %c128_427 = arith.constant 128 : index
    %304 = vector.load %arg15[%c352_426, %c128_427] : memref<1024x256xf32, #tpu.memory_space<vmem>>, vector<32x128xf32>
    tpu.vector_store %arg15[%c352_426, %c128_427], %303 {strides = array<i32>} : memref<1024x256xf32, #tpu.memory_space<vmem>>, vector<32x128xf32>,
    %c1_428 = arith.constant 1 : index
    %c0_429 = arith.constant 0 : index
    %c12_430 = arith.constant 12 : index
    %305 = vector.load %arg12[%c1_428, %c0_429, %c12_430] : memref<2x32x143xf32, #tpu.memory_space<vmem>>, vector<1x32x128xf32>
    %306 = vector.shape_cast %305 : vector<1x32x128xf32> to vector<32x128xf32>
    %c384_431 = arith.constant 384 : index
    %c128_432 = arith.constant 128 : index
    %307 = vector.load %arg15[%c384_431, %c128_432] : memref<1024x256xf32, #tpu.memory_space<vmem>>, vector<32x128xf32>
    tpu.vector_store %arg15[%c384_431, %c128_432], %306 {strides = array<i32>} : memref<1024x256xf32, #tpu.memory_space<vmem>>, vector<32x128xf32>,
    %c1_433 = arith.constant 1 : index
    %c0_434 = arith.constant 0 : index
    %c13_435 = arith.constant 13 : index
    %308 = vector.load %arg12[%c1_433, %c0_434, %c13_435] : memref<2x32x143xf32, #tpu.memory_space<vmem>>, vector<1x32x128xf32>
    %309 = vector.shape_cast %308 : vector<1x32x128xf32> to vector<32x128xf32>
    %c416_436 = arith.constant 416 : index
    %c128_437 = arith.constant 128 : index
    %310 = vector.load %arg15[%c416_436, %c128_437] : memref<1024x256xf32, #tpu.memory_space<vmem>>, vector<32x128xf32>
    tpu.vector_store %arg15[%c416_436, %c128_437], %309 {strides = array<i32>} : memref<1024x256xf32, #tpu.memory_space<vmem>>, vector<32x128xf32>,
    %c1_438 = arith.constant 1 : index
    %c0_439 = arith.constant 0 : index
    %c14_440 = arith.constant 14 : index
    %311 = vector.load %arg12[%c1_438, %c0_439, %c14_440] : memref<2x32x143xf32, #tpu.memory_space<vmem>>, vector<1x32x128xf32>
    %312 = vector.shape_cast %311 : vector<1x32x128xf32> to vector<32x128xf32>
    %c448_441 = arith.constant 448 : index
    %c128_442 = arith.constant 128 : index
    %313 = vector.load %arg15[%c448_441, %c128_442] : memref<1024x256xf32, #tpu.memory_space<vmem>>, vector<32x128xf32>
    tpu.vector_store %arg15[%c448_441, %c128_442], %312 {strides = array<i32>} : memref<1024x256xf32, #tpu.memory_space<vmem>>, vector<32x128xf32>,
    %c1_443 = arith.constant 1 : index
    %c0_444 = arith.constant 0 : index
    %c15_445 = arith.constant 15 : index
    %314 = vector.load %arg12[%c1_443, %c0_444, %c15_445] : memref<2x32x143xf32, #tpu.memory_space<vmem>>, vector<1x32x128xf32>
    %315 = vector.shape_cast %314 : vector<1x32x128xf32> to vector<32x128xf32>
    %c480_446 = arith.constant 480 : index
    %c128_447 = arith.constant 128 : index
    %316 = vector.load %arg15[%c480_446, %c128_447] : memref<1024x256xf32, #tpu.memory_space<vmem>>, vector<32x128xf32>
    tpu.vector_store %arg15[%c480_446, %c128_447], %315 {strides = array<i32>} : memref<1024x256xf32, #tpu.memory_space<vmem>>, vector<32x128xf32>,
    %c0_448 = arith.constant 0 : index
    %c0_449 = arith.constant 0 : index
    %317 = vector.load %arg4[%c0_448, %c0_449] : memref<64x512xf32, #tpu.memory_space<vmem>>, vector<64x512xf32>
    %c0_450 = arith.constant 0 : index
    %c0_451 = arith.constant 0 : index
    %318 = vector.load %arg15[%c0_450, %c0_451] : memref<1024x256xf32, #tpu.memory_space<vmem>>, vector<512x256xf32>
    %cst_452 = arith.constant dense<0.000000e+00> : vector<64x256xf32>
    %319 = tpu.matmul %317, %318, %cst_452 {dimension_numbers = #tpu.dot_dimension_numbers<[1], [0], [0], [1], [0, 0, 1, 1], [], []>} : vector<64x512xf32>, vector<512x256xf32>, vector<64x256xf32> -> vector<64x256xf32>
    %c0_453 = arith.constant 0 : index
    %c0_454 = arith.constant 0 : index
    %320 = vector.load %arg5[%c0_453, %c0_454] : memref<64x1xf32, #tpu.memory_space<vmem>>, vector<64x1xf32>
    %321 = vector.broadcast %320 : vector<64x1xf32> to vector<64x256xf32>
    %322 = arith.addf %319, %321 : vector<64x256xf32>
    %cst_455 = arith.constant 0.000000e+00 : f32
    %323 = vector.broadcast %cst_455 : f32 to vector<64x256xf32>
    %324 = arith.cmpf oge, %322, %323 : vector<64x256xf32>
    %cst_456 = arith.constant 0.00999999977 : f32
    %325 = vector.broadcast %cst_456 : f32 to vector<64x256xf32>
    %326 = arith.mulf %325, %322 : vector<64x256xf32>
    %327 = arith.select %324, %322, %326 : vector<64x256xi1>, vector<64x256xf32>
    %cst_457 = arith.constant 0.000000e+00 : f32
    %328 = vector.broadcast %cst_457 : f32 to vector<2x64x4xf32>
    %c0_458 = arith.constant 0 : index
    %c0_459 = arith.constant 0 : index
    %c0_460 = arith.constant 0 : index
    %329 = vector.load %arg13[%c0_458, %c0_459, %c0_460] : memref<2x64x135xf32, #tpu.memory_space<vmem>>, vector<2x64x4xf32>
    tpu.vector_store %arg13[%c0_458, %c0_459, %c0_460], %328 {strides = array<i32>} : memref<2x64x135xf32, #tpu.memory_space<vmem>>, vector<2x64x4xf32>,
    %cst_461 = arith.constant 0.000000e+00 : f32
    %330 = vector.broadcast %cst_461 : f32 to vector<2x64x3xf32>
    %c0_462 = arith.constant 0 : index
    %c0_463 = arith.constant 0 : index
    %c132 = arith.constant 132 : index
    %331 = vector.load %arg13[%c0_462, %c0_463, %c132] : memref<2x64x135xf32, #tpu.memory_space<vmem>>, vector<2x64x3xf32>
    tpu.vector_store %arg13[%c0_462, %c0_463, %c132], %330 {strides = array<i32>} : memref<2x64x135xf32, #tpu.memory_space<vmem>>, vector<2x64x3xf32>,
    %332 = vector.extract_strided_slice %327 {offsets = [0, 0], sizes = [64, 128], strides = [1, 1]} : vector<64x256xf32> to vector<64x128xf32>
    %c0_464 = arith.constant 0 : index
    %c0_465 = arith.constant 0 : index
    %c4_466 = arith.constant 4 : index
    %333 = vector.load %arg13[%c0_464, %c0_465, %c4_466] : memref<2x64x135xf32, #tpu.memory_space<vmem>>, vector<1x64x128xf32>
    %334 = vector.shape_cast %333 : vector<1x64x128xf32> to vector<64x128xf32>
    %335 = vector.shape_cast %332 : vector<64x128xf32> to vector<1x64x128xf32>
    tpu.vector_store %arg13[%c0_464, %c0_465, %c4_466], %335 {strides = array<i32>} : memref<2x64x135xf32, #tpu.memory_space<vmem>>, vector<1x64x128xf32>,
    %336 = vector.extract_strided_slice %327 {offsets = [0, 128], sizes = [64, 128], strides = [1, 1]} : vector<64x256xf32> to vector<64x128xf32>
    %c1_467 = arith.constant 1 : index
    %c0_468 = arith.constant 0 : index
    %c4_469 = arith.constant 4 : index
    %337 = vector.load %arg13[%c1_467, %c0_468, %c4_469] : memref<2x64x135xf32, #tpu.memory_space<vmem>>, vector<1x64x128xf32>
    %338 = vector.shape_cast %337 : vector<1x64x128xf32> to vector<64x128xf32>
    %339 = vector.shape_cast %336 : vector<64x128xf32> to vector<1x64x128xf32>
    tpu.vector_store %arg13[%c1_467, %c0_468, %c4_469], %339 {strides = array<i32>} : memref<2x64x135xf32, #tpu.memory_space<vmem>>, vector<1x64x128xf32>,
    %c0_470 = arith.constant 0 : index
    %c0_471 = arith.constant 0 : index
    %c0_472 = arith.constant 0 : index
    %340 = vector.load %arg13[%c0_470, %c0_471, %c0_472] : memref<2x64x135xf32, #tpu.memory_space<vmem>>, vector<1x64x128xf32>
    %341 = vector.shape_cast %340 : vector<1x64x128xf32> to vector<64x128xf32>
    %c0_473 = arith.constant 0 : index
    %c0_474 = arith.constant 0 : index
    %342 = vector.load %arg15[%c0_473, %c0_474] : memref<1024x256xf32, #tpu.memory_space<vmem>>, vector<64x128xf32>
    tpu.vector_store %arg15[%c0_473, %c0_474], %341 {strides = array<i32>} : memref<1024x256xf32, #tpu.memory_space<vmem>>, vector<64x128xf32>,
    %c0_475 = arith.constant 0 : index
    %c0_476 = arith.constant 0 : index
    %c1_477 = arith.constant 1 : index
    %343 = vector.load %arg13[%c0_475, %c0_476, %c1_477] : memref<2x64x135xf32, #tpu.memory_space<vmem>>, vector<1x64x128xf32>
    %344 = vector.shape_cast %343 : vector<1x64x128xf32> to vector<64x128xf32>
    %c64_478 = arith.constant 64 : index
    %c0_479 = arith.constant 0 : index
    %345 = vector.load %arg15[%c64_478, %c0_479] : memref<1024x256xf32, #tpu.memory_space<vmem>>, vector<64x128xf32>
    tpu.vector_store %arg15[%c64_478, %c0_479], %344 {strides = array<i32>} : memref<1024x256xf32, #tpu.memory_space<vmem>>, vector<64x128xf32>,
    %c0_480 = arith.constant 0 : index
    %c0_481 = arith.constant 0 : index
    %c2_482 = arith.constant 2 : index
    %346 = vector.load %arg13[%c0_480, %c0_481, %c2_482] : memref<2x64x135xf32, #tpu.memory_space<vmem>>, vector<1x64x128xf32>
    %347 = vector.shape_cast %346 : vector<1x64x128xf32> to vector<64x128xf32>
    %c128_483 = arith.constant 128 : index
    %c0_484 = arith.constant 0 : index
    %348 = vector.load %arg15[%c128_483, %c0_484] : memref<1024x256xf32, #tpu.memory_space<vmem>>, vector<64x128xf32>
    tpu.vector_store %arg15[%c128_483, %c0_484], %347 {strides = array<i32>} : memref<1024x256xf32, #tpu.memory_space<vmem>>, vector<64x128xf32>,
    %c0_485 = arith.constant 0 : index
    %c0_486 = arith.constant 0 : index
    %c3_487 = arith.constant 3 : index
    %349 = vector.load %arg13[%c0_485, %c0_486, %c3_487] : memref<2x64x135xf32, #tpu.memory_space<vmem>>, vector<1x64x128xf32>
    %350 = vector.shape_cast %349 : vector<1x64x128xf32> to vector<64x128xf32>
    %c192_488 = arith.constant 192 : index
    %c0_489 = arith.constant 0 : index
    %351 = vector.load %arg15[%c192_488, %c0_489] : memref<1024x256xf32, #tpu.memory_space<vmem>>, vector<64x128xf32>
    tpu.vector_store %arg15[%c192_488, %c0_489], %350 {strides = array<i32>} : memref<1024x256xf32, #tpu.memory_space<vmem>>, vector<64x128xf32>,
    %c0_490 = arith.constant 0 : index
    %c0_491 = arith.constant 0 : index
    %c4_492 = arith.constant 4 : index
    %352 = vector.load %arg13[%c0_490, %c0_491, %c4_492] : memref<2x64x135xf32, #tpu.memory_space<vmem>>, vector<1x64x128xf32>
    %353 = vector.shape_cast %352 : vector<1x64x128xf32> to vector<64x128xf32>
    %c256_493 = arith.constant 256 : index
    %c0_494 = arith.constant 0 : index
    %354 = vector.load %arg15[%c256_493, %c0_494] : memref<1024x256xf32, #tpu.memory_space<vmem>>, vector<64x128xf32>
    tpu.vector_store %arg15[%c256_493, %c0_494], %353 {strides = array<i32>} : memref<1024x256xf32, #tpu.memory_space<vmem>>, vector<64x128xf32>,
    %c0_495 = arith.constant 0 : index
    %c0_496 = arith.constant 0 : index
    %c5_497 = arith.constant 5 : index
    %355 = vector.load %arg13[%c0_495, %c0_496, %c5_497] : memref<2x64x135xf32, #tpu.memory_space<vmem>>, vector<1x64x128xf32>
    %356 = vector.shape_cast %355 : vector<1x64x128xf32> to vector<64x128xf32>
    %c320_498 = arith.constant 320 : index
    %c0_499 = arith.constant 0 : index
    %357 = vector.load %arg15[%c320_498, %c0_499] : memref<1024x256xf32, #tpu.memory_space<vmem>>, vector<64x128xf32>
    tpu.vector_store %arg15[%c320_498, %c0_499], %356 {strides = array<i32>} : memref<1024x256xf32, #tpu.memory_space<vmem>>, vector<64x128xf32>,
    %c0_500 = arith.constant 0 : index
    %c0_501 = arith.constant 0 : index
    %c6_502 = arith.constant 6 : index
    %358 = vector.load %arg13[%c0_500, %c0_501, %c6_502] : memref<2x64x135xf32, #tpu.memory_space<vmem>>, vector<1x64x128xf32>
    %359 = vector.shape_cast %358 : vector<1x64x128xf32> to vector<64x128xf32>
    %c384_503 = arith.constant 384 : index
    %c0_504 = arith.constant 0 : index
    %360 = vector.load %arg15[%c384_503, %c0_504] : memref<1024x256xf32, #tpu.memory_space<vmem>>, vector<64x128xf32>
    tpu.vector_store %arg15[%c384_503, %c0_504], %359 {strides = array<i32>} : memref<1024x256xf32, #tpu.memory_space<vmem>>, vector<64x128xf32>,
    %c0_505 = arith.constant 0 : index
    %c0_506 = arith.constant 0 : index
    %c7_507 = arith.constant 7 : index
    %361 = vector.load %arg13[%c0_505, %c0_506, %c7_507] : memref<2x64x135xf32, #tpu.memory_space<vmem>>, vector<1x64x128xf32>
    %362 = vector.shape_cast %361 : vector<1x64x128xf32> to vector<64x128xf32>
    %c448_508 = arith.constant 448 : index
    %c0_509 = arith.constant 0 : index
    %363 = vector.load %arg15[%c448_508, %c0_509] : memref<1024x256xf32, #tpu.memory_space<vmem>>, vector<64x128xf32>
    tpu.vector_store %arg15[%c448_508, %c0_509], %362 {strides = array<i32>} : memref<1024x256xf32, #tpu.memory_space<vmem>>, vector<64x128xf32>,
    %c1_510 = arith.constant 1 : index
    %c0_511 = arith.constant 0 : index
    %c0_512 = arith.constant 0 : index
    %364 = vector.load %arg13[%c1_510, %c0_511, %c0_512] : memref<2x64x135xf32, #tpu.memory_space<vmem>>, vector<1x64x128xf32>
    %365 = vector.shape_cast %364 : vector<1x64x128xf32> to vector<64x128xf32>
    %c0_513 = arith.constant 0 : index
    %c128_514 = arith.constant 128 : index
    %366 = vector.load %arg15[%c0_513, %c128_514] : memref<1024x256xf32, #tpu.memory_space<vmem>>, vector<64x128xf32>
    tpu.vector_store %arg15[%c0_513, %c128_514], %365 {strides = array<i32>} : memref<1024x256xf32, #tpu.memory_space<vmem>>, vector<64x128xf32>,
    %c1_515 = arith.constant 1 : index
    %c0_516 = arith.constant 0 : index
    %c1_517 = arith.constant 1 : index
    %367 = vector.load %arg13[%c1_515, %c0_516, %c1_517] : memref<2x64x135xf32, #tpu.memory_space<vmem>>, vector<1x64x128xf32>
    %368 = vector.shape_cast %367 : vector<1x64x128xf32> to vector<64x128xf32>
    %c64_518 = arith.constant 64 : index
    %c128_519 = arith.constant 128 : index
    %369 = vector.load %arg15[%c64_518, %c128_519] : memref<1024x256xf32, #tpu.memory_space<vmem>>, vector<64x128xf32>
    tpu.vector_store %arg15[%c64_518, %c128_519], %368 {strides = array<i32>} : memref<1024x256xf32, #tpu.memory_space<vmem>>, vector<64x128xf32>,
    %c1_520 = arith.constant 1 : index
    %c0_521 = arith.constant 0 : index
    %c2_522 = arith.constant 2 : index
    %370 = vector.load %arg13[%c1_520, %c0_521, %c2_522] : memref<2x64x135xf32, #tpu.memory_space<vmem>>, vector<1x64x128xf32>
    %371 = vector.shape_cast %370 : vector<1x64x128xf32> to vector<64x128xf32>
    %c128_523 = arith.constant 128 : index
    %c128_524 = arith.constant 128 : index
    %372 = vector.load %arg15[%c128_523, %c128_524] : memref<1024x256xf32, #tpu.memory_space<vmem>>, vector<64x128xf32>
    tpu.vector_store %arg15[%c128_523, %c128_524], %371 {strides = array<i32>} : memref<1024x256xf32, #tpu.memory_space<vmem>>, vector<64x128xf32>,
    %c1_525 = arith.constant 1 : index
    %c0_526 = arith.constant 0 : index
    %c3_527 = arith.constant 3 : index
    %373 = vector.load %arg13[%c1_525, %c0_526, %c3_527] : memref<2x64x135xf32, #tpu.memory_space<vmem>>, vector<1x64x128xf32>
    %374 = vector.shape_cast %373 : vector<1x64x128xf32> to vector<64x128xf32>
    %c192_528 = arith.constant 192 : index
    %c128_529 = arith.constant 128 : index
    %375 = vector.load %arg15[%c192_528, %c128_529] : memref<1024x256xf32, #tpu.memory_space<vmem>>, vector<64x128xf32>
    tpu.vector_store %arg15[%c192_528, %c128_529], %374 {strides = array<i32>} : memref<1024x256xf32, #tpu.memory_space<vmem>>, vector<64x128xf32>,
    %c1_530 = arith.constant 1 : index
    %c0_531 = arith.constant 0 : index
    %c4_532 = arith.constant 4 : index
    %376 = vector.load %arg13[%c1_530, %c0_531, %c4_532] : memref<2x64x135xf32, #tpu.memory_space<vmem>>, vector<1x64x128xf32>
    %377 = vector.shape_cast %376 : vector<1x64x128xf32> to vector<64x128xf32>
    %c256_533 = arith.constant 256 : index
    %c128_534 = arith.constant 128 : index
    %378 = vector.load %arg15[%c256_533, %c128_534] : memref<1024x256xf32, #tpu.memory_space<vmem>>, vector<64x128xf32>
    tpu.vector_store %arg15[%c256_533, %c128_534], %377 {strides = array<i32>} : memref<1024x256xf32, #tpu.memory_space<vmem>>, vector<64x128xf32>,
    %c1_535 = arith.constant 1 : index
    %c0_536 = arith.constant 0 : index
    %c5_537 = arith.constant 5 : index
    %379 = vector.load %arg13[%c1_535, %c0_536, %c5_537] : memref<2x64x135xf32, #tpu.memory_space<vmem>>, vector<1x64x128xf32>
    %380 = vector.shape_cast %379 : vector<1x64x128xf32> to vector<64x128xf32>
    %c320_538 = arith.constant 320 : index
    %c128_539 = arith.constant 128 : index
    %381 = vector.load %arg15[%c320_538, %c128_539] : memref<1024x256xf32, #tpu.memory_space<vmem>>, vector<64x128xf32>
    tpu.vector_store %arg15[%c320_538, %c128_539], %380 {strides = array<i32>} : memref<1024x256xf32, #tpu.memory_space<vmem>>, vector<64x128xf32>,
    %c1_540 = arith.constant 1 : index
    %c0_541 = arith.constant 0 : index
    %c6_542 = arith.constant 6 : index
    %382 = vector.load %arg13[%c1_540, %c0_541, %c6_542] : memref<2x64x135xf32, #tpu.memory_space<vmem>>, vector<1x64x128xf32>
    %383 = vector.shape_cast %382 : vector<1x64x128xf32> to vector<64x128xf32>
    %c384_543 = arith.constant 384 : index
    %c128_544 = arith.constant 128 : index
    %384 = vector.load %arg15[%c384_543, %c128_544] : memref<1024x256xf32, #tpu.memory_space<vmem>>, vector<64x128xf32>
    tpu.vector_store %arg15[%c384_543, %c128_544], %383 {strides = array<i32>} : memref<1024x256xf32, #tpu.memory_space<vmem>>, vector<64x128xf32>,
    %c1_545 = arith.constant 1 : index
    %c0_546 = arith.constant 0 : index
    %c7_547 = arith.constant 7 : index
    %385 = vector.load %arg13[%c1_545, %c0_546, %c7_547] : memref<2x64x135xf32, #tpu.memory_space<vmem>>, vector<1x64x128xf32>
    %386 = vector.shape_cast %385 : vector<1x64x128xf32> to vector<64x128xf32>
    %c448_548 = arith.constant 448 : index
    %c128_549 = arith.constant 128 : index
    %387 = vector.load %arg15[%c448_548, %c128_549] : memref<1024x256xf32, #tpu.memory_space<vmem>>, vector<64x128xf32>
    tpu.vector_store %arg15[%c448_548, %c128_549], %386 {strides = array<i32>} : memref<1024x256xf32, #tpu.memory_space<vmem>>, vector<64x128xf32>,
    %c0_550 = arith.constant 0 : index
    %c0_551 = arith.constant 0 : index
    %388 = vector.load %arg6[%c0_550, %c0_551] : memref<128x512xf32, #tpu.memory_space<vmem>>, vector<128x512xf32>
    %c0_552 = arith.constant 0 : index
    %c0_553 = arith.constant 0 : index
    %389 = vector.load %arg15[%c0_552, %c0_553] : memref<1024x256xf32, #tpu.memory_space<vmem>>, vector<512x256xf32>
    %cst_554 = arith.constant dense<0.000000e+00> : vector<128x256xf32>
    %390 = tpu.matmul %388, %389, %cst_554 {dimension_numbers = #tpu.dot_dimension_numbers<[1], [0], [0], [1], [0, 0, 1, 1], [], []>} : vector<128x512xf32>, vector<512x256xf32>, vector<128x256xf32> -> vector<128x256xf32>
    %c0_555 = arith.constant 0 : index
    %c0_556 = arith.constant 0 : index
    %391 = vector.load %arg7[%c0_555, %c0_556] : memref<128x1xf32, #tpu.memory_space<vmem>>, vector<128x1xf32>
    %392 = vector.broadcast %391 : vector<128x1xf32> to vector<128x256xf32>
    %393 = arith.addf %390, %392 : vector<128x256xf32>
    %cst_557 = arith.constant 0.000000e+00 : f32
    %394 = vector.broadcast %cst_557 : f32 to vector<128x256xf32>
    %395 = arith.cmpf oge, %393, %394 : vector<128x256xf32>
    %cst_558 = arith.constant 0.00999999977 : f32
    %396 = vector.broadcast %cst_558 : f32 to vector<128x256xf32>
    %397 = arith.mulf %396, %393 : vector<128x256xf32>
    %398 = arith.select %395, %393, %397 : vector<128x256xi1>, vector<128x256xf32>
    %cst_559 = arith.constant 0.000000e+00 : f32
    %399 = vector.broadcast %cst_559 : f32 to vector<2x128x4xf32>
    %c0_560 = arith.constant 0 : index
    %c0_561 = arith.constant 0 : index
    %c0_562 = arith.constant 0 : index
    %400 = vector.load %arg14[%c0_560, %c0_561, %c0_562] : memref<2x128x135xf32, #tpu.memory_space<vmem>>, vector<2x128x4xf32>
    tpu.vector_store %arg14[%c0_560, %c0_561, %c0_562], %399 {strides = array<i32>} : memref<2x128x135xf32, #tpu.memory_space<vmem>>, vector<2x128x4xf32>,
    %cst_563 = arith.constant 0.000000e+00 : f32
    %401 = vector.broadcast %cst_563 : f32 to vector<2x128x3xf32>
    %c0_564 = arith.constant 0 : index
    %c0_565 = arith.constant 0 : index
    %c132_566 = arith.constant 132 : index
    %402 = vector.load %arg14[%c0_564, %c0_565, %c132_566] : memref<2x128x135xf32, #tpu.memory_space<vmem>>, vector<2x128x3xf32>
    tpu.vector_store %arg14[%c0_564, %c0_565, %c132_566], %401 {strides = array<i32>} : memref<2x128x135xf32, #tpu.memory_space<vmem>>, vector<2x128x3xf32>,
    %403 = vector.extract_strided_slice %398 {offsets = [0, 0], sizes = [128, 128], strides = [1, 1]} : vector<128x256xf32> to vector<128x128xf32>
    %c0_567 = arith.constant 0 : index
    %c0_568 = arith.constant 0 : index
    %c4_569 = arith.constant 4 : index
    %404 = vector.load %arg14[%c0_567, %c0_568, %c4_569] : memref<2x128x135xf32, #tpu.memory_space<vmem>>, vector<1x128x128xf32>
    %405 = vector.shape_cast %404 : vector<1x128x128xf32> to vector<128x128xf32>
    %406 = vector.shape_cast %403 : vector<128x128xf32> to vector<1x128x128xf32>
    tpu.vector_store %arg14[%c0_567, %c0_568, %c4_569], %406 {strides = array<i32>} : memref<2x128x135xf32, #tpu.memory_space<vmem>>, vector<1x128x128xf32>,
    %407 = vector.extract_strided_slice %398 {offsets = [0, 128], sizes = [128, 128], strides = [1, 1]} : vector<128x256xf32> to vector<128x128xf32>
    %c1_570 = arith.constant 1 : index
    %c0_571 = arith.constant 0 : index
    %c4_572 = arith.constant 4 : index
    %408 = vector.load %arg14[%c1_570, %c0_571, %c4_572] : memref<2x128x135xf32, #tpu.memory_space<vmem>>, vector<1x128x128xf32>
    %409 = vector.shape_cast %408 : vector<1x128x128xf32> to vector<128x128xf32>
    %410 = vector.shape_cast %407 : vector<128x128xf32> to vector<1x128x128xf32>
    tpu.vector_store %arg14[%c1_570, %c0_571, %c4_572], %410 {strides = array<i32>} : memref<2x128x135xf32, #tpu.memory_space<vmem>>, vector<1x128x128xf32>,
    %c0_573 = arith.constant 0 : index
    %c0_574 = arith.constant 0 : index
    %c0_575 = arith.constant 0 : index
    %411 = vector.load %arg14[%c0_573, %c0_574, %c0_575] : memref<2x128x135xf32, #tpu.memory_space<vmem>>, vector<1x128x128xf32>
    %412 = vector.shape_cast %411 : vector<1x128x128xf32> to vector<128x128xf32>
    %c0_576 = arith.constant 0 : index
    %c0_577 = arith.constant 0 : index
    %413 = vector.load %arg15[%c0_576, %c0_577] : memref<1024x256xf32, #tpu.memory_space<vmem>>, vector<128x128xf32>
    tpu.vector_store %arg15[%c0_576, %c0_577], %412 {strides = array<i32>} : memref<1024x256xf32, #tpu.memory_space<vmem>>, vector<128x128xf32>,
    %c0_578 = arith.constant 0 : index
    %c0_579 = arith.constant 0 : index
    %c1_580 = arith.constant 1 : index
    %414 = vector.load %arg14[%c0_578, %c0_579, %c1_580] : memref<2x128x135xf32, #tpu.memory_space<vmem>>, vector<1x128x128xf32>
    %415 = vector.shape_cast %414 : vector<1x128x128xf32> to vector<128x128xf32>
    %c128_581 = arith.constant 128 : index
    %c0_582 = arith.constant 0 : index
    %416 = vector.load %arg15[%c128_581, %c0_582] : memref<1024x256xf32, #tpu.memory_space<vmem>>, vector<128x128xf32>
    tpu.vector_store %arg15[%c128_581, %c0_582], %415 {strides = array<i32>} : memref<1024x256xf32, #tpu.memory_space<vmem>>, vector<128x128xf32>,
    %c0_583 = arith.constant 0 : index
    %c0_584 = arith.constant 0 : index
    %c2_585 = arith.constant 2 : index
    %417 = vector.load %arg14[%c0_583, %c0_584, %c2_585] : memref<2x128x135xf32, #tpu.memory_space<vmem>>, vector<1x128x128xf32>
    %418 = vector.shape_cast %417 : vector<1x128x128xf32> to vector<128x128xf32>
    %c256_586 = arith.constant 256 : index
    %c0_587 = arith.constant 0 : index
    %419 = vector.load %arg15[%c256_586, %c0_587] : memref<1024x256xf32, #tpu.memory_space<vmem>>, vector<128x128xf32>
    tpu.vector_store %arg15[%c256_586, %c0_587], %418 {strides = array<i32>} : memref<1024x256xf32, #tpu.memory_space<vmem>>, vector<128x128xf32>,
    %c0_588 = arith.constant 0 : index
    %c0_589 = arith.constant 0 : index
    %c3_590 = arith.constant 3 : index
    %420 = vector.load %arg14[%c0_588, %c0_589, %c3_590] : memref<2x128x135xf32, #tpu.memory_space<vmem>>, vector<1x128x128xf32>
    %421 = vector.shape_cast %420 : vector<1x128x128xf32> to vector<128x128xf32>
    %c384_591 = arith.constant 384 : index
    %c0_592 = arith.constant 0 : index
    %422 = vector.load %arg15[%c384_591, %c0_592] : memref<1024x256xf32, #tpu.memory_space<vmem>>, vector<128x128xf32>
    tpu.vector_store %arg15[%c384_591, %c0_592], %421 {strides = array<i32>} : memref<1024x256xf32, #tpu.memory_space<vmem>>, vector<128x128xf32>,
    %c0_593 = arith.constant 0 : index
    %c0_594 = arith.constant 0 : index
    %c4_595 = arith.constant 4 : index
    %423 = vector.load %arg14[%c0_593, %c0_594, %c4_595] : memref<2x128x135xf32, #tpu.memory_space<vmem>>, vector<1x128x128xf32>
    %424 = vector.shape_cast %423 : vector<1x128x128xf32> to vector<128x128xf32>
    %c512 = arith.constant 512 : index
    %c0_596 = arith.constant 0 : index
    %425 = vector.load %arg15[%c512, %c0_596] : memref<1024x256xf32, #tpu.memory_space<vmem>>, vector<128x128xf32>
    tpu.vector_store %arg15[%c512, %c0_596], %424 {strides = array<i32>} : memref<1024x256xf32, #tpu.memory_space<vmem>>, vector<128x128xf32>,
    %c0_597 = arith.constant 0 : index
    %c0_598 = arith.constant 0 : index
    %c5_599 = arith.constant 5 : index
    %426 = vector.load %arg14[%c0_597, %c0_598, %c5_599] : memref<2x128x135xf32, #tpu.memory_space<vmem>>, vector<1x128x128xf32>
    %427 = vector.shape_cast %426 : vector<1x128x128xf32> to vector<128x128xf32>
    %c640 = arith.constant 640 : index
    %c0_600 = arith.constant 0 : index
    %428 = vector.load %arg15[%c640, %c0_600] : memref<1024x256xf32, #tpu.memory_space<vmem>>, vector<128x128xf32>
    tpu.vector_store %arg15[%c640, %c0_600], %427 {strides = array<i32>} : memref<1024x256xf32, #tpu.memory_space<vmem>>, vector<128x128xf32>,
    %c0_601 = arith.constant 0 : index
    %c0_602 = arith.constant 0 : index
    %c6_603 = arith.constant 6 : index
    %429 = vector.load %arg14[%c0_601, %c0_602, %c6_603] : memref<2x128x135xf32, #tpu.memory_space<vmem>>, vector<1x128x128xf32>
    %430 = vector.shape_cast %429 : vector<1x128x128xf32> to vector<128x128xf32>
    %c768 = arith.constant 768 : index
    %c0_604 = arith.constant 0 : index
    %431 = vector.load %arg15[%c768, %c0_604] : memref<1024x256xf32, #tpu.memory_space<vmem>>, vector<128x128xf32>
    tpu.vector_store %arg15[%c768, %c0_604], %430 {strides = array<i32>} : memref<1024x256xf32, #tpu.memory_space<vmem>>, vector<128x128xf32>,
    %c0_605 = arith.constant 0 : index
    %c0_606 = arith.constant 0 : index
    %c7_607 = arith.constant 7 : index
    %432 = vector.load %arg14[%c0_605, %c0_606, %c7_607] : memref<2x128x135xf32, #tpu.memory_space<vmem>>, vector<1x128x128xf32>
    %433 = vector.shape_cast %432 : vector<1x128x128xf32> to vector<128x128xf32>
    %c896 = arith.constant 896 : index
    %c0_608 = arith.constant 0 : index
    %434 = vector.load %arg15[%c896, %c0_608] : memref<1024x256xf32, #tpu.memory_space<vmem>>, vector<128x128xf32>
    tpu.vector_store %arg15[%c896, %c0_608], %433 {strides = array<i32>} : memref<1024x256xf32, #tpu.memory_space<vmem>>, vector<128x128xf32>,
    %c1_609 = arith.constant 1 : index
    %c0_610 = arith.constant 0 : index
    %c0_611 = arith.constant 0 : index
    %435 = vector.load %arg14[%c1_609, %c0_610, %c0_611] : memref<2x128x135xf32, #tpu.memory_space<vmem>>, vector<1x128x128xf32>
    %436 = vector.shape_cast %435 : vector<1x128x128xf32> to vector<128x128xf32>
    %c0_612 = arith.constant 0 : index
    %c128_613 = arith.constant 128 : index
    %437 = vector.load %arg15[%c0_612, %c128_613] : memref<1024x256xf32, #tpu.memory_space<vmem>>, vector<128x128xf32>
    tpu.vector_store %arg15[%c0_612, %c128_613], %436 {strides = array<i32>} : memref<1024x256xf32, #tpu.memory_space<vmem>>, vector<128x128xf32>,
    %c1_614 = arith.constant 1 : index
    %c0_615 = arith.constant 0 : index
    %c1_616 = arith.constant 1 : index
    %438 = vector.load %arg14[%c1_614, %c0_615, %c1_616] : memref<2x128x135xf32, #tpu.memory_space<vmem>>, vector<1x128x128xf32>
    %439 = vector.shape_cast %438 : vector<1x128x128xf32> to vector<128x128xf32>
    %c128_617 = arith.constant 128 : index
    %c128_618 = arith.constant 128 : index
    %440 = vector.load %arg15[%c128_617, %c128_618] : memref<1024x256xf32, #tpu.memory_space<vmem>>, vector<128x128xf32>
    tpu.vector_store %arg15[%c128_617, %c128_618], %439 {strides = array<i32>} : memref<1024x256xf32, #tpu.memory_space<vmem>>, vector<128x128xf32>,
    %c1_619 = arith.constant 1 : index
    %c0_620 = arith.constant 0 : index
    %c2_621 = arith.constant 2 : index
    %441 = vector.load %arg14[%c1_619, %c0_620, %c2_621] : memref<2x128x135xf32, #tpu.memory_space<vmem>>, vector<1x128x128xf32>
    %442 = vector.shape_cast %441 : vector<1x128x128xf32> to vector<128x128xf32>
    %c256_622 = arith.constant 256 : index
    %c128_623 = arith.constant 128 : index
    %443 = vector.load %arg15[%c256_622, %c128_623] : memref<1024x256xf32, #tpu.memory_space<vmem>>, vector<128x128xf32>
    tpu.vector_store %arg15[%c256_622, %c128_623], %442 {strides = array<i32>} : memref<1024x256xf32, #tpu.memory_space<vmem>>, vector<128x128xf32>,
    %c1_624 = arith.constant 1 : index
    %c0_625 = arith.constant 0 : index
    %c3_626 = arith.constant 3 : index
    %444 = vector.load %arg14[%c1_624, %c0_625, %c3_626] : memref<2x128x135xf32, #tpu.memory_space<vmem>>, vector<1x128x128xf32>
    %445 = vector.shape_cast %444 : vector<1x128x128xf32> to vector<128x128xf32>
    %c384_627 = arith.constant 384 : index
    %c128_628 = arith.constant 128 : index
    %446 = vector.load %arg15[%c384_627, %c128_628] : memref<1024x256xf32, #tpu.memory_space<vmem>>, vector<128x128xf32>
    tpu.vector_store %arg15[%c384_627, %c128_628], %445 {strides = array<i32>} : memref<1024x256xf32, #tpu.memory_space<vmem>>, vector<128x128xf32>,
    %c1_629 = arith.constant 1 : index
    %c0_630 = arith.constant 0 : index
    %c4_631 = arith.constant 4 : index
    %447 = vector.load %arg14[%c1_629, %c0_630, %c4_631] : memref<2x128x135xf32, #tpu.memory_space<vmem>>, vector<1x128x128xf32>
    %448 = vector.shape_cast %447 : vector<1x128x128xf32> to vector<128x128xf32>
    %c512_632 = arith.constant 512 : index
    %c128_633 = arith.constant 128 : index
    %449 = vector.load %arg15[%c512_632, %c128_633] : memref<1024x256xf32, #tpu.memory_space<vmem>>, vector<128x128xf32>
    tpu.vector_store %arg15[%c512_632, %c128_633], %448 {strides = array<i32>} : memref<1024x256xf32, #tpu.memory_space<vmem>>, vector<128x128xf32>,
    %c1_634 = arith.constant 1 : index
    %c0_635 = arith.constant 0 : index
    %c5_636 = arith.constant 5 : index
    %450 = vector.load %arg14[%c1_634, %c0_635, %c5_636] : memref<2x128x135xf32, #tpu.memory_space<vmem>>, vector<1x128x128xf32>
    %451 = vector.shape_cast %450 : vector<1x128x128xf32> to vector<128x128xf32>
    %c640_637 = arith.constant 640 : index
    %c128_638 = arith.constant 128 : index
    %452 = vector.load %arg15[%c640_637, %c128_638] : memref<1024x256xf32, #tpu.memory_space<vmem>>, vector<128x128xf32>
    tpu.vector_store %arg15[%c640_637, %c128_638], %451 {strides = array<i32>} : memref<1024x256xf32, #tpu.memory_space<vmem>>, vector<128x128xf32>,
    %c1_639 = arith.constant 1 : index
    %c0_640 = arith.constant 0 : index
    %c6_641 = arith.constant 6 : index
    %453 = vector.load %arg14[%c1_639, %c0_640, %c6_641] : memref<2x128x135xf32, #tpu.memory_space<vmem>>, vector<1x128x128xf32>
    %454 = vector.shape_cast %453 : vector<1x128x128xf32> to vector<128x128xf32>
    %c768_642 = arith.constant 768 : index
    %c128_643 = arith.constant 128 : index
    %455 = vector.load %arg15[%c768_642, %c128_643] : memref<1024x256xf32, #tpu.memory_space<vmem>>, vector<128x128xf32>
    tpu.vector_store %arg15[%c768_642, %c128_643], %454 {strides = array<i32>} : memref<1024x256xf32, #tpu.memory_space<vmem>>, vector<128x128xf32>,
    %c1_644 = arith.constant 1 : index
    %c0_645 = arith.constant 0 : index
    %c7_646 = arith.constant 7 : index
    %456 = vector.load %arg14[%c1_644, %c0_645, %c7_646] : memref<2x128x135xf32, #tpu.memory_space<vmem>>, vector<1x128x128xf32>
    %457 = vector.shape_cast %456 : vector<1x128x128xf32> to vector<128x128xf32>
    %c896_647 = arith.constant 896 : index
    %c128_648 = arith.constant 128 : index
    %458 = vector.load %arg15[%c896_647, %c128_648] : memref<1024x256xf32, #tpu.memory_space<vmem>>, vector<128x128xf32>
    tpu.vector_store %arg15[%c896_647, %c128_648], %457 {strides = array<i32>} : memref<1024x256xf32, #tpu.memory_space<vmem>>, vector<128x128xf32>,
    %c0_649 = arith.constant 0 : index
    %c0_650 = arith.constant 0 : index
    %459 = vector.load %arg8[%c0_649, %c0_650] : memref<32x1024xf32, #tpu.memory_space<vmem>>, vector<32x1024xf32>
    %c0_651 = arith.constant 0 : index
    %c0_652 = arith.constant 0 : index
    %460 = vector.load %arg15[%c0_651, %c0_652] : memref<1024x256xf32, #tpu.memory_space<vmem>>, vector<1024x256xf32>
    %cst_653 = arith.constant dense<0.000000e+00> : vector<32x256xf32>
    %461 = tpu.matmul %459, %460, %cst_653 {dimension_numbers = #tpu.dot_dimension_numbers<[1], [0], [0], [1], [0, 0, 1, 1], [], []>} : vector<32x1024xf32>, vector<1024x256xf32>, vector<32x256xf32> -> vector<32x256xf32>
    %c0_654 = arith.constant 0 : index
    %c0_655 = arith.constant 0 : index
    %462 = vector.load %arg9[%c0_654, %c0_655] : memref<32x1xf32, #tpu.memory_space<vmem>>, vector<32x1xf32>
    %463 = vector.broadcast %462 : vector<32x1xf32> to vector<32x256xf32>
    %464 = arith.addf %461, %463 : vector<32x256xf32>
    %cst_656 = arith.constant 0.000000e+00 : f32
    %465 = vector.broadcast %cst_656 : f32 to vector<32x256xf32>
    %466 = arith.cmpf oge, %464, %465 : vector<32x256xf32>
    %cst_657 = arith.constant 0.00999999977 : f32
    %467 = vector.broadcast %cst_657 : f32 to vector<32x256xf32>
    %468 = arith.mulf %467, %464 : vector<32x256xf32>
    %469 = arith.select %466, %464, %468 : vector<32x256xi1>, vector<32x256xf32>
    %470 = vector.extract_strided_slice %469 {offsets = [0, 0], sizes = [32, 128], strides = [1, 1]} : vector<32x256xf32> to vector<32x128xf32>
    %cst_658 = arith.constant dense<0xFF800000> : vector<32xf32>
    %471 = vector.multi_reduction <maximumf>, %470, %cst_658 [1] : vector<32x128xf32> to vector<32xf32>
    %472 = vector.shape_cast %471 : vector<32xf32> to vector<32x1xf32>
    %473 = vector.extract_strided_slice %469 {offsets = [0, 128], sizes = [32, 128], strides = [1, 1]} : vector<32x256xf32> to vector<32x128xf32>
    %cst_659 = arith.constant dense<0xFF800000> : vector<32xf32>
    %474 = vector.multi_reduction <maximumf>, %473, %cst_659 [1] : vector<32x128xf32> to vector<32xf32>
    %475 = vector.shape_cast %474 : vector<32xf32> to vector<32x1xf32>
    %476 = tpu.concatenate %472, %475 in 1 : vector<32x1xf32>, vector<32x1xf32> -> vector<32x2xf32>
    %477 = arith.mulf %476, %476 : vector<32x2xf32>
    %cst_660 = arith.constant dense<0.000000e+00> : vector<2xf32>
    %478 = vector.multi_reduction <add>, %477, %cst_660 [0] : vector<32x2xf32> to vector<2xf32>
    %479 = vector.shape_cast %478 : vector<2xf32> to vector<1x2xf32>
    %480 = math.sqrt %479 : vector<1x2xf32>
    %cst_661 = arith.constant 9.99999974E-6 : f32
    %481 = vector.broadcast %cst_661 : f32 to vector<1x2xf32>
    %482 = arith.addf %480, %481 : vector<1x2xf32>
    %483 = tpu.reciprocal %482 {approx = true} : vector<1x2xf32> -> vector<1x2xf32>
    %484 = vector.broadcast %483 : vector<1x2xf32> to vector<32x2xf32>
    %485 = arith.mulf %476, %484 : vector<32x2xf32>
    %c0_662 = arith.constant 0 : index
    %c0_663 = arith.constant 0 : index
    %c0_664 = arith.constant 0 : index
    %486 = vector.load %arg10[%c0_662, %c0_663, %c0_664] : memref<1x32x2xf32, #tpu.memory_space<vmem>>, vector<1x32x2xf32>
    %487 = vector.shape_cast %486 : vector<1x32x2xf32> to vector<32x2xf32>
    %488 = vector.shape_cast %485 : vector<32x2xf32> to vector<1x32x2xf32>
    tpu.vector_store %arg10[%c0_662, %c0_663, %c0_664], %488 {strides = array<i32>} : memref<1x32x2xf32, #tpu.memory_space<vmem>>, vector<1x32x2xf32>,
    return
  }
  func.func @transform_0(%arg0: i32) -> (i32, i32, i32) {
    %c0_i32 = arith.constant 0 : i32
    %c0_i32_0 = arith.constant 0 : i32
    %c0_i32_1 = arith.constant 0 : i32
    return %arg0, %c0_i32, %c0_i32_0 : i32, i32, i32
  }
  func.func @transform_1(%arg0: i32) -> (i32, i32) {
    %c0_i32 = arith.constant 0 : i32
    %c0_i32_0 = arith.constant 0 : i32
    %c0_i32_1 = arith.constant 0 : i32
    return %c0_i32, %c0_i32_0 : i32, i32
  }
  func.func @transform_2(%arg0: i32) -> (i32, i32) {
    %c0_i32 = arith.constant 0 : i32
    %c0_i32_0 = arith.constant 0 : i32
    %c0_i32_1 = arith.constant 0 : i32
    return %c0_i32, %c0_i32_0 : i32, i32
  }
  func.func @transform_3(%arg0: i32) -> (i32, i32) {
    %c0_i32 = arith.constant 0 : i32
    %c0_i32_0 = arith.constant 0 : i32
    %c0_i32_1 = arith.constant 0 : i32
    return %c0_i32, %c0_i32_0 : i32, i32
  }
  func.func @transform_4(%arg0: i32) -> (i32, i32) {
    %c0_i32 = arith.constant 0 : i32
    %c0_i32_0 = arith.constant 0 : i32
    %c0_i32_1 = arith.constant 0 : i32
    return %c0_i32, %c0_i32_0 : i32, i32
  }
  func.func @transform_5(%arg0: i32) -> (i32, i32) {
    %c0_i32 = arith.constant 0 : i32
    %c0_i32_0 = arith.constant 0 : i32
    %c0_i32_1 = arith.constant 0 : i32
    return %c0_i32, %c0_i32_0 : i32, i32
  }
  func.func @transform_6(%arg0: i32) -> (i32, i32) {
    %c0_i32 = arith.constant 0 : i32
    %c0_i32_0 = arith.constant 0 : i32
    %c0_i32_1 = arith.constant 0 : i32
    return %c0_i32, %c0_i32_0 : i32, i32
  }
  func.func @transform_7(%arg0: i32) -> (i32, i32) {
    %c0_i32 = arith.constant 0 : i32
    %c0_i32_0 = arith.constant 0 : i32
    %c0_i32_1 = arith.constant 0 : i32
    return %c0_i32, %c0_i32_0 : i32, i32
  }
  func.func @transform_8(%arg0: i32) -> (i32, i32) {
    %c0_i32 = arith.constant 0 : i32
    %c0_i32_0 = arith.constant 0 : i32
    %c0_i32_1 = arith.constant 0 : i32
    return %c0_i32, %c0_i32_0 : i32, i32
  }
  func.func @transform_9(%arg0: i32) -> (i32, i32, i32) {
    %c0_i32 = arith.constant 0 : i32
    %c0_i32_0 = arith.constant 0 : i32
    %c0_i32_1 = arith.constant 0 : i32
    return %arg0, %c0_i32, %c0_i32_0 : i32, i32, i32
  }
}

</mosaic_0001>

<llo_original>
// kernel: tpu_custom_call.1
$region0: #{tpu_custom_call.1}
  #allocation0 [shape = 'u32[]', space=smem, size = 0x4, offset = 0x4, fixed_abs, tag = 'smem constant byte address 0x4 - core index']
  #allocation1 [shape = 'u32[144,128]{1,0:T(1,128)}', space=vmem, size = 0x12000, scoped, tag = 'internal scratch']
  #allocation2 [shape = 'f32[2,8,159]{2,1,0:T(8,128)}', space=vmem, size = 0x4000, scoped, tag = 'scratch operand']
  #allocation3 [shape = 'f32[2,32,143]{2,1,0:T(8,128)}', space=vmem, size = 0x10000, scoped, tag = 'scratch operand']
  #allocation4 [shape = 'f32[2,64,135]{2,1,0:T(8,128)}', space=vmem, size = 0x20000, scoped, tag = 'scratch operand']
  #allocation5 [shape = 'f32[2,128,135]{2,1,0:T(8,128)}', space=vmem, size = 0x40000, scoped, tag = 'scratch operand']
  #allocation6 [shape = 'f32[1024,256]{1,0:T(8,128)}', space=vmem, size = 0x100000, scoped, tag = 'scratch operand']
  %s0 = inlined_call_operand.hbm [shape: f32[2,8,128], index: 0, kind: input, shape index: {}]
  %s1 = inlined_call_operand.hbm [shape: f32[32,256], index: 1, kind: input, shape index: {}]
  %s2 = inlined_call_operand.vmem [shape: f32[32,1], index: 2, kind: input, shape index: {}]
  %s3 = inlined_call_operand.vmem [shape: f32[64,512], index: 3, kind: input, shape index: {}]
  %s4 = inlined_call_operand.vmem [shape: f32[64,1], index: 4, kind: input, shape index: {}]
  %s5 = inlined_call_operand.hbm [shape: f32[128,512], index: 5, kind: input, shape index: {}]
  %s6 = inlined_call_operand.vmem [shape: f32[128,1], index: 6, kind: input, shape index: {}]
  %s7 = inlined_call_operand.hbm [shape: f32[32,1024], index: 7, kind: input, shape index: {}]
  %s8 = inlined_call_operand.vmem [shape: f32[32,1], index: 8, kind: input, shape index: {}]
  %s9 = inlined_call_operand.vmem [shape: f32[1,32,2], index: 9, kind: output, shape index: {}]
  %s10 = sld [smem:[#allocation0]]
  $region62: #{tpu_custom_call.1} parent=0
    _
  %s12 = ssub.s32 1, %s10
  %s13 = scalar_select 0, %s12, %s10
  $region1: #{tpu_custom_call.1} parent=0
    #allocation7 [shape = 'u8[8192]{0}', space=vmem, size = 0x2000, scoped, tag = 'input window, operand 0, single buffered']
    #allocation8 [shape = 's32[1]{0}', space=sflag, size = 0x4, scoped, tag = 'scoped memory for tpu_custom_call.1']
    #allocation9 [shape = 'u8[32768]{0}', space=vmem, size = 0x8000, scoped, tag = 'input window, operand 1, single buffered']
    #allocation10 [shape = 's32[1]{0}', space=sflag, size = 0x4, scoped, tag = 'scoped memory for tpu_custom_call.1']
    #allocation11 [shape = 'u8[262144]{0}', space=vmem, size = 0x40000, scoped, tag = 'input window, operand 5, single buffered']
    #allocation12 [shape = 'u8[131072]{0}', space=vmem, size = 0x20000, scoped, tag = 'input window, operand 7, single buffered']
    #allocation13 [shape = 's32[1]{0}', space=sflag, size = 0x4, scoped, tag = 'scoped memory for tpu_custom_call.1']
    %14 = vsyncpa [#allocation8], 0
    %15 = vsyncpa [#allocation10], 0
    %16 = vsyncpa [#allocation13], 0
    // Predicated region
    $region2: #{tpu_custom_call.1} parent=1 // pred_check
      _
    $region3: #{tpu_custom_call.1} parent=1 // pred_check_branch
      %18 = sbr.rel (0) target = $region5
    $region4: #{tpu_custom_call.1} parent=1 // pred_region
      %s20 = ssub.s32 256, 256
      %21 = vsyncadd [#allocation8], %s20
      %s22 = sshll.u32 [#allocation7], 4
      %s23 = int_to_ptr.vmem [resolvable:$true] %s22
      %28 = dma.hbm_to_vmem [thread:$0]  %s0, 256, %s23, [#allocation8], 128, 128, 8
    $region5: #{tpu_custom_call.1} parent=1 // pred_fallthru
      _
    // Predicated region
    $region6: #{tpu_custom_call.1} parent=1 // pred_check
      _
    $region7: #{tpu_custom_call.1} parent=1 // pred_check_branch
      %30 = sbr.rel (0) target = $region9
    $region8: #{tpu_custom_call.1} parent=1 // pred_region
      %s32 = ssub.s32 1024, 1024
      %33 = vsyncadd [#allocation10], %s32
      %s34 = sshll.u32 [#allocation9], 4
      %s35 = int_to_ptr.vmem [resolvable:$true] %s34
      %40 = dma.hbm_to_vmem [thread:$0]  %s1, 1024, %s35, [#allocation10], 256, 256, 16
    $region9: #{tpu_custom_call.1} parent=1 // pred_fallthru
      _
    // Predicated region
    $region10: #{tpu_custom_call.1} parent=1 // pred_check
      _
    $region11: #{tpu_custom_call.1} parent=1 // pred_check_branch
      %42 = sbr.rel (0) target = $region13
    $region12: #{tpu_custom_call.1} parent=1 // pred_region
      _
    $region13: #{tpu_custom_call.1} parent=1 // pred_fallthru
      _
    // Predicated region
    $region14: #{tpu_custom_call.1} parent=1 // pred_check
      _
    $region15: #{tpu_custom_call.1} parent=1 // pred_check_branch
      %44 = sbr.rel (0) target = $region17
    $region16: #{tpu_custom_call.1} parent=1 // pred_region
      _
    $region17: #{tpu_custom_call.1} parent=1 // pred_fallthru
      _
    // Predicated region
    $region18: #{tpu_custom_call.1} parent=1 // pred_check
      _
    $region19: #{tpu_custom_call.1} parent=1 // pred_check_branch
      %46 = sbr.rel (0) target = $region21
    $region20: #{tpu_custom_call.1} parent=1 // pred_region
      _
    $region21: #{tpu_custom_call.1} parent=1 // pred_fallthru
      _
    // Predicated region
    $region22: #{tpu_custom_call.1} parent=1 // pred_check
      _
    $region23: #{tpu_custom_call.1} parent=1 // pred_check_branch
      %48 = sbr.rel (0) target = $region25
    $region24: #{tpu_custom_call.1} parent=1 // pred_region
      %s50 = ssub.s32 8192, 8192
      %51 = vsyncadd [#allocation10], %s50
      %s52 = sshll.u32 [#allocation11], 4
      %s53 = int_to_ptr.vmem [resolvable:$true] %s52
      %58 = dma.hbm_to_vmem [thread:$0]  %s5, 8192, %s53, [#allocation10], 512, 512, 32
    $region25: #{tpu_custom_call.1} parent=1 // pred_fallthru
      _
    // Predicated region
    $region26: #{tpu_custom_call.1} parent=1 // pred_check
      _
    $region27: #{tpu_custom_call.1} parent=1 // pred_check_branch
      %60 = sbr.rel (0) target = $region29
    $region28: #{tpu_custom_call.1} parent=1 // pred_region
      _
    $region29: #{tpu_custom_call.1} parent=1 // pred_fallthru
      _
    // Predicated region
    $region30: #{tpu_custom_call.1} parent=1 // pred_check
      _
    $region31: #{tpu_custom_call.1} parent=1 // pred_check_branch
      %62 = sbr.rel (0) target = $region33
    $region32: #{tpu_custom_call.1} parent=1 // pred_region
      %s64 = ssub.s32 4096, 4096
      %65 = vsyncadd [#allocation13], %s64
      %s66 = sshll.u32 [#allocation12], 4
      %s67 = int_to_ptr.vmem [resolvable:$true] %s66
      %72 = dma.hbm_to_vmem [thread:$0]  %s7, 4096, %s67, [#allocation13], 1024, 1024, 64
    $region33: #{tpu_custom_call.1} parent=1 // pred_fallthru
      _
    // Predicated region
    $region34: #{tpu_custom_call.1} parent=1 // pred_check
      _
    $region35: #{tpu_custom_call.1} parent=1 // pred_check_branch
      %74 = sbr.rel (0) target = $region37
    $region36: #{tpu_custom_call.1} parent=1 // pred_region
      _
    $region37: #{tpu_custom_call.1} parent=1 // pred_fallthru
      _
    // Predicated region
    $region38: #{tpu_custom_call.1} parent=1 // pred_check
      _
    $region39: #{tpu_custom_call.1} parent=1 // pred_check_branch
      %76 = sbr.rel (0) target = $region41
    $region40: #{tpu_custom_call.1} parent=1 // pred_region
      %77 = dma.done [#allocation8], 256
    $region41: #{tpu_custom_call.1} parent=1 // pred_fallthru
      _
    // Predicated region
    $region42: #{tpu_custom_call.1} parent=1 // pred_check
      _
    $region43: #{tpu_custom_call.1} parent=1 // pred_check_branch
      %79 = sbr.rel (0) target = $region45
    $region44: #{tpu_custom_call.1} parent=1 // pred_region
      %80 = dma.done [#allocation10], 1024
    $region45: #{tpu_custom_call.1} parent=1 // pred_fallthru
      _
    // Predicated region
    $region46: #{tpu_custom_call.1} parent=1 // pred_check
      _
    $region47: #{tpu_custom_call.1} parent=1 // pred_check_branch
      %82 = sbr.rel (0) target = $region49
    $region48: #{tpu_custom_call.1} parent=1 // pred_region
      %83 = dma.done [#allocation10], 8192
    $region49: #{tpu_custom_call.1} parent=1 // pred_fallthru
      _
    // Predicated region
    $region50: #{tpu_custom_call.1} parent=1 // pred_check
      _
    $region51: #{tpu_custom_call.1} parent=1 // pred_check_branch
      %85 = sbr.rel (0) target = $region53
    $region52: #{tpu_custom_call.1} parent=1 // pred_region
      %86 = dma.done [#allocation13], 4096
    $region53: #{tpu_custom_call.1} parent=1 // pred_fallthru
      _
    %vm87 = vcmask 130048
    %88 = vst.msk [vmem:[#allocation2] sm:$0xff] %vm87, 0.0
    %89 = vst.msk [vmem:[#allocation2 + $0x10] sm:$0xff] %vm87, 0.0
    %vm90 = vcmask 253056
    %91 = vst.msk [vmem:[#allocation2 + $0x8] sm:$0xff] %vm90, 0.0
    %92 = vst.msk [vmem:[#allocation2 + $0x18] sm:$0xff] %vm90, 0.0
    %v93 = vld [vmem:[#allocation7] sm:$0xff]
    %v94 = vld [vmem:[#allocation7 + $0x8] sm:$0xff]
    %97 = vrot.lane.b32.xlu0 %v93, 16
    %v98 = vpop.permute.xlu0 %97
    %99 = vrot.lane.b32.xlu0 %v94, 16
    %v100 = vpop.permute.xlu0 %99
    %vm103 = vcmask 1047680
    %104 = vst.msk [vmem:[#allocation2] sm:$0xff] %vm103, %v98
    %105 = vst.msk [vmem:[#allocation2 + $0x8] sm:$0xff] %vm87, %v98
    %106 = vst.msk [vmem:[#allocation2 + $0x10] sm:$0xff] %vm103, %v100
    %107 = vst.msk [vmem:[#allocation2 + $0x18] sm:$0xff] %vm87, %v100
    %v108 = vld [vmem:[#allocation2] sm:$0xff]
    %109 = vst [vmem:[#allocation6] sm:$0xff] %v108
    %v110 = vld [vmem:[#allocation2] sm:$0xff]
    %v111 = vld [vmem:[#allocation2 + $0x8] sm:$0xff]
    %114 = vrot.lane.b32.xlu0 %v110, 127
    %v115 = vpop.permute.xlu0 %114
    %116 = vrot.lane.b32.xlu0 %v111, 127
    %v117 = vpop.permute.xlu0 %116
    %vm118 = vcmask 1039360
    %v119 = vsel %vm118, %v115, %v117
    %121 = vst [vmem:[#allocation6 + $0x10] sm:$0xff] %v119
    %v122 = vld [vmem:[#allocation2] sm:$0xff]
    %v123 = vld [vmem:[#allocation2 + $0x8] sm:$0xff]
    %126 = vrot.lane.b32.xlu0 %v122, 126
    %v127 = vpop.permute.xlu0 %126
    %128 = vrot.lane.b32.xlu0 %v123, 126
    %v129 = vpop.permute.xlu0 %128
    %vm130 = vcmask 1031168
    %v131 = vsel %vm130, %v127, %v129
    %133 = vst [vmem:[#allocation6 + $0x20] sm:$0xff] %v131
    %v134 = vld [vmem:[#allocation2] sm:$0xff]
    %v135 = vld [vmem:[#allocation2 + $0x8] sm:$0xff]
    %138 = vrot.lane.b32.xlu0 %v134, 125
    %v139 = vpop.permute.xlu0 %138
    %140 = vrot.lane.b32.xlu0 %v135, 125
    %v141 = vpop.permute.xlu0 %140
    %vm142 = vcmask 1022976
    %v143 = vsel %vm142, %v139, %v141
    %145 = vst [vmem:[#allocation6 + $0x30] sm:$0xff] %v143
    %v146 = vld [vmem:[#allocation2] sm:$0xff]
    %v147 = vld [vmem:[#allocation2 + $0x8] sm:$0xff]
    %150 = vrot.lane.b32.xlu0 %v146, 124
    %v151 = vpop.permute.xlu0 %150
    %152 = vrot.lane.b32.xlu0 %v147, 124
    %v153 = vpop.permute.xlu0 %152
    %vm154 = vcmask 1014784
    %v155 = vsel %vm154, %v151, %v153
    %157 = vst [vmem:[#allocation6 + $0x40] sm:$0xff] %v155
    %v158 = vld [vmem:[#allocation2] sm:$0xff]
    %v159 = vld [vmem:[#allocation2 + $0x8] sm:$0xff]
    %162 = vrot.lane.b32.xlu0 %v158, 123
    %v163 = vpop.permute.xlu0 %162
    %164 = vrot.lane.b32.xlu0 %v159, 123
    %v165 = vpop.permute.xlu0 %164
    %vm166 = vcmask 1006592
    %v167 = vsel %vm166, %v163, %v165
    %169 = vst [vmem:[#allocation6 + $0x50] sm:$0xff] %v167
    %v170 = vld [vmem:[#allocation2] sm:$0xff]
    %v171 = vld [vmem:[#allocation2 + $0x8] sm:$0xff]
    %174 = vrot.lane.b32.xlu0 %v170, 122
    %v175 = vpop.permute.xlu0 %174
    %176 = vrot.lane.b32.xlu0 %v171, 122
    %v177 = vpop.permute.xlu0 %176
    %vm178 = vcmask 998400
    %v179 = vsel %vm178, %v175, %v177
    %181 = vst [vmem:[#allocation6 + $0x60] sm:$0xff] %v179
    %v182 = vld [vmem:[#allocation2] sm:$0xff]
    %v183 = vld [vmem:[#allocation2 + $0x8] sm:$0xff]
    %186 = vrot.lane.b32.xlu0 %v182, 121
    %v187 = vpop.permute.xlu0 %186
    %188 = vrot.lane.b32.xlu0 %v183, 121
    %v189 = vpop.permute.xlu0 %188
    %vm190 = vcmask 990208
    %v191 = vsel %vm190, %v187, %v189
    %193 = vst [vmem:[#allocation6 + $0x70] sm:$0xff] %v191
    %v194 = vld [vmem:[#allocation2] sm:$0xff]
    %v195 = vld [vmem:[#allocation2 + $0x8] sm:$0xff]
    %198 = vrot.lane.b32.xlu0 %v194, 120
    %v199 = vpop.permute.xlu0 %198
    %200 = vrot.lane.b32.xlu0 %v195, 120
    %v201 = vpop.permute.xlu0 %200
    %vm202 = vcmask 982016
    %v203 = vsel %vm202, %v199, %v201
    %205 = vst [vmem:[#allocation6 + $0x80] sm:$0xff] %v203
    %v206 = vld [vmem:[#allocation2] sm:$0xff]
    %v207 = vld [vmem:[#allocation2 + $0x8] sm:$0xff]
    %210 = vrot.lane.b32.xlu0 %v206, 119
    %v211 = vpop.permute.xlu0 %210
    %212 = vrot.lane.b32.xlu0 %v207, 119
    %v213 = vpop.permute.xlu0 %212
    %vm214 = vcmask 973824
    %v215 = vsel %vm214, %v211, %v213
    %217 = vst [vmem:[#allocation6 + $0x90] sm:$0xff] %v215
    %v218 = vld [vmem:[#allocation2] sm:$0xff]
    %v219 = vld [vmem:[#allocation2 + $0x8] sm:$0xff]
    %222 = vrot.lane.b32.xlu0 %v218, 118
    %v223 = vpop.permute.xlu0 %222
    %224 = vrot.lane.b32.xlu0 %v219, 118
    %v225 = vpop.permute.xlu0 %224
    %vm226 = vcmask 965632
    %v227 = vsel %vm226, %v223, %v225
    %229 = vst [vmem:[#allocation6 + $0xa0] sm:$0xff] %v227
    %v230 = vld [vmem:[#allocation2] sm:$0xff]
    %v231 = vld [vmem:[#allocation2 + $0x8] sm:$0xff]
    %234 = vrot.lane.b32.xlu0 %v230, 117
    %v235 = vpop.permute.xlu0 %234
    %236 = vrot.lane.b32.xlu0 %v231, 117
    %v237 = vpop.permute.xlu0 %236
    %vm238 = vcmask 957440
    %v239 = vsel %vm238, %v235, %v237
    %241 = vst [vmem:[#allocation6 + $0xb0] sm:$0xff] %v239
    %v242 = vld [vmem:[#allocation2] sm:$0xff]
    %v243 = vld [vmem:[#allocation2 + $0x8] sm:$0xff]
    %246 = vrot.lane.b32.xlu0 %v242, 116
    %v247 = vpop.permute.xlu0 %246
    %248 = vrot.lane.b32.xlu0 %v243, 116
    %v249 = vpop.permute.xlu0 %248
    %vm250 = vcmask 949248
    %v251 = vsel %vm250, %v247, %v249
    %253 = vst [vmem:[#allocation6 + $0xc0] sm:$0xff] %v251
    %v254 = vld [vmem:[#allocation2] sm:$0xff]
    %v255 = vld [vmem:[#allocation2 + $0x8] sm:$0xff]
    %258 = vrot.lane.b32.xlu0 %v254, 115
    %v259 = vpop.permute.xlu0 %258
    %260 = vrot.lane.b32.xlu0 %v255, 115
    %v261 = vpop.permute.xlu0 %260
    %vm262 = vcmask 941056
    %v263 = vsel %vm262, %v259, %v261
    %265 = vst [vmem:[#allocation6 + $0xd0] sm:$0xff] %v263
    %v266 = vld [vmem:[#allocation2] sm:$0xff]
    %v267 = vld [vmem:[#allocation2 + $0x8] sm:$0xff]
    %270 = vrot.lane.b32.xlu0 %v266, 114
    %v271 = vpop.permute.xlu0 %270
    %272 = vrot.lane.b32.xlu0 %v267, 114
    %v273 = vpop.permute.xlu0 %272
    %vm274 = vcmask 932864
    %v275 = vsel %vm274, %v271, %v273
    %277 = vst [vmem:[#allocation6 + $0xe0] sm:$0xff] %v275
    %v278 = vld [vmem:[#allocation2] sm:$0xff]
    %v279 = vld [vmem:[#allocation2 + $0x8] sm:$0xff]
    %282 = vrot.lane.b32.xlu0 %v278, 113
    %v283 = vpop.permute.xlu0 %282
    %284 = vrot.lane.b32.xlu0 %v279, 113
    %v285 = vpop.permute.xlu0 %284
    %vm286 = vcmask 924672
    %v287 = vsel %vm286, %v283, %v285
    %289 = vst [vmem:[#allocation6 + $0xf0] sm:$0xff] %v287
    %v290 = vld [vmem:[#allocation2] sm:$0xff]
    %v291 = vld [vmem:[#allocation2 + $0x8] sm:$0xff]
    %294 = vrot.lane.b32.xlu0 %v290, 112
    %v295 = vpop.permute.xlu0 %294
    %296 = vrot.lane.b32.xlu0 %v291, 112
    %v297 = vpop.permute.xlu0 %296
    %vm298 = vcmask 916480
    %v299 = vsel %vm298, %v295, %v297
    %301 = vst [vmem:[#allocation6 + $0x100] sm:$0xff] %v299
    %v302 = vld [vmem:[#allocation2] sm:$0xff]
    %v303 = vld [vmem:[#allocation2 + $0x8] sm:$0xff]
    %306 = vrot.lane.b32.xlu0 %v302, 111
    %v307 = vpop.permute.xlu0 %306
    %308 = vrot.lane.b32.xlu0 %v303, 111
    %v309 = vpop.permute.xlu0 %308
    %vm310 = vcmask 908288
    %v311 = vsel %vm310, %v307, %v309
    %313 = vst [vmem:[#allocation6 + $0x110] sm:$0xff] %v311
    %v314 = vld [vmem:[#allocation2] sm:$0xff]
    %v315 = vld [vmem:[#allocation2 + $0x8] sm:$0xff]
    %318 = vrot.lane.b32.xlu0 %v314, 110
    %v319 = vpop.permute.xlu0 %318
    %320 = vrot.lane.b32.xlu0 %v315, 110
    %v321 = vpop.permute.xlu0 %320
    %vm322 = vcmask 900096
    %v323 = vsel %vm322, %v319, %v321
    %325 = vst [vmem:[#allocation6 + $0x120] sm:$0xff] %v323
    %v326 = vld [vmem:[#allocation2] sm:$0xff]
    %v327 = vld [vmem:[#allocation2 + $0x8] sm:$0xff]
    %330 = vrot.lane.b32.xlu0 %v326, 109
    %v331 = vpop.permute.xlu0 %330
    %332 = vrot.lane.b32.xlu0 %v327, 109
    %v333 = vpop.permute.xlu0 %332
    %vm334 = vcmask 891904
    %v335 = vsel %vm334, %v331, %v333
    %337 = vst [vmem:[#allocation6 + $0x130] sm:$0xff] %v335
    %v338 = vld [vmem:[#allocation2] sm:$0xff]
    %v339 = vld [vmem:[#allocation2 + $0x8] sm:$0xff]
    %342 = vrot.lane.b32.xlu0 %v338, 108
    %v343 = vpop.permute.xlu0 %342
    %344 = vrot.lane.b32.xlu0 %v339, 108
    %v345 = vpop.permute.xlu0 %344
    %vm346 = vcmask 883712
    %v347 = vsel %vm346, %v343, %v345
    %349 = vst [vmem:[#allocation6 + $0x140] sm:$0xff] %v347
    %v350 = vld [vmem:[#allocation2] sm:$0xff]
    %v351 = vld [vmem:[#allocation2 + $0x8] sm:$0xff]
    %354 = vrot.lane.b32.xlu0 %v350, 107
    %v355 = vpop.permute.xlu0 %354
    %356 = vrot.lane.b32.xlu0 %v351, 107
    %v357 = vpop.permute.xlu0 %356
    %vm358 = vcmask 875520
    %v359 = vsel %vm358, %v355, %v357
    %361 = vst [vmem:[#allocation6 + $0x150] sm:$0xff] %v359
    %v362 = vld [vmem:[#allocation2] sm:$0xff]
    %v363 = vld [vmem:[#allocation2 + $0x8] sm:$0xff]
    %366 = vrot.lane.b32.xlu0 %v362, 106
    %v367 = vpop.permute.xlu0 %366
    %368 = vrot.lane.b32.xlu0 %v363, 106
    %v369 = vpop.permute.xlu0 %368
    %vm370 = vcmask 867328
    %v371 = vsel %vm370, %v367, %v369
    %373 = vst [vmem:[#allocation6 + $0x160] sm:$0xff] %v371
    %v374 = vld [vmem:[#allocation2] sm:$0xff]
    %v375 = vld [vmem:[#allocation2 + $0x8] sm:$0xff]
    %378 = vrot.lane.b32.xlu0 %v374, 105
    %v379 = vpop.permute.xlu0 %378
    %380 = vrot.lane.b32.xlu0 %v375, 105
    %v381 = vpop.permute.xlu0 %380
    %vm382 = vcmask 859136
    %v383 = vsel %vm382, %v379, %v381
    %385 = vst [vmem:[#allocation6 + $0x170] sm:$0xff] %v383
    %v386 = vld [vmem:[#allocation2] sm:$0xff]
    %v387 = vld [vmem:[#allocation2 + $0x8] sm:$0xff]
    %390 = vrot.lane.b32.xlu0 %v386, 104
    %v391 = vpop.permute.xlu0 %390
    %392 = vrot.lane.b32.xlu0 %v387, 104
    %v393 = vpop.permute.xlu0 %392
    %vm394 = vcmask 850944
    %v395 = vsel %vm394, %v391, %v393
    %397 = vst [vmem:[#allocation6 + $0x180] sm:$0xff] %v395
    %v398 = vld [vmem:[#allocation2] sm:$0xff]
    %v399 = vld [vmem:[#allocation2 + $0x8] sm:$0xff]
    %402 = vrot.lane.b32.xlu0 %v398, 103
    %v403 = vpop.permute.xlu0 %402
    %404 = vrot.lane.b32.xlu0 %v399, 103
    %v405 = vpop.permute.xlu0 %404
    %vm406 = vcmask 842752
    %v407 = vsel %vm406, %v403, %v405
    %409 = vst [vmem:[#allocation6 + $0x190] sm:$0xff] %v407
    %v410 = vld [vmem:[#allocation2] sm:$0xff]
    %v411 = vld [vmem:[#allocation2 + $0x8] sm:$0xff]
    %414 = vrot.lane.b32.xlu0 %v410, 102
    %v415 = vpop.permute.xlu0 %414
    %416 = vrot.lane.b32.xlu0 %v411, 102
    %v417 = vpop.permute.xlu0 %416
    %vm418 = vcmask 834560
    %v419 = vsel %vm418, %v415, %v417
    %421 = vst [vmem:[#allocation6 + $0x1a0] sm:$0xff] %v419
    %v422 = vld [vmem:[#allocation2] sm:$0xff]
    %v423 = vld [vmem:[#allocation2 + $0x8] sm:$0xff]
    %426 = vrot.lane.b32.xlu0 %v422, 101
    %v427 = vpop.permute.xlu0 %426
    %428 = vrot.lane.b32.xlu0 %v423, 101
    %v429 = vpop.permute.xlu0 %428
    %vm430 = vcmask 826368
    %v431 = vsel %vm430, %v427, %v429
    %433 = vst [vmem:[#allocation6 + $0x1b0] sm:$0xff] %v431
    %v434 = vld [vmem:[#allocation2] sm:$0xff]
    %v435 = vld [vmem:[#allocation2 + $0x8] sm:$0xff]
    %438 = vrot.lane.b32.xlu0 %v434, 100
    %v439 = vpop.permute.xlu0 %438
    %440 = vrot.lane.b32.xlu0 %v435, 100
    %v441 = vpop.permute.xlu0 %440
    %vm442 = vcmask 818176
    %v443 = vsel %vm442, %v439, %v441
    %445 = vst [vmem:[#allocation6 + $0x1c0] sm:$0xff] %v443
    %v446 = vld [vmem:[#allocation2] sm:$0xff]
    %v447 = vld [vmem:[#allocation2 + $0x8] sm:$0xff]
    %450 = vrot.lane.b32.xlu0 %v446, 99
    %v451 = vpop.permute.xlu0 %450
    %452 = vrot.lane.b32.xlu0 %v447, 99
    %v453 = vpop.permute.xlu0 %452
    %vm454 = vcmask 809984
    %v455 = vsel %vm454, %v451, %v453
    %457 = vst [vmem:[#allocation6 + $0x1d0] sm:$0xff] %v455
    %v458 = vld [vmem:[#allocation2] sm:$0xff]
    %v459 = vld [vmem:[#allocation2 + $0x8] sm:$0xff]
    %462 = vrot.lane.b32.xlu0 %v458, 98
    %v463 = vpop.permute.xlu0 %462
    %464 = vrot.lane.b32.xlu0 %v459, 98
    %v465 = vpop.permute.xlu0 %464
    %vm466 = vcmask 801792
    %v467 = vsel %vm466, %v463, %v465
    %469 = vst [vmem:[#allocation6 + $0x1e0] sm:$0xff] %v467
    %v470 = vld [vmem:[#allocation2] sm:$0xff]
    %v471 = vld [vmem:[#allocation2 + $0x8] sm:$0xff]
    %474 = vrot.lane.b32.xlu0 %v470, 97
    %v475 = vpop.permute.xlu0 %474
    %476 = vrot.lane.b32.xlu0 %v471, 97
    %v477 = vpop.permute.xlu0 %476
    %vm478 = vcmask 793600
    %v479 = vsel %vm478, %v475, %v477
    %481 = vst [vmem:[#allocation6 + $0x1f0] sm:$0xff] %v479
    %s482 = scalar_lea.vmem [#allocation2], 16
    %v483 = vld [vmem:[%s482] sm:$0xff]
    %484 = vst [vmem:[#allocation6 + $0x8] sm:$0xff] %v483
    %v485 = vld [vmem:[%s482] sm:$0xff]
    %v486 = vld [vmem:[%s482 + $0x8] sm:$0xff]
    %489 = vrot.lane.b32.xlu0 %v485, 127
    %v490 = vpop.permute.xlu0 %489
    %491 = vrot.lane.b32.xlu0 %v486, 127
    %v492 = vpop.permute.xlu0 %491
    %v493 = vsel %vm118, %v490, %v492
    %495 = vst [vmem:[#allocation6 + $0x18] sm:$0xff] %v493
    %v496 = vld [vmem:[%s482] sm:$0xff]
    %v497 = vld [vmem:[%s482 + $0x8] sm:$0xff]
    %500 = vrot.lane.b32.xlu0 %v496, 126
    %v501 = vpop.permute.xlu0 %500
    %502 = vrot.lane.b32.xlu0 %v497, 126
    %v503 = vpop.permute.xlu0 %502
    %v504 = vsel %vm130, %v501, %v503
    %506 = vst [vmem:[#allocation6 + $0x28] sm:$0xff] %v504
    %v507 = vld [vmem:[%s482] sm:$0xff]
    %v508 = vld [vmem:[%s482 + $0x8] sm:$0xff]
    %511 = vrot.lane.b32.xlu0 %v507, 125
    %v512 = vpop.permute.xlu0 %511
    %513 = vrot.lane.b32.xlu0 %v508, 125
    %v514 = vpop.permute.xlu0 %513
    %v515 = vsel %vm142, %v512, %v514
    %517 = vst [vmem:[#allocation6 + $0x38] sm:$0xff] %v515
    %v518 = vld [vmem:[%s482] sm:$0xff]
    %v519 = vld [vmem:[%s482 + $0x8] sm:$0xff]
    %522 = vrot.lane.b32.xlu0 %v518, 124
    %v523 = vpop.permute.xlu0 %522
    %524 = vrot.lane.b32.xlu0 %v519, 124
    %v525 = vpop.permute.xlu0 %524
    %v526 = vsel %vm154, %v523, %v525
    %528 = vst [vmem:[#allocation6 + $0x48] sm:$0xff] %v526
    %v529 = vld [vmem:[%s482] sm:$0xff]
    %v530 = vld [vmem:[%s482 + $0x8] sm:$0xff]
    %533 = vrot.lane.b32.xlu0 %v529, 123
    %v534 = vpop.permute.xlu0 %533
    %535 = vrot.lane.b32.xlu0 %v530, 123
    %v536 = vpop.permute.xlu0 %535
    %v537 = vsel %vm166, %v534, %v536
    %539 = vst [vmem:[#allocation6 + $0x58] sm:$0xff] %v537
    %v540 = vld [vmem:[%s482] sm:$0xff]
    %v541 = vld [vmem:[%s482 + $0x8] sm:$0xff]
    %544 = vrot.lane.b32.xlu0 %v540, 122
    %v545 = vpop.permute.xlu0 %544
    %546 = vrot.lane.b32.xlu0 %v541, 122
    %v547 = vpop.permute.xlu0 %546
    %v548 = vsel %vm178, %v545, %v547
    %550 = vst [vmem:[#allocation6 + $0x68] sm:$0xff] %v548
    %v551 = vld [vmem:[%s482] sm:$0xff]
    %v552 = vld [vmem:[%s482 + $0x8] sm:$0xff]
    %555 = vrot.lane.b32.xlu0 %v551, 121
    %v556 = vpop.permute.xlu0 %555
    %557 = vrot.lane.b32.xlu0 %v552, 121
    %v558 = vpop.permute.xlu0 %557
    %v559 = vsel %vm190, %v556, %v558
    %561 = vst [vmem:[#allocation6 + $0x78] sm:$0xff] %v559
    %v562 = vld [vmem:[%s482] sm:$0xff]
    %v563 = vld [vmem:[%s482 + $0x8] sm:$0xff]
    %566 = vrot.lane.b32.xlu0 %v562, 120
    %v567 = vpop.permute.xlu0 %566
    %568 = vrot.lane.b32.xlu0 %v563, 120
    %v569 = vpop.permute.xlu0 %568
    %v570 = vsel %vm202, %v567, %v569
    %572 = vst [vmem:[#allocation6 + $0x88] sm:$0xff] %v570
    %v573 = vld [vmem:[%s482] sm:$0xff]
    %v574 = vld [vmem:[%s482 + $0x8] sm:$0xff]
    %577 = vrot.lane.b32.xlu0 %v573, 119
    %v578 = vpop.permute.xlu0 %577
    %579 = vrot.lane.b32.xlu0 %v574, 119
    %v580 = vpop.permute.xlu0 %579
    %v581 = vsel %vm214, %v578, %v580
    %583 = vst [vmem:[#allocation6 + $0x98] sm:$0xff] %v581
    %v584 = vld [vmem:[%s482] sm:$0xff]
    %v585 = vld [vmem:[%s482 + $0x8] sm:$0xff]
    %588 = vrot.lane.b32.xlu0 %v584, 118
    %v589 = vpop.permute.xlu0 %588
    %590 = vrot.lane.b32.xlu0 %v585, 118
    %v591 = vpop.permute.xlu0 %590
    %v592 = vsel %vm226, %v589, %v591
    %594 = vst [vmem:[#allocation6 + $0xa8] sm:$0xff] %v592
    %v595 = vld [vmem:[%s482] sm:$0xff]
    %v596 = vld [vmem:[%s482 + $0x8] sm:$0xff]
    %599 = vrot.lane.b32.xlu0 %v595, 117
    %v600 = vpop.permute.xlu0 %599
    %601 = vrot.lane.b32.xlu0 %v596, 117
    %v602 = vpop.permute.xlu0 %601
    %v603 = vsel %vm238, %v600, %v602
    %605 = vst [vmem:[#allocation6 + $0xb8] sm:$0xff] %v603
    %v606 = vld [vmem:[%s482] sm:$0xff]
    %v607 = vld [vmem:[%s482 + $0x8] sm:$0xff]
    %610 = vrot.lane.b32.xlu0 %v606, 116
    %v611 = vpop.permute.xlu0 %610
    %612 = vrot.lane.b32.xlu0 %v607, 116
    %v613 = vpop.permute.xlu0 %612
    %v614 = vsel %vm250, %v611, %v613
    %616 = vst [vmem:[#allocation6 + $0xc8] sm:$0xff] %v614
    %v617 = vld [vmem:[%s482] sm:$0xff]
    %v618 = vld [vmem:[%s482 + $0x8] sm:$0xff]
    %621 = vrot.lane.b32.xlu0 %v617, 115
    %v622 = vpop.permute.xlu0 %621
    %623 = vrot.lane.b32.xlu0 %v618, 115
    %v624 = vpop.permute.xlu0 %623
    %v625 = vsel %vm262, %v622, %v624
    %627 = vst [vmem:[#allocation6 + $0xd8] sm:$0xff] %v625
    %v628 = vld [vmem:[%s482] sm:$0xff]
    %v629 = vld [vmem:[%s482 + $0x8] sm:$0xff]
    %632 = vrot.lane.b32.xlu0 %v628, 114
    %v633 = vpop.permute.xlu0 %632
    %634 = vrot.lane.b32.xlu0 %v629, 114
    %v635 = vpop.permute.xlu0 %634
    %v636 = vsel %vm274, %v633, %v635
    %638 = vst [vmem:[#allocation6 + $0xe8] sm:$0xff] %v636
    %v639 = vld [vmem:[%s482] sm:$0xff]
    %v640 = vld [vmem:[%s482 + $0x8] sm:$0xff]
    %643 = vrot.lane.b32.xlu0 %v639, 113
    %v644 = vpop.permute.xlu0 %643
    %645 = vrot.lane.b32.xlu0 %v640, 113
    %v646 = vpop.permute.xlu0 %645
    %v647 = vsel %vm286, %v644, %v646
    %649 = vst [vmem:[#allocation6 + $0xf8] sm:$0xff] %v647
    %v650 = vld [vmem:[%s482] sm:$0xff]
    %v651 = vld [vmem:[%s482 + $0x8] sm:$0xff]
    %654 = vrot.lane.b32.xlu0 %v650, 112
    %v655 = vpop.permute.xlu0 %654
    %656 = vrot.lane.b32.xlu0 %v651, 112
    %v657 = vpop.permute.xlu0 %656
    %v658 = vsel %vm298, %v655, %v657
    %660 = vst [vmem:[#allocation6 + $0x108] sm:$0xff] %v658
    %v661 = vld [vmem:[%s482] sm:$0xff]
    %v662 = vld [vmem:[%s482 + $0x8] sm:$0xff]
    %665 = vrot.lane.b32.xlu0 %v661, 111
    %v666 = vpop.permute.xlu0 %665
    %667 = vrot.lane.b32.xlu0 %v662, 111
    %v668 = vpop.permute.xlu0 %667
    %v669 = vsel %vm310, %v666, %v668
    %671 = vst [vmem:[#allocation6 + $0x118] sm:$0xff] %v669
    %v672 = vld [vmem:[%s482] sm:$0xff]
    %v673 = vld [vmem:[%s482 + $0x8] sm:$0xff]
    %676 = vrot.lane.b32.xlu0 %v672, 110
    %v677 = vpop.permute.xlu0 %676
    %678 = vrot.lane.b32.xlu0 %v673, 110
    %v679 = vpop.permute.xlu0 %678
    %v680 = vsel %vm322, %v677, %v679
    %682 = vst [vmem:[#allocation6 + $0x128] sm:$0xff] %v680
    %v683 = vld [vmem:[%s482] sm:$0xff]
    %v684 = vld [vmem:[%s482 + $0x8] sm:$0xff]
    %687 = vrot.lane.b32.xlu0 %v683, 109
    %v688 = vpop.permute.xlu0 %687
    %689 = vrot.lane.b32.xlu0 %v684, 109
    %v690 = vpop.permute.xlu0 %689
    %v691 = vsel %vm334, %v688, %v690
    %693 = vst [vmem:[#allocation6 + $0x138] sm:$0xff] %v691
    %v694 = vld [vmem:[%s482] sm:$0xff]
    %v695 = vld [vmem:[%s482 + $0x8] sm:$0xff]
    %698 = vrot.lane.b32.xlu0 %v694, 108
    %v699 = vpop.permute.xlu0 %698
    %700 = vrot.lane.b32.xlu0 %v695, 108
    %v701 = vpop.permute.xlu0 %700
    %v702 = vsel %vm346, %v699, %v701
    %704 = vst [vmem:[#allocation6 + $0x148] sm:$0xff] %v702
    %v705 = vld [vmem:[%s482] sm:$0xff]
    %v706 = vld [vmem:[%s482 + $0x8] sm:$0xff]
    %709 = vrot.lane.b32.xlu0 %v705, 107
    %v710 = vpop.permute.xlu0 %709
    %711 = vrot.lane.b32.xlu0 %v706, 107
    %v712 = vpop.permute.xlu0 %711
    %v713 = vsel %vm358, %v710, %v712
    %715 = vst [vmem:[#allocation6 + $0x158] sm:$0xff] %v713
    %v716 = vld [vmem:[%s482] sm:$0xff]
    %v717 = vld [vmem:[%s482 + $0x8] sm:$0xff]
    %720 = vrot.lane.b32.xlu0 %v716, 106
    %v721 = vpop.permute.xlu0 %720
    %722 = vrot.lane.b32.xlu0 %v717, 106
    %v723 = vpop.permute.xlu0 %722
    %v724 = vsel %vm370, %v721, %v723
    %726 = vst [vmem:[#allocation6 + $0x168] sm:$0xff] %v724
    %v727 = vld [vmem:[%s482] sm:$0xff]
    %v728 = vld [vmem:[%s482 + $0x8] sm:$0xff]
    %731 = vrot.lane.b32.xlu0 %v727, 105
    %v732 = vpop.permute.xlu0 %731
    %733 = vrot.lane.b32.xlu0 %v728, 105
    %v734 = vpop.permute.xlu0 %733
    %v735 = vsel %vm382, %v732, %v734
    %737 = vst [vmem:[#allocation6 + $0x178] sm:$0xff] %v735
    %v738 = vld [vmem:[%s482] sm:$0xff]
    %v739 = vld [vmem:[%s482 + $0x8] sm:$0xff]
    %742 = vrot.lane.b32.xlu0 %v738, 104
    %v743 = vpop.permute.xlu0 %742
    %744 = vrot.lane.b32.xlu0 %v739, 104
    %v745 = vpop.permute.xlu0 %744
    %v746 = vsel %vm394, %v743, %v745
    %748 = vst [vmem:[#allocation6 + $0x188] sm:$0xff] %v746
    %v749 = vld [vmem:[%s482] sm:$0xff]
    %v750 = vld [vmem:[%s482 + $0x8] sm:$0xff]
    %753 = vrot.lane.b32.xlu0 %v749, 103
    %v754 = vpop.permute.xlu0 %753
    %755 = vrot.lane.b32.xlu0 %v750, 103
    %v756 = vpop.permute.xlu0 %755
    %v757 = vsel %vm406, %v754, %v756
    %759 = vst [vmem:[#allocation6 + $0x198] sm:$0xff] %v757
    %v760 = vld [vmem:[%s482] sm:$0xff]
    %v761 = vld [vmem:[%s482 + $0x8] sm:$0xff]
    %764 = vrot.lane.b32.xlu0 %v760, 102
    %v765 = vpop.permute.xlu0 %764
    %766 = vrot.lane.b32.xlu0 %v761, 102
    %v767 = vpop.permute.xlu0 %766
    %v768 = vsel %vm418, %v765, %v767
    %770 = vst [vmem:[#allocation6 + $0x1a8] sm:$0xff] %v768
    %v771 = vld [vmem:[%s482] sm:$0xff]
    %v772 = vld [vmem:[%s482 + $0x8] sm:$0xff]
    %775 = vrot.lane.b32.xlu0 %v771, 101
    %v776 = vpop.permute.xlu0 %775
    %777 = vrot.lane.b32.xlu0 %v772, 101
    %v778 = vpop.permute.xlu0 %777
    %v779 = vsel %vm430, %v776, %v778
    %781 = vst [vmem:[#allocation6 + $0x1b8] sm:$0xff] %v779
    %v782 = vld [vmem:[%s482] sm:$0xff]
    %v783 = vld [vmem:[%s482 + $0x8] sm:$0xff]
    %786 = vrot.lane.b32.xlu0 %v782, 100
    %v787 = vpop.permute.xlu0 %786
    %788 = vrot.lane.b32.xlu0 %v783, 100
    %v789 = vpop.permute.xlu0 %788
    %v790 = vsel %vm442, %v787, %v789
    %792 = vst [vmem:[#allocation6 + $0x1c8] sm:$0xff] %v790
    %v793 = vld [vmem:[%s482] sm:$0xff]
    %v794 = vld [vmem:[%s482 + $0x8] sm:$0xff]
    %797 = vrot.lane.b32.xlu0 %v793, 99
    %v798 = vpop.permute.xlu0 %797
    %799 = vrot.lane.b32.xlu0 %v794, 99
    %v800 = vpop.permute.xlu0 %799
    %v801 = vsel %vm454, %v798, %v800
    %803 = vst [vmem:[#allocation6 + $0x1d8] sm:$0xff] %v801
    %v804 = vld [vmem:[%s482] sm:$0xff]
    %v805 = vld [vmem:[%s482 + $0x8] sm:$0xff]
    %808 = vrot.lane.b32.xlu0 %v804, 98
    %v809 = vpop.permute.xlu0 %808
    %810 = vrot.lane.b32.xlu0 %v805, 98
    %v811 = vpop.permute.xlu0 %810
    %v812 = vsel %vm466, %v809, %v811
    %814 = vst [vmem:[#allocation6 + $0x1e8] sm:$0xff] %v812
    %v815 = vld [vmem:[%s482] sm:$0xff]
    %v816 = vld [vmem:[%s482 + $0x8] sm:$0xff]
    %819 = vrot.lane.b32.xlu0 %v815, 97
    %v820 = vpop.permute.xlu0 %819
    %821 = vrot.lane.b32.xlu0 %v816, 97
    %v822 = vpop.permute.xlu0 %821
    %v823 = vsel %vm478, %v820, %v822
    %825 = vst [vmem:[#allocation6 + $0x1f8] sm:$0xff] %v823
    %v826 = vld [vmem:[#allocation9] sm:$0xff]
    %v827 = vld [vmem:[#allocation9 + $0x8] sm:$0xff]
    %v828 = vld [vmem:[#allocation9 + $0x10] sm:$0xff]
    %v829 = vld [vmem:[#allocation9 + $0x18] sm:$0xff]
    %v830 = vld [vmem:[#allocation9 + $0x20] sm:$0xff]
    %v831 = vld [vmem:[#allocation9 + $0x28] sm:$0xff]
    %v832 = vld [vmem:[#allocation9 + $0x30] sm:$0xff]
    %v833 = vld [vmem:[#allocation9 + $0x38] sm:$0xff]
    %v834 = vld [vmem:[#allocation6] sm:$0xff]
    %v835 = vld [vmem:[#allocation6 + $0x8] sm:$0xff]
    %v836 = vld [vmem:[#allocation6 + $0x10] sm:$0xff]
    %v837 = vld [vmem:[#allocation6 + $0x18] sm:$0xff]
    %v838 = vld [vmem:[#allocation6 + $0x20] sm:$0xff]
    %v839 = vld [vmem:[#allocation6 + $0x28] sm:$0xff]
    %v840 = vld [vmem:[#allocation6 + $0x30] sm:$0xff]
    %v841 = vld [vmem:[#allocation6 + $0x38] sm:$0xff]
    %v842 = vld [vmem:[#allocation6 + $0x40] sm:$0xff]
    %v843 = vld [vmem:[#allocation6 + $0x48] sm:$0xff]
    %v844 = vld [vmem:[#allocation6 + $0x50] sm:$0xff]
    %v845 = vld [vmem:[#allocation6 + $0x58] sm:$0xff]
    %v846 = vld [vmem:[#allocation6 + $0x60] sm:$0xff]
    %v847 = vld [vmem:[#allocation6 + $0x68] sm:$0xff]
    %v848 = vld [vmem:[#allocation6 + $0x70] sm:$0xff]
    %v849 = vld [vmem:[#allocation6 + $0x78] sm:$0xff]
    %v850 = vld [vmem:[#allocation6 + $0x80] sm:$0xff]
    %v851 = vld [vmem:[#allocation6 + $0x88] sm:$0xff]
    %v852 = vld [vmem:[#allocation6 + $0x90] sm:$0xff]
    %v853 = vld [vmem:[#allocation6 + $0x98] sm:$0xff]
    %v854 = vld [vmem:[#allocation6 + $0xa0] sm:$0xff]
    %v855 = vld [vmem:[#allocation6 + $0xa8] sm:$0xff]
    %v856 = vld [vmem:[#allocation6 + $0xb0] sm:$0xff]
    %v857 = vld [vmem:[#allocation6 + $0xb8] sm:$0xff]
    %v858 = vld [vmem:[#allocation6 + $0xc0] sm:$0xff]
    %v859 = vld [vmem:[#allocation6 + $0xc8] sm:$0xff]
    %v860 = vld [vmem:[#allocation6 + $0xd0] sm:$0xff]
    %v861 = vld [vmem:[#allocation6 + $0xd8] sm:$0xff]
    %v862 = vld [vmem:[#allocation6 + $0xe0] sm:$0xff]
    %v863 = vld [vmem:[#allocation6 + $0xe8] sm:$0xff]
    %v864 = vld [vmem:[#allocation6 + $0xf0] sm:$0xff]
    %v865 = vld [vmem:[#allocation6 + $0xf8] sm:$0xff]
    %v866 = vld [vmem:[#allocation6 + $0x100] sm:$0xff]
    %v867 = vld [vmem:[#allocation6 + $0x108] sm:$0xff]
    %v868 = vld [vmem:[#allocation6 + $0x110] sm:$0xff]
    %v869 = vld [vmem:[#allocation6 + $0x118] sm:$0xff]
    %v870 = vld [vmem:[#allocation6 + $0x120] sm:$0xff]
    %v871 = vld [vmem:[#allocation6 + $0x128] sm:$0xff]
    %v872 = vld [vmem:[#allocation6 + $0x130] sm:$0xff]
    %v873 = vld [vmem:[#allocation6 + $0x138] sm:$0xff]
    %v874 = vld [vmem:[#allocation6 + $0x140] sm:$0xff]
    %v875 = vld [vmem:[#allocation6 + $0x148] sm:$0xff]
    %v876 = vld [vmem:[#allocation6 + $0x150] sm:$0xff]
    %v877 = vld [vmem:[#allocation6 + $0x158] sm:$0xff]
    %v878 = vld [vmem:[#allocation6 + $0x160] sm:$0xff]
    %v879 = vld [vmem:[#allocation6 + $0x168] sm:$0xff]
    %v880 = vld [vmem:[#allocation6 + $0x170] sm:$0xff]
    %v881 = vld [vmem:[#allocation6 + $0x178] sm:$0xff]
    %v882 = vld [vmem:[#allocation6 + $0x180] sm:$0xff]
    %v883 = vld [vmem:[#allocation6 + $0x188] sm:$0xff]
    %v884 = vld [vmem:[#allocation6 + $0x190] sm:$0xff]
    %v885 = vld [vmem:[#allocation6 + $0x198] sm:$0xff]
    %v886 = vld [vmem:[#allocation6 + $0x1a0] sm:$0xff]
    %v887 = vld [vmem:[#allocation6 + $0x1a8] sm:$0xff]
    %v888 = vld [vmem:[#allocation6 + $0x1b0] sm:$0xff]
    %v889 = vld [vmem:[#allocation6 + $0x1b8] sm:$0xff]
    %v890 = vld [vmem:[#allocation6 + $0x1c0] sm:$0xff]
    %v891 = vld [vmem:[#allocation6 + $0x1c8] sm:$0xff]
    %v892 = vld [vmem:[#allocation6 + $0x1d0] sm:$0xff]
    %v893 = vld [vmem:[#allocation6 + $0x1d8] sm:$0xff]
    %v894 = vld [vmem:[#allocation6 + $0x1e0] sm:$0xff]
    %v895 = vld [vmem:[#allocation6 + $0x1e8] sm:$0xff]
    %v896 = vld [vmem:[#allocation6 + $0x1f0] sm:$0xff]
    %v897 = vld [vmem:[#allocation6 + $0x1f8] sm:$0xff]
    %v898 = vld [vmem:[%s2] sm:$0xff]
    %v899 = vld [vmem:[%s2 + $0x8] sm:$0xff]
    %v900 = vld [vmem:[%s2 + $0x10] sm:$0xff]
    %v901 = vld [vmem:[%s2 + $0x18] sm:$0xff]
    %903 = vset.pattern.permute.xlu0 0
    %904 = vperm.xlu0 %903, %v898
    %v905 = vpop.permute.xlu0 %904
    %908 = vset.pattern.permute.xlu0 0
    %909 = vperm.xlu0 %908, %v899
    %v910 = vpop.permute.xlu0 %909
    %913 = vset.pattern.permute.xlu0 0
    %914 = vperm.xlu0 %913, %v900
    %v915 = vpop.permute.xlu0 %914
    %918 = vset.pattern.permute.xlu0 0
    %919 = vperm.xlu0 %918, %v901
    %v920 = vpop.permute.xlu0 %919
    %922 = vmatprep.subr.mxu0 %v835
    %923 = vmatpush1.msra.mxu0 %v834
    %924 = vmatprep.subr.mxu0 %v837
    %925 = vmatpush1.msra.mxu0 %v836
    %926 = vmatprep.subr.mxu0 %v839
    %927 = vmatpush1.msra.mxu0 %v838
    %928 = vmatprep.subr.mxu0 %v841
    %929 = vmatpush1.msra.mxu0 %v840
    %930 = vmatprep.subr.mxu0 %v843
    %931 = vmatpush1.msra.mxu0 %v842
    %932 = vmatprep.subr.mxu0 %v845
    %933 = vmatpush1.msra.mxu0 %v844
    %934 = vmatprep.subr.mxu0 %v847
    %935 = vmatpush1.msra.mxu0 %v846
    %936 = vmatprep.subr.mxu0 %v849
    %937 = vmatpush1.msra.mxu0 %v848
    %938 = vmatprep.subr.mxu0 %v851
    %939 = vmatpush1.msra.mxu0 %v850
    %940 = vmatprep.subr.mxu0 %v853
    %941 = vmatpush1.msra.mxu0 %v852
    %942 = vmatprep.subr.mxu0 %v855
    %943 = vmatpush1.msra.mxu0 %v854
    %944 = vmatprep.subr.mxu0 %v857
    %945 = vmatpush1.msra.mxu0 %v856
    %946 = vmatprep.subr.mxu0 %v859
    %947 = vmatpush1.msra.mxu0 %v858
    %948 = vmatprep.subr.mxu0 %v861
    %949 = vmatpush1.msra.mxu0 %v860
    %950 = vmatprep.subr.mxu0 %v863
    %951 = vmatpush1.msra.mxu0 %v862
    %952 = vmatprep.subr.mxu0 %v865
    %953 = vmatpush1.msra.mxu0 %v864
    %954 = vmatprep.subr.mxu0 %v867
    %955 = vmatpush1.msra.mxu0 %v866
    %956 = vmatprep.subr.mxu0 %v869
    %957 = vmatpush1.msra.mxu0 %v868
    %958 = vmatprep.subr.mxu0 %v871
    %959 = vmatpush1.msra.mxu0 %v870
    %960 = vmatprep.subr.mxu0 %v873
    %961 = vmatpush1.msra.mxu0 %v872
    %962 = vmatprep.subr.mxu0 %v875
    %963 = vmatpush1.msra.mxu0 %v874
    %964 = vmatprep.subr.mxu0 %v877
    %965 = vmatpush1.msra.mxu0 %v876
    %966 = vmatprep.subr.mxu0 %v879
    %967 = vmatpush1.msra.mxu0 %v878
    %968 = vmatprep.subr.mxu0 %v881
    %969 = vmatpush1.msra.mxu0 %v880
    %970 = vmatprep.subr.mxu0 %v883
    %971 = vmatpush1.msra.mxu0 %v882
    %972 = vmatprep.subr.mxu0 %v885
    %973 = vmatpush1.msra.mxu0 %v884
    %974 = vmatprep.subr.mxu0 %v887
    %975 = vmatpush1.msra.mxu0 %v886
    %976 = vmatprep.subr.mxu0 %v889
    %977 = vmatpush1.msra.mxu0 %v888
    %978 = vmatprep.subr.mxu0 %v891
    %979 = vmatpush1.msra.mxu0 %v890
    %980 = vmatprep.subr.mxu0 %v893
    %981 = vmatpush1.msra.mxu0 %v892
    %982 = vmatprep.subr.mxu0 %v895
    %983 = vmatpush1.msra.mxu0 %v894
    %984 = vmatprep.subr.mxu0 %v897
    %985 = vmatpush1.msra.mxu0 %v896
    %986 = vmatprep.mubr.f32.mxu0 %v827
    %987 = vmatmul.mubr.f32.gmra.mrb[0].mxu0 %v826
    %v988 = vpop.f32.mrb[0].mxu0
    %v989 = vadd.f32 %v905, %v988
    %v990 = vpop.f32.mrb[0].mxu0
    %v991 = vadd.f32 %v905, %v990
    %992 = vmatprep.mubr.f32.mxu0 %v829
    %993 = vmatmul.mubr.f32.gmra.mrb[0].mxu0 %v828
    %v994 = vpop.f32.mrb[0].mxu0
    %v995 = vadd.f32 %v910, %v994
    %v996 = vpop.f32.mrb[0].mxu0
    %v997 = vadd.f32 %v910, %v996
    %998 = vmatprep.mubr.f32.mxu0 %v831
    %999 = vmatmul.mubr.f32.gmra.mrb[0].mxu0 %v830
    %v1000 = vpop.f32.mrb[0].mxu0
    %v1001 = vadd.f32 %v915, %v1000
    %v1002 = vpop.f32.mrb[0].mxu0
    %v1003 = vadd.f32 %v915, %v1002
    %1004 = vmatprep.mubr.f32.mxu0 %v833
    %1005 = vmatmul.mubr.f32.gmra.mrb[0].mxu0 %v832
    %v1006 = vpop.f32.mrb[0].mxu0
    %v1007 = vadd.f32 %v920, %v1006
    %v1008 = vpop.f32.mrb[0].mxu0
    %v1009 = vadd.f32 %v920, %v1008
    %1010 = vdwg.mxu0
    %vm1011 = vcmp.ge.f32.partialorder %v989, 0.0
    %vm1012 = vcmp.ge.f32.partialorder %v991, 0.0
    %vm1013 = vcmp.ge.f32.partialorder %v995, 0.0
    %vm1014 = vcmp.ge.f32.partialorder %v997, 0.0
    %vm1015 = vcmp.ge.f32.partialorder %v1001, 0.0
    %vm1016 = vcmp.ge.f32.partialorder %v1003, 0.0
    %vm1017 = vcmp.ge.f32.partialorder %v1007, 0.0
    %vm1018 = vcmp.ge.f32.partialorder %v1009, 0.0
    %v1019 = vmul.f32 %v989, 0.01
    %v1020 = vmul.f32 %v991, 0.01
    %v1021 = vmul.f32 %v995, 0.01
    %v1022 = vmul.f32 %v997, 0.01
    %v1023 = vmul.f32 %v1001, 0.01
    %v1024 = vmul.f32 %v1003, 0.01
    %v1025 = vmul.f32 %v1007, 0.01
    %v1026 = vmul.f32 %v1009, 0.01
    %v1027 = vsel %vm1011, %v989, %v1019
    %v1028 = vsel %vm1012, %v991, %v1020
    %v1029 = vsel %vm1013, %v995, %v1021
    %v1030 = vsel %vm1014, %v997, %v1022
    %v1031 = vsel %vm1015, %v1001, %v1023
    %v1032 = vsel %vm1016, %v1003, %v1024
    %v1033 = vsel %vm1017, %v1007, %v1025
    %v1034 = vsel %vm1018, %v1009, %v1026
    %vm1035 = vcmask 64512
    %1036 = vst.msk [vmem:[#allocation3] sm:$0xff] %vm1035, 0.0
    %1037 = vst.msk [vmem:[#allocation3 + $0x10] sm:$0xff] %vm1035, 0.0
    %1038 = vst.msk [vmem:[#allocation3 + $0x20] sm:$0xff] %vm1035, 0.0
    %1039 = vst.msk [vmem:[#allocation3 + $0x30] sm:$0xff] %vm1035, 0.0
    %1040 = vst.msk [vmem:[#allocation3 + $0x40] sm:$0xff] %vm1035, 0.0
    %1041 = vst.msk [vmem:[#allocation3 + $0x50] sm:$0xff] %vm1035, 0.0
    %1042 = vst.msk [vmem:[#allocation3 + $0x60] sm:$0xff] %vm1035, 0.0
    %1043 = vst.msk [vmem:[#allocation3 + $0x70] sm:$0xff] %vm1035, 0.0
    %vm1044 = vcmask 121920
    %1045 = vst.msk [vmem:[#allocation3 + $0x8] sm:$0xff] %vm1044, 0.0
    %1046 = vst.msk [vmem:[#allocation3 + $0x18] sm:$0xff] %vm1044, 0.0
    %1047 = vst.msk [vmem:[#allocation3 + $0x28] sm:$0xff] %vm1044, 0.0
    %1048 = vst.msk [vmem:[#allocation3 + $0x38] sm:$0xff] %vm1044, 0.0
    %1049 = vst.msk [vmem:[#allocation3 + $0x48] sm:$0xff] %vm1044, 0.0
    %1050 = vst.msk [vmem:[#allocation3 + $0x58] sm:$0xff] %vm1044, 0.0
    %1051 = vst.msk [vmem:[#allocation3 + $0x68] sm:$0xff] %vm1044, 0.0
    %1052 = vst.msk [vmem:[#allocation3 + $0x78] sm:$0xff] %vm1044, 0.0
    %1057 = vrot.lane.b32.xlu0 %v1027, 8
    %v1058 = vpop.permute.xlu0 %1057
    %1059 = vrot.lane.b32.xlu0 %v1029, 8
    %v1060 = vpop.permute.xlu0 %1059
    %1061 = vrot.lane.b32.xlu0 %v1031, 8
    %v1062 = vpop.permute.xlu0 %1061
    %1063 = vrot.lane.b32.xlu0 %v1033, 8
    %v1064 = vpop.permute.xlu0 %1063
    %vm1069 = vcmask 1047616
    %1070 = vst.msk [vmem:[#allocation3] sm:$0xff] %vm1069, %v1058
    %1071 = vst.msk [vmem:[#allocation3 + $0x8] sm:$0xff] %vm1035, %v1058
    %1072 = vst.msk [vmem:[#allocation3 + $0x10] sm:$0xff] %vm1069, %v1060
    %1073 = vst.msk [vmem:[#allocation3 + $0x18] sm:$0xff] %vm1035, %v1060
    %1074 = vst.msk [vmem:[#allocation3 + $0x20] sm:$0xff] %vm1069, %v1062
    %1075 = vst.msk [vmem:[#allocation3 + $0x28] sm:$0xff] %vm1035, %v1062
    %1076 = vst.msk [vmem:[#allocation3 + $0x30] sm:$0xff] %vm1069, %v1064
    %1077 = vst.msk [vmem:[#allocation3 + $0x38] sm:$0xff] %vm1035, %v1064
    %1082 = vrot.lane.b32.xlu0 %v1028, 8
    %v1083 = vpop.permute.xlu0 %1082
    %1084 = vrot.lane.b32.xlu0 %v1030, 8
    %v1085 = vpop.permute.xlu0 %1084
    %1086 = vrot.lane.b32.xlu0 %v1032, 8
    %v1087 = vpop.permute.xlu0 %1086
    %1088 = vrot.lane.b32.xlu0 %v1034, 8
    %v1089 = vpop.permute.xlu0 %1088
    %s1094 = scalar_lea.vmem [#allocation3], 64
    %1095 = vst.msk [vmem:[%s1094] sm:$0xff] %vm1069, %v1083
    %1096 = vst.msk [vmem:[%s1094 + $0x8] sm:$0xff] %vm1035, %v1083
    %1097 = vst.msk [vmem:[%s1094 + $0x10] sm:$0xff] %vm1069, %v1085
    %1098 = vst.msk [vmem:[%s1094 + $0x18] sm:$0xff] %vm1035, %v1085
    %1099 = vst.msk [vmem:[%s1094 + $0x20] sm:$0xff] %vm1069, %v1087
    %1100 = vst.msk [vmem:[%s1094 + $0x28] sm:$0xff] %vm1035, %v1087
    %1101 = vst.msk [vmem:[%s1094 + $0x30] sm:$0xff] %vm1069, %v1089
    %1102 = vst.msk [vmem:[%s1094 + $0x38] sm:$0xff] %vm1035, %v1089
    %v1103 = vld [vmem:[#allocation3] sm:$0xff]
    %v1104 = vld [vmem:[#allocation3 + $0x10] sm:$0xff]
    %v1105 = vld [vmem:[#allocation3 + $0x20] sm:$0xff]
    %v1106 = vld [vmem:[#allocation3 + $0x30] sm:$0xff]
    %1107 = vst [vmem:[#allocation6] sm:$0xff] %v1103
    %1108 = vst [vmem:[#allocation6 + $0x10] sm:$0xff] %v1104
    %1109 = vst [vmem:[#allocation6 + $0x20] sm:$0xff] %v1105
    %1110 = vst [vmem:[#allocation6 + $0x30] sm:$0xff] %v1106
    %v1111 = vld [vmem:[#allocation3] sm:$0xff]
    %v1112 = vld [vmem:[#allocation3 + $0x8] sm:$0xff]
    %v1113 = vld [vmem:[#allocation3 + $0x10] sm:$0xff]
    %v1114 = vld [vmem:[#allocation3 + $0x18] sm:$0xff]
    %v1115 = vld [vmem:[#allocation3 + $0x20] sm:$0xff]
    %v1116 = vld [vmem:[#allocation3 + $0x28] sm:$0xff]
    %v1117 = vld [vmem:[#allocation3 + $0x30] sm:$0xff]
    %v1118 = vld [vmem:[#allocation3 + $0x38] sm:$0xff]
    %1127 = vrot.lane.b32.xlu0 %v1111, 127
    %v1128 = vpop.permute.xlu0 %1127
    %1129 = vrot.lane.b32.xlu0 %v1112, 127
    %v1130 = vpop.permute.xlu0 %1129
    %1131 = vrot.lane.b32.xlu0 %v1113, 127
    %v1132 = vpop.permute.xlu0 %1131
    %1133 = vrot.lane.b32.xlu0 %v1114, 127
    %v1134 = vpop.permute.xlu0 %1133
    %1135 = vrot.lane.b32.xlu0 %v1115, 127
    %v1136 = vpop.permute.xlu0 %1135
    %1137 = vrot.lane.b32.xlu0 %v1116, 127
    %v1138 = vpop.permute.xlu0 %1137
    %1139 = vrot.lane.b32.xlu0 %v1117, 127
    %v1140 = vpop.permute.xlu0 %1139
    %1141 = vrot.lane.b32.xlu0 %v1118, 127
    %v1142 = vpop.permute.xlu0 %1141
    %v1143 = vsel %vm118, %v1128, %v1130
    %v1144 = vsel %vm118, %v1132, %v1134
    %v1145 = vsel %vm118, %v1136, %v1138
    %v1146 = vsel %vm118, %v1140, %v1142
    %1151 = vst [vmem:[#allocation6 + $0x40] sm:$0xff] %v1143
    %1152 = vst [vmem:[#allocation6 + $0x50] sm:$0xff] %v1144
    %1153 = vst [vmem:[#allocation6 + $0x60] sm:$0xff] %v1145
    %1154 = vst [vmem:[#allocation6 + $0x70] sm:$0xff] %v1146
    %v1155 = vld [vmem:[#allocation3] sm:$0xff]
    %v1156 = vld [vmem:[#allocation3 + $0x8] sm:$0xff]
    %v1157 = vld [vmem:[#allocation3 + $0x10] sm:$0xff]
    %v1158 = vld [vmem:[#allocation3 + $0x18] sm:$0xff]
    %v1159 = vld [vmem:[#allocation3 + $0x20] sm:$0xff]
    %v1160 = vld [vmem:[#allocation3 + $0x28] sm:$0xff]
    %v1161 = vld [vmem:[#allocation3 + $0x30] sm:$0xff]
    %v1162 = vld [vmem:[#allocation3 + $0x38] sm:$0xff]
    %1171 = vrot.lane.b32.xlu0 %v1155, 126
    %v1172 = vpop.permute.xlu0 %1171
    %1173 = vrot.lane.b32.xlu0 %v1156, 126
    %v1174 = vpop.permute.xlu0 %1173
    %1175 = vrot.lane.b32.xlu0 %v1157, 126
    %v1176 = vpop.permute.xlu0 %1175
    %1177 = vrot.lane.b32.xlu0 %v1158, 126
    %v1178 = vpop.permute.xlu0 %1177
    %1179 = vrot.lane.b32.xlu0 %v1159, 126
    %v1180 = vpop.permute.xlu0 %1179
    %1181 = vrot.lane.b32.xlu0 %v1160, 126
    %v1182 = vpop.permute.xlu0 %1181
    %1183 = vrot.lane.b32.xlu0 %v1161, 126
    %v1184 = vpop.permute.xlu0 %1183
    %1185 = vrot.lane.b32.xlu0 %v1162, 126
    %v1186 = vpop.permute.xlu0 %1185
    %v1187 = vsel %vm130, %v1172, %v1174
    %v1188 = vsel %vm130, %v1176, %v1178
    %v1189 = vsel %vm130, %v1180, %v1182
    %v1190 = vsel %vm130, %v1184, %v1186
    %1195 = vst [vmem:[#allocation6 + $0x80] sm:$0xff] %v1187
    %1196 = vst [vmem:[#allocation6 + $0x90] sm:$0xff] %v1188
    %1197 = vst [vmem:[#allocation6 + $0xa0] sm:$0xff] %v1189
    %1198 = vst [vmem:[#allocation6 + $0xb0] sm:$0xff] %v1190
    %v1199 = vld [vmem:[#allocation3] sm:$0xff]
    %v1200 = vld [vmem:[#allocation3 + $0x8] sm:$0xff]
    %v1201 = vld [vmem:[#allocation3 + $0x10] sm:$0xff]
    %v1202 = vld [vmem:[#allocation3 + $0x18] sm:$0xff]
    %v1203 = vld [vmem:[#allocation3 + $0x20] sm:$0xff]
    %v1204 = vld [vmem:[#allocation3 + $0x28] sm:$0xff]
    %v1205 = vld [vmem:[#allocation3 + $0x30] sm:$0xff]
    %v1206 = vld [vmem:[#allocation3 + $0x38] sm:$0xff]
    %1215 = vrot.lane.b32.xlu0 %v1199, 125
    %v1216 = vpop.permute.xlu0 %1215
    %1217 = vrot.lane.b32.xlu0 %v1200, 125
    %v1218 = vpop.permute.xlu0 %1217
    %1219 = vrot.lane.b32.xlu0 %v1201, 125
    %v1220 = vpop.permute.xlu0 %1219
    %1221 = vrot.lane.b32.xlu0 %v1202, 125
    %v1222 = vpop.permute.xlu0 %1221
    %1223 = vrot.lane.b32.xlu0 %v1203, 125
    %v1224 = vpop.permute.xlu0 %1223
    %1225 = vrot.lane.b32.xlu0 %v1204, 125
    %v1226 = vpop.permute.xlu0 %1225
    %1227 = vrot.lane.b32.xlu0 %v1205, 125
    %v1228 = vpop.permute.xlu0 %1227
    %1229 = vrot.lane.b32.xlu0 %v1206, 125
    %v1230 = vpop.permute.xlu0 %1229
    %v1231 = vsel %vm142, %v1216, %v1218
    %v1232 = vsel %vm142, %v1220, %v1222
    %v1233 = vsel %vm142, %v1224, %v1226
    %v1234 = vsel %vm142, %v1228, %v1230
    %1239 = vst [vmem:[#allocation6 + $0xc0] sm:$0xff] %v1231
    %1240 = vst [vmem:[#allocation6 + $0xd0] sm:$0xff] %v1232
    %1241 = vst [vmem:[#allocation6 + $0xe0] sm:$0xff] %v1233
    %1242 = vst [vmem:[#allocation6 + $0xf0] sm:$0xff] %v1234
    %v1243 = vld [vmem:[#allocation3] sm:$0xff]
    %v1244 = vld [vmem:[#allocation3 + $0x8] sm:$0xff]
    %v1245 = vld [vmem:[#allocation3 + $0x10] sm:$0xff]
    %v1246 = vld [vmem:[#allocation3 + $0x18] sm:$0xff]
    %v1247 = vld [vmem:[#allocation3 + $0x20] sm:$0xff]
    %v1248 = vld [vmem:[#allocation3 + $0x28] sm:$0xff]
    %v1249 = vld [vmem:[#allocation3 + $0x30] sm:$0xff]
    %v1250 = vld [vmem:[#allocation3 + $0x38] sm:$0xff]
    %1259 = vrot.lane.b32.xlu0 %v1243, 124
    %v1260 = vpop.permute.xlu0 %1259
    %1261 = vrot.lane.b32.xlu0 %v1244, 124
    %v1262 = vpop.permute.xlu0 %1261
    %1263 = vrot.lane.b32.xlu0 %v1245, 124
    %v1264 = vpop.permute.xlu0 %1263
    %1265 = vrot.lane.b32.xlu0 %v1246, 124
    %v1266 = vpop.permute.xlu0 %1265
    %1267 = vrot.lane.b32.xlu0 %v1247, 124
    %v1268 = vpop.permute.xlu0 %1267
    %1269 = vrot.lane.b32.xlu0 %v1248, 124
    %v1270 = vpop.permute.xlu0 %1269
    %1271 = vrot.lane.b32.xlu0 %v1249, 124
    %v1272 = vpop.permute.xlu0 %1271
    %1273 = vrot.lane.b32.xlu0 %v1250, 124
    %v1274 = vpop.permute.xlu0 %1273
    %v1275 = vsel %vm154, %v1260, %v1262
    %v1276 = vsel %vm154, %v1264, %v1266
    %v1277 = vsel %vm154, %v1268, %v1270
    %v1278 = vsel %vm154, %v1272, %v1274
    %1283 = vst [vmem:[#allocation6 + $0x100] sm:$0xff] %v1275
    %1284 = vst [vmem:[#allocation6 + $0x110] sm:$0xff] %v1276
    %1285 = vst [vmem:[#allocation6 + $0x120] sm:$0xff] %v1277
    %1286 = vst [vmem:[#allocation6 + $0x130] sm:$0xff] %v1278
    %v1287 = vld [vmem:[#allocation3] sm:$0xff]
    %v1288 = vld [vmem:[#allocation3 + $0x8] sm:$0xff]
    %v1289 = vld [vmem:[#allocation3 + $0x10] sm:$0xff]
    %v1290 = vld [vmem:[#allocation3 + $0x18] sm:$0xff]
    %v1291 = vld [vmem:[#allocation3 + $0x20] sm:$0xff]
    %v1292 = vld [vmem:[#allocation3 + $0x28] sm:$0xff]
    %v1293 = vld [vmem:[#allocation3 + $0x30] sm:$0xff]
    %v1294 = vld [vmem:[#allocation3 + $0x38] sm:$0xff]
    %1303 = vrot.lane.b32.xlu0 %v1287, 123
    %v1304 = vpop.permute.xlu0 %1303
    %1305 = vrot.lane.b32.xlu0 %v1288, 123
    %v1306 = vpop.permute.xlu0 %1305
    %1307 = vrot.lane.b32.xlu0 %v1289, 123
    %v1308 = vpop.permute.xlu0 %1307
    %1309 = vrot.lane.b32.xlu0 %v1290, 123
    %v1310 = vpop.permute.xlu0 %1309
    %1311 = vrot.lane.b32.xlu0 %v1291, 123
    %v1312 = vpop.permute.xlu0 %1311
    %1313 = vrot.lane.b32.xlu0 %v1292, 123
    %v1314 = vpop.permute.xlu0 %1313
    %1315 = vrot.lane.b32.xlu0 %v1293, 123
    %v1316 = vpop.permute.xlu0 %1315
    %1317 = vrot.lane.b32.xlu0 %v1294, 123
    %v1318 = vpop.permute.xlu0 %1317
    %v1319 = vsel %vm166, %v1304, %v1306
    %v1320 = vsel %vm166, %v1308, %v1310
    %v1321 = vsel %vm166, %v1312, %v1314
    %v1322 = vsel %vm166, %v1316, %v1318
    %1327 = vst [vmem:[#allocation6 + $0x140] sm:$0xff] %v1319
    %1328 = vst [vmem:[#allocation6 + $0x150] sm:$0xff] %v1320
    %1329 = vst [vmem:[#allocation6 + $0x160] sm:$0xff] %v1321
    %1330 = vst [vmem:[#allocation6 + $0x170] sm:$0xff] %v1322
    %v1331 = vld [vmem:[#allocation3] sm:$0xff]
    %v1332 = vld [vmem:[#allocation3 + $0x8] sm:$0xff]
    %v1333 = vld [vmem:[#allocation3 + $0x10] sm:$0xff]
    %v1334 = vld [vmem:[#allocation3 + $0x18] sm:$0xff]
    %v1335 = vld [vmem:[#allocation3 + $0x20] sm:$0xff]
    %v1336 = vld [vmem:[#allocation3 + $0x28] sm:$0xff]
    %v1337 = vld [vmem:[#allocation3 + $0x30] sm:$0xff]
    %v1338 = vld [vmem:[#allocation3 + $0x38] sm:$0xff]
    %1347 = vrot.lane.b32.xlu0 %v1331, 122
    %v1348 = vpop.permute.xlu0 %1347
    %1349 = vrot.lane.b32.xlu0 %v1332, 122
    %v1350 = vpop.permute.xlu0 %1349
    %1351 = vrot.lane.b32.xlu0 %v1333, 122
    %v1352 = vpop.permute.xlu0 %1351
    %1353 = vrot.lane.b32.xlu0 %v1334, 122
    %v1354 = vpop.permute.xlu0 %1353
    %1355 = vrot.lane.b32.xlu0 %v1335, 122
    %v1356 = vpop.permute.xlu0 %1355
    %1357 = vrot.lane.b32.xlu0 %v1336, 122
    %v1358 = vpop.permute.xlu0 %1357
    %1359 = vrot.lane.b32.xlu0 %v1337, 122
    %v1360 = vpop.permute.xlu0 %1359
    %1361 = vrot.lane.b32.xlu0 %v1338, 122
    %v1362 = vpop.permute.xlu0 %1361
    %v1363 = vsel %vm178, %v1348, %v1350
    %v1364 = vsel %vm178, %v1352, %v1354
    %v1365 = vsel %vm178, %v1356, %v1358
    %v1366 = vsel %vm178, %v1360, %v1362
    %1371 = vst [vmem:[#allocation6 + $0x180] sm:$0xff] %v1363
    %1372 = vst [vmem:[#allocation6 + $0x190] sm:$0xff] %v1364
    %1373 = vst [vmem:[#allocation6 + $0x1a0] sm:$0xff] %v1365
    %1374 = vst [vmem:[#allocation6 + $0x1b0] sm:$0xff] %v1366
    %v1375 = vld [vmem:[#allocation3] sm:$0xff]
    %v1376 = vld [vmem:[#allocation3 + $0x8] sm:$0xff]
    %v1377 = vld [vmem:[#allocation3 + $0x10] sm:$0xff]
    %v1378 = vld [vmem:[#allocation3 + $0x18] sm:$0xff]
    %v1379 = vld [vmem:[#allocation3 + $0x20] sm:$0xff]
    %v1380 = vld [vmem:[#allocation3 + $0x28] sm:$0xff]
    %v1381 = vld [vmem:[#allocation3 + $0x30] sm:$0xff]
    %v1382 = vld [vmem:[#allocation3 + $0x38] sm:$0xff]
    %1391 = vrot.lane.b32.xlu0 %v1375, 121
    %v1392 = vpop.permute.xlu0 %1391
    %1393 = vrot.lane.b32.xlu0 %v1376, 121
    %v1394 = vpop.permute.xlu0 %1393
    %1395 = vrot.lane.b32.xlu0 %v1377, 121
    %v1396 = vpop.permute.xlu0 %1395
    %1397 = vrot.lane.b32.xlu0 %v1378, 121
    %v1398 = vpop.permute.xlu0 %1397
    %1399 = vrot.lane.b32.xlu0 %v1379, 121
    %v1400 = vpop.permute.xlu0 %1399
    %1401 = vrot.lane.b32.xlu0 %v1380, 121
    %v1402 = vpop.permute.xlu0 %1401
    %1403 = vrot.lane.b32.xlu0 %v1381, 121
    %v1404 = vpop.permute.xlu0 %1403
    %1405 = vrot.lane.b32.xlu0 %v1382, 121
    %v1406 = vpop.permute.xlu0 %1405
    %v1407 = vsel %vm190, %v1392, %v1394
    %v1408 = vsel %vm190, %v1396, %v1398
    %v1409 = vsel %vm190, %v1400, %v1402
    %v1410 = vsel %vm190, %v1404, %v1406
    %1415 = vst [vmem:[#allocation6 + $0x1c0] sm:$0xff] %v1407
    %1416 = vst [vmem:[#allocation6 + $0x1d0] sm:$0xff] %v1408
    %1417 = vst [vmem:[#allocation6 + $0x1e0] sm:$0xff] %v1409
    %1418 = vst [vmem:[#allocation6 + $0x1f0] sm:$0xff] %v1410
    %v1419 = vld [vmem:[#allocation3] sm:$0xff]
    %v1420 = vld [vmem:[#allocation3 + $0x8] sm:$0xff]
    %v1421 = vld [vmem:[#allocation3 + $0x10] sm:$0xff]
    %v1422 = vld [vmem:[#allocation3 + $0x18] sm:$0xff]
    %v1423 = vld [vmem:[#allocation3 + $0x20] sm:$0xff]
    %v1424 = vld [vmem:[#allocation3 + $0x28] sm:$0xff]
    %v1425 = vld [vmem:[#allocation3 + $0x30] sm:$0xff]
    %v1426 = vld [vmem:[#allocation3 + $0x38] sm:$0xff]
    %1435 = vrot.lane.b32.xlu0 %v1419, 120
    %v1436 = vpop.permute.xlu0 %1435
    %1437 = vrot.lane.b32.xlu0 %v1420, 120
    %v1438 = vpop.permute.xlu0 %1437
    %1439 = vrot.lane.b32.xlu0 %v1421, 120
    %v1440 = vpop.permute.xlu0 %1439
    %1441 = vrot.lane.b32.xlu0 %v1422, 120
    %v1442 = vpop.permute.xlu0 %1441
    %1443 = vrot.lane.b32.xlu0 %v1423, 120
    %v1444 = vpop.permute.xlu0 %1443
    %1445 = vrot.lane.b32.xlu0 %v1424, 120
    %v1446 = vpop.permute.xlu0 %1445
    %1447 = vrot.lane.b32.xlu0 %v1425, 120
    %v1448 = vpop.permute.xlu0 %1447
    %1449 = vrot.lane.b32.xlu0 %v1426, 120
    %v1450 = vpop.permute.xlu0 %1449
    %v1451 = vsel %vm202, %v1436, %v1438
    %v1452 = vsel %vm202, %v1440, %v1442
    %v1453 = vsel %vm202, %v1444, %v1446
    %v1454 = vsel %vm202, %v1448, %v1450
    %1459 = vst [vmem:[#allocation6 + $0x200] sm:$0xff] %v1451
    %1460 = vst [vmem:[#allocation6 + $0x210] sm:$0xff] %v1452
    %1461 = vst [vmem:[#allocation6 + $0x220] sm:$0xff] %v1453
    %1462 = vst [vmem:[#allocation6 + $0x230] sm:$0xff] %v1454
    %v1463 = vld [vmem:[#allocation3] sm:$0xff]
    %v1464 = vld [vmem:[#allocation3 + $0x8] sm:$0xff]
    %v1465 = vld [vmem:[#allocation3 + $0x10] sm:$0xff]
    %v1466 = vld [vmem:[#allocation3 + $0x18] sm:$0xff]
    %v1467 = vld [vmem:[#allocation3 + $0x20] sm:$0xff]
    %v1468 = vld [vmem:[#allocation3 + $0x28] sm:$0xff]
    %v1469 = vld [vmem:[#allocation3 + $0x30] sm:$0xff]
    %v1470 = vld [vmem:[#allocation3 + $0x38] sm:$0xff]
    %1479 = vrot.lane.b32.xlu0 %v1463, 119
    %v1480 = vpop.permute.xlu0 %1479
    %1481 = vrot.lane.b32.xlu0 %v1464, 119
    %v1482 = vpop.permute.xlu0 %1481
    %1483 = vrot.lane.b32.xlu0 %v1465, 119
    %v1484 = vpop.permute.xlu0 %1483
    %1485 = vrot.lane.b32.xlu0 %v1466, 119
    %v1486 = vpop.permute.xlu0 %1485
    %1487 = vrot.lane.b32.xlu0 %v1467, 119
    %v1488 = vpop.permute.xlu0 %1487
    %1489 = vrot.lane.b32.xlu0 %v1468, 119
    %v1490 = vpop.permute.xlu0 %1489
    %1491 = vrot.lane.b32.xlu0 %v1469, 119
    %v1492 = vpop.permute.xlu0 %1491
    %1493 = vrot.lane.b32.xlu0 %v1470, 119
    %v1494 = vpop.permute.xlu0 %1493
    %v1495 = vsel %vm214, %v1480, %v1482
    %v1496 = vsel %vm214, %v1484, %v1486
    %v1497 = vsel %vm214, %v1488, %v1490
    %v1498 = vsel %vm214, %v1492, %v1494
    %1503 = vst [vmem:[#allocation6 + $0x240] sm:$0xff] %v1495
    %1504 = vst [vmem:[#allocation6 + $0x250] sm:$0xff] %v1496
    %1505 = vst [vmem:[#allocation6 + $0x260] sm:$0xff] %v1497
    %1506 = vst [vmem:[#allocation6 + $0x270] sm:$0xff] %v1498
    %v1507 = vld [vmem:[#allocation3] sm:$0xff]
    %v1508 = vld [vmem:[#allocation3 + $0x8] sm:$0xff]
    %v1509 = vld [vmem:[#allocation3 + $0x10] sm:$0xff]
    %v1510 = vld [vmem:[#allocation3 + $0x18] sm:$0xff]
    %v1511 = vld [vmem:[#allocation3 + $0x20] sm:$0xff]
    %v1512 = vld [vmem:[#allocation3 + $0x28] sm:$0xff]
    %v1513 = vld [vmem:[#allocation3 + $0x30] sm:$0xff]
    %v1514 = vld [vmem:[#allocation3 + $0x38] sm:$0xff]
    %1523 = vrot.lane.b32.xlu0 %v1507, 118
    %v1524 = vpop.permute.xlu0 %1523
    %1525 = vrot.lane.b32.xlu0 %v1508, 118
    %v1526 = vpop.permute.xlu0 %1525
    %1527 = vrot.lane.b32.xlu0 %v1509, 118
    %v1528 = vpop.permute.xlu0 %1527
    %1529 = vrot.lane.b32.xlu0 %v1510, 118
    %v1530 = vpop.permute.xlu0 %1529
    %1531 = vrot.lane.b32.xlu0 %v1511, 118
    %v1532 = vpop.permute.xlu0 %1531
    %1533 = vrot.lane.b32.xlu0 %v1512, 118
    %v1534 = vpop.permute.xlu0 %1533
    %1535 = vrot.lane.b32.xlu0 %v1513, 118
    %v1536 = vpop.permute.xlu0 %1535
    %1537 = vrot.lane.b32.xlu0 %v1514, 118
    %v1538 = vpop.permute.xlu0 %1537
    %v1539 = vsel %vm226, %v1524, %v1526
    %v1540 = vsel %vm226, %v1528, %v1530
    %v1541 = vsel %vm226, %v1532, %v1534
    %v1542 = vsel %vm226, %v1536, %v1538
    %1547 = vst [vmem:[#allocation6 + $0x280] sm:$0xff] %v1539
    %1548 = vst [vmem:[#allocation6 + $0x290] sm:$0xff] %v1540
    %1549 = vst [vmem:[#allocation6 + $0x2a0] sm:$0xff] %v1541
    %1550 = vst [vmem:[#allocation6 + $0x2b0] sm:$0xff] %v1542
    %v1551 = vld [vmem:[#allocation3] sm:$0xff]
    %v1552 = vld [vmem:[#allocation3 + $0x8] sm:$0xff]
    %v1553 = vld [vmem:[#allocation3 + $0x10] sm:$0xff]
    %v1554 = vld [vmem:[#allocation3 + $0x18] sm:$0xff]
    %v1555 = vld [vmem:[#allocation3 + $0x20] sm:$0xff]
    %v1556 = vld [vmem:[#allocation3 + $0x28] sm:$0xff]
    %v1557 = vld [vmem:[#allocation3 + $0x30] sm:$0xff]
    %v1558 = vld [vmem:[#allocation3 + $0x38] sm:$0xff]
    %1567 = vrot.lane.b32.xlu0 %v1551, 117
    %v1568 = vpop.permute.xlu0 %1567
    %1569 = vrot.lane.b32.xlu0 %v1552, 117
    %v1570 = vpop.permute.xlu0 %1569
    %1571 = vrot.lane.b32.xlu0 %v1553, 117
    %v1572 = vpop.permute.xlu0 %1571
    %1573 = vrot.lane.b32.xlu0 %v1554, 117
    %v1574 = vpop.permute.xlu0 %1573
    %1575 = vrot.lane.b32.xlu0 %v1555, 117
    %v1576 = vpop.permute.xlu0 %1575
    %1577 = vrot.lane.b32.xlu0 %v1556, 117
    %v1578 = vpop.permute.xlu0 %1577
    %1579 = vrot.lane.b32.xlu0 %v1557, 117
    %v1580 = vpop.permute.xlu0 %1579
    %1581 = vrot.lane.b32.xlu0 %v1558, 117
    %v1582 = vpop.permute.xlu0 %1581
    %v1583 = vsel %vm238, %v1568, %v1570
    %v1584 = vsel %vm238, %v1572, %v1574
    %v1585 = vsel %vm238, %v1576, %v1578
    %v1586 = vsel %vm238, %v1580, %v1582
    %1591 = vst [vmem:[#allocation6 + $0x2c0] sm:$0xff] %v1583
    %1592 = vst [vmem:[#allocation6 + $0x2d0] sm:$0xff] %v1584
    %1593 = vst [vmem:[#allocation6 + $0x2e0] sm:$0xff] %v1585
    %1594 = vst [vmem:[#allocation6 + $0x2f0] sm:$0xff] %v1586
    %v1595 = vld [vmem:[#allocation3] sm:$0xff]
    %v1596 = vld [vmem:[#allocation3 + $0x8] sm:$0xff]
    %v1597 = vld [vmem:[#allocation3 + $0x10] sm:$0xff]
    %v1598 = vld [vmem:[#allocation3 + $0x18] sm:$0xff]
    %v1599 = vld [vmem:[#allocation3 + $0x20] sm:$0xff]
    %v1600 = vld [vmem:[#allocation3 + $0x28] sm:$0xff]
    %v1601 = vld [vmem:[#allocation3 + $0x30] sm:$0xff]
    %v1602 = vld [vmem:[#allocation3 + $0x38] sm:$0xff]
    %1611 = vrot.lane.b32.xlu0 %v1595, 116
    %v1612 = vpop.permute.xlu0 %1611
    %1613 = vrot.lane.b32.xlu0 %v1596, 116
    %v1614 = vpop.permute.xlu0 %1613
    %1615 = vrot.lane.b32.xlu0 %v1597, 116
    %v1616 = vpop.permute.xlu0 %1615
    %1617 = vrot.lane.b32.xlu0 %v1598, 116
    %v1618 = vpop.permute.xlu0 %1617
    %1619 = vrot.lane.b32.xlu0 %v1599, 116
    %v1620 = vpop.permute.xlu0 %1619
    %1621 = vrot.lane.b32.xlu0 %v1600, 116
    %v1622 = vpop.permute.xlu0 %1621
    %1623 = vrot.lane.b32.xlu0 %v1601, 116
    %v1624 = vpop.permute.xlu0 %1623
    %1625 = vrot.lane.b32.xlu0 %v1602, 116
    %v1626 = vpop.permute.xlu0 %1625
    %v1627 = vsel %vm250, %v1612, %v1614
    %v1628 = vsel %vm250, %v1616, %v1618
    %v1629 = vsel %vm250, %v1620, %v1622
    %v1630 = vsel %vm250, %v1624, %v1626
    %1635 = vst [vmem:[#allocation6 + $0x300] sm:$0xff] %v1627
    %1636 = vst [vmem:[#allocation6 + $0x310] sm:$0xff] %v1628
    %1637 = vst [vmem:[#allocation6 + $0x320] sm:$0xff] %v1629
    %1638 = vst [vmem:[#allocation6 + $0x330] sm:$0xff] %v1630
    %v1639 = vld [vmem:[#allocation3] sm:$0xff]
    %v1640 = vld [vmem:[#allocation3 + $0x8] sm:$0xff]
    %v1641 = vld [vmem:[#allocation3 + $0x10] sm:$0xff]
    %v1642 = vld [vmem:[#allocation3 + $0x18] sm:$0xff]
    %v1643 = vld [vmem:[#allocation3 + $0x20] sm:$0xff]
    %v1644 = vld [vmem:[#allocation3 + $0x28] sm:$0xff]
    %v1645 = vld [vmem:[#allocation3 + $0x30] sm:$0xff]
    %v1646 = vld [vmem:[#allocation3 + $0x38] sm:$0xff]
    %1655 = vrot.lane.b32.xlu0 %v1639, 115
    %v1656 = vpop.permute.xlu0 %1655
    %1657 = vrot.lane.b32.xlu0 %v1640, 115
    %v1658 = vpop.permute.xlu0 %1657
    %1659 = vrot.lane.b32.xlu0 %v1641, 115
    %v1660 = vpop.permute.xlu0 %1659
    %1661 = vrot.lane.b32.xlu0 %v1642, 115
    %v1662 = vpop.permute.xlu0 %1661
    %1663 = vrot.lane.b32.xlu0 %v1643, 115
    %v1664 = vpop.permute.xlu0 %1663
    %1665 = vrot.lane.b32.xlu0 %v1644, 115
    %v1666 = vpop.permute.xlu0 %1665
    %1667 = vrot.lane.b32.xlu0 %v1645, 115
    %v1668 = vpop.permute.xlu0 %1667
    %1669 = vrot.lane.b32.xlu0 %v1646, 115
    %v1670 = vpop.permute.xlu0 %1669
    %v1671 = vsel %vm262, %v1656, %v1658
    %v1672 = vsel %vm262, %v1660, %v1662
    %v1673 = vsel %vm262, %v1664, %v1666
    %v1674 = vsel %vm262, %v1668, %v1670
    %1679 = vst [vmem:[#allocation6 + $0x340] sm:$0xff] %v1671
    %1680 = vst [vmem:[#allocation6 + $0x350] sm:$0xff] %v1672
    %1681 = vst [vmem:[#allocation6 + $0x360] sm:$0xff] %v1673
    %1682 = vst [vmem:[#allocation6 + $0x370] sm:$0xff] %v1674
    %v1683 = vld [vmem:[#allocation3] sm:$0xff]
    %v1684 = vld [vmem:[#allocation3 + $0x8] sm:$0xff]
    %v1685 = vld [vmem:[#allocation3 + $0x10] sm:$0xff]
    %v1686 = vld [vmem:[#allocation3 + $0x18] sm:$0xff]
    %v1687 = vld [vmem:[#allocation3 + $0x20] sm:$0xff]
    %v1688 = vld [vmem:[#allocation3 + $0x28] sm:$0xff]
    %v1689 = vld [vmem:[#allocation3 + $0x30] sm:$0xff]
    %v1690 = vld [vmem:[#allocation3 + $0x38] sm:$0xff]
    %1699 = vrot.lane.b32.xlu0 %v1683, 114
    %v1700 = vpop.permute.xlu0 %1699
    %1701 = vrot.lane.b32.xlu0 %v1684, 114
    %v1702 = vpop.permute.xlu0 %1701
    %1703 = vrot.lane.b32.xlu0 %v1685, 114
    %v1704 = vpop.permute.xlu0 %1703
    %1705 = vrot.lane.b32.xlu0 %v1686, 114
    %v1706 = vpop.permute.xlu0 %1705
    %1707 = vrot.lane.b32.xlu0 %v1687, 114
    %v1708 = vpop.permute.xlu0 %1707
    %1709 = vrot.lane.b32.xlu0 %v1688, 114
    %v1710 = vpop.permute.xlu0 %1709
    %1711 = vrot.lane.b32.xlu0 %v1689, 114
    %v1712 = vpop.permute.xlu0 %1711
    %1713 = vrot.lane.b32.xlu0 %v1690, 114
    %v1714 = vpop.permute.xlu0 %1713
    %v1715 = vsel %vm274, %v1700, %v1702
    %v1716 = vsel %vm274, %v1704, %v1706
    %v1717 = vsel %vm274, %v1708, %v1710
    %v1718 = vsel %vm274, %v1712, %v1714
    %1723 = vst [vmem:[#allocation6 + $0x380] sm:$0xff] %v1715
    %1724 = vst [vmem:[#allocation6 + $0x390] sm:$0xff] %v1716
    %1725 = vst [vmem:[#allocation6 + $0x3a0] sm:$0xff] %v1717
    %1726 = vst [vmem:[#allocation6 + $0x3b0] sm:$0xff] %v1718
    %v1727 = vld [vmem:[#allocation3] sm:$0xff]
    %v1728 = vld [vmem:[#allocation3 + $0x8] sm:$0xff]
    %v1729 = vld [vmem:[#allocation3 + $0x10] sm:$0xff]
    %v1730 = vld [vmem:[#allocation3 + $0x18] sm:$0xff]
    %v1731 = vld [vmem:[#allocation3 + $0x20] sm:$0xff]
    %v1732 = vld [vmem:[#allocation3 + $0x28] sm:$0xff]
    %v1733 = vld [vmem:[#allocation3 + $0x30] sm:$0xff]
    %v1734 = vld [vmem:[#allocation3 + $0x38] sm:$0xff]
    %1743 = vrot.lane.b32.xlu0 %v1727, 113
    %v1744 = vpop.permute.xlu0 %1743
    %1745 = vrot.lane.b32.xlu0 %v1728, 113
    %v1746 = vpop.permute.xlu0 %1745
    %1747 = vrot.lane.b32.xlu0 %v1729, 113
    %v1748 = vpop.permute.xlu0 %1747
    %1749 = vrot.lane.b32.xlu0 %v1730, 113
    %v1750 = vpop.permute.xlu0 %1749
    %1751 = vrot.lane.b32.xlu0 %v1731, 113
    %v1752 = vpop.permute.xlu0 %1751
    %1753 = vrot.lane.b32.xlu0 %v1732, 113
    %v1754 = vpop.permute.xlu0 %1753
    %1755 = vrot.lane.b32.xlu0 %v1733, 113
    %v1756 = vpop.permute.xlu0 %1755
    %1757 = vrot.lane.b32.xlu0 %v1734, 113
    %v1758 = vpop.permute.xlu0 %1757
    %v1759 = vsel %vm286, %v1744, %v1746
    %v1760 = vsel %vm286, %v1748, %v1750
    %v1761 = vsel %vm286, %v1752, %v1754
    %v1762 = vsel %vm286, %v1756, %v1758
    %1767 = vst [vmem:[#allocation6 + $0x3c0] sm:$0xff] %v1759
    %1768 = vst [vmem:[#allocation6 + $0x3d0] sm:$0xff] %v1760
    %1769 = vst [vmem:[#allocation6 + $0x3e0] sm:$0xff] %v1761
    %1770 = vst [vmem:[#allocation6 + $0x3f0] sm:$0xff] %v1762
    %v1771 = vld [vmem:[%s1094] sm:$0xff]
    %v1772 = vld [vmem:[%s1094 + $0x10] sm:$0xff]
    %v1773 = vld [vmem:[%s1094 + $0x20] sm:$0xff]
    %v1774 = vld [vmem:[%s1094 + $0x30] sm:$0xff]
    %1775 = vst [vmem:[#allocation6 + $0x8] sm:$0xff] %v1771
    %1776 = vst [vmem:[#allocation6 + $0x18] sm:$0xff] %v1772
    %1777 = vst [vmem:[#allocation6 + $0x28] sm:$0xff] %v1773
    %1778 = vst [vmem:[#allocation6 + $0x38] sm:$0xff] %v1774
    %v1779 = vld [vmem:[%s1094] sm:$0xff]
    %v1780 = vld [vmem:[%s1094 + $0x8] sm:$0xff]
    %v1781 = vld [vmem:[%s1094 + $0x10] sm:$0xff]
    %v1782 = vld [vmem:[%s1094 + $0x18] sm:$0xff]
    %v1783 = vld [vmem:[%s1094 + $0x20] sm:$0xff]
    %v1784 = vld [vmem:[%s1094 + $0x28] sm:$0xff]
    %v1785 = vld [vmem:[%s1094 + $0x30] sm:$0xff]
    %v1786 = vld [vmem:[%s1094 + $0x38] sm:$0xff]
    %1795 = vrot.lane.b32.xlu0 %v1779, 127
    %v1796 = vpop.permute.xlu0 %1795
    %1797 = vrot.lane.b32.xlu0 %v1780, 127
    %v1798 = vpop.permute.xlu0 %1797
    %1799 = vrot.lane.b32.xlu0 %v1781, 127
    %v1800 = vpop.permute.xlu0 %1799
    %1801 = vrot.lane.b32.xlu0 %v1782, 127
    %v1802 = vpop.permute.xlu0 %1801
    %1803 = vrot.lane.b32.xlu0 %v1783, 127
    %v1804 = vpop.permute.xlu0 %1803
    %1805 = vrot.lane.b32.xlu0 %v1784, 127
    %v1806 = vpop.permute.xlu0 %1805
    %1807 = vrot.lane.b32.xlu0 %v1785, 127
    %v1808 = vpop.permute.xlu0 %1807
    %1809 = vrot.lane.b32.xlu0 %v1786, 127
    %v1810 = vpop.permute.xlu0 %1809
    %v1811 = vsel %vm118, %v1796, %v1798
    %v1812 = vsel %vm118, %v1800, %v1802
    %v1813 = vsel %vm118, %v1804, %v1806
    %v1814 = vsel %vm118, %v1808, %v1810
    %1819 = vst [vmem:[#allocation6 + $0x48] sm:$0xff] %v1811
    %1820 = vst [vmem:[#allocation6 + $0x58] sm:$0xff] %v1812
    %1821 = vst [vmem:[#allocation6 + $0x68] sm:$0xff] %v1813
    %1822 = vst [vmem:[#allocation6 + $0x78] sm:$0xff] %v1814
    %v1823 = vld [vmem:[%s1094] sm:$0xff]
    %v1824 = vld [vmem:[%s1094 + $0x8] sm:$0xff]
    %v1825 = vld [vmem:[%s1094 + $0x10] sm:$0xff]
    %v1826 = vld [vmem:[%s1094 + $0x18] sm:$0xff]
    %v1827 = vld [vmem:[%s1094 + $0x20] sm:$0xff]
    %v1828 = vld [vmem:[%s1094 + $0x28] sm:$0xff]
    %v1829 = vld [vmem:[%s1094 + $0x30] sm:$0xff]
    %v1830 = vld [vmem:[%s1094 + $0x38] sm:$0xff]
    %1839 = vrot.lane.b32.xlu0 %v1823, 126
    %v1840 = vpop.permute.xlu0 %1839
    %1841 = vrot.lane.b32.xlu0 %v1824, 126
    %v1842 = vpop.permute.xlu0 %1841
    %1843 = vrot.lane.b32.xlu0 %v1825, 126
    %v1844 = vpop.permute.xlu0 %1843
    %1845 = vrot.lane.b32.xlu0 %v1826, 126
    %v1846 = vpop.permute.xlu0 %1845
    %1847 = vrot.lane.b32.xlu0 %v1827, 126
    %v1848 = vpop.permute.xlu0 %1847
    %1849 = vrot.lane.b32.xlu0 %v1828, 126
    %v1850 = vpop.permute.xlu0 %1849
    %1851 = vrot.lane.b32.xlu0 %v1829, 126
    %v1852 = vpop.permute.xlu0 %1851
    %1853 = vrot.lane.b32.xlu0 %v1830, 126
    %v1854 = vpop.permute.xlu0 %1853
    %v1855 = vsel %vm130, %v1840, %v1842
    %v1856 = vsel %vm130, %v1844, %v1846
    %v1857 = vsel %vm130, %v1848, %v1850
    %v1858 = vsel %vm130, %v1852, %v1854
    %1863 = vst [vmem:[#allocation6 + $0x88] sm:$0xff] %v1855
    %1864 = vst [vmem:[#allocation6 + $0x98] sm:$0xff] %v1856
    %1865 = vst [vmem:[#allocation6 + $0xa8] sm:$0xff] %v1857
    %1866 = vst [vmem:[#allocation6 + $0xb8] sm:$0xff] %v1858
    %v1867 = vld [vmem:[%s1094] sm:$0xff]
    %v1868 = vld [vmem:[%s1094 + $0x8] sm:$0xff]
    %v1869 = vld [vmem:[%s1094 + $0x10] sm:$0xff]
    %v1870 = vld [vmem:[%s1094 + $0x18] sm:$0xff]
    %v1871 = vld [vmem:[%s1094 + $0x20] sm:$0xff]
    %v1872 = vld [vmem:[%s1094 + $0x28] sm:$0xff]
    %v1873 = vld [vmem:[%s1094 + $0x30] sm:$0xff]
    %v1874 = vld [vmem:[%s1094 + $0x38] sm:$0xff]
    %1883 = vrot.lane.b32.xlu0 %v1867, 125
    %v1884 = vpop.permute.xlu0 %1883
    %1885 = vrot.lane.b32.xlu0 %v1868, 125
    %v1886 = vpop.permute.xlu0 %1885
    %1887 = vrot.lane.b32.xlu0 %v1869, 125
    %v1888 = vpop.permute.xlu0 %1887
    %1889 = vrot.lane.b32.xlu0 %v1870, 125
    %v1890 = vpop.permute.xlu0 %1889
    %1891 = vrot.lane.b32.xlu0 %v1871, 125
    %v1892 = vpop.permute.xlu0 %1891
    %1893 = vrot.lane.b32.xlu0 %v1872, 125
    %v1894 = vpop.permute.xlu0 %1893
    %1895 = vrot.lane.b32.xlu0 %v1873, 125
    %v1896 = vpop.permute.xlu0 %1895
    %1897 = vrot.lane.b32.xlu0 %v1874, 125
    %v1898 = vpop.permute.xlu0 %1897
    %v1899 = vsel %vm142, %v1884, %v1886
    %v1900 = vsel %vm142, %v1888, %v1890
    %v1901 = vsel %vm142, %v1892, %v1894
    %v1902 = vsel %vm142, %v1896, %v1898
    %1907 = vst [vmem:[#allocation6 + $0xc8] sm:$0xff] %v1899
    %1908 = vst [vmem:[#allocation6 + $0xd8] sm:$0xff] %v1900
    %1909 = vst [vmem:[#allocation6 + $0xe8] sm:$0xff] %v1901
    %1910 = vst [vmem:[#allocation6 + $0xf8] sm:$0xff] %v1902
    %v1911 = vld [vmem:[%s1094] sm:$0xff]
    %v1912 = vld [vmem:[%s1094 + $0x8] sm:$0xff]
    %v1913 = vld [vmem:[%s1094 + $0x10] sm:$0xff]
    %v1914 = vld [vmem:[%s1094 + $0x18] sm:$0xff]
    %v1915 = vld [vmem:[%s1094 + $0x20] sm:$0xff]
    %v1916 = vld [vmem:[%s1094 + $0x28] sm:$0xff]
    %v1917 = vld [vmem:[%s1094 + $0x30] sm:$0xff]
    %v1918 = vld [vmem:[%s1094 + $0x38] sm:$0xff]
    %1927 = vrot.lane.b32.xlu0 %v1911, 124
    %v1928 = vpop.permute.xlu0 %1927
    %1929 = vrot.lane.b32.xlu0 %v1912, 124
    %v1930 = vpop.permute.xlu0 %1929
    %1931 = vrot.lane.b32.xlu0 %v1913, 124
    %v1932 = vpop.permute.xlu0 %1931
    %1933 = vrot.lane.b32.xlu0 %v1914, 124
    %v1934 = vpop.permute.xlu0 %1933
    %1935 = vrot.lane.b32.xlu0 %v1915, 124
    %v1936 = vpop.permute.xlu0 %1935
    %1937 = vrot.lane.b32.xlu0 %v1916, 124
    %v1938 = vpop.permute.xlu0 %1937
    %1939 = vrot.lane.b32.xlu0 %v1917, 124
    %v1940 = vpop.permute.xlu0 %1939
    %1941 = vrot.lane.b32.xlu0 %v1918, 124
    %v1942 = vpop.permute.xlu0 %1941
    %v1943 = vsel %vm154, %v1928, %v1930
    %v1944 = vsel %vm154, %v1932, %v1934
    %v1945 = vsel %vm154, %v1936, %v1938
    %v1946 = vsel %vm154, %v1940, %v1942
    %1951 = vst [vmem:[#allocation6 + $0x108] sm:$0xff] %v1943
    %1952 = vst [vmem:[#allocation6 + $0x118] sm:$0xff] %v1944
    %1953 = vst [vmem:[#allocation6 + $0x128] sm:$0xff] %v1945
    %1954 = vst [vmem:[#allocation6 + $0x138] sm:$0xff] %v1946
    %v1955 = vld [vmem:[%s1094] sm:$0xff]
    %v1956 = vld [vmem:[%s1094 + $0x8] sm:$0xff]
    %v1957 = vld [vmem:[%s1094 + $0x10] sm:$0xff]
    %v1958 = vld [vmem:[%s1094 + $0x18] sm:$0xff]
    %v1959 = vld [vmem:[%s1094 + $0x20] sm:$0xff]
    %v1960 = vld [vmem:[%s1094 + $0x28] sm:$0xff]
    %v1961 = vld [vmem:[%s1094 + $0x30] sm:$0xff]
    %v1962 = vld [vmem:[%s1094 + $0x38] sm:$0xff]
    %1971 = vrot.lane.b32.xlu0 %v1955, 123
    %v1972 = vpop.permute.xlu0 %1971
    %1973 = vrot.lane.b32.xlu0 %v1956, 123
    %v1974 = vpop.permute.xlu0 %1973
    %1975 = vrot.lane.b32.xlu0 %v1957, 123
    %v1976 = vpop.permute.xlu0 %1975
    %1977 = vrot.lane.b32.xlu0 %v1958, 123
    %v1978 = vpop.permute.xlu0 %1977
    %1979 = vrot.lane.b32.xlu0 %v1959, 123
    %v1980 = vpop.permute.xlu0 %1979
    %1981 = vrot.lane.b32.xlu0 %v1960, 123
    %v1982 = vpop.permute.xlu0 %1981
    %1983 = vrot.lane.b32.xlu0 %v1961, 123
    %v1984 = vpop.permute.xlu0 %1983
    %1985 = vrot.lane.b32.xlu0 %v1962, 123
    %v1986 = vpop.permute.xlu0 %1985
    %v1987 = vsel %vm166, %v1972, %v1974
    %v1988 = vsel %vm166, %v1976, %v1978
    %v1989 = vsel %vm166, %v1980, %v1982
    %v1990 = vsel %vm166, %v1984, %v1986
    %1995 = vst [vmem:[#allocation6 + $0x148] sm:$0xff] %v1987
    %1996 = vst [vmem:[#allocation6 + $0x158] sm:$0xff] %v1988
    %1997 = vst [vmem:[#allocation6 + $0x168] sm:$0xff] %v1989
    %1998 = vst [vmem:[#allocation6 + $0x178] sm:$0xff] %v1990
    %v1999 = vld [vmem:[%s1094] sm:$0xff]
    %v2000 = vld [vmem:[%s1094 + $0x8] sm:$0xff]
    %v2001 = vld [vmem:[%s1094 + $0x10] sm:$0xff]
    %v2002 = vld [vmem:[%s1094 + $0x18] sm:$0xff]
    %v2003 = vld [vmem:[%s1094 + $0x20] sm:$0xff]
    %v2004 = vld [vmem:[%s1094 + $0x28] sm:$0xff]
    %v2005 = vld [vmem:[%s1094 + $0x30] sm:$0xff]
    %v2006 = vld [vmem:[%s1094 + $0x38] sm:$0xff]
    %2015 = vrot.lane.b32.xlu0 %v1999, 122
    %v2016 = vpop.permute.xlu0 %2015
    %2017 = vrot.lane.b32.xlu0 %v2000, 122
    %v2018 = vpop.permute.xlu0 %2017
    %2019 = vrot.lane.b32.xlu0 %v2001, 122
    %v2020 = vpop.permute.xlu0 %2019
    %2021 = vrot.lane.b32.xlu0 %v2002, 122
    %v2022 = vpop.permute.xlu0 %2021
    %2023 = vrot.lane.b32.xlu0 %v2003, 122
    %v2024 = vpop.permute.xlu0 %2023
    %2025 = vrot.lane.b32.xlu0 %v2004, 122
    %v2026 = vpop.permute.xlu0 %2025
    %2027 = vrot.lane.b32.xlu0 %v2005, 122
    %v2028 = vpop.permute.xlu0 %2027
    %2029 = vrot.lane.b32.xlu0 %v2006, 122
    %v2030 = vpop.permute.xlu0 %2029
    %v2031 = vsel %vm178, %v2016, %v2018
    %v2032 = vsel %vm178, %v2020, %v2022
    %v2033 = vsel %vm178, %v2024, %v2026
    %v2034 = vsel %vm178, %v2028, %v2030
    %2039 = vst [vmem:[#allocation6 + $0x188] sm:$0xff] %v2031
    %2040 = vst [vmem:[#allocation6 + $0x198] sm:$0xff] %v2032
    %2041 = vst [vmem:[#allocation6 + $0x1a8] sm:$0xff] %v2033
    %2042 = vst [vmem:[#allocation6 + $0x1b8] sm:$0xff] %v2034
    %v2043 = vld [vmem:[%s1094] sm:$0xff]
    %v2044 = vld [vmem:[%s1094 + $0x8] sm:$0xff]
    %v2045 = vld [vmem:[%s1094 + $0x10] sm:$0xff]
    %v2046 = vld [vmem:[%s1094 + $0x18] sm:$0xff]
    %v2047 = vld [vmem:[%s1094 + $0x20] sm:$0xff]
    %v2048 = vld [vmem:[%s1094 + $0x28] sm:$0xff]
    %v2049 = vld [vmem:[%s1094 + $0x30] sm:$0xff]
    %v2050 = vld [vmem:[%s1094 + $0x38] sm:$0xff]
    %2059 = vrot.lane.b32.xlu0 %v2043, 121
    %v2060 = vpop.permute.xlu0 %2059
    %2061 = vrot.lane.b32.xlu0 %v2044, 121
    %v2062 = vpop.permute.xlu0 %2061
    %2063 = vrot.lane.b32.xlu0 %v2045, 121
    %v2064 = vpop.permute.xlu0 %2063
    %2065 = vrot.lane.b32.xlu0 %v2046, 121
    %v2066 = vpop.permute.xlu0 %2065
    %2067 = vrot.lane.b32.xlu0 %v2047, 121
    %v2068 = vpop.permute.xlu0 %2067
    %2069 = vrot.lane.b32.xlu0 %v2048, 121
    %v2070 = vpop.permute.xlu0 %2069
    %2071 = vrot.lane.b32.xlu0 %v2049, 121
    %v2072 = vpop.permute.xlu0 %2071
    %2073 = vrot.lane.b32.xlu0 %v2050, 121
    %v2074 = vpop.permute.xlu0 %2073
    %v2075 = vsel %vm190, %v2060, %v2062
    %v2076 = vsel %vm190, %v2064, %v2066
    %v2077 = vsel %vm190, %v2068, %v2070
    %v2078 = vsel %vm190, %v2072, %v2074
    %2083 = vst [vmem:[#allocation6 + $0x1c8] sm:$0xff] %v2075
    %2084 = vst [vmem:[#allocation6 + $0x1d8] sm:$0xff] %v2076
    %2085 = vst [vmem:[#allocation6 + $0x1e8] sm:$0xff] %v2077
    %2086 = vst [vmem:[#allocation6 + $0x1f8] sm:$0xff] %v2078
    %v2087 = vld [vmem:[%s1094] sm:$0xff]
    %v2088 = vld [vmem:[%s1094 + $0x8] sm:$0xff]
    %v2089 = vld [vmem:[%s1094 + $0x10] sm:$0xff]
    %v2090 = vld [vmem:[%s1094 + $0x18] sm:$0xff]
    %v2091 = vld [vmem:[%s1094 + $0x20] sm:$0xff]
    %v2092 = vld [vmem:[%s1094 + $0x28] sm:$0xff]
    %v2093 = vld [vmem:[%s1094 + $0x30] sm:$0xff]
    %v2094 = vld [vmem:[%s1094 + $0x38] sm:$0xff]
    %2103 = vrot.lane.b32.xlu0 %v2087, 120
    %v2104 = vpop.permute.xlu0 %2103
    %2105 = vrot.lane.b32.xlu0 %v2088, 120
    %v2106 = vpop.permute.xlu0 %2105
    %2107 = vrot.lane.b32.xlu0 %v2089, 120
    %v2108 = vpop.permute.xlu0 %2107
    %2109 = vrot.lane.b32.xlu0 %v2090, 120
    %v2110 = vpop.permute.xlu0 %2109
    %2111 = vrot.lane.b32.xlu0 %v2091, 120
    %v2112 = vpop.permute.xlu0 %2111
    %2113 = vrot.lane.b32.xlu0 %v2092, 120
    %v2114 = vpop.permute.xlu0 %2113
    %2115 = vrot.lane.b32.xlu0 %v2093, 120
    %v2116 = vpop.permute.xlu0 %2115
    %2117 = vrot.lane.b32.xlu0 %v2094, 120
    %v2118 = vpop.permute.xlu0 %2117
    %v2119 = vsel %vm202, %v2104, %v2106
    %v2120 = vsel %vm202, %v2108, %v2110
    %v2121 = vsel %vm202, %v2112, %v2114
    %v2122 = vsel %vm202, %v2116, %v2118
    %2127 = vst [vmem:[#allocation6 + $0x208] sm:$0xff] %v2119
    %2128 = vst [vmem:[#allocation6 + $0x218] sm:$0xff] %v2120
    %2129 = vst [vmem:[#allocation6 + $0x228] sm:$0xff] %v2121
    %2130 = vst [vmem:[#allocation6 + $0x238] sm:$0xff] %v2122
    %v2131 = vld [vmem:[%s1094] sm:$0xff]
    %v2132 = vld [vmem:[%s1094 + $0x8] sm:$0xff]
    %v2133 = vld [vmem:[%s1094 + $0x10] sm:$0xff]
    %v2134 = vld [vmem:[%s1094 + $0x18] sm:$0xff]
    %v2135 = vld [vmem:[%s1094 + $0x20] sm:$0xff]
    %v2136 = vld [vmem:[%s1094 + $0x28] sm:$0xff]
    %v2137 = vld [vmem:[%s1094 + $0x30] sm:$0xff]
    %v2138 = vld [vmem:[%s1094 + $0x38] sm:$0xff]
    %2147 = vrot.lane.b32.xlu0 %v2131, 119
    %v2148 = vpop.permute.xlu0 %2147
    %2149 = vrot.lane.b32.xlu0 %v2132, 119
    %v2150 = vpop.permute.xlu0 %2149
    %2151 = vrot.lane.b32.xlu0 %v2133, 119
    %v2152 = vpop.permute.xlu0 %2151
    %2153 = vrot.lane.b32.xlu0 %v2134, 119
    %v2154 = vpop.permute.xlu0 %2153
    %2155 = vrot.lane.b32.xlu0 %v2135, 119
    %v2156 = vpop.permute.xlu0 %2155
    %2157 = vrot.lane.b32.xlu0 %v2136, 119
    %v2158 = vpop.permute.xlu0 %2157
    %2159 = vrot.lane.b32.xlu0 %v2137, 119
    %v2160 = vpop.permute.xlu0 %2159
    %2161 = vrot.lane.b32.xlu0 %v2138, 119
    %v2162 = vpop.permute.xlu0 %2161
    %v2163 = vsel %vm214, %v2148, %v2150
    %v2164 = vsel %vm214, %v2152, %v2154
    %v2165 = vsel %vm214, %v2156, %v2158
    %v2166 = vsel %vm214, %v2160, %v2162
    %2171 = vst [vmem:[#allocation6 + $0x248] sm:$0xff] %v2163
    %2172 = vst [vmem:[#allocation6 + $0x258] sm:$0xff] %v2164
    %2173 = vst [vmem:[#allocation6 + $0x268] sm:$0xff] %v2165
    %2174 = vst [vmem:[#allocation6 + $0x278] sm:$0xff] %v2166
    %v2175 = vld [vmem:[%s1094] sm:$0xff]
    %v2176 = vld [vmem:[%s1094 + $0x8] sm:$0xff]
    %v2177 = vld [vmem:[%s1094 + $0x10] sm:$0xff]
    %v2178 = vld [vmem:[%s1094 + $0x18] sm:$0xff]
    %v2179 = vld [vmem:[%s1094 + $0x20] sm:$0xff]
    %v2180 = vld [vmem:[%s1094 + $0x28] sm:$0xff]
    %v2181 = vld [vmem:[%s1094 + $0x30] sm:$0xff]
    %v2182 = vld [vmem:[%s1094 + $0x38] sm:$0xff]
    %2191 = vrot.lane.b32.xlu0 %v2175, 118
    %v2192 = vpop.permute.xlu0 %2191
    %2193 = vrot.lane.b32.xlu0 %v2176, 118
    %v2194 = vpop.permute.xlu0 %2193
    %2195 = vrot.lane.b32.xlu0 %v2177, 118
    %v2196 = vpop.permute.xlu0 %2195
    %2197 = vrot.lane.b32.xlu0 %v2178, 118
    %v2198 = vpop.permute.xlu0 %2197
    %2199 = vrot.lane.b32.xlu0 %v2179, 118
    %v2200 = vpop.permute.xlu0 %2199
    %2201 = vrot.lane.b32.xlu0 %v2180, 118
    %v2202 = vpop.permute.xlu0 %2201
    %2203 = vrot.lane.b32.xlu0 %v2181, 118
    %v2204 = vpop.permute.xlu0 %2203
    %2205 = vrot.lane.b32.xlu0 %v2182, 118
    %v2206 = vpop.permute.xlu0 %2205
    %v2207 = vsel %vm226, %v2192, %v2194
    %v2208 = vsel %vm226, %v2196, %v2198
    %v2209 = vsel %vm226, %v2200, %v2202
    %v2210 = vsel %vm226, %v2204, %v2206
    %2215 = vst [vmem:[#allocation6 + $0x288] sm:$0xff] %v2207
    %2216 = vst [vmem:[#allocation6 + $0x298] sm:$0xff] %v2208
    %2217 = vst [vmem:[#allocation6 + $0x2a8] sm:$0xff] %v2209
    %2218 = vst [vmem:[#allocation6 + $0x2b8] sm:$0xff] %v2210
    %v2219 = vld [vmem:[%s1094] sm:$0xff]
    %v2220 = vld [vmem:[%s1094 + $0x8] sm:$0xff]
    %v2221 = vld [vmem:[%s1094 + $0x10] sm:$0xff]
    %v2222 = vld [vmem:[%s1094 + $0x18] sm:$0xff]
    %v2223 = vld [vmem:[%s1094 + $0x20] sm:$0xff]
    %v2224 = vld [vmem:[%s1094 + $0x28] sm:$0xff]
    %v2225 = vld [vmem:[%s1094 + $0x30] sm:$0xff]
    %v2226 = vld [vmem:[%s1094 + $0x38] sm:$0xff]
    %2235 = vrot.lane.b32.xlu0 %v2219, 117
    %v2236 = vpop.permute.xlu0 %2235
    %2237 = vrot.lane.b32.xlu0 %v2220, 117
    %v2238 = vpop.permute.xlu0 %2237
    %2239 = vrot.lane.b32.xlu0 %v2221, 117
    %v2240 = vpop.permute.xlu0 %2239
    %2241 = vrot.lane.b32.xlu0 %v2222, 117
    %v2242 = vpop.permute.xlu0 %2241
    %2243 = vrot.lane.b32.xlu0 %v2223, 117
    %v2244 = vpop.permute.xlu0 %2243
    %2245 = vrot.lane.b32.xlu0 %v2224, 117
    %v2246 = vpop.permute.xlu0 %2245
    %2247 = vrot.lane.b32.xlu0 %v2225, 117
    %v2248 = vpop.permute.xlu0 %2247
    %2249 = vrot.lane.b32.xlu0 %v2226, 117
    %v2250 = vpop.permute.xlu0 %2249
    %v2251 = vsel %vm238, %v2236, %v2238
    %v2252 = vsel %vm238, %v2240, %v2242
    %v2253 = vsel %vm238, %v2244, %v2246
    %v2254 = vsel %vm238, %v2248, %v2250
    %2259 = vst [vmem:[#allocation6 + $0x2c8] sm:$0xff] %v2251
    %2260 = vst [vmem:[#allocation6 + $0x2d8] sm:$0xff] %v2252
    %2261 = vst [vmem:[#allocation6 + $0x2e8] sm:$0xff] %v2253
    %2262 = vst [vmem:[#allocation6 + $0x2f8] sm:$0xff] %v2254
    %v2263 = vld [vmem:[%s1094] sm:$0xff]
    %v2264 = vld [vmem:[%s1094 + $0x8] sm:$0xff]
    %v2265 = vld [vmem:[%s1094 + $0x10] sm:$0xff]
    %v2266 = vld [vmem:[%s1094 + $0x18] sm:$0xff]
    %v2267 = vld [vmem:[%s1094 + $0x20] sm:$0xff]
    %v2268 = vld [vmem:[%s1094 + $0x28] sm:$0xff]
    %v2269 = vld [vmem:[%s1094 + $0x30] sm:$0xff]
    %v2270 = vld [vmem:[%s1094 + $0x38] sm:$0xff]
    %2279 = vrot.lane.b32.xlu0 %v2263, 116
    %v2280 = vpop.permute.xlu0 %2279
    %2281 = vrot.lane.b32.xlu0 %v2264, 116
    %v2282 = vpop.permute.xlu0 %2281
    %2283 = vrot.lane.b32.xlu0 %v2265, 116
    %v2284 = vpop.permute.xlu0 %2283
    %2285 = vrot.lane.b32.xlu0 %v2266, 116
    %v2286 = vpop.permute.xlu0 %2285
    %2287 = vrot.lane.b32.xlu0 %v2267, 116
    %v2288 = vpop.permute.xlu0 %2287
    %2289 = vrot.lane.b32.xlu0 %v2268, 116
    %v2290 = vpop.permute.xlu0 %2289
    %2291 = vrot.lane.b32.xlu0 %v2269, 116
    %v2292 = vpop.permute.xlu0 %2291
    %2293 = vrot.lane.b32.xlu0 %v2270, 116
    %v2294 = vpop.permute.xlu0 %2293
    %v2295 = vsel %vm250, %v2280, %v2282
    %v2296 = vsel %vm250, %v2284, %v2286
    %v2297 = vsel %vm250, %v2288, %v2290
    %v2298 = vsel %vm250, %v2292, %v2294
    %2303 = vst [vmem:[#allocation6 + $0x308] sm:$0xff] %v2295
    %2304 = vst [vmem:[#allocation6 + $0x318] sm:$0xff] %v2296
    %2305 = vst [vmem:[#allocation6 + $0x328] sm:$0xff] %v2297
    %2306 = vst [vmem:[#allocation6 + $0x338] sm:$0xff] %v2298
    %v2307 = vld [vmem:[%s1094] sm:$0xff]
    %v2308 = vld [vmem:[%s1094 + $0x8] sm:$0xff]
    %v2309 = vld [vmem:[%s1094 + $0x10] sm:$0xff]
    %v2310 = vld [vmem:[%s1094 + $0x18] sm:$0xff]
    %v2311 = vld [vmem:[%s1094 + $0x20] sm:$0xff]
    %v2312 = vld [vmem:[%s1094 + $0x28] sm:$0xff]
    %v2313 = vld [vmem:[%s1094 + $0x30] sm:$0xff]
    %v2314 = vld [vmem:[%s1094 + $0x38] sm:$0xff]
    %2323 = vrot.lane.b32.xlu0 %v2307, 115
    %v2324 = vpop.permute.xlu0 %2323
    %2325 = vrot.lane.b32.xlu0 %v2308, 115
    %v2326 = vpop.permute.xlu0 %2325
    %2327 = vrot.lane.b32.xlu0 %v2309, 115
    %v2328 = vpop.permute.xlu0 %2327
    %2329 = vrot.lane.b32.xlu0 %v2310, 115
    %v2330 = vpop.permute.xlu0 %2329
    %2331 = vrot.lane.b32.xlu0 %v2311, 115
    %v2332 = vpop.permute.xlu0 %2331
    %2333 = vrot.lane.b32.xlu0 %v2312, 115
    %v2334 = vpop.permute.xlu0 %2333
    %2335 = vrot.lane.b32.xlu0 %v2313, 115
    %v2336 = vpop.permute.xlu0 %2335
    %2337 = vrot.lane.b32.xlu0 %v2314, 115
    %v2338 = vpop.permute.xlu0 %2337
    %v2339 = vsel %vm262, %v2324, %v2326
    %v2340 = vsel %vm262, %v2328, %v2330
    %v2341 = vsel %vm262, %v2332, %v2334
    %v2342 = vsel %vm262, %v2336, %v2338
    %2347 = vst [vmem:[#allocation6 + $0x348] sm:$0xff] %v2339
    %2348 = vst [vmem:[#allocation6 + $0x358] sm:$0xff] %v2340
    %2349 = vst [vmem:[#allocation6 + $0x368] sm:$0xff] %v2341
    %2350 = vst [vmem:[#allocation6 + $0x378] sm:$0xff] %v2342
    %v2351 = vld [vmem:[%s1094] sm:$0xff]
    %v2352 = vld [vmem:[%s1094 + $0x8] sm:$0xff]
    %v2353 = vld [vmem:[%s1094 + $0x10] sm:$0xff]
    %v2354 = vld [vmem:[%s1094 + $0x18] sm:$0xff]
    %v2355 = vld [vmem:[%s1094 + $0x20] sm:$0xff]
    %v2356 = vld [vmem:[%s1094 + $0x28] sm:$0xff]
    %v2357 = vld [vmem:[%s1094 + $0x30] sm:$0xff]
    %v2358 = vld [vmem:[%s1094 + $0x38] sm:$0xff]
    %2367 = vrot.lane.b32.xlu0 %v2351, 114
    %v2368 = vpop.permute.xlu0 %2367
    %2369 = vrot.lane.b32.xlu0 %v2352, 114
    %v2370 = vpop.permute.xlu0 %2369
    %2371 = vrot.lane.b32.xlu0 %v2353, 114
    %v2372 = vpop.permute.xlu0 %2371
    %2373 = vrot.lane.b32.xlu0 %v2354, 114
    %v2374 = vpop.permute.xlu0 %2373
    %2375 = vrot.lane.b32.xlu0 %v2355, 114
    %v2376 = vpop.permute.xlu0 %2375
    %2377 = vrot.lane.b32.xlu0 %v2356, 114
    %v2378 = vpop.permute.xlu0 %2377
    %2379 = vrot.lane.b32.xlu0 %v2357, 114
    %v2380 = vpop.permute.xlu0 %2379
    %2381 = vrot.lane.b32.xlu0 %v2358, 114
    %v2382 = vpop.permute.xlu0 %2381
    %v2383 = vsel %vm274, %v2368, %v2370
    %v2384 = vsel %vm274, %v2372, %v2374
    %v2385 = vsel %vm274, %v2376, %v2378
    %v2386 = vsel %vm274, %v2380, %v2382
    %2391 = vst [vmem:[#allocation6 + $0x388] sm:$0xff] %v2383
    %2392 = vst [vmem:[#allocation6 + $0x398] sm:$0xff] %v2384
    %2393 = vst [vmem:[#allocation6 + $0x3a8] sm:$0xff] %v2385
    %2394 = vst [vmem:[#allocation6 + $0x3b8] sm:$0xff] %v2386
    %v2395 = vld [vmem:[%s1094] sm:$0xff]
    %v2396 = vld [vmem:[%s1094 + $0x8] sm:$0xff]
    %v2397 = vld [vmem:[%s1094 + $0x10] sm:$0xff]
    %v2398 = vld [vmem:[%s1094 + $0x18] sm:$0xff]
    %v2399 = vld [vmem:[%s1094 + $0x20] sm:$0xff]
    %v2400 = vld [vmem:[%s1094 + $0x28] sm:$0xff]
    %v2401 = vld [vmem:[%s1094 + $0x30] sm:$0xff]
    %v2402 = vld [vmem:[%s1094 + $0x38] sm:$0xff]
    %2411 = vrot.lane.b32.xlu0 %v2395, 113
    %v2412 = vpop.permute.xlu0 %2411
    %2413 = vrot.lane.b32.xlu0 %v2396, 113
    %v2414 = vpop.permute.xlu0 %2413
    %2415 = vrot.lane.b32.xlu0 %v2397, 113
    %v2416 = vpop.permute.xlu0 %2415
    %2417 = vrot.lane.b32.xlu0 %v2398, 113
    %v2418 = vpop.permute.xlu0 %2417
    %2419 = vrot.lane.b32.xlu0 %v2399, 113
    %v2420 = vpop.permute.xlu0 %2419
    %2421 = vrot.lane.b32.xlu0 %v2400, 113
    %v2422 = vpop.permute.xlu0 %2421
    %2423 = vrot.lane.b32.xlu0 %v2401, 113
    %v2424 = vpop.permute.xlu0 %2423
    %2425 = vrot.lane.b32.xlu0 %v2402, 113
    %v2426 = vpop.permute.xlu0 %2425
    %v2427 = vsel %vm286, %v2412, %v2414
    %v2428 = vsel %vm286, %v2416, %v2418
    %v2429 = vsel %vm286, %v2420, %v2422
    %v2430 = vsel %vm286, %v2424, %v2426
    %2435 = vst [vmem:[#allocation6 + $0x3c8] sm:$0xff] %v2427
    %2436 = vst [vmem:[#allocation6 + $0x3d8] sm:$0xff] %v2428
    %2437 = vst [vmem:[#allocation6 + $0x3e8] sm:$0xff] %v2429
    %2438 = vst [vmem:[#allocation6 + $0x3f8] sm:$0xff] %v2430
    %v2439 = vld [vmem:[%s3] sm:$0xff]
    %v2440 = vld [vmem:[%s3 + $0x8] sm:$0xff]
    %v2441 = vld [vmem:[%s3 + $0x10] sm:$0xff]
    %v2442 = vld [vmem:[%s3 + $0x18] sm:$0xff]
    %v2443 = vld [vmem:[%s3 + $0x20] sm:$0xff]
    %v2444 = vld [vmem:[%s3 + $0x28] sm:$0xff]
    %v2445 = vld [vmem:[%s3 + $0x30] sm:$0xff]
    %v2446 = vld [vmem:[%s3 + $0x38] sm:$0xff]
    %v2447 = vld [vmem:[%s3 + $0x40] sm:$0xff]
    %v2448 = vld [vmem:[%s3 + $0x48] sm:$0xff]
    %v2449 = vld [vmem:[%s3 + $0x50] sm:$0xff]
    %v2450 = vld [vmem:[%s3 + $0x58] sm:$0xff]
    %v2451 = vld [vmem:[%s3 + $0x60] sm:$0xff]
    %v2452 = vld [vmem:[%s3 + $0x68] sm:$0xff]
    %v2453 = vld [vmem:[%s3 + $0x70] sm:$0xff]
    %v2454 = vld [vmem:[%s3 + $0x78] sm:$0xff]
    %v2455 = vld [vmem:[%s3 + $0x80] sm:$0xff]
    %v2456 = vld [vmem:[%s3 + $0x88] sm:$0xff]
    %v2457 = vld [vmem:[%s3 + $0x90] sm:$0xff]
    %v2458 = vld [vmem:[%s3 + $0x98] sm:$0xff]
    %v2459 = vld [vmem:[%s3 + $0xa0] sm:$0xff]
    %v2460 = vld [vmem:[%s3 + $0xa8] sm:$0xff]
    %v2461 = vld [vmem:[%s3 + $0xb0] sm:$0xff]
    %v2462 = vld [vmem:[%s3 + $0xb8] sm:$0xff]
    %v2463 = vld [vmem:[%s3 + $0xc0] sm:$0xff]
    %v2464 = vld [vmem:[%s3 + $0xc8] sm:$0xff]
    %v2465 = vld [vmem:[%s3 + $0xd0] sm:$0xff]
    %v2466 = vld [vmem:[%s3 + $0xd8] sm:$0xff]
    %v2467 = vld [vmem:[%s3 + $0xe0] sm:$0xff]
    %v2468 = vld [vmem:[%s3 + $0xe8] sm:$0xff]
    %v2469 = vld [vmem:[%s3 + $0xf0] sm:$0xff]
    %v2470 = vld [vmem:[%s3 + $0xf8] sm:$0xff]
    %v2471 = vld [vmem:[#allocation6] sm:$0xff]
    %v2472 = vld [vmem:[#allocation6 + $0x8] sm:$0xff]
    %v2473 = vld [vmem:[#allocation6 + $0x10] sm:$0xff]
    %v2474 = vld [vmem:[#allocation6 + $0x18] sm:$0xff]
    %v2475 = vld [vmem:[#allocation6 + $0x20] sm:$0xff]
    %v2476 = vld [vmem:[#allocation6 + $0x28] sm:$0xff]
    %v2477 = vld [vmem:[#allocation6 + $0x30] sm:$0xff]
    %v2478 = vld [vmem:[#allocation6 + $0x38] sm:$0xff]
    %v2479 = vld [vmem:[#allocation6 + $0x40] sm:$0xff]
    %v2480 = vld [vmem:[#allocation6 + $0x48] sm:$0xff]
    %v2481 = vld [vmem:[#allocation6 + $0x50] sm:$0xff]
    %v2482 = vld [vmem:[#allocation6 + $0x58] sm:$0xff]
    %v2483 = vld [vmem:[#allocation6 + $0x60] sm:$0xff]
    %v2484 = vld [vmem:[#allocation6 + $0x68] sm:$0xff]
    %v2485 = vld [vmem:[#allocation6 + $0x70] sm:$0xff]
    %v2486 = vld [vmem:[#allocation6 + $0x78] sm:$0xff]
    %v2487 = vld [vmem:[#allocation6 + $0x80] sm:$0xff]
    %v2488 = vld [vmem:[#allocation6 + $0x88] sm:$0xff]
    %v2489 = vld [vmem:[#allocation6 + $0x90] sm:$0xff]
    %v2490 = vld [vmem:[#allocation6 + $0x98] sm:$0xff]
    %v2491 = vld [vmem:[#allocation6 + $0xa0] sm:$0xff]
    %v2492 = vld [vmem:[#allocation6 + $0xa8] sm:$0xff]
    %v2493 = vld [vmem:[#allocation6 + $0xb0] sm:$0xff]
    %v2494 = vld [vmem:[#allocation6 + $0xb8] sm:$0xff]
    %v2495 = vld [vmem:[#allocation6 + $0xc0] sm:$0xff]
    %v2496 = vld [vmem:[#allocation6 + $0xc8] sm:$0xff]
    %v2497 = vld [vmem:[#allocation6 + $0xd0] sm:$0xff]
    %v2498 = vld [vmem:[#allocation6 + $0xd8] sm:$0xff]
    %v2499 = vld [vmem:[#allocation6 + $0xe0] sm:$0xff]
    %v2500 = vld [vmem:[#allocation6 + $0xe8] sm:$0xff]
    %v2501 = vld [vmem:[#allocation6 + $0xf0] sm:$0xff]
    %v2502 = vld [vmem:[#allocation6 + $0xf8] sm:$0xff]
    %v2503 = vld [vmem:[#allocation6 + $0x100] sm:$0xff]
    %v2504 = vld [vmem:[#allocation6 + $0x108] sm:$0xff]
    %v2505 = vld [vmem:[#allocation6 + $0x110] sm:$0xff]
    %v2506 = vld [vmem:[#allocation6 + $0x118] sm:$0xff]
    %v2507 = vld [vmem:[#allocation6 + $0x120] sm:$0xff]
    %v2508 = vld [vmem:[#allocation6 + $0x128] sm:$0xff]
    %v2509 = vld [vmem:[#allocation6 + $0x130] sm:$0xff]
    %v2510 = vld [vmem:[#allocation6 + $0x138] sm:$0xff]
    %v2511 = vld [vmem:[#allocation6 + $0x140] sm:$0xff]
    %v2512 = vld [vmem:[#allocation6 + $0x148] sm:$0xff]
    %v2513 = vld [vmem:[#allocation6 + $0x150] sm:$0xff]
    %v2514 = vld [vmem:[#allocation6 + $0x158] sm:$0xff]
    %v2515 = vld [vmem:[#allocation6 + $0x160] sm:$0xff]
    %v2516 = vld [vmem:[#allocation6 + $0x168] sm:$0xff]
    %v2517 = vld [vmem:[#allocation6 + $0x170] sm:$0xff]
    %v2518 = vld [vmem:[#allocation6 + $0x178] sm:$0xff]
    %v2519 = vld [vmem:[#allocation6 + $0x180] sm:$0xff]
    %v2520 = vld [vmem:[#allocation6 + $0x188] sm:$0xff]
    %v2521 = vld [vmem:[#allocation6 + $0x190] sm:$0xff]
    %v2522 = vld [vmem:[#allocation6 + $0x198] sm:$0xff]
    %v2523 = vld [vmem:[#allocation6 + $0x1a0] sm:$0xff]
    %v2524 = vld [vmem:[#allocation6 + $0x1a8] sm:$0xff]
    %v2525 = vld [vmem:[#allocation6 + $0x1b0] sm:$0xff]
    %v2526 = vld [vmem:[#allocation6 + $0x1b8] sm:$0xff]
    %v2527 = vld [vmem:[#allocation6 + $0x1c0] sm:$0xff]
    %v2528 = vld [vmem:[#allocation6 + $0x1c8] sm:$0xff]
    %v2529 = vld [vmem:[#allocation6 + $0x1d0] sm:$0xff]
    %v2530 = vld [vmem:[#allocation6 + $0x1d8] sm:$0xff]
    %v2531 = vld [vmem:[#allocation6 + $0x1e0] sm:$0xff]
    %v2532 = vld [vmem:[#allocation6 + $0x1e8] sm:$0xff]
    %v2533 = vld [vmem:[#allocation6 + $0x1f0] sm:$0xff]
    %v2534 = vld [vmem:[#allocation6 + $0x1f8] sm:$0xff]
    %v2535 = vld [vmem:[#allocation6 + $0x200] sm:$0xff]
    %v2536 = vld [vmem:[#allocation6 + $0x208] sm:$0xff]
    %v2537 = vld [vmem:[#allocation6 + $0x210] sm:$0xff]
    %v2538 = vld [vmem:[#allocation6 + $0x218] sm:$0xff]
    %v2539 = vld [vmem:[#allocation6 + $0x220] sm:$0xff]
    %v2540 = vld [vmem:[#allocation6 + $0x228] sm:$0xff]
    %v2541 = vld [vmem:[#allocation6 + $0x230] sm:$0xff]
    %v2542 = vld [vmem:[#allocation6 + $0x238] sm:$0xff]
    %v2543 = vld [vmem:[#allocation6 + $0x240] sm:$0xff]
    %v2544 = vld [vmem:[#allocation6 + $0x248] sm:$0xff]
    %v2545 = vld [vmem:[#allocation6 + $0x250] sm:$0xff]
    %v2546 = vld [vmem:[#allocation6 + $0x258] sm:$0xff]
    %v2547 = vld [vmem:[#allocation6 + $0x260] sm:$0xff]
    %v2548 = vld [vmem:[#allocation6 + $0x268] sm:$0xff]
    %v2549 = vld [vmem:[#allocation6 + $0x270] sm:$0xff]
    %v2550 = vld [vmem:[#allocation6 + $0x278] sm:$0xff]
    %v2551 = vld [vmem:[#allocation6 + $0x280] sm:$0xff]
    %v2552 = vld [vmem:[#allocation6 + $0x288] sm:$0xff]
    %v2553 = vld [vmem:[#allocation6 + $0x290] sm:$0xff]
    %v2554 = vld [vmem:[#allocation6 + $0x298] sm:$0xff]
    %v2555 = vld [vmem:[#allocation6 + $0x2a0] sm:$0xff]
    %v2556 = vld [vmem:[#allocation6 + $0x2a8] sm:$0xff]
    %v2557 = vld [vmem:[#allocation6 + $0x2b0] sm:$0xff]
    %v2558 = vld [vmem:[#allocation6 + $0x2b8] sm:$0xff]
    %v2559 = vld [vmem:[#allocation6 + $0x2c0] sm:$0xff]
    %v2560 = vld [vmem:[#allocation6 + $0x2c8] sm:$0xff]
    %v2561 = vld [vmem:[#allocation6 + $0x2d0] sm:$0xff]
    %v2562 = vld [vmem:[#allocation6 + $0x2d8] sm:$0xff]
    %v2563 = vld [vmem:[#allocation6 + $0x2e0] sm:$0xff]
    %v2564 = vld [vmem:[#allocation6 + $0x2e8] sm:$0xff]
    %v2565 = vld [vmem:[#allocation6 + $0x2f0] sm:$0xff]
    %v2566 = vld [vmem:[#allocation6 + $0x2f8] sm:$0xff]
    %v2567 = vld [vmem:[#allocation6 + $0x300] sm:$0xff]
    %v2568 = vld [vmem:[#allocation6 + $0x308] sm:$0xff]
    %v2569 = vld [vmem:[#allocation6 + $0x310] sm:$0xff]
    %v2570 = vld [vmem:[#allocation6 + $0x318] sm:$0xff]
    %v2571 = vld [vmem:[#allocation6 + $0x320] sm:$0xff]
    %v2572 = vld [vmem:[#allocation6 + $0x328] sm:$0xff]
    %v2573 = vld [vmem:[#allocation6 + $0x330] sm:$0xff]
    %v2574 = vld [vmem:[#allocation6 + $0x338] sm:$0xff]
    %v2575 = vld [vmem:[#allocation6 + $0x340] sm:$0xff]
    %v2576 = vld [vmem:[#allocation6 + $0x348] sm:$0xff]
    %v2577 = vld [vmem:[#allocation6 + $0x350] sm:$0xff]
    %v2578 = vld [vmem:[#allocation6 + $0x358] sm:$0xff]
    %v2579 = vld [vmem:[#allocation6 + $0x360] sm:$0xff]
    %v2580 = vld [vmem:[#allocation6 + $0x368] sm:$0xff]
    %v2581 = vld [vmem:[#allocation6 + $0x370] sm:$0xff]
    %v2582 = vld [vmem:[#allocation6 + $0x378] sm:$0xff]
    %v2583 = vld [vmem:[#allocation6 + $0x380] sm:$0xff]
    %v2584 = vld [vmem:[#allocation6 + $0x388] sm:$0xff]
    %v2585 = vld [vmem:[#allocation6 + $0x390] sm:$0xff]
    %v2586 = vld [vmem:[#allocation6 + $0x398] sm:$0xff]
    %v2587 = vld [vmem:[#allocation6 + $0x3a0] sm:$0xff]
    %v2588 = vld [vmem:[#allocation6 + $0x3a8] sm:$0xff]
    %v2589 = vld [vmem:[#allocation6 + $0x3b0] sm:$0xff]
    %v2590 = vld [vmem:[#allocation6 + $0x3b8] sm:$0xff]
    %v2591 = vld [vmem:[#allocation6 + $0x3c0] sm:$0xff]
    %v2592 = vld [vmem:[#allocation6 + $0x3c8] sm:$0xff]
    %v2593 = vld [vmem:[#allocation6 + $0x3d0] sm:$0xff]
    %v2594 = vld [vmem:[#allocation6 + $0x3d8] sm:$0xff]
    %v2595 = vld [vmem:[#allocation6 + $0x3e0] sm:$0xff]
    %v2596 = vld [vmem:[#allocation6 + $0x3e8] sm:$0xff]
    %v2597 = vld [vmem:[#allocation6 + $0x3f0] sm:$0xff]
    %v2598 = vld [vmem:[#allocation6 + $0x3f8] sm:$0xff]
    %v2599 = vld [vmem:[%s4] sm:$0xff]
    %v2600 = vld [vmem:[%s4 + $0x8] sm:$0xff]
    %v2601 = vld [vmem:[%s4 + $0x10] sm:$0xff]
    %v2602 = vld [vmem:[%s4 + $0x18] sm:$0xff]
    %v2603 = vld [vmem:[%s4 + $0x20] sm:$0xff]
    %v2604 = vld [vmem:[%s4 + $0x28] sm:$0xff]
    %v2605 = vld [vmem:[%s4 + $0x30] sm:$0xff]
    %v2606 = vld [vmem:[%s4 + $0x38] sm:$0xff]
    %2608 = vset.pattern.permute.xlu0 0
    %2609 = vperm.xlu0 %2608, %v2599
    %v2610 = vpop.permute.xlu0 %2609
    %2613 = vset.pattern.permute.xlu0 0
    %2614 = vperm.xlu0 %2613, %v2600
    %v2615 = vpop.permute.xlu0 %2614
    %2618 = vset.pattern.permute.xlu0 0
    %2619 = vperm.xlu0 %2618, %v2601
    %v2620 = vpop.permute.xlu0 %2619
    %2623 = vset.pattern.permute.xlu0 0
    %2624 = vperm.xlu0 %2623, %v2602
    %v2625 = vpop.permute.xlu0 %2624
    %2628 = vset.pattern.permute.xlu0 0
    %2629 = vperm.xlu0 %2628, %v2603
    %v2630 = vpop.permute.xlu0 %2629
    %2633 = vset.pattern.permute.xlu0 0
    %2634 = vperm.xlu0 %2633, %v2604
    %v2635 = vpop.permute.xlu0 %2634
    %2638 = vset.pattern.permute.xlu0 0
    %2639 = vperm.xlu0 %2638, %v2605
    %v2640 = vpop.permute.xlu0 %2639
    %2643 = vset.pattern.permute.xlu0 0
    %2644 = vperm.xlu0 %2643, %v2606
    %v2645 = vpop.permute.xlu0 %2644
    %2647 = vmatprep.subr.mxu0 %v2472
    %2648 = vmatpush1.msra.mxu0 %v2471
    %2649 = vmatprep.subr.mxu0 %v2474
    %2650 = vmatpush1.msra.mxu0 %v2473
    %2651 = vmatprep.subr.mxu0 %v2476
    %2652 = vmatpush1.msra.mxu0 %v2475
    %2653 = vmatprep.subr.mxu0 %v2478
    %2654 = vmatpush1.msra.mxu0 %v2477
    %2655 = vmatprep.subr.mxu0 %v2480
    %2656 = vmatpush1.msra.mxu0 %v2479
    %2657 = vmatprep.subr.mxu0 %v2482
    %2658 = vmatpush1.msra.mxu0 %v2481
    %2659 = vmatprep.subr.mxu0 %v2484
    %2660 = vmatpush1.msra.mxu0 %v2483
    %2661 = vmatprep.subr.mxu0 %v2486
    %2662 = vmatpush1.msra.mxu0 %v2485
    %2663 = vmatprep.subr.mxu0 %v2488
    %2664 = vmatpush1.msra.mxu0 %v2487
    %2665 = vmatprep.subr.mxu0 %v2490
    %2666 = vmatpush1.msra.mxu0 %v2489
    %2667 = vmatprep.subr.mxu0 %v2492
    %2668 = vmatpush1.msra.mxu0 %v2491
    %2669 = vmatprep.subr.mxu0 %v2494
    %2670 = vmatpush1.msra.mxu0 %v2493
    %2671 = vmatprep.subr.mxu0 %v2496
    %2672 = vmatpush1.msra.mxu0 %v2495
    %2673 = vmatprep.subr.mxu0 %v2498
    %2674 = vmatpush1.msra.mxu0 %v2497
    %2675 = vmatprep.subr.mxu0 %v2500
    %2676 = vmatpush1.msra.mxu0 %v2499
    %2677 = vmatprep.subr.mxu0 %v2502
    %2678 = vmatpush1.msra.mxu0 %v2501
    %2679 = vmatprep.subr.mxu0 %v2504
    %2680 = vmatpush1.msra.mxu0 %v2503
    %2681 = vmatprep.subr.mxu0 %v2506
    %2682 = vmatpush1.msra.mxu0 %v2505
    %2683 = vmatprep.subr.mxu0 %v2508
    %2684 = vmatpush1.msra.mxu0 %v2507
    %2685 = vmatprep.subr.mxu0 %v2510
    %2686 = vmatpush1.msra.mxu0 %v2509
    %2687 = vmatprep.subr.mxu0 %v2512
    %2688 = vmatpush1.msra.mxu0 %v2511
    %2689 = vmatprep.subr.mxu0 %v2514
    %2690 = vmatpush1.msra.mxu0 %v2513
    %2691 = vmatprep.subr.mxu0 %v2516
    %2692 = vmatpush1.msra.mxu0 %v2515
    %2693 = vmatprep.subr.mxu0 %v2518
    %2694 = vmatpush1.msra.mxu0 %v2517
    %2695 = vmatprep.subr.mxu0 %v2520
    %2696 = vmatpush1.msra.mxu0 %v2519
    %2697 = vmatprep.subr.mxu0 %v2522
    %2698 = vmatpush1.msra.mxu0 %v2521
    %2699 = vmatprep.subr.mxu0 %v2524
    %2700 = vmatpush1.msra.mxu0 %v2523
    %2701 = vmatprep.subr.mxu0 %v2526
    %2702 = vmatpush1.msra.mxu0 %v2525
    %2703 = vmatprep.subr.mxu0 %v2528
    %2704 = vmatpush1.msra.mxu0 %v2527
    %2705 = vmatprep.subr.mxu0 %v2530
    %2706 = vmatpush1.msra.mxu0 %v2529
    %2707 = vmatprep.subr.mxu0 %v2532
    %2708 = vmatpush1.msra.mxu0 %v2531
    %2709 = vmatprep.subr.mxu0 %v2534
    %2710 = vmatpush1.msra.mxu0 %v2533
    %2711 = vmatprep.mubr.f32.mxu0 %v2440
    %2712 = vmatmul.mubr.f32.gmra.mrb[0].mxu0 %v2439
    %v2713 = vpop.f32.mrb[0].mxu0
    %v2714 = vadd.f32 %v2610, %v2713
    %v2715 = vpop.f32.mrb[0].mxu0
    %v2716 = vadd.f32 %v2610, %v2715
    %2717 = vmatprep.mubr.f32.mxu0 %v2444
    %2718 = vmatmul.mubr.f32.gmra.mrb[0].mxu0 %v2443
    %v2719 = vpop.f32.mrb[0].mxu0
    %v2720 = vadd.f32 %v2615, %v2719
    %v2721 = vpop.f32.mrb[0].mxu0
    %v2722 = vadd.f32 %v2615, %v2721
    %2723 = vmatprep.mubr.f32.mxu0 %v2448
    %2724 = vmatmul.mubr.f32.gmra.mrb[0].mxu0 %v2447
    %v2725 = vpop.f32.mrb[0].mxu0
    %v2726 = vadd.f32 %v2620, %v2725
    %v2727 = vpop.f32.mrb[0].mxu0
    %v2728 = vadd.f32 %v2620, %v2727
    %2729 = vmatprep.mubr.f32.mxu0 %v2452
    %2730 = vmatmul.mubr.f32.gmra.mrb[0].mxu0 %v2451
    %v2731 = vpop.f32.mrb[0].mxu0
    %v2732 = vadd.f32 %v2625, %v2731
    %v2733 = vpop.f32.mrb[0].mxu0
    %v2734 = vadd.f32 %v2625, %v2733
    %2735 = vmatprep.mubr.f32.mxu0 %v2456
    %2736 = vmatmul.mubr.f32.gmra.mrb[0].mxu0 %v2455
    %v2737 = vpop.f32.mrb[0].mxu0
    %v2738 = vadd.f32 %v2630, %v2737
    %v2739 = vpop.f32.mrb[0].mxu0
    %v2740 = vadd.f32 %v2630, %v2739
    %2741 = vmatprep.mubr.f32.mxu0 %v2460
    %2742 = vmatmul.mubr.f32.gmra.mrb[0].mxu0 %v2459
    %v2743 = vpop.f32.mrb[0].mxu0
    %v2744 = vadd.f32 %v2635, %v2743
    %v2745 = vpop.f32.mrb[0].mxu0
    %v2746 = vadd.f32 %v2635, %v2745
    %2747 = vmatprep.mubr.f32.mxu0 %v2464
    %2748 = vmatmul.mubr.f32.gmra.mrb[0].mxu0 %v2463
    %v2749 = vpop.f32.mrb[0].mxu0
    %v2750 = vadd.f32 %v2640, %v2749
    %v2751 = vpop.f32.mrb[0].mxu0
    %v2752 = vadd.f32 %v2640, %v2751
    %2753 = vmatprep.mubr.f32.mxu0 %v2468
    %2754 = vmatmul.mubr.f32.gmra.mrb[0].mxu0 %v2467
    %v2755 = vpop.f32.mrb[0].mxu0
    %v2756 = vadd.f32 %v2645, %v2755
    %v2757 = vpop.f32.mrb[0].mxu0
    %v2758 = vadd.f32 %v2645, %v2757
    %2759 = vdwg.mxu0
    %2760 = vmatprep.subr.mxu0 %v2536
    %2761 = vmatpush1.msra.mxu0 %v2535
    %2762 = vmatprep.subr.mxu0 %v2538
    %2763 = vmatpush1.msra.mxu0 %v2537
    %2764 = vmatprep.subr.mxu0 %v2540
    %2765 = vmatpush1.msra.mxu0 %v2539
    %2766 = vmatprep.subr.mxu0 %v2542
    %2767 = vmatpush1.msra.mxu0 %v2541
    %2768 = vmatprep.subr.mxu0 %v2544
    %2769 = vmatpush1.msra.mxu0 %v2543
    %2770 = vmatprep.subr.mxu0 %v2546
    %2771 = vmatpush1.msra.mxu0 %v2545
    %2772 = vmatprep.subr.mxu0 %v2548
    %2773 = vmatpush1.msra.mxu0 %v2547
    %2774 = vmatprep.subr.mxu0 %v2550
    %2775 = vmatpush1.msra.mxu0 %v2549
    %2776 = vmatprep.subr.mxu0 %v2552
    %2777 = vmatpush1.msra.mxu0 %v2551
    %2778 = vmatprep.subr.mxu0 %v2554
    %2779 = vmatpush1.msra.mxu0 %v2553
    %2780 = vmatprep.subr.mxu0 %v2556
    %2781 = vmatpush1.msra.mxu0 %v2555
    %2782 = vmatprep.subr.mxu0 %v2558
    %2783 = vmatpush1.msra.mxu0 %v2557
    %2784 = vmatprep.subr.mxu0 %v2560
    %2785 = vmatpush1.msra.mxu0 %v2559
    %2786 = vmatprep.subr.mxu0 %v2562
    %2787 = vmatpush1.msra.mxu0 %v2561
    %2788 = vmatprep.subr.mxu0 %v2564
    %2789 = vmatpush1.msra.mxu0 %v2563
    %2790 = vmatprep.subr.mxu0 %v2566
    %2791 = vmatpush1.msra.mxu0 %v2565
    %2792 = vmatprep.subr.mxu0 %v2568
    %2793 = vmatpush1.msra.mxu0 %v2567
    %2794 = vmatprep.subr.mxu0 %v2570
    %2795 = vmatpush1.msra.mxu0 %v2569
    %2796 = vmatprep.subr.mxu0 %v2572
    %2797 = vmatpush1.msra.mxu0 %v2571
    %2798 = vmatprep.subr.mxu0 %v2574
    %2799 = vmatpush1.msra.mxu0 %v2573
    %2800 = vmatprep.subr.mxu0 %v2576
    %2801 = vmatpush1.msra.mxu0 %v2575
    %2802 = vmatprep.subr.mxu0 %v2578
    %2803 = vmatpush1.msra.mxu0 %v2577
    %2804 = vmatprep.subr.mxu0 %v2580
    %2805 = vmatpush1.msra.mxu0 %v2579
    %2806 = vmatprep.subr.mxu0 %v2582
    %2807 = vmatpush1.msra.mxu0 %v2581
    %2808 = vmatprep.subr.mxu0 %v2584
    %2809 = vmatpush1.msra.mxu0 %v2583
    %2810 = vmatprep.subr.mxu0 %v2586
    %2811 = vmatpush1.msra.mxu0 %v2585
    %2812 = vmatprep.subr.mxu0 %v2588
    %2813 = vmatpush1.msra.mxu0 %v2587
    %2814 = vmatprep.subr.mxu0 %v2590
    %2815 = vmatpush1.msra.mxu0 %v2589
    %2816 = vmatprep.subr.mxu0 %v2592
    %2817 = vmatpush1.msra.mxu0 %v2591
    %2818 = vmatprep.subr.mxu0 %v2594
    %2819 = vmatpush1.msra.mxu0 %v2593
    %2820 = vmatprep.subr.mxu0 %v2596
    %2821 = vmatpush1.msra.mxu0 %v2595
    %2822 = vmatprep.subr.mxu0 %v2598
    %2823 = vmatpush1.msra.mxu0 %v2597
    %2824 = vmatprep.mubr.f32.mxu0 %v2442
    %2825 = vmatmul.mubr.f32.gmra.mrb[0].mxu0 %v2441
    %v2826 = vpop.f32.mrb[0].mxu0
    %v2827 = vadd.f32 %v2714, %v2826
    %v2828 = vpop.f32.mrb[0].mxu0
    %v2829 = vadd.f32 %v2716, %v2828
    %2830 = vmatprep.mubr.f32.mxu0 %v2446
    %2831 = vmatmul.mubr.f32.gmra.mrb[0].mxu0 %v2445
    %v2832 = vpop.f32.mrb[0].mxu0
    %v2833 = vadd.f32 %v2720, %v2832
    %v2834 = vpop.f32.mrb[0].mxu0
    %v2835 = vadd.f32 %v2722, %v2834
    %2836 = vmatprep.mubr.f32.mxu0 %v2450
    %2837 = vmatmul.mubr.f32.gmra.mrb[0].mxu0 %v2449
    %v2838 = vpop.f32.mrb[0].mxu0
    %v2839 = vadd.f32 %v2726, %v2838
    %v2840 = vpop.f32.mrb[0].mxu0
    %v2841 = vadd.f32 %v2728, %v2840
    %2842 = vmatprep.mubr.f32.mxu0 %v2454
    %2843 = vmatmul.mubr.f32.gmra.mrb[0].mxu0 %v2453
    %v2844 = vpop.f32.mrb[0].mxu0
    %v2845 = vadd.f32 %v2732, %v2844
    %v2846 = vpop.f32.mrb[0].mxu0
    %v2847 = vadd.f32 %v2734, %v2846
    %2848 = vmatprep.mubr.f32.mxu0 %v2458
    %2849 = vmatmul.mubr.f32.gmra.mrb[0].mxu0 %v2457
    %v2850 = vpop.f32.mrb[0].mxu0
    %v2851 = vadd.f32 %v2738, %v2850
    %v2852 = vpop.f32.mrb[0].mxu0
    %v2853 = vadd.f32 %v2740, %v2852
    %2854 = vmatprep.mubr.f32.mxu0 %v2462
    %2855 = vmatmul.mubr.f32.gmra.mrb[0].mxu0 %v2461
    %v2856 = vpop.f32.mrb[0].mxu0
    %v2857 = vadd.f32 %v2744, %v2856
    %v2858 = vpop.f32.mrb[0].mxu0
    %v2859 = vadd.f32 %v2746, %v2858
    %2860 = vmatprep.mubr.f32.mxu0 %v2466
    %2861 = vmatmul.mubr.f32.gmra.mrb[0].mxu0 %v2465
    %v2862 = vpop.f32.mrb[0].mxu0
    %v2863 = vadd.f32 %v2750, %v2862
    %v2864 = vpop.f32.mrb[0].mxu0
    %v2865 = vadd.f32 %v2752, %v2864
    %2866 = vmatprep.mubr.f32.mxu0 %v2470
    %2867 = vmatmul.mubr.f32.gmra.mrb[0].mxu0 %v2469
    %v2868 = vpop.f32.mrb[0].mxu0
    %v2869 = vadd.f32 %v2756, %v2868
    %v2870 = vpop.f32.mrb[0].mxu0
    %v2871 = vadd.f32 %v2758, %v2870
    %2872 = vdwg.mxu0
    %vm2873 = vcmp.ge.f32.partialorder %v2827, 0.0
    %vm2874 = vcmp.ge.f32.partialorder %v2829, 0.0
    %vm2875 = vcmp.ge.f32.partialorder %v2833, 0.0
    %vm2876 = vcmp.ge.f32.partialorder %v2835, 0.0
    %vm2877 = vcmp.ge.f32.partialorder %v2839, 0.0
    %vm2878 = vcmp.ge.f32.partialorder %v2841, 0.0
    %vm2879 = vcmp.ge.f32.partialorder %v2845, 0.0
    %vm2880 = vcmp.ge.f32.partialorder %v2847, 0.0
    %vm2881 = vcmp.ge.f32.partialorder %v2851, 0.0
    %vm2882 = vcmp.ge.f32.partialorder %v2853, 0.0
    %vm2883 = vcmp.ge.f32.partialorder %v2857, 0.0
    %vm2884 = vcmp.ge.f32.partialorder %v2859, 0.0
    %vm2885 = vcmp.ge.f32.partialorder %v2863, 0.0
    %vm2886 = vcmp.ge.f32.partialorder %v2865, 0.0
    %vm2887 = vcmp.ge.f32.partialorder %v2869, 0.0
    %vm2888 = vcmp.ge.f32.partialorder %v2871, 0.0
    %v2889 = vmul.f32 %v2827, 0.01
    %v2890 = vmul.f32 %v2829, 0.01
    %v2891 = vmul.f32 %v2833, 0.01
    %v2892 = vmul.f32 %v2835, 0.01
    %v2893 = vmul.f32 %v2839, 0.01
    %v2894 = vmul.f32 %v2841, 0.01
    %v2895 = vmul.f32 %v2845, 0.01
    %v2896 = vmul.f32 %v2847, 0.01
    %v2897 = vmul.f32 %v2851, 0.01
    %v2898 = vmul.f32 %v2853, 0.01
    %v2899 = vmul.f32 %v2857, 0.01
    %v2900 = vmul.f32 %v2859, 0.01
    %v2901 = vmul.f32 %v2863, 0.01
    %v2902 = vmul.f32 %v2865, 0.01
    %v2903 = vmul.f32 %v2869, 0.01
    %v2904 = vmul.f32 %v2871, 0.01
    %v2905 = vsel %vm2873, %v2827, %v2889
    %v2906 = vsel %vm2874, %v2829, %v2890
    %v2907 = vsel %vm2875, %v2833, %v2891
    %v2908 = vsel %vm2876, %v2835, %v2892
    %v2909 = vsel %vm2877, %v2839, %v2893
    %v2910 = vsel %vm2878, %v2841, %v2894
    %v2911 = vsel %vm2879, %v2845, %v2895
    %v2912 = vsel %vm2880, %v2847, %v2896
    %v2913 = vsel %vm2881, %v2851, %v2897
    %v2914 = vsel %vm2882, %v2853, %v2898
    %v2915 = vsel %vm2883, %v2857, %v2899
    %v2916 = vsel %vm2884, %v2859, %v2900
    %v2917 = vsel %vm2885, %v2863, %v2901
    %v2918 = vsel %vm2886, %v2865, %v2902
    %v2919 = vsel %vm2887, %v2869, %v2903
    %v2920 = vsel %vm2888, %v2871, %v2904
    %vm2921 = vcmask 31744
    %2922 = vst.msk [vmem:[#allocation4] sm:$0xff] %vm2921, 0.0
    %2923 = vst.msk [vmem:[#allocation4 + $0x10] sm:$0xff] %vm2921, 0.0
    %2924 = vst.msk [vmem:[#allocation4 + $0x20] sm:$0xff] %vm2921, 0.0
    %2925 = vst.msk [vmem:[#allocation4 + $0x30] sm:$0xff] %vm2921, 0.0
    %2926 = vst.msk [vmem:[#allocation4 + $0x40] sm:$0xff] %vm2921, 0.0
    %2927 = vst.msk [vmem:[#allocation4 + $0x50] sm:$0xff] %vm2921, 0.0
    %2928 = vst.msk [vmem:[#allocation4 + $0x60] sm:$0xff] %vm2921, 0.0
    %2929 = vst.msk [vmem:[#allocation4 + $0x70] sm:$0xff] %vm2921, 0.0
    %2930 = vst.msk [vmem:[#allocation4 + $0x80] sm:$0xff] %vm2921, 0.0
    %2931 = vst.msk [vmem:[#allocation4 + $0x90] sm:$0xff] %vm2921, 0.0
    %2932 = vst.msk [vmem:[#allocation4 + $0xa0] sm:$0xff] %vm2921, 0.0
    %2933 = vst.msk [vmem:[#allocation4 + $0xb0] sm:$0xff] %vm2921, 0.0
    %2934 = vst.msk [vmem:[#allocation4 + $0xc0] sm:$0xff] %vm2921, 0.0
    %2935 = vst.msk [vmem:[#allocation4 + $0xd0] sm:$0xff] %vm2921, 0.0
    %2936 = vst.msk [vmem:[#allocation4 + $0xe0] sm:$0xff] %vm2921, 0.0
    %2937 = vst.msk [vmem:[#allocation4 + $0xf0] sm:$0xff] %vm2921, 0.0
    %vm2938 = vcmask 56352
    %2939 = vst.msk [vmem:[#allocation4 + $0x8] sm:$0xff] %vm2938, 0.0
    %2940 = vst.msk [vmem:[#allocation4 + $0x18] sm:$0xff] %vm2938, 0.0
    %2941 = vst.msk [vmem:[#allocation4 + $0x28] sm:$0xff] %vm2938, 0.0
    %2942 = vst.msk [vmem:[#allocation4 + $0x38] sm:$0xff] %vm2938, 0.0
    %2943 = vst.msk [vmem:[#allocation4 + $0x48] sm:$0xff] %vm2938, 0.0
    %2944 = vst.msk [vmem:[#allocation4 + $0x58] sm:$0xff] %vm2938, 0.0
    %2945 = vst.msk [vmem:[#allocation4 + $0x68] sm:$0xff] %vm2938, 0.0
    %2946 = vst.msk [vmem:[#allocation4 + $0x78] sm:$0xff] %vm2938, 0.0
    %2947 = vst.msk [vmem:[#allocation4 + $0x88] sm:$0xff] %vm2938, 0.0
    %2948 = vst.msk [vmem:[#allocation4 + $0x98] sm:$0xff] %vm2938, 0.0
    %2949 = vst.msk [vmem:[#allocation4 + $0xa8] sm:$0xff] %vm2938, 0.0
    %2950 = vst.msk [vmem:[#allocation4 + $0xb8] sm:$0xff] %vm2938, 0.0
    %2951 = vst.msk [vmem:[#allocation4 + $0xc8] sm:$0xff] %vm2938, 0.0
    %2952 = vst.msk [vmem:[#allocation4 + $0xd8] sm:$0xff] %vm2938, 0.0
    %2953 = vst.msk [vmem:[#allocation4 + $0xe8] sm:$0xff] %vm2938, 0.0
    %2954 = vst.msk [vmem:[#allocation4 + $0xf8] sm:$0xff] %vm2938, 0.0
    %2963 = vrot.lane.b32.xlu0 %v2905, 4
    %v2964 = vpop.permute.xlu0 %2963
    %2965 = vrot.lane.b32.xlu0 %v2907, 4
    %v2966 = vpop.permute.xlu0 %2965
    %2967 = vrot.lane.b32.xlu0 %v2909, 4
    %v2968 = vpop.permute.xlu0 %2967
    %2969 = vrot.lane.b32.xlu0 %v2911, 4
    %v2970 = vpop.permute.xlu0 %2969
    %2971 = vrot.lane.b32.xlu0 %v2913, 4
    %v2972 = vpop.permute.xlu0 %2971
    %2973 = vrot.lane.b32.xlu0 %v2915, 4
    %v2974 = vpop.permute.xlu0 %2973
    %2975 = vrot.lane.b32.xlu0 %v2917, 4
    %v2976 = vpop.permute.xlu0 %2975
    %2977 = vrot.lane.b32.xlu0 %v2919, 4
    %v2978 = vpop.permute.xlu0 %2977
    %vm2987 = vcmask 1047584
    %2988 = vst.msk [vmem:[#allocation4] sm:$0xff] %vm2987, %v2964
    %2989 = vst.msk [vmem:[#allocation4 + $0x8] sm:$0xff] %vm2921, %v2964
    %2990 = vst.msk [vmem:[#allocation4 + $0x10] sm:$0xff] %vm2987, %v2966
    %2991 = vst.msk [vmem:[#allocation4 + $0x18] sm:$0xff] %vm2921, %v2966
    %2992 = vst.msk [vmem:[#allocation4 + $0x20] sm:$0xff] %vm2987, %v2968
    %2993 = vst.msk [vmem:[#allocation4 + $0x28] sm:$0xff] %vm2921, %v2968
    %2994 = vst.msk [vmem:[#allocation4 + $0x30] sm:$0xff] %vm2987, %v2970
    %2995 = vst.msk [vmem:[#allocation4 + $0x38] sm:$0xff] %vm2921, %v2970
    %2996 = vst.msk [vmem:[#allocation4 + $0x40] sm:$0xff] %vm2987, %v2972
    %2997 = vst.msk [vmem:[#allocation4 + $0x48] sm:$0xff] %vm2921, %v2972
    %2998 = vst.msk [vmem:[#allocation4 + $0x50] sm:$0xff] %vm2987, %v2974
    %2999 = vst.msk [vmem:[#allocation4 + $0x58] sm:$0xff] %vm2921, %v2974
    %3000 = vst.msk [vmem:[#allocation4 + $0x60] sm:$0xff] %vm2987, %v2976
    %3001 = vst.msk [vmem:[#allocation4 + $0x68] sm:$0xff] %vm2921, %v2976
    %3002 = vst.msk [vmem:[#allocation4 + $0x70] sm:$0xff] %vm2987, %v2978
    %3003 = vst.msk [vmem:[#allocation4 + $0x78] sm:$0xff] %vm2921, %v2978
    %3012 = vrot.lane.b32.xlu0 %v2906, 4
    %v3013 = vpop.permute.xlu0 %3012
    %3014 = vrot.lane.b32.xlu0 %v2908, 4
    %v3015 = vpop.permute.xlu0 %3014
    %3016 = vrot.lane.b32.xlu0 %v2910, 4
    %v3017 = vpop.permute.xlu0 %3016
    %3018 = vrot.lane.b32.xlu0 %v2912, 4
    %v3019 = vpop.permute.xlu0 %3018
    %3020 = vrot.lane.b32.xlu0 %v2914, 4
    %v3021 = vpop.permute.xlu0 %3020
    %3022 = vrot.lane.b32.xlu0 %v2916, 4
    %v3023 = vpop.permute.xlu0 %3022
    %3024 = vrot.lane.b32.xlu0 %v2918, 4
    %v3025 = vpop.permute.xlu0 %3024
    %3026 = vrot.lane.b32.xlu0 %v2920, 4
    %v3027 = vpop.permute.xlu0 %3026
    %s3036 = scalar_lea.vmem [#allocation4], 128
    %3037 = vst.msk [vmem:[%s3036] sm:$0xff] %vm2987, %v3013
    %3038 = vst.msk [vmem:[%s3036 + $0x8] sm:$0xff] %vm2921, %v3013
    %3039 = vst.msk [vmem:[%s3036 + $0x10] sm:$0xff] %vm2987, %v3015
    %3040 = vst.msk [vmem:[%s3036 + $0x18] sm:$0xff] %vm2921, %v3015
    %3041 = vst.msk [vmem:[%s3036 + $0x20] sm:$0xff] %vm2987, %v3017
    %3042 = vst.msk [vmem:[%s3036 + $0x28] sm:$0xff] %vm2921, %v3017
    %3043 = vst.msk [vmem:[%s3036 + $0x30] sm:$0xff] %vm2987, %v3019
    %3044 = vst.msk [vmem:[%s3036 + $0x38] sm:$0xff] %vm2921, %v3019
    %3045 = vst.msk [vmem:[%s3036 + $0x40] sm:$0xff] %vm2987, %v3021
    %3046 = vst.msk [vmem:[%s3036 + $0x48] sm:$0xff] %vm2921, %v3021
    %3047 = vst.msk [vmem:[%s3036 + $0x50] sm:$0xff] %vm2987, %v3023
    %3048 = vst.msk [vmem:[%s3036 + $0x58] sm:$0xff] %vm2921, %v3023
    %3049 = vst.msk [vmem:[%s3036 + $0x60] sm:$0xff] %vm2987, %v3025
    %3050 = vst.msk [vmem:[%s3036 + $0x68] sm:$0xff] %vm2921, %v3025
    %3051 = vst.msk [vmem:[%s3036 + $0x70] sm:$0xff] %vm2987, %v3027
    %3052 = vst.msk [vmem:[%s3036 + $0x78] sm:$0xff] %vm2921, %v3027
    %v3053 = vld [vmem:[#allocation4] sm:$0xff]
    %v3054 = vld [vmem:[#allocation4 + $0x10] sm:$0xff]
    %v3055 = vld [vmem:[#allocation4 + $0x20] sm:$0xff]
    %v3056 = vld [vmem:[#allocation4 + $0x30] sm:$0xff]
    %v3057 = vld [vmem:[#allocation4 + $0x40] sm:$0xff]
    %v3058 = vld [vmem:[#allocation4 + $0x50] sm:$0xff]
    %v3059 = vld [vmem:[#allocation4 + $0x60] sm:$0xff]
    %v3060 = vld [vmem:[#allocation4 + $0x70] sm:$0xff]
    %3061 = vst [vmem:[#allocation6] sm:$0xff] %v3053
    %3062 = vst [vmem:[#allocation6 + $0x10] sm:$0xff] %v3054
    %3063 = vst [vmem:[#allocation6 + $0x20] sm:$0xff] %v3055
    %3064 = vst [vmem:[#allocation6 + $0x30] sm:$0xff] %v3056
    %3065 = vst [vmem:[#allocation6 + $0x40] sm:$0xff] %v3057
    %3066 = vst [vmem:[#allocation6 + $0x50] sm:$0xff] %v3058
    %3067 = vst [vmem:[#allocation6 + $0x60] sm:$0xff] %v3059
    %3068 = vst [vmem:[#allocation6 + $0x70] sm:$0xff] %v3060
    %v3069 = vld [vmem:[#allocation4] sm:$0xff]
    %v3070 = vld [vmem:[#allocation4 + $0x8] sm:$0xff]
    %v3071 = vld [vmem:[#allocation4 + $0x10] sm:$0xff]
    %v3072 = vld [vmem:[#allocation4 + $0x18] sm:$0xff]
    %v3073 = vld [vmem:[#allocation4 + $0x20] sm:$0xff]
    %v3074 = vld [vmem:[#allocation4 + $0x28] sm:$0xff]
    %v3075 = vld [vmem:[#allocation4 + $0x30] sm:$0xff]
    %v3076 = vld [vmem:[#allocation4 + $0x38] sm:$0xff]
    %v3077 = vld [vmem:[#allocation4 + $0x40] sm:$0xff]
    %v3078 = vld [vmem:[#allocation4 + $0x48] sm:$0xff]
    %v3079 = vld [vmem:[#allocation4 + $0x50] sm:$0xff]
    %v3080 = vld [vmem:[#allocation4 + $0x58] sm:$0xff]
    %v3081 = vld [vmem:[#allocation4 + $0x60] sm:$0xff]
    %v3082 = vld [vmem:[#allocation4 + $0x68] sm:$0xff]
    %v3083 = vld [vmem:[#allocation4 + $0x70] sm:$0xff]
    %v3084 = vld [vmem:[#allocation4 + $0x78] sm:$0xff]
    %3101 = vrot.lane.b32.xlu0 %v3069, 127
    %v3102 = vpop.permute.xlu0 %3101
    %3103 = vrot.lane.b32.xlu0 %v3070, 127
    %v3104 = vpop.permute.xlu0 %3103
    %3105 = vrot.lane.b32.xlu0 %v3071, 127
    %v3106 = vpop.permute.xlu0 %3105
    %3107 = vrot.lane.b32.xlu0 %v3072, 127
    %v3108 = vpop.permute.xlu0 %3107
    %3109 = vrot.lane.b32.xlu0 %v3073, 127
    %v3110 = vpop.permute.xlu0 %3109
    %3111 = vrot.lane.b32.xlu0 %v3074, 127
    %v3112 = vpop.permute.xlu0 %3111
    %3113 = vrot.lane.b32.xlu0 %v3075, 127
    %v3114 = vpop.permute.xlu0 %3113
    %3115 = vrot.lane.b32.xlu0 %v3076, 127
    %v3116 = vpop.permute.xlu0 %3115
    %3117 = vrot.lane.b32.xlu0 %v3077, 127
    %v3118 = vpop.permute.xlu0 %3117
    %3119 = vrot.lane.b32.xlu0 %v3078, 127
    %v3120 = vpop.permute.xlu0 %3119
    %3121 = vrot.lane.b32.xlu0 %v3079, 127
    %v3122 = vpop.permute.xlu0 %3121
    %3123 = vrot.lane.b32.xlu0 %v3080, 127
    %v3124 = vpop.permute.xlu0 %3123
    %3125 = vrot.lane.b32.xlu0 %v3081, 127
    %v3126 = vpop.permute.xlu0 %3125
    %3127 = vrot.lane.b32.xlu0 %v3082, 127
    %v3128 = vpop.permute.xlu0 %3127
    %3129 = vrot.lane.b32.xlu0 %v3083, 127
    %v3130 = vpop.permute.xlu0 %3129
    %3131 = vrot.lane.b32.xlu0 %v3084, 127
    %v3132 = vpop.permute.xlu0 %3131
    %v3133 = vsel %vm118, %v3102, %v3104
    %v3134 = vsel %vm118, %v3106, %v3108
    %v3135 = vsel %vm118, %v3110, %v3112
    %v3136 = vsel %vm118, %v3114, %v3116
    %v3137 = vsel %vm118, %v3118, %v3120
    %v3138 = vsel %vm118, %v3122, %v3124
    %v3139 = vsel %vm118, %v3126, %v3128
    %v3140 = vsel %vm118, %v3130, %v3132
    %3149 = vst [vmem:[#allocation6 + $0x80] sm:$0xff] %v3133
    %3150 = vst [vmem:[#allocation6 + $0x90] sm:$0xff] %v3134
    %3151 = vst [vmem:[#allocation6 + $0xa0] sm:$0xff] %v3135
    %3152 = vst [vmem:[#allocation6 + $0xb0] sm:$0xff] %v3136
    %3153 = vst [vmem:[#allocation6 + $0xc0] sm:$0xff] %v3137
    %3154 = vst [vmem:[#allocation6 + $0xd0] sm:$0xff] %v3138
    %3155 = vst [vmem:[#allocation6 + $0xe0] sm:$0xff] %v3139
    %3156 = vst [vmem:[#allocation6 + $0xf0] sm:$0xff] %v3140
    %v3157 = vld [vmem:[#allocation4] sm:$0xff]
    %v3158 = vld [vmem:[#allocation4 + $0x8] sm:$0xff]
    %v3159 = vld [vmem:[#allocation4 + $0x10] sm:$0xff]
    %v3160 = vld [vmem:[#allocation4 + $0x18] sm:$0xff]
    %v3161 = vld [vmem:[#allocation4 + $0x20] sm:$0xff]
    %v3162 = vld [vmem:[#allocation4 + $0x28] sm:$0xff]
    %v3163 = vld [vmem:[#allocation4 + $0x30] sm:$0xff]
    %v3164 = vld [vmem:[#allocation4 + $0x38] sm:$0xff]
    %v3165 = vld [vmem:[#allocation4 + $0x40] sm:$0xff]
    %v3166 = vld [vmem:[#allocation4 + $0x48] sm:$0xff]
    %v3167 = vld [vmem:[#allocation4 + $0x50] sm:$0xff]
    %v3168 = vld [vmem:[#allocation4 + $0x58] sm:$0xff]
    %v3169 = vld [vmem:[#allocation4 + $0x60] sm:$0xff]
    %v3170 = vld [vmem:[#allocation4 + $0x68] sm:$0xff]
    %v3171 = vld [vmem:[#allocation4 + $0x70] sm:$0xff]
    %v3172 = vld [vmem:[#allocation4 + $0x78] sm:$0xff]
    %3189 = vrot.lane.b32.xlu0 %v3157, 126
    %v3190 = vpop.permute.xlu0 %3189
    %3191 = vrot.lane.b32.xlu0 %v3158, 126
    %v3192 = vpop.permute.xlu0 %3191
    %3193 = vrot.lane.b32.xlu0 %v3159, 126
    %v3194 = vpop.permute.xlu0 %3193
    %3195 = vrot.lane.b32.xlu0 %v3160, 126
    %v3196 = vpop.permute.xlu0 %3195
    %3197 = vrot.lane.b32.xlu0 %v3161, 126
    %v3198 = vpop.permute.xlu0 %3197
    %3199 = vrot.lane.b32.xlu0 %v3162, 126
    %v3200 = vpop.permute.xlu0 %3199
    %3201 = vrot.lane.b32.xlu0 %v3163, 126
    %v3202 = vpop.permute.xlu0 %3201
    %3203 = vrot.lane.b32.xlu0 %v3164, 126
    %v3204 = vpop.permute.xlu0 %3203
    %3205 = vrot.lane.b32.xlu0 %v3165, 126
    %v3206 = vpop.permute.xlu0 %3205
    %3207 = vrot.lane.b32.xlu0 %v3166, 126
    %v3208 = vpop.permute.xlu0 %3207
    %3209 = vrot.lane.b32.xlu0 %v3167, 126
    %v3210 = vpop.permute.xlu0 %3209
    %3211 = vrot.lane.b32.xlu0 %v3168, 126
    %v3212 = vpop.permute.xlu0 %3211
    %3213 = vrot.lane.b32.xlu0 %v3169, 126
    %v3214 = vpop.permute.xlu0 %3213
    %3215 = vrot.lane.b32.xlu0 %v3170, 126
    %v3216 = vpop.permute.xlu0 %3215
    %3217 = vrot.lane.b32.xlu0 %v3171, 126
    %v3218 = vpop.permute.xlu0 %3217
    %3219 = vrot.lane.b32.xlu0 %v3172, 126
    %v3220 = vpop.permute.xlu0 %3219
    %v3221 = vsel %vm130, %v3190, %v3192
    %v3222 = vsel %vm130, %v3194, %v3196
    %v3223 = vsel %vm130, %v3198, %v3200
    %v3224 = vsel %vm130, %v3202, %v3204
    %v3225 = vsel %vm130, %v3206, %v3208
    %v3226 = vsel %vm130, %v3210, %v3212
    %v3227 = vsel %vm130, %v3214, %v3216
    %v3228 = vsel %vm130, %v3218, %v3220
    %3237 = vst [vmem:[#allocation6 + $0x100] sm:$0xff] %v3221
    %3238 = vst [vmem:[#allocation6 + $0x110] sm:$0xff] %v3222
    %3239 = vst [vmem:[#allocation6 + $0x120] sm:$0xff] %v3223
    %3240 = vst [vmem:[#allocation6 + $0x130] sm:$0xff] %v3224
    %3241 = vst [vmem:[#allocation6 + $0x140] sm:$0xff] %v3225
    %3242 = vst [vmem:[#allocation6 + $0x150] sm:$0xff] %v3226
    %3243 = vst [vmem:[#allocation6 + $0x160] sm:$0xff] %v3227
    %3244 = vst [vmem:[#allocation6 + $0x170] sm:$0xff] %v3228
    %v3245 = vld [vmem:[#allocation4] sm:$0xff]
    %v3246 = vld [vmem:[#allocation4 + $0x8] sm:$0xff]
    %v3247 = vld [vmem:[#allocation4 + $0x10] sm:$0xff]
    %v3248 = vld [vmem:[#allocation4 + $0x18] sm:$0xff]
    %v3249 = vld [vmem:[#allocation4 + $0x20] sm:$0xff]
    %v3250 = vld [vmem:[#allocation4 + $0x28] sm:$0xff]
    %v3251 = vld [vmem:[#allocation4 + $0x30] sm:$0xff]
    %v3252 = vld [vmem:[#allocation4 + $0x38] sm:$0xff]
    %v3253 = vld [vmem:[#allocation4 + $0x40] sm:$0xff]
    %v3254 = vld [vmem:[#allocation4 + $0x48] sm:$0xff]
    %v3255 = vld [vmem:[#allocation4 + $0x50] sm:$0xff]
    %v3256 = vld [vmem:[#allocation4 + $0x58] sm:$0xff]
    %v3257 = vld [vmem:[#allocation4 + $0x60] sm:$0xff]
    %v3258 = vld [vmem:[#allocation4 + $0x68] sm:$0xff]
    %v3259 = vld [vmem:[#allocation4 + $0x70] sm:$0xff]
    %v3260 = vld [vmem:[#allocation4 + $0x78] sm:$0xff]
    %3277 = vrot.lane.b32.xlu0 %v3245, 125
    %v3278 = vpop.permute.xlu0 %3277
    %3279 = vrot.lane.b32.xlu0 %v3246, 125
    %v3280 = vpop.permute.xlu0 %3279
    %3281 = vrot.lane.b32.xlu0 %v3247, 125
    %v3282 = vpop.permute.xlu0 %3281
    %3283 = vrot.lane.b32.xlu0 %v3248, 125
    %v3284 = vpop.permute.xlu0 %3283
    %3285 = vrot.lane.b32.xlu0 %v3249, 125
    %v3286 = vpop.permute.xlu0 %3285
    %3287 = vrot.lane.b32.xlu0 %v3250, 125
    %v3288 = vpop.permute.xlu0 %3287
    %3289 = vrot.lane.b32.xlu0 %v3251, 125
    %v3290 = vpop.permute.xlu0 %3289
    %3291 = vrot.lane.b32.xlu0 %v3252, 125
    %v3292 = vpop.permute.xlu0 %3291
    %3293 = vrot.lane.b32.xlu0 %v3253, 125
    %v3294 = vpop.permute.xlu0 %3293
    %3295 = vrot.lane.b32.xlu0 %v3254, 125
    %v3296 = vpop.permute.xlu0 %3295
    %3297 = vrot.lane.b32.xlu0 %v3255, 125
    %v3298 = vpop.permute.xlu0 %3297
    %3299 = vrot.lane.b32.xlu0 %v3256, 125
    %v3300 = vpop.permute.xlu0 %3299
    %3301 = vrot.lane.b32.xlu0 %v3257, 125
    %v3302 = vpop.permute.xlu0 %3301
    %3303 = vrot.lane.b32.xlu0 %v3258, 125
    %v3304 = vpop.permute.xlu0 %3303
    %3305 = vrot.lane.b32.xlu0 %v3259, 125
    %v3306 = vpop.permute.xlu0 %3305
    %3307 = vrot.lane.b32.xlu0 %v3260, 125
    %v3308 = vpop.permute.xlu0 %3307
    %v3309 = vsel %vm142, %v3278, %v3280
    %v3310 = vsel %vm142, %v3282, %v3284
    %v3311 = vsel %vm142, %v3286, %v3288
    %v3312 = vsel %vm142, %v3290, %v3292
    %v3313 = vsel %vm142, %v3294, %v3296
    %v3314 = vsel %vm142, %v3298, %v3300
    %v3315 = vsel %vm142, %v3302, %v3304
    %v3316 = vsel %vm142, %v3306, %v3308
    %3325 = vst [vmem:[#allocation6 + $0x180] sm:$0xff] %v3309
    %3326 = vst [vmem:[#allocation6 + $0x190] sm:$0xff] %v3310
    %3327 = vst [vmem:[#allocation6 + $0x1a0] sm:$0xff] %v3311
    %3328 = vst [vmem:[#allocation6 + $0x1b0] sm:$0xff] %v3312
    %3329 = vst [vmem:[#allocation6 + $0x1c0] sm:$0xff] %v3313
    %3330 = vst [vmem:[#allocation6 + $0x1d0] sm:$0xff] %v3314
    %3331 = vst [vmem:[#allocation6 + $0x1e0] sm:$0xff] %v3315
    %3332 = vst [vmem:[#allocation6 + $0x1f0] sm:$0xff] %v3316
    %v3333 = vld [vmem:[#allocation4] sm:$0xff]
    %v3334 = vld [vmem:[#allocation4 + $0x8] sm:$0xff]
    %v3335 = vld [vmem:[#allocation4 + $0x10] sm:$0xff]
    %v3336 = vld [vmem:[#allocation4 + $0x18] sm:$0xff]
    %v3337 = vld [vmem:[#allocation4 + $0x20] sm:$0xff]
    %v3338 = vld [vmem:[#allocation4 + $0x28] sm:$0xff]
    %v3339 = vld [vmem:[#allocation4 + $0x30] sm:$0xff]
    %v3340 = vld [vmem:[#allocation4 + $0x38] sm:$0xff]
    %v3341 = vld [vmem:[#allocation4 + $0x40] sm:$0xff]
    %v3342 = vld [vmem:[#allocation4 + $0x48] sm:$0xff]
    %v3343 = vld [vmem:[#allocation4 + $0x50] sm:$0xff]
    %v3344 = vld [vmem:[#allocation4 + $0x58] sm:$0xff]
    %v3345 = vld [vmem:[#allocation4 + $0x60] sm:$0xff]
    %v3346 = vld [vmem:[#allocation4 + $0x68] sm:$0xff]
    %v3347 = vld [vmem:[#allocation4 + $0x70] sm:$0xff]
    %v3348 = vld [vmem:[#allocation4 + $0x78] sm:$0xff]
    %3365 = vrot.lane.b32.xlu0 %v3333, 124
    %v3366 = vpop.permute.xlu0 %3365
    %3367 = vrot.lane.b32.xlu0 %v3334, 124
    %v3368 = vpop.permute.xlu0 %3367
    %3369 = vrot.lane.b32.xlu0 %v3335, 124
    %v3370 = vpop.permute.xlu0 %3369
    %3371 = vrot.lane.b32.xlu0 %v3336, 124
    %v3372 = vpop.permute.xlu0 %3371
    %3373 = vrot.lane.b32.xlu0 %v3337, 124
    %v3374 = vpop.permute.xlu0 %3373
    %3375 = vrot.lane.b32.xlu0 %v3338, 124
    %v3376 = vpop.permute.xlu0 %3375
    %3377 = vrot.lane.b32.xlu0 %v3339, 124
    %v3378 = vpop.permute.xlu0 %3377
    %3379 = vrot.lane.b32.xlu0 %v3340, 124
    %v3380 = vpop.permute.xlu0 %3379
    %3381 = vrot.lane.b32.xlu0 %v3341, 124
    %v3382 = vpop.permute.xlu0 %3381
    %3383 = vrot.lane.b32.xlu0 %v3342, 124
    %v3384 = vpop.permute.xlu0 %3383
    %3385 = vrot.lane.b32.xlu0 %v3343, 124
    %v3386 = vpop.permute.xlu0 %3385
    %3387 = vrot.lane.b32.xlu0 %v3344, 124
    %v3388 = vpop.permute.xlu0 %3387
    %3389 = vrot.lane.b32.xlu0 %v3345, 124
    %v3390 = vpop.permute.xlu0 %3389
    %3391 = vrot.lane.b32.xlu0 %v3346, 124
    %v3392 = vpop.permute.xlu0 %3391
    %3393 = vrot.lane.b32.xlu0 %v3347, 124
    %v3394 = vpop.permute.xlu0 %3393
    %3395 = vrot.lane.b32.xlu0 %v3348, 124
    %v3396 = vpop.permute.xlu0 %3395
    %v3397 = vsel %vm154, %v3366, %v3368
    %v3398 = vsel %vm154, %v3370, %v3372
    %v3399 = vsel %vm154, %v3374, %v3376
    %v3400 = vsel %vm154, %v3378, %v3380
    %v3401 = vsel %vm154, %v3382, %v3384
    %v3402 = vsel %vm154, %v3386, %v3388
    %v3403 = vsel %vm154, %v3390, %v3392
    %v3404 = vsel %vm154, %v3394, %v3396
    %3413 = vst [vmem:[#allocation6 + $0x200] sm:$0xff] %v3397
    %3414 = vst [vmem:[#allocation6 + $0x210] sm:$0xff] %v3398
    %3415 = vst [vmem:[#allocation6 + $0x220] sm:$0xff] %v3399
    %3416 = vst [vmem:[#allocation6 + $0x230] sm:$0xff] %v3400
    %3417 = vst [vmem:[#allocation6 + $0x240] sm:$0xff] %v3401
    %3418 = vst [vmem:[#allocation6 + $0x250] sm:$0xff] %v3402
    %3419 = vst [vmem:[#allocation6 + $0x260] sm:$0xff] %v3403
    %3420 = vst [vmem:[#allocation6 + $0x270] sm:$0xff] %v3404
    %v3421 = vld [vmem:[#allocation4] sm:$0xff]
    %v3422 = vld [vmem:[#allocation4 + $0x8] sm:$0xff]
    %v3423 = vld [vmem:[#allocation4 + $0x10] sm:$0xff]
    %v3424 = vld [vmem:[#allocation4 + $0x18] sm:$0xff]
    %v3425 = vld [vmem:[#allocation4 + $0x20] sm:$0xff]
    %v3426 = vld [vmem:[#allocation4 + $0x28] sm:$0xff]
    %v3427 = vld [vmem:[#allocation4 + $0x30] sm:$0xff]
    %v3428 = vld [vmem:[#allocation4 + $0x38] sm:$0xff]
    %v3429 = vld [vmem:[#allocation4 + $0x40] sm:$0xff]
    %v3430 = vld [vmem:[#allocation4 + $0x48] sm:$0xff]
    %v3431 = vld [vmem:[#allocation4 + $0x50] sm:$0xff]
    %v3432 = vld [vmem:[#allocation4 + $0x58] sm:$0xff]
    %v3433 = vld [vmem:[#allocation4 + $0x60] sm:$0xff]
    %v3434 = vld [vmem:[#allocation4 + $0x68] sm:$0xff]
    %v3435 = vld [vmem:[#allocation4 + $0x70] sm:$0xff]
    %v3436 = vld [vmem:[#allocation4 + $0x78] sm:$0xff]
    %3453 = vrot.lane.b32.xlu0 %v3421, 123
    %v3454 = vpop.permute.xlu0 %3453
    %3455 = vrot.lane.b32.xlu0 %v3422, 123
    %v3456 = vpop.permute.xlu0 %3455
    %3457 = vrot.lane.b32.xlu0 %v3423, 123
    %v3458 = vpop.permute.xlu0 %3457
    %3459 = vrot.lane.b32.xlu0 %v3424, 123
    %v3460 = vpop.permute.xlu0 %3459
    %3461 = vrot.lane.b32.xlu0 %v3425, 123
    %v3462 = vpop.permute.xlu0 %3461
    %3463 = vrot.lane.b32.xlu0 %v3426, 123
    %v3464 = vpop.permute.xlu0 %3463
    %3465 = vrot.lane.b32.xlu0 %v3427, 123
    %v3466 = vpop.permute.xlu0 %3465
    %3467 = vrot.lane.b32.xlu0 %v3428, 123
    %v3468 = vpop.permute.xlu0 %3467
    %3469 = vrot.lane.b32.xlu0 %v3429, 123
    %v3470 = vpop.permute.xlu0 %3469
    %3471 = vrot.lane.b32.xlu0 %v3430, 123
    %v3472 = vpop.permute.xlu0 %3471
    %3473 = vrot.lane.b32.xlu0 %v3431, 123
    %v3474 = vpop.permute.xlu0 %3473
    %3475 = vrot.lane.b32.xlu0 %v3432, 123
    %v3476 = vpop.permute.xlu0 %3475
    %3477 = vrot.lane.b32.xlu0 %v3433, 123
    %v3478 = vpop.permute.xlu0 %3477
    %3479 = vrot.lane.b32.xlu0 %v3434, 123
    %v3480 = vpop.permute.xlu0 %3479
    %3481 = vrot.lane.b32.xlu0 %v3435, 123
    %v3482 = vpop.permute.xlu0 %3481
    %3483 = vrot.lane.b32.xlu0 %v3436, 123
    %v3484 = vpop.permute.xlu0 %3483
    %v3485 = vsel %vm166, %v3454, %v3456
    %v3486 = vsel %vm166, %v3458, %v3460
    %v3487 = vsel %vm166, %v3462, %v3464
    %v3488 = vsel %vm166, %v3466, %v3468
    %v3489 = vsel %vm166, %v3470, %v3472
    %v3490 = vsel %vm166, %v3474, %v3476
    %v3491 = vsel %vm166, %v3478, %v3480
    %v3492 = vsel %vm166, %v3482, %v3484
    %3501 = vst [vmem:[#allocation6 + $0x280] sm:$0xff] %v3485
    %3502 = vst [vmem:[#allocation6 + $0x290] sm:$0xff] %v3486
    %3503 = vst [vmem:[#allocation6 + $0x2a0] sm:$0xff] %v3487
    %3504 = vst [vmem:[#allocation6 + $0x2b0] sm:$0xff] %v3488
    %3505 = vst [vmem:[#allocation6 + $0x2c0] sm:$0xff] %v3489
    %3506 = vst [vmem:[#allocation6 + $0x2d0] sm:$0xff] %v3490
    %3507 = vst [vmem:[#allocation6 + $0x2e0] sm:$0xff] %v3491
    %3508 = vst [vmem:[#allocation6 + $0x2f0] sm:$0xff] %v3492
    %v3509 = vld [vmem:[#allocation4] sm:$0xff]
    %v3510 = vld [vmem:[#allocation4 + $0x8] sm:$0xff]
    %v3511 = vld [vmem:[#allocation4 + $0x10] sm:$0xff]
    %v3512 = vld [vmem:[#allocation4 + $0x18] sm:$0xff]
    %v3513 = vld [vmem:[#allocation4 + $0x20] sm:$0xff]
    %v3514 = vld [vmem:[#allocation4 + $0x28] sm:$0xff]
    %v3515 = vld [vmem:[#allocation4 + $0x30] sm:$0xff]
    %v3516 = vld [vmem:[#allocation4 + $0x38] sm:$0xff]
    %v3517 = vld [vmem:[#allocation4 + $0x40] sm:$0xff]
    %v3518 = vld [vmem:[#allocation4 + $0x48] sm:$0xff]
    %v3519 = vld [vmem:[#allocation4 + $0x50] sm:$0xff]
    %v3520 = vld [vmem:[#allocation4 + $0x58] sm:$0xff]
    %v3521 = vld [vmem:[#allocation4 + $0x60] sm:$0xff]
    %v3522 = vld [vmem:[#allocation4 + $0x68] sm:$0xff]
    %v3523 = vld [vmem:[#allocation4 + $0x70] sm:$0xff]
    %v3524 = vld [vmem:[#allocation4 + $0x78] sm:$0xff]
    %3541 = vrot.lane.b32.xlu0 %v3509, 122
    %v3542 = vpop.permute.xlu0 %3541
    %3543 = vrot.lane.b32.xlu0 %v3510, 122
    %v3544 = vpop.permute.xlu0 %3543
    %3545 = vrot.lane.b32.xlu0 %v3511, 122
    %v3546 = vpop.permute.xlu0 %3545
    %3547 = vrot.lane.b32.xlu0 %v3512, 122
    %v3548 = vpop.permute.xlu0 %3547
    %3549 = vrot.lane.b32.xlu0 %v3513, 122
    %v3550 = vpop.permute.xlu0 %3549
    %3551 = vrot.lane.b32.xlu0 %v3514, 122
    %v3552 = vpop.permute.xlu0 %3551
    %3553 = vrot.lane.b32.xlu0 %v3515, 122
    %v3554 = vpop.permute.xlu0 %3553
    %3555 = vrot.lane.b32.xlu0 %v3516, 122
    %v3556 = vpop.permute.xlu0 %3555
    %3557 = vrot.lane.b32.xlu0 %v3517, 122
    %v3558 = vpop.permute.xlu0 %3557
    %3559 = vrot.lane.b32.xlu0 %v3518, 122
    %v3560 = vpop.permute.xlu0 %3559
    %3561 = vrot.lane.b32.xlu0 %v3519, 122
    %v3562 = vpop.permute.xlu0 %3561
    %3563 = vrot.lane.b32.xlu0 %v3520, 122
    %v3564 = vpop.permute.xlu0 %3563
    %3565 = vrot.lane.b32.xlu0 %v3521, 122
    %v3566 = vpop.permute.xlu0 %3565
    %3567 = vrot.lane.b32.xlu0 %v3522, 122
    %v3568 = vpop.permute.xlu0 %3567
    %3569 = vrot.lane.b32.xlu0 %v3523, 122
    %v3570 = vpop.permute.xlu0 %3569
    %3571 = vrot.lane.b32.xlu0 %v3524, 122
    %v3572 = vpop.permute.xlu0 %3571
    %v3573 = vsel %vm178, %v3542, %v3544
    %v3574 = vsel %vm178, %v3546, %v3548
    %v3575 = vsel %vm178, %v3550, %v3552
    %v3576 = vsel %vm178, %v3554, %v3556
    %v3577 = vsel %vm178, %v3558, %v3560
    %v3578 = vsel %vm178, %v3562, %v3564
    %v3579 = vsel %vm178, %v3566, %v3568
    %v3580 = vsel %vm178, %v3570, %v3572
    %3589 = vst [vmem:[#allocation6 + $0x300] sm:$0xff] %v3573
    %3590 = vst [vmem:[#allocation6 + $0x310] sm:$0xff] %v3574
    %3591 = vst [vmem:[#allocation6 + $0x320] sm:$0xff] %v3575
    %3592 = vst [vmem:[#allocation6 + $0x330] sm:$0xff] %v3576
    %3593 = vst [vmem:[#allocation6 + $0x340] sm:$0xff] %v3577
    %3594 = vst [vmem:[#allocation6 + $0x350] sm:$0xff] %v3578
    %3595 = vst [vmem:[#allocation6 + $0x360] sm:$0xff] %v3579
    %3596 = vst [vmem:[#allocation6 + $0x370] sm:$0xff] %v3580
    %v3597 = vld [vmem:[#allocation4] sm:$0xff]
    %v3598 = vld [vmem:[#allocation4 + $0x8] sm:$0xff]
    %v3599 = vld [vmem:[#allocation4 + $0x10] sm:$0xff]
    %v3600 = vld [vmem:[#allocation4 + $0x18] sm:$0xff]
    %v3601 = vld [vmem:[#allocation4 + $0x20] sm:$0xff]
    %v3602 = vld [vmem:[#allocation4 + $0x28] sm:$0xff]
    %v3603 = vld [vmem:[#allocation4 + $0x30] sm:$0xff]
    %v3604 = vld [vmem:[#allocation4 + $0x38] sm:$0xff]
    %v3605 = vld [vmem:[#allocation4 + $0x40] sm:$0xff]
    %v3606 = vld [vmem:[#allocation4 + $0x48] sm:$0xff]
    %v3607 = vld [vmem:[#allocation4 + $0x50] sm:$0xff]
    %v3608 = vld [vmem:[#allocation4 + $0x58] sm:$0xff]
    %v3609 = vld [vmem:[#allocation4 + $0x60] sm:$0xff]
    %v3610 = vld [vmem:[#allocation4 + $0x68] sm:$0xff]
    %v3611 = vld [vmem:[#allocation4 + $0x70] sm:$0xff]
    %v3612 = vld [vmem:[#allocation4 + $0x78] sm:$0xff]
    %3629 = vrot.lane.b32.xlu0 %v3597, 121
    %v3630 = vpop.permute.xlu0 %3629
    %3631 = vrot.lane.b32.xlu0 %v3598, 121
    %v3632 = vpop.permute.xlu0 %3631
    %3633 = vrot.lane.b32.xlu0 %v3599, 121
    %v3634 = vpop.permute.xlu0 %3633
    %3635 = vrot.lane.b32.xlu0 %v3600, 121
    %v3636 = vpop.permute.xlu0 %3635
    %3637 = vrot.lane.b32.xlu0 %v3601, 121
    %v3638 = vpop.permute.xlu0 %3637
    %3639 = vrot.lane.b32.xlu0 %v3602, 121
    %v3640 = vpop.permute.xlu0 %3639
    %3641 = vrot.lane.b32.xlu0 %v3603, 121
    %v3642 = vpop.permute.xlu0 %3641
    %3643 = vrot.lane.b32.xlu0 %v3604, 121
    %v3644 = vpop.permute.xlu0 %3643
    %3645 = vrot.lane.b32.xlu0 %v3605, 121
    %v3646 = vpop.permute.xlu0 %3645
    %3647 = vrot.lane.b32.xlu0 %v3606, 121
    %v3648 = vpop.permute.xlu0 %3647
    %3649 = vrot.lane.b32.xlu0 %v3607, 121
    %v3650 = vpop.permute.xlu0 %3649
    %3651 = vrot.lane.b32.xlu0 %v3608, 121
    %v3652 = vpop.permute.xlu0 %3651
    %3653 = vrot.lane.b32.xlu0 %v3609, 121
    %v3654 = vpop.permute.xlu0 %3653
    %3655 = vrot.lane.b32.xlu0 %v3610, 121
    %v3656 = vpop.permute.xlu0 %3655
    %3657 = vrot.lane.b32.xlu0 %v3611, 121
    %v3658 = vpop.permute.xlu0 %3657
    %3659 = vrot.lane.b32.xlu0 %v3612, 121
    %v3660 = vpop.permute.xlu0 %3659
    %v3661 = vsel %vm190, %v3630, %v3632
    %v3662 = vsel %vm190, %v3634, %v3636
    %v3663 = vsel %vm190, %v3638, %v3640
    %v3664 = vsel %vm190, %v3642, %v3644
    %v3665 = vsel %vm190, %v3646, %v3648
    %v3666 = vsel %vm190, %v3650, %v3652
    %v3667 = vsel %vm190, %v3654, %v3656
    %v3668 = vsel %vm190, %v3658, %v3660
    %3677 = vst [vmem:[#allocation6 + $0x380] sm:$0xff] %v3661
    %3678 = vst [vmem:[#allocation6 + $0x390] sm:$0xff] %v3662
    %3679 = vst [vmem:[#allocation6 + $0x3a0] sm:$0xff] %v3663
    %3680 = vst [vmem:[#allocation6 + $0x3b0] sm:$0xff] %v3664
    %3681 = vst [vmem:[#allocation6 + $0x3c0] sm:$0xff] %v3665
    %3682 = vst [vmem:[#allocation6 + $0x3d0] sm:$0xff] %v3666
    %3683 = vst [vmem:[#allocation6 + $0x3e0] sm:$0xff] %v3667
    %3684 = vst [vmem:[#allocation6 + $0x3f0] sm:$0xff] %v3668
    %v3685 = vld [vmem:[%s3036] sm:$0xff]
    %v3686 = vld [vmem:[%s3036 + $0x10] sm:$0xff]
    %v3687 = vld [vmem:[%s3036 + $0x20] sm:$0xff]
    %v3688 = vld [vmem:[%s3036 + $0x30] sm:$0xff]
    %v3689 = vld [vmem:[%s3036 + $0x40] sm:$0xff]
    %v3690 = vld [vmem:[%s3036 + $0x50] sm:$0xff]
    %v3691 = vld [vmem:[%s3036 + $0x60] sm:$0xff]
    %v3692 = vld [vmem:[%s3036 + $0x70] sm:$0xff]
    %3693 = vst [vmem:[#allocation6 + $0x8] sm:$0xff] %v3685
    %3694 = vst [vmem:[#allocation6 + $0x18] sm:$0xff] %v3686
    %3695 = vst [vmem:[#allocation6 + $0x28] sm:$0xff] %v3687
    %3696 = vst [vmem:[#allocation6 + $0x38] sm:$0xff] %v3688
    %3697 = vst [vmem:[#allocation6 + $0x48] sm:$0xff] %v3689
    %3698 = vst [vmem:[#allocation6 + $0x58] sm:$0xff] %v3690
    %3699 = vst [vmem:[#allocation6 + $0x68] sm:$0xff] %v3691
    %3700 = vst [vmem:[#allocation6 + $0x78] sm:$0xff] %v3692
    %v3701 = vld [vmem:[%s3036] sm:$0xff]
    %v3702 = vld [vmem:[%s3036 + $0x8] sm:$0xff]
    %v3703 = vld [vmem:[%s3036 + $0x10] sm:$0xff]
    %v3704 = vld [vmem:[%s3036 + $0x18] sm:$0xff]
    %v3705 = vld [vmem:[%s3036 + $0x20] sm:$0xff]
    %v3706 = vld [vmem:[%s3036 + $0x28] sm:$0xff]
    %v3707 = vld [vmem:[%s3036 + $0x30] sm:$0xff]
    %v3708 = vld [vmem:[%s3036 + $0x38] sm:$0xff]
    %v3709 = vld [vmem:[%s3036 + $0x40] sm:$0xff]
    %v3710 = vld [vmem:[%s3036 + $0x48] sm:$0xff]
    %v3711 = vld [vmem:[%s3036 + $0x50] sm:$0xff]
    %v3712 = vld [vmem:[%s3036 + $0x58] sm:$0xff]
    %v3713 = vld [vmem:[%s3036 + $0x60] sm:$0xff]
    %v3714 = vld [vmem:[%s3036 + $0x68] sm:$0xff]
    %v3715 = vld [vmem:[%s3036 + $0x70] sm:$0xff]
    %v3716 = vld [vmem:[%s3036 + $0x78] sm:$0xff]
    %3733 = vrot.lane.b32.xlu0 %v3701, 127
    %v3734 = vpop.permute.xlu0 %3733
    %3735 = vrot.lane.b32.xlu0 %v3702, 127
    %v3736 = vpop.permute.xlu0 %3735
    %3737 = vrot.lane.b32.xlu0 %v3703, 127
    %v3738 = vpop.permute.xlu0 %3737
    %3739 = vrot.lane.b32.xlu0 %v3704, 127
    %v3740 = vpop.permute.xlu0 %3739
    %3741 = vrot.lane.b32.xlu0 %v3705, 127
    %v3742 = vpop.permute.xlu0 %3741
    %3743 = vrot.lane.b32.xlu0 %v3706, 127
    %v3744 = vpop.permute.xlu0 %3743
    %3745 = vrot.lane.b32.xlu0 %v3707, 127
    %v3746 = vpop.permute.xlu0 %3745
    %3747 = vrot.lane.b32.xlu0 %v3708, 127
    %v3748 = vpop.permute.xlu0 %3747
    %3749 = vrot.lane.b32.xlu0 %v3709, 127
    %v3750 = vpop.permute.xlu0 %3749
    %3751 = vrot.lane.b32.xlu0 %v3710, 127
    %v3752 = vpop.permute.xlu0 %3751
    %3753 = vrot.lane.b32.xlu0 %v3711, 127
    %v3754 = vpop.permute.xlu0 %3753
    %3755 = vrot.lane.b32.xlu0 %v3712, 127
    %v3756 = vpop.permute.xlu0 %3755
    %3757 = vrot.lane.b32.xlu0 %v3713, 127
    %v3758 = vpop.permute.xlu0 %3757
    %3759 = vrot.lane.b32.xlu0 %v3714, 127
    %v3760 = vpop.permute.xlu0 %3759
    %3761 = vrot.lane.b32.xlu0 %v3715, 127
    %v3762 = vpop.permute.xlu0 %3761
    %3763 = vrot.lane.b32.xlu0 %v3716, 127
    %v3764 = vpop.permute.xlu0 %3763
    %v3765 = vsel %vm118, %v3734, %v3736
    %v3766 = vsel %vm118, %v3738, %v3740
    %v3767 = vsel %vm118, %v3742, %v3744
    %v3768 = vsel %vm118, %v3746, %v3748
    %v3769 = vsel %vm118, %v3750, %v3752
    %v3770 = vsel %vm118, %v3754, %v3756
    %v3771 = vsel %vm118, %v3758, %v3760
    %v3772 = vsel %vm118, %v3762, %v3764
    %3781 = vst [vmem:[#allocation6 + $0x88] sm:$0xff] %v3765
    %3782 = vst [vmem:[#allocation6 + $0x98] sm:$0xff] %v3766
    %3783 = vst [vmem:[#allocation6 + $0xa8] sm:$0xff] %v3767
    %3784 = vst [vmem:[#allocation6 + $0xb8] sm:$0xff] %v3768
    %3785 = vst [vmem:[#allocation6 + $0xc8] sm:$0xff] %v3769
    %3786 = vst [vmem:[#allocation6 + $0xd8] sm:$0xff] %v3770
    %3787 = vst [vmem:[#allocation6 + $0xe8] sm:$0xff] %v3771
    %3788 = vst [vmem:[#allocation6 + $0xf8] sm:$0xff] %v3772
    %v3789 = vld [vmem:[%s3036] sm:$0xff]
    %v3790 = vld [vmem:[%s3036 + $0x8] sm:$0xff]
    %v3791 = vld [vmem:[%s3036 + $0x10] sm:$0xff]
    %v3792 = vld [vmem:[%s3036 + $0x18] sm:$0xff]
    %v3793 = vld [vmem:[%s3036 + $0x20] sm:$0xff]
    %v3794 = vld [vmem:[%s3036 + $0x28] sm:$0xff]
    %v3795 = vld [vmem:[%s3036 + $0x30] sm:$0xff]
    %v3796 = vld [vmem:[%s3036 + $0x38] sm:$0xff]
    %v3797 = vld [vmem:[%s3036 + $0x40] sm:$0xff]
    %v3798 = vld [vmem:[%s3036 + $0x48] sm:$0xff]
    %v3799 = vld [vmem:[%s3036 + $0x50] sm:$0xff]
    %v3800 = vld [vmem:[%s3036 + $0x58] sm:$0xff]
    %v3801 = vld [vmem:[%s3036 + $0x60] sm:$0xff]
    %v3802 = vld [vmem:[%s3036 + $0x68] sm:$0xff]
    %v3803 = vld [vmem:[%s3036 + $0x70] sm:$0xff]
    %v3804 = vld [vmem:[%s3036 + $0x78] sm:$0xff]
    %3821 = vrot.lane.b32.xlu0 %v3789, 126
    %v3822 = vpop.permute.xlu0 %3821
    %3823 = vrot.lane.b32.xlu0 %v3790, 126
    %v3824 = vpop.permute.xlu0 %3823
    %3825 = vrot.lane.b32.xlu0 %v3791, 126
    %v3826 = vpop.permute.xlu0 %3825
    %3827 = vrot.lane.b32.xlu0 %v3792, 126
    %v3828 = vpop.permute.xlu0 %3827
    %3829 = vrot.lane.b32.xlu0 %v3793, 126
    %v3830 = vpop.permute.xlu0 %3829
    %3831 = vrot.lane.b32.xlu0 %v3794, 126
    %v3832 = vpop.permute.xlu0 %3831
    %3833 = vrot.lane.b32.xlu0 %v3795, 126
    %v3834 = vpop.permute.xlu0 %3833
    %3835 = vrot.lane.b32.xlu0 %v3796, 126
    %v3836 = vpop.permute.xlu0 %3835
    %3837 = vrot.lane.b32.xlu0 %v3797, 126
    %v3838 = vpop.permute.xlu0 %3837
    %3839 = vrot.lane.b32.xlu0 %v3798, 126
    %v3840 = vpop.permute.xlu0 %3839
    %3841 = vrot.lane.b32.xlu0 %v3799, 126
    %v3842 = vpop.permute.xlu0 %3841
    %3843 = vrot.lane.b32.xlu0 %v3800, 126
    %v3844 = vpop.permute.xlu0 %3843
    %3845 = vrot.lane.b32.xlu0 %v3801, 126
    %v3846 = vpop.permute.xlu0 %3845
    %3847 = vrot.lane.b32.xlu0 %v3802, 126
    %v3848 = vpop.permute.xlu0 %3847
    %3849 = vrot.lane.b32.xlu0 %v3803, 126
    %v3850 = vpop.permute.xlu0 %3849
    %3851 = vrot.lane.b32.xlu0 %v3804, 126
    %v3852 = vpop.permute.xlu0 %3851
    %v3853 = vsel %vm130, %v3822, %v3824
    %v3854 = vsel %vm130, %v3826, %v3828
    %v3855 = vsel %vm130, %v3830, %v3832
    %v3856 = vsel %vm130, %v3834, %v3836
    %v3857 = vsel %vm130, %v3838, %v3840
    %v3858 = vsel %vm130, %v3842, %v3844
    %v3859 = vsel %vm130, %v3846, %v3848
    %v3860 = vsel %vm130, %v3850, %v3852
    %3869 = vst [vmem:[#allocation6 + $0x108] sm:$0xff] %v3853
    %3870 = vst [vmem:[#allocation6 + $0x118] sm:$0xff] %v3854
    %3871 = vst [vmem:[#allocation6 + $0x128] sm:$0xff] %v3855
    %3872 = vst [vmem:[#allocation6 + $0x138] sm:$0xff] %v3856
    %3873 = vst [vmem:[#allocation6 + $0x148] sm:$0xff] %v3857
    %3874 = vst [vmem:[#allocation6 + $0x158] sm:$0xff] %v3858
    %3875 = vst [vmem:[#allocation6 + $0x168] sm:$0xff] %v3859
    %3876 = vst [vmem:[#allocation6 + $0x178] sm:$0xff] %v3860
    %v3877 = vld [vmem:[%s3036] sm:$0xff]
    %v3878 = vld [vmem:[%s3036 + $0x8] sm:$0xff]
    %v3879 = vld [vmem:[%s3036 + $0x10] sm:$0xff]
    %v3880 = vld [vmem:[%s3036 + $0x18] sm:$0xff]
    %v3881 = vld [vmem:[%s3036 + $0x20] sm:$0xff]
    %v3882 = vld [vmem:[%s3036 + $0x28] sm:$0xff]
    %v3883 = vld [vmem:[%s3036 + $0x30] sm:$0xff]
    %v3884 = vld [vmem:[%s3036 + $0x38] sm:$0xff]
    %v3885 = vld [vmem:[%s3036 + $0x40] sm:$0xff]
    %v3886 = vld [vmem:[%s3036 + $0x48] sm:$0xff]
    %v3887 = vld [vmem:[%s3036 + $0x50] sm:$0xff]
    %v3888 = vld [vmem:[%s3036 + $0x58] sm:$0xff]
    %v3889 = vld [vmem:[%s3036 + $0x60] sm:$0xff]
    %v3890 = vld [vmem:[%s3036 + $0x68] sm:$0xff]
    %v3891 = vld [vmem:[%s3036 + $0x70] sm:$0xff]
    %v3892 = vld [vmem:[%s3036 + $0x78] sm:$0xff]
    %3909 = vrot.lane.b32.xlu0 %v3877, 125
    %v3910 = vpop.permute.xlu0 %3909
    %3911 = vrot.lane.b32.xlu0 %v3878, 125
    %v3912 = vpop.permute.xlu0 %3911
    %3913 = vrot.lane.b32.xlu0 %v3879, 125
    %v3914 = vpop.permute.xlu0 %3913
    %3915 = vrot.lane.b32.xlu0 %v3880, 125
    %v3916 = vpop.permute.xlu0 %3915
    %3917 = vrot.lane.b32.xlu0 %v3881, 125
    %v3918 = vpop.permute.xlu0 %3917
    %3919 = vrot.lane.b32.xlu0 %v3882, 125
    %v3920 = vpop.permute.xlu0 %3919
    %3921 = vrot.lane.b32.xlu0 %v3883, 125
    %v3922 = vpop.permute.xlu0 %3921
    %3923 = vrot.lane.b32.xlu0 %v3884, 125
    %v3924 = vpop.permute.xlu0 %3923
    %3925 = vrot.lane.b32.xlu0 %v3885, 125
    %v3926 = vpop.permute.xlu0 %3925
    %3927 = vrot.lane.b32.xlu0 %v3886, 125
    %v3928 = vpop.permute.xlu0 %3927
    %3929 = vrot.lane.b32.xlu0 %v3887, 125
    %v3930 = vpop.permute.xlu0 %3929
    %3931 = vrot.lane.b32.xlu0 %v3888, 125
    %v3932 = vpop.permute.xlu0 %3931
    %3933 = vrot.lane.b32.xlu0 %v3889, 125
    %v3934 = vpop.permute.xlu0 %3933
    %3935 = vrot.lane.b32.xlu0 %v3890, 125
    %v3936 = vpop.permute.xlu0 %3935
    %3937 = vrot.lane.b32.xlu0 %v3891, 125
    %v3938 = vpop.permute.xlu0 %3937
    %3939 = vrot.lane.b32.xlu0 %v3892, 125
    %v3940 = vpop.permute.xlu0 %3939
    %v3941 = vsel %vm142, %v3910, %v3912
    %v3942 = vsel %vm142, %v3914, %v3916
    %v3943 = vsel %vm142, %v3918, %v3920
    %v3944 = vsel %vm142, %v3922, %v3924
    %v3945 = vsel %vm142, %v3926, %v3928
    %v3946 = vsel %vm142, %v3930, %v3932
    %v3947 = vsel %vm142, %v3934, %v3936
    %v3948 = vsel %vm142, %v3938, %v3940
    %3957 = vst [vmem:[#allocation6 + $0x188] sm:$0xff] %v3941
    %3958 = vst [vmem:[#allocation6 + $0x198] sm:$0xff] %v3942
    %3959 = vst [vmem:[#allocation6 + $0x1a8] sm:$0xff] %v3943
    %3960 = vst [vmem:[#allocation6 + $0x1b8] sm:$0xff] %v3944
    %3961 = vst [vmem:[#allocation6 + $0x1c8] sm:$0xff] %v3945
    %3962 = vst [vmem:[#allocation6 + $0x1d8] sm:$0xff] %v3946
    %3963 = vst [vmem:[#allocation6 + $0x1e8] sm:$0xff] %v3947
    %3964 = vst [vmem:[#allocation6 + $0x1f8] sm:$0xff] %v3948
    %v3965 = vld [vmem:[%s3036] sm:$0xff]
    %v3966 = vld [vmem:[%s3036 + $0x8] sm:$0xff]
    %v3967 = vld [vmem:[%s3036 + $0x10] sm:$0xff]
    %v3968 = vld [vmem:[%s3036 + $0x18] sm:$0xff]
    %v3969 = vld [vmem:[%s3036 + $0x20] sm:$0xff]
    %v3970 = vld [vmem:[%s3036 + $0x28] sm:$0xff]
    %v3971 = vld [vmem:[%s3036 + $0x30] sm:$0xff]
    %v3972 = vld [vmem:[%s3036 + $0x38] sm:$0xff]
    %v3973 = vld [vmem:[%s3036 + $0x40] sm:$0xff]
    %v3974 = vld [vmem:[%s3036 + $0x48] sm:$0xff]
    %v3975 = vld [vmem:[%s3036 + $0x50] sm:$0xff]
    %v3976 = vld [vmem:[%s3036 + $0x58] sm:$0xff]
    %v3977 = vld [vmem:[%s3036 + $0x60] sm:$0xff]
    %v3978 = vld [vmem:[%s3036 + $0x68] sm:$0xff]
    %v3979 = vld [vmem:[%s3036 + $0x70] sm:$0xff]
    %v3980 = vld [vmem:[%s3036 + $0x78] sm:$0xff]
    %3997 = vrot.lane.b32.xlu0 %v3965, 124
    %v3998 = vpop.permute.xlu0 %3997
    %3999 = vrot.lane.b32.xlu0 %v3966, 124
    %v4000 = vpop.permute.xlu0 %3999
    %4001 = vrot.lane.b32.xlu0 %v3967, 124
    %v4002 = vpop.permute.xlu0 %4001
    %4003 = vrot.lane.b32.xlu0 %v3968, 124
    %v4004 = vpop.permute.xlu0 %4003
    %4005 = vrot.lane.b32.xlu0 %v3969, 124
    %v4006 = vpop.permute.xlu0 %4005
    %4007 = vrot.lane.b32.xlu0 %v3970, 124
    %v4008 = vpop.permute.xlu0 %4007
    %4009 = vrot.lane.b32.xlu0 %v3971, 124
    %v4010 = vpop.permute.xlu0 %4009
    %4011 = vrot.lane.b32.xlu0 %v3972, 124
    %v4012 = vpop.permute.xlu0 %4011
    %4013 = vrot.lane.b32.xlu0 %v3973, 124
    %v4014 = vpop.permute.xlu0 %4013
    %4015 = vrot.lane.b32.xlu0 %v3974, 124
    %v4016 = vpop.permute.xlu0 %4015
    %4017 = vrot.lane.b32.xlu0 %v3975, 124
    %v4018 = vpop.permute.xlu0 %4017
    %4019 = vrot.lane.b32.xlu0 %v3976, 124
    %v4020 = vpop.permute.xlu0 %4019
    %4021 = vrot.lane.b32.xlu0 %v3977, 124
    %v4022 = vpop.permute.xlu0 %4021
    %4023 = vrot.lane.b32.xlu0 %v3978, 124
    %v4024 = vpop.permute.xlu0 %4023
    %4025 = vrot.lane.b32.xlu0 %v3979, 124
    %v4026 = vpop.permute.xlu0 %4025
    %4027 = vrot.lane.b32.xlu0 %v3980, 124
    %v4028 = vpop.permute.xlu0 %4027
    %v4029 = vsel %vm154, %v3998, %v4000
    %v4030 = vsel %vm154, %v4002, %v4004
    %v4031 = vsel %vm154, %v4006, %v4008
    %v4032 = vsel %vm154, %v4010, %v4012
    %v4033 = vsel %vm154, %v4014, %v4016
    %v4034 = vsel %vm154, %v4018, %v4020
    %v4035 = vsel %vm154, %v4022, %v4024
    %v4036 = vsel %vm154, %v4026, %v4028
    %4045 = vst [vmem:[#allocation6 + $0x208] sm:$0xff] %v4029
    %4046 = vst [vmem:[#allocation6 + $0x218] sm:$0xff] %v4030
    %4047 = vst [vmem:[#allocation6 + $0x228] sm:$0xff] %v4031
    %4048 = vst [vmem:[#allocation6 + $0x238] sm:$0xff] %v4032
    %4049 = vst [vmem:[#allocation6 + $0x248] sm:$0xff] %v4033
    %4050 = vst [vmem:[#allocation6 + $0x258] sm:$0xff] %v4034
    %4051 = vst [vmem:[#allocation6 + $0x268] sm:$0xff] %v4035
    %4052 = vst [vmem:[#allocation6 + $0x278] sm:$0xff] %v4036
    %v4053 = vld [vmem:[%s3036] sm:$0xff]
    %v4054 = vld [vmem:[%s3036 + $0x8] sm:$0xff]
    %v4055 = vld [vmem:[%s3036 + $0x10] sm:$0xff]
    %v4056 = vld [vmem:[%s3036 + $0x18] sm:$0xff]
    %v4057 = vld [vmem:[%s3036 + $0x20] sm:$0xff]
    %v4058 = vld [vmem:[%s3036 + $0x28] sm:$0xff]
    %v4059 = vld [vmem:[%s3036 + $0x30] sm:$0xff]
    %v4060 = vld [vmem:[%s3036 + $0x38] sm:$0xff]
    %v4061 = vld [vmem:[%s3036 + $0x40] sm:$0xff]
    %v4062 = vld [vmem:[%s3036 + $0x48] sm:$0xff]
    %v4063 = vld [vmem:[%s3036 + $0x50] sm:$0xff]
    %v4064 = vld [vmem:[%s3036 + $0x58] sm:$0xff]
    %v4065 = vld [vmem:[%s3036 + $0x60] sm:$0xff]
    %v4066 = vld [vmem:[%s3036 + $0x68] sm:$0xff]
    %v4067 = vld [vmem:[%s3036 + $0x70] sm:$0xff]
    %v4068 = vld [vmem:[%s3036 + $0x78] sm:$0xff]
    %4085 = vrot.lane.b32.xlu0 %v4053, 123
    %v4086 = vpop.permute.xlu0 %4085
    %4087 = vrot.lane.b32.xlu0 %v4054, 123
    %v4088 = vpop.permute.xlu0 %4087
    %4089 = vrot.lane.b32.xlu0 %v4055, 123
    %v4090 = vpop.permute.xlu0 %4089
    %4091 = vrot.lane.b32.xlu0 %v4056, 123
    %v4092 = vpop.permute.xlu0 %4091
    %4093 = vrot.lane.b32.xlu0 %v4057, 123
    %v4094 = vpop.permute.xlu0 %4093
    %4095 = vrot.lane.b32.xlu0 %v4058, 123
    %v4096 = vpop.permute.xlu0 %4095
    %4097 = vrot.lane.b32.xlu0 %v4059, 123
    %v4098 = vpop.permute.xlu0 %4097
    %4099 = vrot.lane.b32.xlu0 %v4060, 123
    %v4100 = vpop.permute.xlu0 %4099
    %4101 = vrot.lane.b32.xlu0 %v4061, 123
    %v4102 = vpop.permute.xlu0 %4101
    %4103 = vrot.lane.b32.xlu0 %v4062, 123
    %v4104 = vpop.permute.xlu0 %4103
    %4105 = vrot.lane.b32.xlu0 %v4063, 123
    %v4106 = vpop.permute.xlu0 %4105
    %4107 = vrot.lane.b32.xlu0 %v4064, 123
    %v4108 = vpop.permute.xlu0 %4107
    %4109 = vrot.lane.b32.xlu0 %v4065, 123
    %v4110 = vpop.permute.xlu0 %4109
    %4111 = vrot.lane.b32.xlu0 %v4066, 123
    %v4112 = vpop.permute.xlu0 %4111
    %4113 = vrot.lane.b32.xlu0 %v4067, 123
    %v4114 = vpop.permute.xlu0 %4113
    %4115 = vrot.lane.b32.xlu0 %v4068, 123
    %v4116 = vpop.permute.xlu0 %4115
    %v4117 = vsel %vm166, %v4086, %v4088
    %v4118 = vsel %vm166, %v4090, %v4092
    %v4119 = vsel %vm166, %v4094, %v4096
    %v4120 = vsel %vm166, %v4098, %v4100
    %v4121 = vsel %vm166, %v4102, %v4104
    %v4122 = vsel %vm166, %v4106, %v4108
    %v4123 = vsel %vm166, %v4110, %v4112
    %v4124 = vsel %vm166, %v4114, %v4116
    %4133 = vst [vmem:[#allocation6 + $0x288] sm:$0xff] %v4117
    %4134 = vst [vmem:[#allocation6 + $0x298] sm:$0xff] %v4118
    %4135 = vst [vmem:[#allocation6 + $0x2a8] sm:$0xff] %v4119
    %4136 = vst [vmem:[#allocation6 + $0x2b8] sm:$0xff] %v4120
    %4137 = vst [vmem:[#allocation6 + $0x2c8] sm:$0xff] %v4121
    %4138 = vst [vmem:[#allocation6 + $0x2d8] sm:$0xff] %v4122
    %4139 = vst [vmem:[#allocation6 + $0x2e8] sm:$0xff] %v4123
    %4140 = vst [vmem:[#allocation6 + $0x2f8] sm:$0xff] %v4124
    %v4141 = vld [vmem:[%s3036] sm:$0xff]
    %v4142 = vld [vmem:[%s3036 + $0x8] sm:$0xff]
    %v4143 = vld [vmem:[%s3036 + $0x10] sm:$0xff]
    %v4144 = vld [vmem:[%s3036 + $0x18] sm:$0xff]
    %v4145 = vld [vmem:[%s3036 + $0x20] sm:$0xff]
    %v4146 = vld [vmem:[%s3036 + $0x28] sm:$0xff]
    %v4147 = vld [vmem:[%s3036 + $0x30] sm:$0xff]
    %v4148 = vld [vmem:[%s3036 + $0x38] sm:$0xff]
    %v4149 = vld [vmem:[%s3036 + $0x40] sm:$0xff]
    %v4150 = vld [vmem:[%s3036 + $0x48] sm:$0xff]
    %v4151 = vld [vmem:[%s3036 + $0x50] sm:$0xff]
    %v4152 = vld [vmem:[%s3036 + $0x58] sm:$0xff]
    %v4153 = vld [vmem:[%s3036 + $0x60] sm:$0xff]
    %v4154 = vld [vmem:[%s3036 + $0x68] sm:$0xff]
    %v4155 = vld [vmem:[%s3036 + $0x70] sm:$0xff]
    %v4156 = vld [vmem:[%s3036 + $0x78] sm:$0xff]
    %4173 = vrot.lane.b32.xlu0 %v4141, 122
    %v4174 = vpop.permute.xlu0 %4173
    %4175 = vrot.lane.b32.xlu0 %v4142, 122
    %v4176 = vpop.permute.xlu0 %4175
    %4177 = vrot.lane.b32.xlu0 %v4143, 122
    %v4178 = vpop.permute.xlu0 %4177
    %4179 = vrot.lane.b32.xlu0 %v4144, 122
    %v4180 = vpop.permute.xlu0 %4179
    %4181 = vrot.lane.b32.xlu0 %v4145, 122
    %v4182 = vpop.permute.xlu0 %4181
    %4183 = vrot.lane.b32.xlu0 %v4146, 122
    %v4184 = vpop.permute.xlu0 %4183
    %4185 = vrot.lane.b32.xlu0 %v4147, 122
    %v4186 = vpop.permute.xlu0 %4185
    %4187 = vrot.lane.b32.xlu0 %v4148, 122
    %v4188 = vpop.permute.xlu0 %4187
    %4189 = vrot.lane.b32.xlu0 %v4149, 122
    %v4190 = vpop.permute.xlu0 %4189
    %4191 = vrot.lane.b32.xlu0 %v4150, 122
    %v4192 = vpop.permute.xlu0 %4191
    %4193 = vrot.lane.b32.xlu0 %v4151, 122
    %v4194 = vpop.permute.xlu0 %4193
    %4195 = vrot.lane.b32.xlu0 %v4152, 122
    %v4196 = vpop.permute.xlu0 %4195
    %4197 = vrot.lane.b32.xlu0 %v4153, 122
    %v4198 = vpop.permute.xlu0 %4197
    %4199 = vrot.lane.b32.xlu0 %v4154, 122
    %v4200 = vpop.permute.xlu0 %4199
    %4201 = vrot.lane.b32.xlu0 %v4155, 122
    %v4202 = vpop.permute.xlu0 %4201
    %4203 = vrot.lane.b32.xlu0 %v4156, 122
    %v4204 = vpop.permute.xlu0 %4203
    %v4205 = vsel %vm178, %v4174, %v4176
    %v4206 = vsel %vm178, %v4178, %v4180
    %v4207 = vsel %vm178, %v4182, %v4184
    %v4208 = vsel %vm178, %v4186, %v4188
    %v4209 = vsel %vm178, %v4190, %v4192
    %v4210 = vsel %vm178, %v4194, %v4196
    %v4211 = vsel %vm178, %v4198, %v4200
    %v4212 = vsel %vm178, %v4202, %v4204
    %4221 = vst [vmem:[#allocation6 + $0x308] sm:$0xff] %v4205
    %4222 = vst [vmem:[#allocation6 + $0x318] sm:$0xff] %v4206
    %4223 = vst [vmem:[#allocation6 + $0x328] sm:$0xff] %v4207
    %4224 = vst [vmem:[#allocation6 + $0x338] sm:$0xff] %v4208
    %4225 = vst [vmem:[#allocation6 + $0x348] sm:$0xff] %v4209
    %4226 = vst [vmem:[#allocation6 + $0x358] sm:$0xff] %v4210
    %4227 = vst [vmem:[#allocation6 + $0x368] sm:$0xff] %v4211
    %4228 = vst [vmem:[#allocation6 + $0x378] sm:$0xff] %v4212
    %v4229 = vld [vmem:[%s3036] sm:$0xff]
    %v4230 = vld [vmem:[%s3036 + $0x8] sm:$0xff]
    %v4231 = vld [vmem:[%s3036 + $0x10] sm:$0xff]
    %v4232 = vld [vmem:[%s3036 + $0x18] sm:$0xff]
    %v4233 = vld [vmem:[%s3036 + $0x20] sm:$0xff]
    %v4234 = vld [vmem:[%s3036 + $0x28] sm:$0xff]
    %v4235 = vld [vmem:[%s3036 + $0x30] sm:$0xff]
    %v4236 = vld [vmem:[%s3036 + $0x38] sm:$0xff]
    %v4237 = vld [vmem:[%s3036 + $0x40] sm:$0xff]
    %v4238 = vld [vmem:[%s3036 + $0x48] sm:$0xff]
    %v4239 = vld [vmem:[%s3036 + $0x50] sm:$0xff]
    %v4240 = vld [vmem:[%s3036 + $0x58] sm:$0xff]
    %v4241 = vld [vmem:[%s3036 + $0x60] sm:$0xff]
    %v4242 = vld [vmem:[%s3036 + $0x68] sm:$0xff]
    %v4243 = vld [vmem:[%s3036 + $0x70] sm:$0xff]
    %v4244 = vld [vmem:[%s3036 + $0x78] sm:$0xff]
    %4261 = vrot.lane.b32.xlu0 %v4229, 121
    %v4262 = vpop.permute.xlu0 %4261
    %4263 = vrot.lane.b32.xlu0 %v4230, 121
    %v4264 = vpop.permute.xlu0 %4263
    %4265 = vrot.lane.b32.xlu0 %v4231, 121
    %v4266 = vpop.permute.xlu0 %4265
    %4267 = vrot.lane.b32.xlu0 %v4232, 121
    %v4268 = vpop.permute.xlu0 %4267
    %4269 = vrot.lane.b32.xlu0 %v4233, 121
    %v4270 = vpop.permute.xlu0 %4269
    %4271 = vrot.lane.b32.xlu0 %v4234, 121
    %v4272 = vpop.permute.xlu0 %4271
    %4273 = vrot.lane.b32.xlu0 %v4235, 121
    %v4274 = vpop.permute.xlu0 %4273
    %4275 = vrot.lane.b32.xlu0 %v4236, 121
    %v4276 = vpop.permute.xlu0 %4275
    %4277 = vrot.lane.b32.xlu0 %v4237, 121
    %v4278 = vpop.permute.xlu0 %4277
    %4279 = vrot.lane.b32.xlu0 %v4238, 121
    %v4280 = vpop.permute.xlu0 %4279
    %4281 = vrot.lane.b32.xlu0 %v4239, 121
    %v4282 = vpop.permute.xlu0 %4281
    %4283 = vrot.lane.b32.xlu0 %v4240, 121
    %v4284 = vpop.permute.xlu0 %4283
    %4285 = vrot.lane.b32.xlu0 %v4241, 121
    %v4286 = vpop.permute.xlu0 %4285
    %4287 = vrot.lane.b32.xlu0 %v4242, 121
    %v4288 = vpop.permute.xlu0 %4287
    %4289 = vrot.lane.b32.xlu0 %v4243, 121
    %v4290 = vpop.permute.xlu0 %4289
    %4291 = vrot.lane.b32.xlu0 %v4244, 121
    %v4292 = vpop.permute.xlu0 %4291
    %v4293 = vsel %vm190, %v4262, %v4264
    %v4294 = vsel %vm190, %v4266, %v4268
    %v4295 = vsel %vm190, %v4270, %v4272
    %v4296 = vsel %vm190, %v4274, %v4276
    %v4297 = vsel %vm190, %v4278, %v4280
    %v4298 = vsel %vm190, %v4282, %v4284
    %v4299 = vsel %vm190, %v4286, %v4288
    %v4300 = vsel %vm190, %v4290, %v4292
    %4309 = vst [vmem:[#allocation6 + $0x388] sm:$0xff] %v4293
    %4310 = vst [vmem:[#allocation6 + $0x398] sm:$0xff] %v4294
    %4311 = vst [vmem:[#allocation6 + $0x3a8] sm:$0xff] %v4295
    %4312 = vst [vmem:[#allocation6 + $0x3b8] sm:$0xff] %v4296
    %4313 = vst [vmem:[#allocation6 + $0x3c8] sm:$0xff] %v4297
    %4314 = vst [vmem:[#allocation6 + $0x3d8] sm:$0xff] %v4298
    %4315 = vst [vmem:[#allocation6 + $0x3e8] sm:$0xff] %v4299
    %4316 = vst [vmem:[#allocation6 + $0x3f8] sm:$0xff] %v4300
    %v4317 = vld [vmem:[#allocation11] sm:$0xff]
    %v4318 = vld [vmem:[#allocation11 + $0x8] sm:$0xff]
    %v4319 = vld [vmem:[#allocation11 + $0x10] sm:$0xff]
    %v4320 = vld [vmem:[#allocation11 + $0x18] sm:$0xff]
    %v4321 = vld [vmem:[#allocation11 + $0x20] sm:$0xff]
    %v4322 = vld [vmem:[#allocation11 + $0x28] sm:$0xff]
    %v4323 = vld [vmem:[#allocation11 + $0x30] sm:$0xff]
    %v4324 = vld [vmem:[#allocation11 + $0x38] sm:$0xff]
    %v4325 = vld [vmem:[#allocation11 + $0x40] sm:$0xff]
    %v4326 = vld [vmem:[#allocation11 + $0x48] sm:$0xff]
    %v4327 = vld [vmem:[#allocation11 + $0x50] sm:$0xff]
    %v4328 = vld [vmem:[#allocation11 + $0x58] sm:$0xff]
    %v4329 = vld [vmem:[#allocation11 + $0x60] sm:$0xff]
    %v4330 = vld [vmem:[#allocation11 + $0x68] sm:$0xff]
    %v4331 = vld [vmem:[#allocation11 + $0x70] sm:$0xff]
    %v4332 = vld [vmem:[#allocation11 + $0x78] sm:$0xff]
    %v4333 = vld [vmem:[#allocation11 + $0x80] sm:$0xff]
    %v4334 = vld [vmem:[#allocation11 + $0x88] sm:$0xff]
    %v4335 = vld [vmem:[#allocation11 + $0x90] sm:$0xff]
    %v4336 = vld [vmem:[#allocation11 + $0x98] sm:$0xff]
    %v4337 = vld [vmem:[#allocation11 + $0xa0] sm:$0xff]
    %v4338 = vld [vmem:[#allocation11 + $0xa8] sm:$0xff]
    %v4339 = vld [vmem:[#allocation11 + $0xb0] sm:$0xff]
    %v4340 = vld [vmem:[#allocation11 + $0xb8] sm:$0xff]
    %v4341 = vld [vmem:[#allocation11 + $0xc0] sm:$0xff]
    %v4342 = vld [vmem:[#allocation11 + $0xc8] sm:$0xff]
    %v4343 = vld [vmem:[#allocation11 + $0xd0] sm:$0xff]
    %v4344 = vld [vmem:[#allocation11 + $0xd8] sm:$0xff]
    %v4345 = vld [vmem:[#allocation11 + $0xe0] sm:$0xff]
    %v4346 = vld [vmem:[#allocation11 + $0xe8] sm:$0xff]
    %v4347 = vld [vmem:[#allocation11 + $0xf0] sm:$0xff]
    %v4348 = vld [vmem:[#allocation11 + $0xf8] sm:$0xff]
    %v4349 = vld [vmem:[#allocation11 + $0x100] sm:$0xff]
    %v4350 = vld [vmem:[#allocation11 + $0x108] sm:$0xff]
    %v4351 = vld [vmem:[#allocation11 + $0x110] sm:$0xff]
    %v4352 = vld [vmem:[#allocation11 + $0x118] sm:$0xff]
    %v4353 = vld [vmem:[#allocation11 + $0x120] sm:$0xff]
    %v4354 = vld [vmem:[#allocation11 + $0x128] sm:$0xff]
    %v4355 = vld [vmem:[#allocation11 + $0x130] sm:$0xff]
    %v4356 = vld [vmem:[#allocation11 + $0x138] sm:$0xff]
    %v4357 = vld [vmem:[#allocation11 + $0x140] sm:$0xff]
    %v4358 = vld [vmem:[#allocation11 + $0x148] sm:$0xff]
    %v4359 = vld [vmem:[#allocation11 + $0x150] sm:$0xff]
    %v4360 = vld [vmem:[#allocation11 + $0x158] sm:$0xff]
    %v4361 = vld [vmem:[#allocation11 + $0x160] sm:$0xff]
    %v4362 = vld [vmem:[#allocation11 + $0x168] sm:$0xff]
    %v4363 = vld [vmem:[#allocation11 + $0x170] sm:$0xff]
    %v4364 = vld [vmem:[#allocation11 + $0x178] sm:$0xff]
    %v4365 = vld [vmem:[#allocation11 + $0x180] sm:$0xff]
    %v4366 = vld [vmem:[#allocation11 + $0x188] sm:$0xff]
    %v4367 = vld [vmem:[#allocation11 + $0x190] sm:$0xff]
    %v4368 = vld [vmem:[#allocation11 + $0x198] sm:$0xff]
    %v4369 = vld [vmem:[#allocation11 + $0x1a0] sm:$0xff]
    %v4370 = vld [vmem:[#allocation11 + $0x1a8] sm:$0xff]
    %v4371 = vld [vmem:[#allocation11 + $0x1b0] sm:$0xff]
    %v4372 = vld [vmem:[#allocation11 + $0x1b8] sm:$0xff]
    %v4373 = vld [vmem:[#allocation11 + $0x1c0] sm:$0xff]
    %v4374 = vld [vmem:[#allocation11 + $0x1c8] sm:$0xff]
    %v4375 = vld [vmem:[#allocation11 + $0x1d0] sm:$0xff]
    %v4376 = vld [vmem:[#allocation11 + $0x1d8] sm:$0xff]
    %v4377 = vld [vmem:[#allocation11 + $0x1e0] sm:$0xff]
    %v4378 = vld [vmem:[#allocation11 + $0x1e8] sm:$0xff]
    %v4379 = vld [vmem:[#allocation11 + $0x1f0] sm:$0xff]
    %v4380 = vld [vmem:[#allocation11 + $0x1f8] sm:$0xff]
    %v4381 = vld [vmem:[#allocation6] sm:$0xff]
    %v4382 = vld [vmem:[#allocation6 + $0x8] sm:$0xff]
    %v4383 = vld [vmem:[#allocation6 + $0x10] sm:$0xff]
    %v4384 = vld [vmem:[#allocation6 + $0x18] sm:$0xff]
    %v4385 = vld [vmem:[#allocation6 + $0x20] sm:$0xff]
    %v4386 = vld [vmem:[#allocation6 + $0x28] sm:$0xff]
    %v4387 = vld [vmem:[#allocation6 + $0x30] sm:$0xff]
    %v4388 = vld [vmem:[#allocation6 + $0x38] sm:$0xff]
    %v4389 = vld [vmem:[#allocation6 + $0x40] sm:$0xff]
    %v4390 = vld [vmem:[#allocation6 + $0x48] sm:$0xff]
    %v4391 = vld [vmem:[#allocation6 + $0x50] sm:$0xff]
    %v4392 = vld [vmem:[#allocation6 + $0x58] sm:$0xff]
    %v4393 = vld [vmem:[#allocation6 + $0x60] sm:$0xff]
    %v4394 = vld [vmem:[#allocation6 + $0x68] sm:$0xff]
    %v4395 = vld [vmem:[#allocation6 + $0x70] sm:$0xff]
    %v4396 = vld [vmem:[#allocation6 + $0x78] sm:$0xff]
    %v4397 = vld [vmem:[#allocation6 + $0x80] sm:$0xff]
    %v4398 = vld [vmem:[#allocation6 + $0x88] sm:$0xff]
    %v4399 = vld [vmem:[#allocation6 + $0x90] sm:$0xff]
    %v4400 = vld [vmem:[#allocation6 + $0x98] sm:$0xff]
    %v4401 = vld [vmem:[#allocation6 + $0xa0] sm:$0xff]
    %v4402 = vld [vmem:[#allocation6 + $0xa8] sm:$0xff]
    %v4403 = vld [vmem:[#allocation6 + $0xb0] sm:$0xff]
    %v4404 = vld [vmem:[#allocation6 + $0xb8] sm:$0xff]
    %v4405 = vld [vmem:[#allocation6 + $0xc0] sm:$0xff]
    %v4406 = vld [vmem:[#allocation6 + $0xc8] sm:$0xff]
    %v4407 = vld [vmem:[#allocation6 + $0xd0] sm:$0xff]
    %v4408 = vld [vmem:[#allocation6 + $0xd8] sm:$0xff]
    %v4409 = vld [vmem:[#allocation6 + $0xe0] sm:$0xff]
    %v4410 = vld [vmem:[#allocation6 + $0xe8] sm:$0xff]
    %v4411 = vld [vmem:[#allocation6 + $0xf0] sm:$0xff]
    %v4412 = vld [vmem:[#allocation6 + $0xf8] sm:$0xff]
    %v4413 = vld [vmem:[#allocation6 + $0x100] sm:$0xff]
    %v4414 = vld [vmem:[#allocation6 + $0x108] sm:$0xff]
    %v4415 = vld [vmem:[#allocation6 + $0x110] sm:$0xff]
    %v4416 = vld [vmem:[#allocation6 + $0x118] sm:$0xff]
    %v4417 = vld [vmem:[#allocation6 + $0x120] sm:$0xff]
    %v4418 = vld [vmem:[#allocation6 + $0x128] sm:$0xff]
    %v4419 = vld [vmem:[#allocation6 + $0x130] sm:$0xff]
    %v4420 = vld [vmem:[#allocation6 + $0x138] sm:$0xff]
    %v4421 = vld [vmem:[#allocation6 + $0x140] sm:$0xff]
    %v4422 = vld [vmem:[#allocation6 + $0x148] sm:$0xff]
    %v4423 = vld [vmem:[#allocation6 + $0x150] sm:$0xff]
    %v4424 = vld [vmem:[#allocation6 + $0x158] sm:$0xff]
    %v4425 = vld [vmem:[#allocation6 + $0x160] sm:$0xff]
    %v4426 = vld [vmem:[#allocation6 + $0x168] sm:$0xff]
    %v4427 = vld [vmem:[#allocation6 + $0x170] sm:$0xff]
    %v4428 = vld [vmem:[#allocation6 + $0x178] sm:$0xff]
    %v4429 = vld [vmem:[#allocation6 + $0x180] sm:$0xff]
    %v4430 = vld [vmem:[#allocation6 + $0x188] sm:$0xff]
    %v4431 = vld [vmem:[#allocation6 + $0x190] sm:$0xff]
    %v4432 = vld [vmem:[#allocation6 + $0x198] sm:$0xff]
    %v4433 = vld [vmem:[#allocation6 + $0x1a0] sm:$0xff]
    %v4434 = vld [vmem:[#allocation6 + $0x1a8] sm:$0xff]
    %v4435 = vld [vmem:[#allocation6 + $0x1b0] sm:$0xff]
    %v4436 = vld [vmem:[#allocation6 + $0x1b8] sm:$0xff]
    %v4437 = vld [vmem:[#allocation6 + $0x1c0] sm:$0xff]
    %v4438 = vld [vmem:[#allocation6 + $0x1c8] sm:$0xff]
    %v4439 = vld [vmem:[#allocation6 + $0x1d0] sm:$0xff]
    %v4440 = vld [vmem:[#allocation6 + $0x1d8] sm:$0xff]
    %v4441 = vld [vmem:[#allocation6 + $0x1e0] sm:$0xff]
    %v4442 = vld [vmem:[#allocation6 + $0x1e8] sm:$0xff]
    %v4443 = vld [vmem:[#allocation6 + $0x1f0] sm:$0xff]
    %v4444 = vld [vmem:[#allocation6 + $0x1f8] sm:$0xff]
    %v4445 = vld [vmem:[#allocation6 + $0x200] sm:$0xff]
    %v4446 = vld [vmem:[#allocation6 + $0x208] sm:$0xff]
    %v4447 = vld [vmem:[#allocation6 + $0x210] sm:$0xff]
    %v4448 = vld [vmem:[#allocation6 + $0x218] sm:$0xff]
    %v4449 = vld [vmem:[#allocation6 + $0x220] sm:$0xff]
    %v4450 = vld [vmem:[#allocation6 + $0x228] sm:$0xff]
    %v4451 = vld [vmem:[#allocation6 + $0x230] sm:$0xff]
    %v4452 = vld [vmem:[#allocation6 + $0x238] sm:$0xff]
    %v4453 = vld [vmem:[#allocation6 + $0x240] sm:$0xff]
    %v4454 = vld [vmem:[#allocation6 + $0x248] sm:$0xff]
    %v4455 = vld [vmem:[#allocation6 + $0x250] sm:$0xff]
    %v4456 = vld [vmem:[#allocation6 + $0x258] sm:$0xff]
    %v4457 = vld [vmem:[#allocation6 + $0x260] sm:$0xff]
    %v4458 = vld [vmem:[#allocation6 + $0x268] sm:$0xff]
    %v4459 = vld [vmem:[#allocation6 + $0x270] sm:$0xff]
    %v4460 = vld [vmem:[#allocation6 + $0x278] sm:$0xff]
    %v4461 = vld [vmem:[#allocation6 + $0x280] sm:$0xff]
    %v4462 = vld [vmem:[#allocation6 + $0x288] sm:$0xff]
    %v4463 = vld [vmem:[#allocation6 + $0x290] sm:$0xff]
    %v4464 = vld [vmem:[#allocation6 + $0x298] sm:$0xff]
    %v4465 = vld [vmem:[#allocation6 + $0x2a0] sm:$0xff]
    %v4466 = vld [vmem:[#allocation6 + $0x2a8] sm:$0xff]
    %v4467 = vld [vmem:[#allocation6 + $0x2b0] sm:$0xff]
    %v4468 = vld [vmem:[#allocation6 + $0x2b8] sm:$0xff]
    %v4469 = vld [vmem:[#allocation6 + $0x2c0] sm:$0xff]
    %v4470 = vld [vmem:[#allocation6 + $0x2c8] sm:$0xff]
    %v4471 = vld [vmem:[#allocation6 + $0x2d0] sm:$0xff]
    %v4472 = vld [vmem:[#allocation6 + $0x2d8] sm:$0xff]
    %v4473 = vld [vmem:[#allocation6 + $0x2e0] sm:$0xff]
    %v4474 = vld [vmem:[#allocation6 + $0x2e8] sm:$0xff]
    %v4475 = vld [vmem:[#allocation6 + $0x2f0] sm:$0xff]
    %v4476 = vld [vmem:[#allocation6 + $0x2f8] sm:$0xff]
    %v4477 = vld [vmem:[#allocation6 + $0x300] sm:$0xff]
    %v4478 = vld [vmem:[#allocation6 + $0x308] sm:$0xff]
    %v4479 = vld [vmem:[#allocation6 + $0x310] sm:$0xff]
    %v4480 = vld [vmem:[#allocation6 + $0x318] sm:$0xff]
    %v4481 = vld [vmem:[#allocation6 + $0x320] sm:$0xff]
    %v4482 = vld [vmem:[#allocation6 + $0x328] sm:$0xff]
    %v4483 = vld [vmem:[#allocation6 + $0x330] sm:$0xff]
    %v4484 = vld [vmem:[#allocation6 + $0x338] sm:$0xff]
    %v4485 = vld [vmem:[#allocation6 + $0x340] sm:$0xff]
    %v4486 = vld [vmem:[#allocation6 + $0x348] sm:$0xff]
    %v4487 = vld [vmem:[#allocation6 + $0x350] sm:$0xff]
    %v4488 = vld [vmem:[#allocation6 + $0x358] sm:$0xff]
    %v4489 = vld [vmem:[#allocation6 + $0x360] sm:$0xff]
    %v4490 = vld [vmem:[#allocation6 + $0x368] sm:$0xff]
    %v4491 = vld [vmem:[#allocation6 + $0x370] sm:$0xff]
    %v4492 = vld [vmem:[#allocation6 + $0x378] sm:$0xff]
    %v4493 = vld [vmem:[#allocation6 + $0x380] sm:$0xff]
    %v4494 = vld [vmem:[#allocation6 + $0x388] sm:$0xff]
    %v4495 = vld [vmem:[#allocation6 + $0x390] sm:$0xff]
    %v4496 = vld [vmem:[#allocation6 + $0x398] sm:$0xff]
    %v4497 = vld [vmem:[#allocation6 + $0x3a0] sm:$0xff]
    %v4498 = vld [vmem:[#allocation6 + $0x3a8] sm:$0xff]
    %v4499 = vld [vmem:[#allocation6 + $0x3b0] sm:$0xff]
    %v4500 = vld [vmem:[#allocation6 + $0x3b8] sm:$0xff]
    %v4501 = vld [vmem:[#allocation6 + $0x3c0] sm:$0xff]
    %v4502 = vld [vmem:[#allocation6 + $0x3c8] sm:$0xff]
    %v4503 = vld [vmem:[#allocation6 + $0x3d0] sm:$0xff]
    %v4504 = vld [vmem:[#allocation6 + $0x3d8] sm:$0xff]
    %v4505 = vld [vmem:[#allocation6 + $0x3e0] sm:$0xff]
    %v4506 = vld [vmem:[#allocation6 + $0x3e8] sm:$0xff]
    %v4507 = vld [vmem:[#allocation6 + $0x3f0] sm:$0xff]
    %v4508 = vld [vmem:[#allocation6 + $0x3f8] sm:$0xff]
    %v4509 = vld [vmem:[%s6] sm:$0xff]
    %v4510 = vld [vmem:[%s6 + $0x8] sm:$0xff]
    %v4511 = vld [vmem:[%s6 + $0x10] sm:$0xff]
    %v4512 = vld [vmem:[%s6 + $0x18] sm:$0xff]
    %v4513 = vld [vmem:[%s6 + $0x20] sm:$0xff]
    %v4514 = vld [vmem:[%s6 + $0x28] sm:$0xff]
    %v4515 = vld [vmem:[%s6 + $0x30] sm:$0xff]
    %v4516 = vld [vmem:[%s6 + $0x38] sm:$0xff]
    %v4517 = vld [vmem:[%s6 + $0x40] sm:$0xff]
    %v4518 = vld [vmem:[%s6 + $0x48] sm:$0xff]
    %v4519 = vld [vmem:[%s6 + $0x50] sm:$0xff]
    %v4520 = vld [vmem:[%s6 + $0x58] sm:$0xff]
    %v4521 = vld [vmem:[%s6 + $0x60] sm:$0xff]
    %v4522 = vld [vmem:[%s6 + $0x68] sm:$0xff]
    %v4523 = vld [vmem:[%s6 + $0x70] sm:$0xff]
    %v4524 = vld [vmem:[%s6 + $0x78] sm:$0xff]
    %4526 = vset.pattern.permute.xlu0 0
    %4527 = vperm.xlu0 %4526, %v4509
    %v4528 = vpop.permute.xlu0 %4527
    %4531 = vset.pattern.permute.xlu0 0
    %4532 = vperm.xlu0 %4531, %v4510
    %v4533 = vpop.permute.xlu0 %4532
    %4536 = vset.pattern.permute.xlu0 0
    %4537 = vperm.xlu0 %4536, %v4511
    %v4538 = vpop.permute.xlu0 %4537
    %4541 = vset.pattern.permute.xlu0 0
    %4542 = vperm.xlu0 %4541, %v4512
    %v4543 = vpop.permute.xlu0 %4542
    %4546 = vset.pattern.permute.xlu0 0
    %4547 = vperm.xlu0 %4546, %v4513
    %v4548 = vpop.permute.xlu0 %4547
    %4551 = vset.pattern.permute.xlu0 0
    %4552 = vperm.xlu0 %4551, %v4514
    %v4553 = vpop.permute.xlu0 %4552
    %4556 = vset.pattern.permute.xlu0 0
    %4557 = vperm.xlu0 %4556, %v4515
    %v4558 = vpop.permute.xlu0 %4557
    %4561 = vset.pattern.permute.xlu0 0
    %4562 = vperm.xlu0 %4561, %v4516
    %v4563 = vpop.permute.xlu0 %4562
    %4566 = vset.pattern.permute.xlu0 0
    %4567 = vperm.xlu0 %4566, %v4517
    %v4568 = vpop.permute.xlu0 %4567
    %4571 = vset.pattern.permute.xlu0 0
    %4572 = vperm.xlu0 %4571, %v4518
    %v4573 = vpop.permute.xlu0 %4572
    %4576 = vset.pattern.permute.xlu0 0
    %4577 = vperm.xlu0 %4576, %v4519
    %v4578 = vpop.permute.xlu0 %4577
    %4581 = vset.pattern.permute.xlu0 0
    %4582 = vperm.xlu0 %4581, %v4520
    %v4583 = vpop.permute.xlu0 %4582
    %4586 = vset.pattern.permute.xlu0 0
    %4587 = vperm.xlu0 %4586, %v4521
    %v4588 = vpop.permute.xlu0 %4587
    %4591 = vset.pattern.permute.xlu0 0
    %4592 = vperm.xlu0 %4591, %v4522
    %v4593 = vpop.permute.xlu0 %4592
    %4596 = vset.pattern.permute.xlu0 0
    %4597 = vperm.xlu0 %4596, %v4523
    %v4598 = vpop.permute.xlu0 %4597
    %4601 = vset.pattern.permute.xlu0 0
    %4602 = vperm.xlu0 %4601, %v4524
    %v4603 = vpop.permute.xlu0 %4602
    %4605 = vmatprep.subr.mxu0 %v4382
    %4606 = vmatpush1.msra.mxu0 %v4381
    %4607 = vmatprep.subr.mxu0 %v4384
    %4608 = vmatpush1.msra.mxu0 %v4383
    %4609 = vmatprep.subr.mxu0 %v4386
    %4610 = vmatpush1.msra.mxu0 %v4385
    %4611 = vmatprep.subr.mxu0 %v4388
    %4612 = vmatpush1.msra.mxu0 %v4387
    %4613 = vmatprep.subr.mxu0 %v4390
    %4614 = vmatpush1.msra.mxu0 %v4389
    %4615 = vmatprep.subr.mxu0 %v4392
    %4616 = vmatpush1.msra.mxu0 %v4391
    %4617 = vmatprep.subr.mxu0 %v4394
    %4618 = vmatpush1.msra.mxu0 %v4393
    %4619 = vmatprep.subr.mxu0 %v4396
    %4620 = vmatpush1.msra.mxu0 %v4395
    %4621 = vmatprep.subr.mxu0 %v4398
    %4622 = vmatpush1.msra.mxu0 %v4397
    %4623 = vmatprep.subr.mxu0 %v4400
    %4624 = vmatpush1.msra.mxu0 %v4399
    %4625 = vmatprep.subr.mxu0 %v4402
    %4626 = vmatpush1.msra.mxu0 %v4401
    %4627 = vmatprep.subr.mxu0 %v4404
    %4628 = vmatpush1.msra.mxu0 %v4403
    %4629 = vmatprep.subr.mxu0 %v4406
    %4630 = vmatpush1.msra.mxu0 %v4405
    %4631 = vmatprep.subr.mxu0 %v4408
    %4632 = vmatpush1.msra.mxu0 %v4407
    %4633 = vmatprep.subr.mxu0 %v4410
    %4634 = vmatpush1.msra.mxu0 %v4409
    %4635 = vmatprep.subr.mxu0 %v4412
    %4636 = vmatpush1.msra.mxu0 %v4411
    %4637 = vmatprep.subr.mxu0 %v4414
    %4638 = vmatpush1.msra.mxu0 %v4413
    %4639 = vmatprep.subr.mxu0 %v4416
    %4640 = vmatpush1.msra.mxu0 %v4415
    %4641 = vmatprep.subr.mxu0 %v4418
    %4642 = vmatpush1.msra.mxu0 %v4417
    %4643 = vmatprep.subr.mxu0 %v4420
    %4644 = vmatpush1.msra.mxu0 %v4419
    %4645 = vmatprep.subr.mxu0 %v4422
    %4646 = vmatpush1.msra.mxu0 %v4421
    %4647 = vmatprep.subr.mxu0 %v4424
    %4648 = vmatpush1.msra.mxu0 %v4423
    %4649 = vmatprep.subr.mxu0 %v4426
    %4650 = vmatpush1.msra.mxu0 %v4425
    %4651 = vmatprep.subr.mxu0 %v4428
    %4652 = vmatpush1.msra.mxu0 %v4427
    %4653 = vmatprep.subr.mxu0 %v4430
    %4654 = vmatpush1.msra.mxu0 %v4429
    %4655 = vmatprep.subr.mxu0 %v4432
    %4656 = vmatpush1.msra.mxu0 %v4431
    %4657 = vmatprep.subr.mxu0 %v4434
    %4658 = vmatpush1.msra.mxu0 %v4433
    %4659 = vmatprep.subr.mxu0 %v4436
    %4660 = vmatpush1.msra.mxu0 %v4435
    %4661 = vmatprep.subr.mxu0 %v4438
    %4662 = vmatpush1.msra.mxu0 %v4437
    %4663 = vmatprep.subr.mxu0 %v4440
    %4664 = vmatpush1.msra.mxu0 %v4439
    %4665 = vmatprep.subr.mxu0 %v4442
    %4666 = vmatpush1.msra.mxu0 %v4441
    %4667 = vmatprep.subr.mxu0 %v4444
    %4668 = vmatpush1.msra.mxu0 %v4443
    %4669 = vmatprep.mubr.f32.mxu0 %v4318
    %4670 = vmatmul.mubr.f32.gmra.mrb[0].mxu0 %v4317
    %v4671 = vpop.f32.mrb[0].mxu0
    %v4672 = vadd.f32 %v4528, %v4671
    %v4673 = vpop.f32.mrb[0].mxu0
    %v4674 = vadd.f32 %v4528, %v4673
    %4675 = vmatprep.mubr.f32.mxu0 %v4322
    %4676 = vmatmul.mubr.f32.gmra.mrb[0].mxu0 %v4321
    %v4677 = vpop.f32.mrb[0].mxu0
    %v4678 = vadd.f32 %v4533, %v4677
    %v4679 = vpop.f32.mrb[0].mxu0
    %v4680 = vadd.f32 %v4533, %v4679
    %4681 = vmatprep.mubr.f32.mxu0 %v4326
    %4682 = vmatmul.mubr.f32.gmra.mrb[0].mxu0 %v4325
    %v4683 = vpop.f32.mrb[0].mxu0
    %v4684 = vadd.f32 %v4538, %v4683
    %v4685 = vpop.f32.mrb[0].mxu0
    %v4686 = vadd.f32 %v4538, %v4685
    %4687 = vmatprep.mubr.f32.mxu0 %v4330
    %4688 = vmatmul.mubr.f32.gmra.mrb[0].mxu0 %v4329
    %v4689 = vpop.f32.mrb[0].mxu0
    %v4690 = vadd.f32 %v4543, %v4689
    %v4691 = vpop.f32.mrb[0].mxu0
    %v4692 = vadd.f32 %v4543, %v4691
    %4693 = vmatprep.mubr.f32.mxu0 %v4334
    %4694 = vmatmul.mubr.f32.gmra.mrb[0].mxu0 %v4333
    %v4695 = vpop.f32.mrb[0].mxu0
    %v4696 = vadd.f32 %v4548, %v4695
    %v4697 = vpop.f32.mrb[0].mxu0
    %v4698 = vadd.f32 %v4548, %v4697
    %4699 = vmatprep.mubr.f32.mxu0 %v4338
    %4700 = vmatmul.mubr.f32.gmra.mrb[0].mxu0 %v4337
    %v4701 = vpop.f32.mrb[0].mxu0
    %v4702 = vadd.f32 %v4553, %v4701
    %v4703 = vpop.f32.mrb[0].mxu0
    %v4704 = vadd.f32 %v4553, %v4703
    %4705 = vmatprep.mubr.f32.mxu0 %v4342
    %4706 = vmatmul.mubr.f32.gmra.mrb[0].mxu0 %v4341
    %v4707 = vpop.f32.mrb[0].mxu0
    %v4708 = vadd.f32 %v4558, %v4707
    %v4709 = vpop.f32.mrb[0].mxu0
    %v4710 = vadd.f32 %v4558, %v4709
    %4711 = vmatprep.mubr.f32.mxu0 %v4346
    %4712 = vmatmul.mubr.f32.gmra.mrb[0].mxu0 %v4345
    %v4713 = vpop.f32.mrb[0].mxu0
    %v4714 = vadd.f32 %v4563, %v4713
    %v4715 = vpop.f32.mrb[0].mxu0
    %v4716 = vadd.f32 %v4563, %v4715
    %4717 = vmatprep.mubr.f32.mxu0 %v4350
    %4718 = vmatmul.mubr.f32.gmra.mrb[0].mxu0 %v4349
    %v4719 = vpop.f32.mrb[0].mxu0
    %v4720 = vadd.f32 %v4568, %v4719
    %v4721 = vpop.f32.mrb[0].mxu0
    %v4722 = vadd.f32 %v4568, %v4721
    %4723 = vmatprep.mubr.f32.mxu0 %v4354
    %4724 = vmatmul.mubr.f32.gmra.mrb[0].mxu0 %v4353
    %v4725 = vpop.f32.mrb[0].mxu0
    %v4726 = vadd.f32 %v4573, %v4725
    %v4727 = vpop.f32.mrb[0].mxu0
    %v4728 = vadd.f32 %v4573, %v4727
    %4729 = vmatprep.mubr.f32.mxu0 %v4358
    %4730 = vmatmul.mubr.f32.gmra.mrb[0].mxu0 %v4357
    %v4731 = vpop.f32.mrb[0].mxu0
    %v4732 = vadd.f32 %v4578, %v4731
    %v4733 = vpop.f32.mrb[0].mxu0
    %v4734 = vadd.f32 %v4578, %v4733
    %4735 = vmatprep.mubr.f32.mxu0 %v4362
    %4736 = vmatmul.mubr.f32.gmra.mrb[0].mxu0 %v4361
    %v4737 = vpop.f32.mrb[0].mxu0
    %v4738 = vadd.f32 %v4583, %v4737
    %v4739 = vpop.f32.mrb[0].mxu0
    %v4740 = vadd.f32 %v4583, %v4739
    %4741 = vmatprep.mubr.f32.mxu0 %v4366
    %4742 = vmatmul.mubr.f32.gmra.mrb[0].mxu0 %v4365
    %v4743 = vpop.f32.mrb[0].mxu0
    %v4744 = vadd.f32 %v4588, %v4743
    %v4745 = vpop.f32.mrb[0].mxu0
    %v4746 = vadd.f32 %v4588, %v4745
    %4747 = vmatprep.mubr.f32.mxu0 %v4370
    %4748 = vmatmul.mubr.f32.gmra.mrb[0].mxu0 %v4369
    %v4749 = vpop.f32.mrb[0].mxu0
    %v4750 = vadd.f32 %v4593, %v4749
    %v4751 = vpop.f32.mrb[0].mxu0
    %v4752 = vadd.f32 %v4593, %v4751
    %4753 = vmatprep.mubr.f32.mxu0 %v4374
    %4754 = vmatmul.mubr.f32.gmra.mrb[0].mxu0 %v4373
    %v4755 = vpop.f32.mrb[0].mxu0
    %v4756 = vadd.f32 %v4598, %v4755
    %v4757 = vpop.f32.mrb[0].mxu0
    %v4758 = vadd.f32 %v4598, %v4757
    %4759 = vmatprep.mubr.f32.mxu0 %v4378
    %4760 = vmatmul.mubr.f32.gmra.mrb[0].mxu0 %v4377
    %v4761 = vpop.f32.mrb[0].mxu0
    %v4762 = vadd.f32 %v4603, %v4761
    %v4763 = vpop.f32.mrb[0].mxu0
    %v4764 = vadd.f32 %v4603, %v4763
    %4765 = vdwg.mxu0
    %4766 = vmatprep.subr.mxu0 %v4446
    %4767 = vmatpush1.msra.mxu0 %v4445
    %4768 = vmatprep.subr.mxu0 %v4448
    %4769 = vmatpush1.msra.mxu0 %v4447
    %4770 = vmatprep.subr.mxu0 %v4450
    %4771 = vmatpush1.msra.mxu0 %v4449
    %4772 = vmatprep.subr.mxu0 %v4452
    %4773 = vmatpush1.msra.mxu0 %v4451
    %4774 = vmatprep.subr.mxu0 %v4454
    %4775 = vmatpush1.msra.mxu0 %v4453
    %4776 = vmatprep.subr.mxu0 %v4456
    %4777 = vmatpush1.msra.mxu0 %v4455
    %4778 = vmatprep.subr.mxu0 %v4458
    %4779 = vmatpush1.msra.mxu0 %v4457
    %4780 = vmatprep.subr.mxu0 %v4460
    %4781 = vmatpush1.msra.mxu0 %v4459
    %4782 = vmatprep.subr.mxu0 %v4462
    %4783 = vmatpush1.msra.mxu0 %v4461
    %4784 = vmatprep.subr.mxu0 %v4464
    %4785 = vmatpush1.msra.mxu0 %v4463
    %4786 = vmatprep.subr.mxu0 %v4466
    %4787 = vmatpush1.msra.mxu0 %v4465
    %4788 = vmatprep.subr.mxu0 %v4468
    %4789 = vmatpush1.msra.mxu0 %v4467
    %4790 = vmatprep.subr.mxu0 %v4470
    %4791 = vmatpush1.msra.mxu0 %v4469
    %4792 = vmatprep.subr.mxu0 %v4472
    %4793 = vmatpush1.msra.mxu0 %v4471
    %4794 = vmatprep.subr.mxu0 %v4474
    %4795 = vmatpush1.msra.mxu0 %v4473
    %4796 = vmatprep.subr.mxu0 %v4476
    %4797 = vmatpush1.msra.mxu0 %v4475
    %4798 = vmatprep.subr.mxu0 %v4478
    %4799 = vmatpush1.msra.mxu0 %v4477
    %4800 = vmatprep.subr.mxu0 %v4480
    %4801 = vmatpush1.msra.mxu0 %v4479
    %4802 = vmatprep.subr.mxu0 %v4482
    %4803 = vmatpush1.msra.mxu0 %v4481
    %4804 = vmatprep.subr.mxu0 %v4484
    %4805 = vmatpush1.msra.mxu0 %v4483
    %4806 = vmatprep.subr.mxu0 %v4486
    %4807 = vmatpush1.msra.mxu0 %v4485
    %4808 = vmatprep.subr.mxu0 %v4488
    %4809 = vmatpush1.msra.mxu0 %v4487
    %4810 = vmatprep.subr.mxu0 %v4490
    %4811 = vmatpush1.msra.mxu0 %v4489
    %4812 = vmatprep.subr.mxu0 %v4492
    %4813 = vmatpush1.msra.mxu0 %v4491
    %4814 = vmatprep.subr.mxu0 %v4494
    %4815 = vmatpush1.msra.mxu0 %v4493
    %4816 = vmatprep.subr.mxu0 %v4496
    %4817 = vmatpush1.msra.mxu0 %v4495
    %4818 = vmatprep.subr.mxu0 %v4498
    %4819 = vmatpush1.msra.mxu0 %v4497
    %4820 = vmatprep.subr.mxu0 %v4500
    %4821 = vmatpush1.msra.mxu0 %v4499
    %4822 = vmatprep.subr.mxu0 %v4502
    %4823 = vmatpush1.msra.mxu0 %v4501
    %4824 = vmatprep.subr.mxu0 %v4504
    %4825 = vmatpush1.msra.mxu0 %v4503
    %4826 = vmatprep.subr.mxu0 %v4506
    %4827 = vmatpush1.msra.mxu0 %v4505
    %4828 = vmatprep.subr.mxu0 %v4508
    %4829 = vmatpush1.msra.mxu0 %v4507
    %4830 = vmatprep.mubr.f32.mxu0 %v4320
    %4831 = vmatmul.mubr.f32.gmra.mrb[0].mxu0 %v4319
    %v4832 = vpop.f32.mrb[0].mxu0
    %v4833 = vadd.f32 %v4672, %v4832
    %v4834 = vpop.f32.mrb[0].mxu0
    %v4835 = vadd.f32 %v4674, %v4834
    %4836 = vmatprep.mubr.f32.mxu0 %v4324
    %4837 = vmatmul.mubr.f32.gmra.mrb[0].mxu0 %v4323
    %v4838 = vpop.f32.mrb[0].mxu0
    %v4839 = vadd.f32 %v4678, %v4838
    %v4840 = vpop.f32.mrb[0].mxu0
    %v4841 = vadd.f32 %v4680, %v4840
    %4842 = vmatprep.mubr.f32.mxu0 %v4328
    %4843 = vmatmul.mubr.f32.gmra.mrb[0].mxu0 %v4327
    %v4844 = vpop.f32.mrb[0].mxu0
    %v4845 = vadd.f32 %v4684, %v4844
    %v4846 = vpop.f32.mrb[0].mxu0
    %v4847 = vadd.f32 %v4686, %v4846
    %4848 = vmatprep.mubr.f32.mxu0 %v4332
    %4849 = vmatmul.mubr.f32.gmra.mrb[0].mxu0 %v4331
    %v4850 = vpop.f32.mrb[0].mxu0
    %v4851 = vadd.f32 %v4690, %v4850
    %v4852 = vpop.f32.mrb[0].mxu0
    %v4853 = vadd.f32 %v4692, %v4852
    %4854 = vmatprep.mubr.f32.mxu0 %v4336
    %4855 = vmatmul.mubr.f32.gmra.mrb[0].mxu0 %v4335
    %v4856 = vpop.f32.mrb[0].mxu0
    %v4857 = vadd.f32 %v4696, %v4856
    %v4858 = vpop.f32.mrb[0].mxu0
    %v4859 = vadd.f32 %v4698, %v4858
    %4860 = vmatprep.mubr.f32.mxu0 %v4340
    %4861 = vmatmul.mubr.f32.gmra.mrb[0].mxu0 %v4339
    %v4862 = vpop.f32.mrb[0].mxu0
    %v4863 = vadd.f32 %v4702, %v4862
    %v4864 = vpop.f32.mrb[0].mxu0
    %v4865 = vadd.f32 %v4704, %v4864
    %4866 = vmatprep.mubr.f32.mxu0 %v4344
    %4867 = vmatmul.mubr.f32.gmra.mrb[0].mxu0 %v4343
    %v4868 = vpop.f32.mrb[0].mxu0
    %v4869 = vadd.f32 %v4708, %v4868
    %v4870 = vpop.f32.mrb[0].mxu0
    %v4871 = vadd.f32 %v4710, %v4870
    %4872 = vmatprep.mubr.f32.mxu0 %v4348
    %4873 = vmatmul.mubr.f32.gmra.mrb[0].mxu0 %v4347
    %v4874 = vpop.f32.mrb[0].mxu0
    %v4875 = vadd.f32 %v4714, %v4874
    %v4876 = vpop.f32.mrb[0].mxu0
    %v4877 = vadd.f32 %v4716, %v4876
    %4878 = vmatprep.mubr.f32.mxu0 %v4352
    %4879 = vmatmul.mubr.f32.gmra.mrb[0].mxu0 %v4351
    %v4880 = vpop.f32.mrb[0].mxu0
    %v4881 = vadd.f32 %v4720, %v4880
    %v4882 = vpop.f32.mrb[0].mxu0
    %v4883 = vadd.f32 %v4722, %v4882
    %4884 = vmatprep.mubr.f32.mxu0 %v4356
    %4885 = vmatmul.mubr.f32.gmra.mrb[0].mxu0 %v4355
    %v4886 = vpop.f32.mrb[0].mxu0
    %v4887 = vadd.f32 %v4726, %v4886
    %v4888 = vpop.f32.mrb[0].mxu0
    %v4889 = vadd.f32 %v4728, %v4888
    %4890 = vmatprep.mubr.f32.mxu0 %v4360
    %4891 = vmatmul.mubr.f32.gmra.mrb[0].mxu0 %v4359
    %v4892 = vpop.f32.mrb[0].mxu0
    %v4893 = vadd.f32 %v4732, %v4892
    %v4894 = vpop.f32.mrb[0].mxu0
    %v4895 = vadd.f32 %v4734, %v4894
    %4896 = vmatprep.mubr.f32.mxu0 %v4364
    %4897 = vmatmul.mubr.f32.gmra.mrb[0].mxu0 %v4363
    %v4898 = vpop.f32.mrb[0].mxu0
    %v4899 = vadd.f32 %v4738, %v4898
    %v4900 = vpop.f32.mrb[0].mxu0
    %v4901 = vadd.f32 %v4740, %v4900
    %4902 = vmatprep.mubr.f32.mxu0 %v4368
    %4903 = vmatmul.mubr.f32.gmra.mrb[0].mxu0 %v4367
    %v4904 = vpop.f32.mrb[0].mxu0
    %v4905 = vadd.f32 %v4744, %v4904
    %v4906 = vpop.f32.mrb[0].mxu0
    %v4907 = vadd.f32 %v4746, %v4906
    %4908 = vmatprep.mubr.f32.mxu0 %v4372
    %4909 = vmatmul.mubr.f32.gmra.mrb[0].mxu0 %v4371
    %v4910 = vpop.f32.mrb[0].mxu0
    %v4911 = vadd.f32 %v4750, %v4910
    %v4912 = vpop.f32.mrb[0].mxu0
    %v4913 = vadd.f32 %v4752, %v4912
    %4914 = vmatprep.mubr.f32.mxu0 %v4376
    %4915 = vmatmul.mubr.f32.gmra.mrb[0].mxu0 %v4375
    %v4916 = vpop.f32.mrb[0].mxu0
    %v4917 = vadd.f32 %v4756, %v4916
    %v4918 = vpop.f32.mrb[0].mxu0
    %v4919 = vadd.f32 %v4758, %v4918
    %4920 = vmatprep.mubr.f32.mxu0 %v4380
    %4921 = vmatmul.mubr.f32.gmra.mrb[0].mxu0 %v4379
    %v4922 = vpop.f32.mrb[0].mxu0
    %v4923 = vadd.f32 %v4762, %v4922
    %v4924 = vpop.f32.mrb[0].mxu0
    %v4925 = vadd.f32 %v4764, %v4924
    %4926 = vdwg.mxu0
    %vm4927 = vcmp.ge.f32.partialorder %v4833, 0.0
    %vm4928 = vcmp.ge.f32.partialorder %v4835, 0.0
    %vm4929 = vcmp.ge.f32.partialorder %v4839, 0.0
    %vm4930 = vcmp.ge.f32.partialorder %v4841, 0.0
    %vm4931 = vcmp.ge.f32.partialorder %v4845, 0.0
    %vm4932 = vcmp.ge.f32.partialorder %v4847, 0.0
    %vm4933 = vcmp.ge.f32.partialorder %v4851, 0.0
    %vm4934 = vcmp.ge.f32.partialorder %v4853, 0.0
    %vm4935 = vcmp.ge.f32.partialorder %v4857, 0.0
    %vm4936 = vcmp.ge.f32.partialorder %v4859, 0.0
    %vm4937 = vcmp.ge.f32.partialorder %v4863, 0.0
    %vm4938 = vcmp.ge.f32.partialorder %v4865, 0.0
    %vm4939 = vcmp.ge.f32.partialorder %v4869, 0.0
    %vm4940 = vcmp.ge.f32.partialorder %v4871, 0.0
    %vm4941 = vcmp.ge.f32.partialorder %v4875, 0.0
    %vm4942 = vcmp.ge.f32.partialorder %v4877, 0.0
    %vm4943 = vcmp.ge.f32.partialorder %v4881, 0.0
    %vm4944 = vcmp.ge.f32.partialorder %v4883, 0.0
    %vm4945 = vcmp.ge.f32.partialorder %v4887, 0.0
    %vm4946 = vcmp.ge.f32.partialorder %v4889, 0.0
    %vm4947 = vcmp.ge.f32.partialorder %v4893, 0.0
    %vm4948 = vcmp.ge.f32.partialorder %v4895, 0.0
    %vm4949 = vcmp.ge.f32.partialorder %v4899, 0.0
    %vm4950 = vcmp.ge.f32.partialorder %v4901, 0.0
    %vm4951 = vcmp.ge.f32.partialorder %v4905, 0.0
    %vm4952 = vcmp.ge.f32.partialorder %v4907, 0.0
    %vm4953 = vcmp.ge.f32.partialorder %v4911, 0.0
    %vm4954 = vcmp.ge.f32.partialorder %v4913, 0.0
    %vm4955 = vcmp.ge.f32.partialorder %v4917, 0.0
    %vm4956 = vcmp.ge.f32.partialorder %v4919, 0.0
    %vm4957 = vcmp.ge.f32.partialorder %v4923, 0.0
    %vm4958 = vcmp.ge.f32.partialorder %v4925, 0.0
    %v4959 = vmul.f32 %v4833, 0.01
    %v4960 = vmul.f32 %v4835, 0.01
    %v4961 = vmul.f32 %v4839, 0.01
    %v4962 = vmul.f32 %v4841, 0.01
    %v4963 = vmul.f32 %v4845, 0.01
    %v4964 = vmul.f32 %v4847, 0.01
    %v4965 = vmul.f32 %v4851, 0.01
    %v4966 = vmul.f32 %v4853, 0.01
    %v4967 = vmul.f32 %v4857, 0.01
    %v4968 = vmul.f32 %v4859, 0.01
    %v4969 = vmul.f32 %v4863, 0.01
    %v4970 = vmul.f32 %v4865, 0.01
    %v4971 = vmul.f32 %v4869, 0.01
    %v4972 = vmul.f32 %v4871, 0.01
    %v4973 = vmul.f32 %v4875, 0.01
    %v4974 = vmul.f32 %v4877, 0.01
    %v4975 = vmul.f32 %v4881, 0.01
    %v4976 = vmul.f32 %v4883, 0.01
    %v4977 = vmul.f32 %v4887, 0.01
    %v4978 = vmul.f32 %v4889, 0.01
    %v4979 = vmul.f32 %v4893, 0.01
    %v4980 = vmul.f32 %v4895, 0.01
    %v4981 = vmul.f32 %v4899, 0.01
    %v4982 = vmul.f32 %v4901, 0.01
    %v4983 = vmul.f32 %v4905, 0.01
    %v4984 = vmul.f32 %v4907, 0.01
    %v4985 = vmul.f32 %v4911, 0.01
    %v4986 = vmul.f32 %v4913, 0.01
    %v4987 = vmul.f32 %v4917, 0.01
    %v4988 = vmul.f32 %v4919, 0.01
    %v4989 = vmul.f32 %v4923, 0.01
    %v4990 = vmul.f32 %v4925, 0.01
    %v4991 = vsel %vm4927, %v4833, %v4959
    %v4992 = vsel %vm4928, %v4835, %v4960
    %v4993 = vsel %vm4929, %v4839, %v4961
    %v4994 = vsel %vm4930, %v4841, %v4962
    %v4995 = vsel %vm4931, %v4845, %v4963
    %v4996 = vsel %vm4932, %v4847, %v4964
    %v4997 = vsel %vm4933, %v4851, %v4965
    %v4998 = vsel %vm4934, %v4853, %v4966
    %v4999 = vsel %vm4935, %v4857, %v4967
    %v5000 = vsel %vm4936, %v4859, %v4968
    %v5001 = vsel %vm4937, %v4863, %v4969
    %v5002 = vsel %vm4938, %v4865, %v4970
    %v5003 = vsel %vm4939, %v4869, %v4971
    %v5004 = vsel %vm4940, %v4871, %v4972
    %v5005 = vsel %vm4941, %v4875, %v4973
    %v5006 = vsel %vm4942, %v4877, %v4974
    %v5007 = vsel %vm4943, %v4881, %v4975
    %v5008 = vsel %vm4944, %v4883, %v4976
    %v5009 = vsel %vm4945, %v4887, %v4977
    %v5010 = vsel %vm4946, %v4889, %v4978
    %v5011 = vsel %vm4947, %v4893, %v4979
    %v5012 = vsel %vm4948, %v4895, %v4980
    %v5013 = vsel %vm4949, %v4899, %v4981
    %v5014 = vsel %vm4950, %v4901, %v4982
    %v5015 = vsel %vm4951, %v4905, %v4983
    %v5016 = vsel %vm4952, %v4907, %v4984
    %v5017 = vsel %vm4953, %v4911, %v4985
    %v5018 = vsel %vm4954, %v4913, %v4986
    %v5019 = vsel %vm4955, %v4917, %v4987
    %v5020 = vsel %vm4956, %v4919, %v4988
    %v5021 = vsel %vm4957, %v4923, %v4989
    %v5022 = vsel %vm4958, %v4925, %v4990
    %5023 = vst.msk [vmem:[#allocation5] sm:$0xff] %vm2921, 0.0
    %5024 = vst.msk [vmem:[#allocation5 + $0x10] sm:$0xff] %vm2921, 0.0
    %5025 = vst.msk [vmem:[#allocation5 + $0x20] sm:$0xff] %vm2921, 0.0
    %5026 = vst.msk [vmem:[#allocation5 + $0x30] sm:$0xff] %vm2921, 0.0
    %5027 = vst.msk [vmem:[#allocation5 + $0x40] sm:$0xff] %vm2921, 0.0
    %5028 = vst.msk [vmem:[#allocation5 + $0x50] sm:$0xff] %vm2921, 0.0
    %5029 = vst.msk [vmem:[#allocation5 + $0x60] sm:$0xff] %vm2921, 0.0
    %5030 = vst.msk [vmem:[#allocation5 + $0x70] sm:$0xff] %vm2921, 0.0
    %5031 = vst.msk [vmem:[#allocation5 + $0x80] sm:$0xff] %vm2921, 0.0
    %5032 = vst.msk [vmem:[#allocation5 + $0x90] sm:$0xff] %vm2921, 0.0
    %5033 = vst.msk [vmem:[#allocation5 + $0xa0] sm:$0xff] %vm2921, 0.0
    %5034 = vst.msk [vmem:[#allocation5 + $0xb0] sm:$0xff] %vm2921, 0.0
    %5035 = vst.msk [vmem:[#allocation5 + $0xc0] sm:$0xff] %vm2921, 0.0
    %5036 = vst.msk [vmem:[#allocation5 + $0xd0] sm:$0xff] %vm2921, 0.0
    %5037 = vst.msk [vmem:[#allocation5 + $0xe0] sm:$0xff] %vm2921, 0.0
    %5038 = vst.msk [vmem:[#allocation5 + $0xf0] sm:$0xff] %vm2921, 0.0
    %5039 = vst.msk [vmem:[#allocation5 + $0x100] sm:$0xff] %vm2921, 0.0
    %5040 = vst.msk [vmem:[#allocation5 + $0x110] sm:$0xff] %vm2921, 0.0
    %5041 = vst.msk [vmem:[#allocation5 + $0x120] sm:$0xff] %vm2921, 0.0
    %5042 = vst.msk [vmem:[#allocation5 + $0x130] sm:$0xff] %vm2921, 0.0
    %5043 = vst.msk [vmem:[#allocation5 + $0x140] sm:$0xff] %vm2921, 0.0
    %5044 = vst.msk [vmem:[#allocation5 + $0x150] sm:$0xff] %vm2921, 0.0
    %5045 = vst.msk [vmem:[#allocation5 + $0x160] sm:$0xff] %vm2921, 0.0
    %5046 = vst.msk [vmem:[#allocation5 + $0x170] sm:$0xff] %vm2921, 0.0
    %5047 = vst.msk [vmem:[#allocation5 + $0x180] sm:$0xff] %vm2921, 0.0
    %5048 = vst.msk [vmem:[#allocation5 + $0x190] sm:$0xff] %vm2921, 0.0
    %5049 = vst.msk [vmem:[#allocation5 + $0x1a0] sm:$0xff] %vm2921, 0.0
    %5050 = vst.msk [vmem:[#allocation5 + $0x1b0] sm:$0xff] %vm2921, 0.0
    %5051 = vst.msk [vmem:[#allocation5 + $0x1c0] sm:$0xff] %vm2921, 0.0
    %5052 = vst.msk [vmem:[#allocation5 + $0x1d0] sm:$0xff] %vm2921, 0.0
    %5053 = vst.msk [vmem:[#allocation5 + $0x1e0] sm:$0xff] %vm2921, 0.0
    %5054 = vst.msk [vmem:[#allocation5 + $0x1f0] sm:$0xff] %vm2921, 0.0
    %5055 = vst.msk [vmem:[#allocation5 + $0x8] sm:$0xff] %vm2938, 0.0
    %5056 = vst.msk [vmem:[#allocation5 + $0x18] sm:$0xff] %vm2938, 0.0
    %5057 = vst.msk [vmem:[#allocation5 + $0x28] sm:$0xff] %vm2938, 0.0
    %5058 = vst.msk [vmem:[#allocation5 + $0x38] sm:$0xff] %vm2938, 0.0
    %5059 = vst.msk [vmem:[#allocation5 + $0x48] sm:$0xff] %vm2938, 0.0
    %5060 = vst.msk [vmem:[#allocation5 + $0x58] sm:$0xff] %vm2938, 0.0
    %5061 = vst.msk [vmem:[#allocation5 + $0x68] sm:$0xff] %vm2938, 0.0
    %5062 = vst.msk [vmem:[#allocation5 + $0x78] sm:$0xff] %vm2938, 0.0
    %5063 = vst.msk [vmem:[#allocation5 + $0x88] sm:$0xff] %vm2938, 0.0
    %5064 = vst.msk [vmem:[#allocation5 + $0x98] sm:$0xff] %vm2938, 0.0
    %5065 = vst.msk [vmem:[#allocation5 + $0xa8] sm:$0xff] %vm2938, 0.0
    %5066 = vst.msk [vmem:[#allocation5 + $0xb8] sm:$0xff] %vm2938, 0.0
    %5067 = vst.msk [vmem:[#allocation5 + $0xc8] sm:$0xff] %vm2938, 0.0
    %5068 = vst.msk [vmem:[#allocation5 + $0xd8] sm:$0xff] %vm2938, 0.0
    %5069 = vst.msk [vmem:[#allocation5 + $0xe8] sm:$0xff] %vm2938, 0.0
    %5070 = vst.msk [vmem:[#allocation5 + $0xf8] sm:$0xff] %vm2938, 0.0
    %5071 = vst.msk [vmem:[#allocation5 + $0x108] sm:$0xff] %vm2938, 0.0
    %5072 = vst.msk [vmem:[#allocation5 + $0x118] sm:$0xff] %vm2938, 0.0
    %5073 = vst.msk [vmem:[#allocation5 + $0x128] sm:$0xff] %vm2938, 0.0
    %5074 = vst.msk [vmem:[#allocation5 + $0x138] sm:$0xff] %vm2938, 0.0
    %5075 = vst.msk [vmem:[#allocation5 + $0x148] sm:$0xff] %vm2938, 0.0
    %5076 = vst.msk [vmem:[#allocation5 + $0x158] sm:$0xff] %vm2938, 0.0
    %5077 = vst.msk [vmem:[#allocation5 + $0x168] sm:$0xff] %vm2938, 0.0
    %5078 = vst.msk [vmem:[#allocation5 + $0x178] sm:$0xff] %vm2938, 0.0
    %5079 = vst.msk [vmem:[#allocation5 + $0x188] sm:$0xff] %vm2938, 0.0
    %5080 = vst.msk [vmem:[#allocation5 + $0x198] sm:$0xff] %vm2938, 0.0
    %5081 = vst.msk [vmem:[#allocation5 + $0x1a8] sm:$0xff] %vm2938, 0.0
    %5082 = vst.msk [vmem:[#allocation5 + $0x1b8] sm:$0xff] %vm2938, 0.0
    %5083 = vst.msk [vmem:[#allocation5 + $0x1c8] sm:$0xff] %vm2938, 0.0
    %5084 = vst.msk [vmem:[#allocation5 + $0x1d8] sm:$0xff] %vm2938, 0.0
    %5085 = vst.msk [vmem:[#allocation5 + $0x1e8] sm:$0xff] %vm2938, 0.0
    %5086 = vst.msk [vmem:[#allocation5 + $0x1f8] sm:$0xff] %vm2938, 0.0
    %5103 = vrot.lane.b32.xlu0 %v4991, 4
    %v5104 = vpop.permute.xlu0 %5103
    %5105 = vrot.lane.b32.xlu0 %v4993, 4
    %v5106 = vpop.permute.xlu0 %5105
    %5107 = vrot.lane.b32.xlu0 %v4995, 4
    %v5108 = vpop.permute.xlu0 %5107
    %5109 = vrot.lane.b32.xlu0 %v4997, 4
    %v5110 = vpop.permute.xlu0 %5109
    %5111 = vrot.lane.b32.xlu0 %v4999, 4
    %v5112 = vpop.permute.xlu0 %5111
    %5113 = vrot.lane.b32.xlu0 %v5001, 4
    %v5114 = vpop.permute.xlu0 %5113
    %5115 = vrot.lane.b32.xlu0 %v5003, 4
    %v5116 = vpop.permute.xlu0 %5115
    %5117 = vrot.lane.b32.xlu0 %v5005, 4
    %v5118 = vpop.permute.xlu0 %5117
    %5119 = vrot.lane.b32.xlu0 %v5007, 4
    %v5120 = vpop.permute.xlu0 %5119
    %5121 = vrot.lane.b32.xlu0 %v5009, 4
    %v5122 = vpop.permute.xlu0 %5121
    %5123 = vrot.lane.b32.xlu0 %v5011, 4
    %v5124 = vpop.permute.xlu0 %5123
    %5125 = vrot.lane.b32.xlu0 %v5013, 4
    %v5126 = vpop.permute.xlu0 %5125
    %5127 = vrot.lane.b32.xlu0 %v5015, 4
    %v5128 = vpop.permute.xlu0 %5127
    %5129 = vrot.lane.b32.xlu0 %v5017, 4
    %v5130 = vpop.permute.xlu0 %5129
    %5131 = vrot.lane.b32.xlu0 %v5019, 4
    %v5132 = vpop.permute.xlu0 %5131
    %5133 = vrot.lane.b32.xlu0 %v5021, 4
    %v5134 = vpop.permute.xlu0 %5133
    %5151 = vst.msk [vmem:[#allocation5] sm:$0xff] %vm2987, %v5104
    %5152 = vst.msk [vmem:[#allocation5 + $0x8] sm:$0xff] %vm2921, %v5104
    %5153 = vst.msk [vmem:[#allocation5 + $0x10] sm:$0xff] %vm2987, %v5106
    %5154 = vst.msk [vmem:[#allocation5 + $0x18] sm:$0xff] %vm2921, %v5106
    %5155 = vst.msk [vmem:[#allocation5 + $0x20] sm:$0xff] %vm2987, %v5108
    %5156 = vst.msk [vmem:[#allocation5 + $0x28] sm:$0xff] %vm2921, %v5108
    %5157 = vst.msk [vmem:[#allocation5 + $0x30] sm:$0xff] %vm2987, %v5110
    %5158 = vst.msk [vmem:[#allocation5 + $0x38] sm:$0xff] %vm2921, %v5110
    %5159 = vst.msk [vmem:[#allocation5 + $0x40] sm:$0xff] %vm2987, %v5112
    %5160 = vst.msk [vmem:[#allocation5 + $0x48] sm:$0xff] %vm2921, %v5112
    %5161 = vst.msk [vmem:[#allocation5 + $0x50] sm:$0xff] %vm2987, %v5114
    %5162 = vst.msk [vmem:[#allocation5 + $0x58] sm:$0xff] %vm2921, %v5114
    %5163 = vst.msk [vmem:[#allocation5 + $0x60] sm:$0xff] %vm2987, %v5116
    %5164 = vst.msk [vmem:[#allocation5 + $0x68] sm:$0xff] %vm2921, %v5116
    %5165 = vst.msk [vmem:[#allocation5 + $0x70] sm:$0xff] %vm2987, %v5118
    %5166 = vst.msk [vmem:[#allocation5 + $0x78] sm:$0xff] %vm2921, %v5118
    %5167 = vst.msk [vmem:[#allocation5 + $0x80] sm:$0xff] %vm2987, %v5120
    %5168 = vst.msk [vmem:[#allocation5 + $0x88] sm:$0xff] %vm2921, %v5120
    %5169 = vst.msk [vmem:[#allocation5 + $0x90] sm:$0xff] %vm2987, %v5122
    %5170 = vst.msk [vmem:[#allocation5 + $0x98] sm:$0xff] %vm2921, %v5122
    %5171 = vst.msk [vmem:[#allocation5 + $0xa0] sm:$0xff] %vm2987, %v5124
    %5172 = vst.msk [vmem:[#allocation5 + $0xa8] sm:$0xff] %vm2921, %v5124
    %5173 = vst.msk [vmem:[#allocation5 + $0xb0] sm:$0xff] %vm2987, %v5126
    %5174 = vst.msk [vmem:[#allocation5 + $0xb8] sm:$0xff] %vm2921, %v5126
    %5175 = vst.msk [vmem:[#allocation5 + $0xc0] sm:$0xff] %vm2987, %v5128
    %5176 = vst.msk [vmem:[#allocation5 + $0xc8] sm:$0xff] %vm2921, %v5128
    %5177 = vst.msk [vmem:[#allocation5 + $0xd0] sm:$0xff] %vm2987, %v5130
    %5178 = vst.msk [vmem:[#allocation5 + $0xd8] sm:$0xff] %vm2921, %v5130
    %5179 = vst.msk [vmem:[#allocation5 + $0xe0] sm:$0xff] %vm2987, %v5132
    %5180 = vst.msk [vmem:[#allocation5 + $0xe8] sm:$0xff] %vm2921, %v5132
    %5181 = vst.msk [vmem:[#allocation5 + $0xf0] sm:$0xff] %vm2987, %v5134
    %5182 = vst.msk [vmem:[#allocation5 + $0xf8] sm:$0xff] %vm2921, %v5134
    %5199 = vrot.lane.b32.xlu0 %v4992, 4
    %v5200 = vpop.permute.xlu0 %5199
    %5201 = vrot.lane.b32.xlu0 %v4994, 4
    %v5202 = vpop.permute.xlu0 %5201
    %5203 = vrot.lane.b32.xlu0 %v4996, 4
    %v5204 = vpop.permute.xlu0 %5203
    %5205 = vrot.lane.b32.xlu0 %v4998, 4
    %v5206 = vpop.permute.xlu0 %5205
    %5207 = vrot.lane.b32.xlu0 %v5000, 4
    %v5208 = vpop.permute.xlu0 %5207
    %5209 = vrot.lane.b32.xlu0 %v5002, 4
    %v5210 = vpop.permute.xlu0 %5209
    %5211 = vrot.lane.b32.xlu0 %v5004, 4
    %v5212 = vpop.permute.xlu0 %5211
    %5213 = vrot.lane.b32.xlu0 %v5006, 4
    %v5214 = vpop.permute.xlu0 %5213
    %5215 = vrot.lane.b32.xlu0 %v5008, 4
    %v5216 = vpop.permute.xlu0 %5215
    %5217 = vrot.lane.b32.xlu0 %v5010, 4
    %v5218 = vpop.permute.xlu0 %5217
    %5219 = vrot.lane.b32.xlu0 %v5012, 4
    %v5220 = vpop.permute.xlu0 %5219
    %5221 = vrot.lane.b32.xlu0 %v5014, 4
    %v5222 = vpop.permute.xlu0 %5221
    %5223 = vrot.lane.b32.xlu0 %v5016, 4
    %v5224 = vpop.permute.xlu0 %5223
    %5225 = vrot.lane.b32.xlu0 %v5018, 4
    %v5226 = vpop.permute.xlu0 %5225
    %5227 = vrot.lane.b32.xlu0 %v5020, 4
    %v5228 = vpop.permute.xlu0 %5227
    %5229 = vrot.lane.b32.xlu0 %v5022, 4
    %v5230 = vpop.permute.xlu0 %5229
    %s5247 = scalar_lea.vmem [#allocation5], 256
    %5248 = vst.msk [vmem:[%s5247] sm:$0xff] %vm2987, %v5200
    %5249 = vst.msk [vmem:[%s5247 + $0x8] sm:$0xff] %vm2921, %v5200
    %5250 = vst.msk [vmem:[%s5247 + $0x10] sm:$0xff] %vm2987, %v5202
    %5251 = vst.msk [vmem:[%s5247 + $0x18] sm:$0xff] %vm2921, %v5202
    %5252 = vst.msk [vmem:[%s5247 + $0x20] sm:$0xff] %vm2987, %v5204
    %5253 = vst.msk [vmem:[%s5247 + $0x28] sm:$0xff] %vm2921, %v5204
    %5254 = vst.msk [vmem:[%s5247 + $0x30] sm:$0xff] %vm2987, %v5206
    %5255 = vst.msk [vmem:[%s5247 + $0x38] sm:$0xff] %vm2921, %v5206
    %5256 = vst.msk [vmem:[%s5247 + $0x40] sm:$0xff] %vm2987, %v5208
    %5257 = vst.msk [vmem:[%s5247 + $0x48] sm:$0xff] %vm2921, %v5208
    %5258 = vst.msk [vmem:[%s5247 + $0x50] sm:$0xff] %vm2987, %v5210
    %5259 = vst.msk [vmem:[%s5247 + $0x58] sm:$0xff] %vm2921, %v5210
    %5260 = vst.msk [vmem:[%s5247 + $0x60] sm:$0xff] %vm2987, %v5212
    %5261 = vst.msk [vmem:[%s5247 + $0x68] sm:$0xff] %vm2921, %v5212
    %5262 = vst.msk [vmem:[%s5247 + $0x70] sm:$0xff] %vm2987, %v5214
    %5263 = vst.msk [vmem:[%s5247 + $0x78] sm:$0xff] %vm2921, %v5214
    %5264 = vst.msk [vmem:[%s5247 + $0x80] sm:$0xff] %vm2987, %v5216
    %5265 = vst.msk [vmem:[%s5247 + $0x88] sm:$0xff] %vm2921, %v5216
    %5266 = vst.msk [vmem:[%s5247 + $0x90] sm:$0xff] %vm2987, %v5218
    %5267 = vst.msk [vmem:[%s5247 + $0x98] sm:$0xff] %vm2921, %v5218
    %5268 = vst.msk [vmem:[%s5247 + $0xa0] sm:$0xff] %vm2987, %v5220
    %5269 = vst.msk [vmem:[%s5247 + $0xa8] sm:$0xff] %vm2921, %v5220
    %5270 = vst.msk [vmem:[%s5247 + $0xb0] sm:$0xff] %vm2987, %v5222
    %5271 = vst.msk [vmem:[%s5247 + $0xb8] sm:$0xff] %vm2921, %v5222
    %5272 = vst.msk [vmem:[%s5247 + $0xc0] sm:$0xff] %vm2987, %v5224
    %5273 = vst.msk [vmem:[%s5247 + $0xc8] sm:$0xff] %vm2921, %v5224
    %5274 = vst.msk [vmem:[%s5247 + $0xd0] sm:$0xff] %vm2987, %v5226
    %5275 = vst.msk [vmem:[%s5247 + $0xd8] sm:$0xff] %vm2921, %v5226
    %5276 = vst.msk [vmem:[%s5247 + $0xe0] sm:$0xff] %vm2987, %v5228
    %5277 = vst.msk [vmem:[%s5247 + $0xe8] sm:$0xff] %vm2921, %v5228
    %5278 = vst.msk [vmem:[%s5247 + $0xf0] sm:$0xff] %vm2987, %v5230
    %5279 = vst.msk [vmem:[%s5247 + $0xf8] sm:$0xff] %vm2921, %v5230
    %v5280 = vld [vmem:[#allocation5] sm:$0xff]
    %v5281 = vld [vmem:[#allocation5 + $0x10] sm:$0xff]
    %v5282 = vld [vmem:[#allocation5 + $0x20] sm:$0xff]
    %v5283 = vld [vmem:[#allocation5 + $0x30] sm:$0xff]
    %v5284 = vld [vmem:[#allocation5 + $0x40] sm:$0xff]
    %v5285 = vld [vmem:[#allocation5 + $0x50] sm:$0xff]
    %v5286 = vld [vmem:[#allocation5 + $0x60] sm:$0xff]
    %v5287 = vld [vmem:[#allocation5 + $0x70] sm:$0xff]
    %v5288 = vld [vmem:[#allocation5 + $0x80] sm:$0xff]
    %v5289 = vld [vmem:[#allocation5 + $0x90] sm:$0xff]
    %v5290 = vld [vmem:[#allocation5 + $0xa0] sm:$0xff]
    %v5291 = vld [vmem:[#allocation5 + $0xb0] sm:$0xff]
    %v5292 = vld [vmem:[#allocation5 + $0xc0] sm:$0xff]
    %v5293 = vld [vmem:[#allocation5 + $0xd0] sm:$0xff]
    %v5294 = vld [vmem:[#allocation5 + $0xe0] sm:$0xff]
    %v5295 = vld [vmem:[#allocation5 + $0xf0] sm:$0xff]
    %5296 = vst [vmem:[#allocation6] sm:$0xff] %v5280
    %5297 = vst [vmem:[#allocation6 + $0x10] sm:$0xff] %v5281
    %5298 = vst [vmem:[#allocation6 + $0x20] sm:$0xff] %v5282
    %5299 = vst [vmem:[#allocation6 + $0x30] sm:$0xff] %v5283
    %5300 = vst [vmem:[#allocation6 + $0x40] sm:$0xff] %v5284
    %5301 = vst [vmem:[#allocation6 + $0x50] sm:$0xff] %v5285
    %5302 = vst [vmem:[#allocation6 + $0x60] sm:$0xff] %v5286
    %5303 = vst [vmem:[#allocation6 + $0x70] sm:$0xff] %v5287
    %5304 = vst [vmem:[#allocation6 + $0x80] sm:$0xff] %v5288
    %5305 = vst [vmem:[#allocation6 + $0x90] sm:$0xff] %v5289
    %5306 = vst [vmem:[#allocation6 + $0xa0] sm:$0xff] %v5290
    %5307 = vst [vmem:[#allocation6 + $0xb0] sm:$0xff] %v5291
    %5308 = vst [vmem:[#allocation6 + $0xc0] sm:$0xff] %v5292
    %5309 = vst [vmem:[#allocation6 + $0xd0] sm:$0xff] %v5293
    %5310 = vst [vmem:[#allocation6 + $0xe0] sm:$0xff] %v5294
    %5311 = vst [vmem:[#allocation6 + $0xf0] sm:$0xff] %v5295
    %v5312 = vld [vmem:[#allocation5] sm:$0xff]
    %v5313 = vld [vmem:[#allocation5 + $0x8] sm:$0xff]
    %v5314 = vld [vmem:[#allocation5 + $0x10] sm:$0xff]
    %v5315 = vld [vmem:[#allocation5 + $0x18] sm:$0xff]
    %v5316 = vld [vmem:[#allocation5 + $0x20] sm:$0xff]
    %v5317 = vld [vmem:[#allocation5 + $0x28] sm:$0xff]
    %v5318 = vld [vmem:[#allocation5 + $0x30] sm:$0xff]
    %v5319 = vld [vmem:[#allocation5 + $0x38] sm:$0xff]
    %v5320 = vld [vmem:[#allocation5 + $0x40] sm:$0xff]
    %v5321 = vld [vmem:[#allocation5 + $0x48] sm:$0xff]
    %v5322 = vld [vmem:[#allocation5 + $0x50] sm:$0xff]
    %v5323 = vld [vmem:[#allocation5 + $0x58] sm:$0xff]
    %v5324 = vld [vmem:[#allocation5 + $0x60] sm:$0xff]
    %v5325 = vld [vmem:[#allocation5 + $0x68] sm:$0xff]
    %v5326 = vld [vmem:[#allocation5 + $0x70] sm:$0xff]
    %v5327 = vld [vmem:[#allocation5 + $0x78] sm:$0xff]
    %v5328 = vld [vmem:[#allocation5 + $0x80] sm:$0xff]
    %v5329 = vld [vmem:[#allocation5 + $0x88] sm:$0xff]
    %v5330 = vld [vmem:[#allocation5 + $0x90] sm:$0xff]
    %v5331 = vld [vmem:[#allocation5 + $0x98] sm:$0xff]
    %v5332 = vld [vmem:[#allocation5 + $0xa0] sm:$0xff]
    %v5333 = vld [vmem:[#allocation5 + $0xa8] sm:$0xff]
    %v5334 = vld [vmem:[#allocation5 + $0xb0] sm:$0xff]
    %v5335 = vld [vmem:[#allocation5 + $0xb8] sm:$0xff]
    %v5336 = vld [vmem:[#allocation5 + $0xc0] sm:$0xff]
    %v5337 = vld [vmem:[#allocation5 + $0xc8] sm:$0xff]
    %v5338 = vld [vmem:[#allocation5 + $0xd0] sm:$0xff]
    %v5339 = vld [vmem:[#allocation5 + $0xd8] sm:$0xff]
    %v5340 = vld [vmem:[#allocation5 + $0xe0] sm:$0xff]
    %v5341 = vld [vmem:[#allocation5 + $0xe8] sm:$0xff]
    %v5342 = vld [vmem:[#allocation5 + $0xf0] sm:$0xff]
    %v5343 = vld [vmem:[#allocation5 + $0xf8] sm:$0xff]
    %5376 = vrot.lane.b32.xlu0 %v5312, 127
    %v5377 = vpop.permute.xlu0 %5376
    %5378 = vrot.lane.b32.xlu0 %v5313, 127
    %v5379 = vpop.permute.xlu0 %5378
    %5380 = vrot.lane.b32.xlu0 %v5314, 127
    %v5381 = vpop.permute.xlu0 %5380
    %5382 = vrot.lane.b32.xlu0 %v5315, 127
    %v5383 = vpop.permute.xlu0 %5382
    %5384 = vrot.lane.b32.xlu0 %v5316, 127
    %v5385 = vpop.permute.xlu0 %5384
    %5386 = vrot.lane.b32.xlu0 %v5317, 127
    %v5387 = vpop.permute.xlu0 %5386
    %5388 = vrot.lane.b32.xlu0 %v5318, 127
    %v5389 = vpop.permute.xlu0 %5388
    %5390 = vrot.lane.b32.xlu0 %v5319, 127
    %v5391 = vpop.permute.xlu0 %5390
    %5392 = vrot.lane.b32.xlu0 %v5320, 127
    %v5393 = vpop.permute.xlu0 %5392
    %5394 = vrot.lane.b32.xlu0 %v5321, 127
    %v5395 = vpop.permute.xlu0 %5394
    %5396 = vrot.lane.b32.xlu0 %v5322, 127
    %v5397 = vpop.permute.xlu0 %5396
    %5398 = vrot.lane.b32.xlu0 %v5323, 127
    %v5399 = vpop.permute.xlu0 %5398
    %5400 = vrot.lane.b32.xlu0 %v5324, 127
    %v5401 = vpop.permute.xlu0 %5400
    %5402 = vrot.lane.b32.xlu0 %v5325, 127
    %v5403 = vpop.permute.xlu0 %5402
    %5404 = vrot.lane.b32.xlu0 %v5326, 127
    %v5405 = vpop.permute.xlu0 %5404
    %5406 = vrot.lane.b32.xlu0 %v5327, 127
    %v5407 = vpop.permute.xlu0 %5406
    %5408 = vrot.lane.b32.xlu0 %v5328, 127
    %v5409 = vpop.permute.xlu0 %5408
    %5410 = vrot.lane.b32.xlu0 %v5329, 127
    %v5411 = vpop.permute.xlu0 %5410
    %5412 = vrot.lane.b32.xlu0 %v5330, 127
    %v5413 = vpop.permute.xlu0 %5412
    %5414 = vrot.lane.b32.xlu0 %v5331, 127
    %v5415 = vpop.permute.xlu0 %5414
    %5416 = vrot.lane.b32.xlu0 %v5332, 127
    %v5417 = vpop.permute.xlu0 %5416
    %5418 = vrot.lane.b32.xlu0 %v5333, 127
    %v5419 = vpop.permute.xlu0 %5418
    %5420 = vrot.lane.b32.xlu0 %v5334, 127
    %v5421 = vpop.permute.xlu0 %5420
    %5422 = vrot.lane.b32.xlu0 %v5335, 127
    %v5423 = vpop.permute.xlu0 %5422
    %5424 = vrot.lane.b32.xlu0 %v5336, 127
    %v5425 = vpop.permute.xlu0 %5424
    %5426 = vrot.lane.b32.xlu0 %v5337, 127
    %v5427 = vpop.permute.xlu0 %5426
    %5428 = vrot.lane.b32.xlu0 %v5338, 127
    %v5429 = vpop.permute.xlu0 %5428
    %5430 = vrot.lane.b32.xlu0 %v5339, 127
    %v5431 = vpop.permute.xlu0 %5430
    %5432 = vrot.lane.b32.xlu0 %v5340, 127
    %v5433 = vpop.permute.xlu0 %5432
    %5434 = vrot.lane.b32.xlu0 %v5341, 127
    %v5435 = vpop.permute.xlu0 %5434
    %5436 = vrot.lane.b32.xlu0 %v5342, 127
    %v5437 = vpop.permute.xlu0 %5436
    %5438 = vrot.lane.b32.xlu0 %v5343, 127
    %v5439 = vpop.permute.xlu0 %5438
    %v5440 = vsel %vm118, %v5377, %v5379
    %v5441 = vsel %vm118, %v5381, %v5383
    %v5442 = vsel %vm118, %v5385, %v5387
    %v5443 = vsel %vm118, %v5389, %v5391
    %v5444 = vsel %vm118, %v5393, %v5395
    %v5445 = vsel %vm118, %v5397, %v5399
    %v5446 = vsel %vm118, %v5401, %v5403
    %v5447 = vsel %vm118, %v5405, %v5407
    %v5448 = vsel %vm118, %v5409, %v5411
    %v5449 = vsel %vm118, %v5413, %v5415
    %v5450 = vsel %vm118, %v5417, %v5419
    %v5451 = vsel %vm118, %v5421, %v5423
    %v5452 = vsel %vm118, %v5425, %v5427
    %v5453 = vsel %vm118, %v5429, %v5431
    %v5454 = vsel %vm118, %v5433, %v5435
    %v5455 = vsel %vm118, %v5437, %v5439
    %5472 = vst [vmem:[#allocation6 + $0x100] sm:$0xff] %v5440
    %5473 = vst [vmem:[#allocation6 + $0x110] sm:$0xff] %v5441
    %5474 = vst [vmem:[#allocation6 + $0x120] sm:$0xff] %v5442
    %5475 = vst [vmem:[#allocation6 + $0x130] sm:$0xff] %v5443
    %5476 = vst [vmem:[#allocation6 + $0x140] sm:$0xff] %v5444
    %5477 = vst [vmem:[#allocation6 + $0x150] sm:$0xff] %v5445
    %5478 = vst [vmem:[#allocation6 + $0x160] sm:$0xff] %v5446
    %5479 = vst [vmem:[#allocation6 + $0x170] sm:$0xff] %v5447
    %5480 = vst [vmem:[#allocation6 + $0x180] sm:$0xff] %v5448
    %5481 = vst [vmem:[#allocation6 + $0x190] sm:$0xff] %v5449
    %5482 = vst [vmem:[#allocation6 + $0x1a0] sm:$0xff] %v5450
    %5483 = vst [vmem:[#allocation6 + $0x1b0] sm:$0xff] %v5451
    %5484 = vst [vmem:[#allocation6 + $0x1c0] sm:$0xff] %v5452
    %5485 = vst [vmem:[#allocation6 + $0x1d0] sm:$0xff] %v5453
    %5486 = vst [vmem:[#allocation6 + $0x1e0] sm:$0xff] %v5454
    %5487 = vst [vmem:[#allocation6 + $0x1f0] sm:$0xff] %v5455
    %v5488 = vld [vmem:[#allocation5] sm:$0xff]
    %v5489 = vld [vmem:[#allocation5 + $0x8] sm:$0xff]
    %v5490 = vld [vmem:[#allocation5 + $0x10] sm:$0xff]
    %v5491 = vld [vmem:[#allocation5 + $0x18] sm:$0xff]
    %v5492 = vld [vmem:[#allocation5 + $0x20] sm:$0xff]
    %v5493 = vld [vmem:[#allocation5 + $0x28] sm:$0xff]
    %v5494 = vld [vmem:[#allocation5 + $0x30] sm:$0xff]
    %v5495 = vld [vmem:[#allocation5 + $0x38] sm:$0xff]
    %v5496 = vld [vmem:[#allocation5 + $0x40] sm:$0xff]
    %v5497 = vld [vmem:[#allocation5 + $0x48] sm:$0xff]
    %v5498 = vld [vmem:[#allocation5 + $0x50] sm:$0xff]
    %v5499 = vld [vmem:[#allocation5 + $0x58] sm:$0xff]
    %v5500 = vld [vmem:[#allocation5 + $0x60] sm:$0xff]
    %v5501 = vld [vmem:[#allocation5 + $0x68] sm:$0xff]
    %v5502 = vld [vmem:[#allocation5 + $0x70] sm:$0xff]
    %v5503 = vld [vmem:[#allocation5 + $0x78] sm:$0xff]
    %v5504 = vld [vmem:[#allocation5 + $0x80] sm:$0xff]
    %v5505 = vld [vmem:[#allocation5 + $0x88] sm:$0xff]
    %v5506 = vld [vmem:[#allocation5 + $0x90] sm:$0xff]
    %v5507 = vld [vmem:[#allocation5 + $0x98] sm:$0xff]
    %v5508 = vld [vmem:[#allocation5 + $0xa0] sm:$0xff]
    %v5509 = vld [vmem:[#allocation5 + $0xa8] sm:$0xff]
    %v5510 = vld [vmem:[#allocation5 + $0xb0] sm:$0xff]
    %v5511 = vld [vmem:[#allocation5 + $0xb8] sm:$0xff]
    %v5512 = vld [vmem:[#allocation5 + $0xc0] sm:$0xff]
    %v5513 = vld [vmem:[#allocation5 + $0xc8] sm:$0xff]
    %v5514 = vld [vmem:[#allocation5 + $0xd0] sm:$0xff]
    %v5515 = vld [vmem:[#allocation5 + $0xd8] sm:$0xff]
    %v5516 = vld [vmem:[#allocation5 + $0xe0] sm:$0xff]
    %v5517 = vld [vmem:[#allocation5 + $0xe8] sm:$0xff]
    %v5518 = vld [vmem:[#allocation5 + $0xf0] sm:$0xff]
    %v5519 = vld [vmem:[#allocation5 + $0xf8] sm:$0xff]
    %5552 = vrot.lane.b32.xlu0 %v5488, 126
    %v5553 = vpop.permute.xlu0 %5552
    %5554 = vrot.lane.b32.xlu0 %v5489, 126
    %v5555 = vpop.permute.xlu0 %5554
    %5556 = vrot.lane.b32.xlu0 %v5490, 126
    %v5557 = vpop.permute.xlu0 %5556
    %5558 = vrot.lane.b32.xlu0 %v5491, 126
    %v5559 = vpop.permute.xlu0 %5558
    %5560 = vrot.lane.b32.xlu0 %v5492, 126
    %v5561 = vpop.permute.xlu0 %5560
    %5562 = vrot.lane.b32.xlu0 %v5493, 126
    %v5563 = vpop.permute.xlu0 %5562
    %5564 = vrot.lane.b32.xlu0 %v5494, 126
    %v5565 = vpop.permute.xlu0 %5564
    %5566 = vrot.lane.b32.xlu0 %v5495, 126
    %v5567 = vpop.permute.xlu0 %5566
    %5568 = vrot.lane.b32.xlu0 %v5496, 126
    %v5569 = vpop.permute.xlu0 %5568
    %5570 = vrot.lane.b32.xlu0 %v5497, 126
    %v5571 = vpop.permute.xlu0 %5570
    %5572 = vrot.lane.b32.xlu0 %v5498, 126
    %v5573 = vpop.permute.xlu0 %5572
    %5574 = vrot.lane.b32.xlu0 %v5499, 126
    %v5575 = vpop.permute.xlu0 %5574
    %5576 = vrot.lane.b32.xlu0 %v5500, 126
    %v5577 = vpop.permute.xlu0 %5576
    %5578 = vrot.lane.b32.xlu0 %v5501, 126
    %v5579 = vpop.permute.xlu0 %5578
    %5580 = vrot.lane.b32.xlu0 %v5502, 126
    %v5581 = vpop.permute.xlu0 %5580
    %5582 = vrot.lane.b32.xlu0 %v5503, 126
    %v5583 = vpop.permute.xlu0 %5582
    %5584 = vrot.lane.b32.xlu0 %v5504, 126
    %v5585 = vpop.permute.xlu0 %5584
    %5586 = vrot.lane.b32.xlu0 %v5505, 126
    %v5587 = vpop.permute.xlu0 %5586
    %5588 = vrot.lane.b32.xlu0 %v5506, 126
    %v5589 = vpop.permute.xlu0 %5588
    %5590 = vrot.lane.b32.xlu0 %v5507, 126
    %v5591 = vpop.permute.xlu0 %5590
    %5592 = vrot.lane.b32.xlu0 %v5508, 126
    %v5593 = vpop.permute.xlu0 %5592
    %5594 = vrot.lane.b32.xlu0 %v5509, 126
    %v5595 = vpop.permute.xlu0 %5594
    %5596 = vrot.lane.b32.xlu0 %v5510, 126
    %v5597 = vpop.permute.xlu0 %5596
    %5598 = vrot.lane.b32.xlu0 %v5511, 126
    %v5599 = vpop.permute.xlu0 %5598
    %5600 = vrot.lane.b32.xlu0 %v5512, 126
    %v5601 = vpop.permute.xlu0 %5600
    %5602 = vrot.lane.b32.xlu0 %v5513, 126
    %v5603 = vpop.permute.xlu0 %5602
    %5604 = vrot.lane.b32.xlu0 %v5514, 126
    %v5605 = vpop.permute.xlu0 %5604
    %5606 = vrot.lane.b32.xlu0 %v5515, 126
    %v5607 = vpop.permute.xlu0 %5606
    %5608 = vrot.lane.b32.xlu0 %v5516, 126
    %v5609 = vpop.permute.xlu0 %5608
    %5610 = vrot.lane.b32.xlu0 %v5517, 126
    %v5611 = vpop.permute.xlu0 %5610
    %5612 = vrot.lane.b32.xlu0 %v5518, 126
    %v5613 = vpop.permute.xlu0 %5612
    %5614 = vrot.lane.b32.xlu0 %v5519, 126
    %v5615 = vpop.permute.xlu0 %5614
    %v5616 = vsel %vm130, %v5553, %v5555
    %v5617 = vsel %vm130, %v5557, %v5559
    %v5618 = vsel %vm130, %v5561, %v5563
    %v5619 = vsel %vm130, %v5565, %v5567
    %v5620 = vsel %vm130, %v5569, %v5571
    %v5621 = vsel %vm130, %v5573, %v5575
    %v5622 = vsel %vm130, %v5577, %v5579
    %v5623 = vsel %vm130, %v5581, %v5583
    %v5624 = vsel %vm130, %v5585, %v5587
    %v5625 = vsel %vm130, %v5589, %v5591
    %v5626 = vsel %vm130, %v5593, %v5595
    %v5627 = vsel %vm130, %v5597, %v5599
    %v5628 = vsel %vm130, %v5601, %v5603
    %v5629 = vsel %vm130, %v5605, %v5607
    %v5630 = vsel %vm130, %v5609, %v5611
    %v5631 = vsel %vm130, %v5613, %v5615
    %5648 = vst [vmem:[#allocation6 + $0x200] sm:$0xff] %v5616
    %5649 = vst [vmem:[#allocation6 + $0x210] sm:$0xff] %v5617
    %5650 = vst [vmem:[#allocation6 + $0x220] sm:$0xff] %v5618
    %5651 = vst [vmem:[#allocation6 + $0x230] sm:$0xff] %v5619
    %5652 = vst [vmem:[#allocation6 + $0x240] sm:$0xff] %v5620
    %5653 = vst [vmem:[#allocation6 + $0x250] sm:$0xff] %v5621
    %5654 = vst [vmem:[#allocation6 + $0x260] sm:$0xff] %v5622
    %5655 = vst [vmem:[#allocation6 + $0x270] sm:$0xff] %v5623
    %5656 = vst [vmem:[#allocation6 + $0x280] sm:$0xff] %v5624
    %5657 = vst [vmem:[#allocation6 + $0x290] sm:$0xff] %v5625
    %5658 = vst [vmem:[#allocation6 + $0x2a0] sm:$0xff] %v5626
    %5659 = vst [vmem:[#allocation6 + $0x2b0] sm:$0xff] %v5627
    %5660 = vst [vmem:[#allocation6 + $0x2c0] sm:$0xff] %v5628
    %5661 = vst [vmem:[#allocation6 + $0x2d0] sm:$0xff] %v5629
    %5662 = vst [vmem:[#allocation6 + $0x2e0] sm:$0xff] %v5630
    %5663 = vst [vmem:[#allocation6 + $0x2f0] sm:$0xff] %v5631
    %v5664 = vld [vmem:[#allocation5] sm:$0xff]
    %v5665 = vld [vmem:[#allocation5 + $0x8] sm:$0xff]
    %v5666 = vld [vmem:[#allocation5 + $0x10] sm:$0xff]
    %v5667 = vld [vmem:[#allocation5 + $0x18] sm:$0xff]
    %v5668 = vld [vmem:[#allocation5 + $0x20] sm:$0xff]
    %v5669 = vld [vmem:[#allocation5 + $0x28] sm:$0xff]
    %v5670 = vld [vmem:[#allocation5 + $0x30] sm:$0xff]
    %v5671 = vld [vmem:[#allocation5 + $0x38] sm:$0xff]
    %v5672 = vld [vmem:[#allocation5 + $0x40] sm:$0xff]
    %v5673 = vld [vmem:[#allocation5 + $0x48] sm:$0xff]
    %v5674 = vld [vmem:[#allocation5 + $0x50] sm:$0xff]
    %v5675 = vld [vmem:[#allocation5 + $0x58] sm:$0xff]
    %v5676 = vld [vmem:[#allocation5 + $0x60] sm:$0xff]
    %v5677 = vld [vmem:[#allocation5 + $0x68] sm:$0xff]
    %v5678 = vld [vmem:[#allocation5 + $0x70] sm:$0xff]
    %v5679 = vld [vmem:[#allocation5 + $0x78] sm:$0xff]
    %v5680 = vld [vmem:[#allocation5 + $0x80] sm:$0xff]
    %v5681 = vld [vmem:[#allocation5 + $0x88] sm:$0xff]
    %v5682 = vld [vmem:[#allocation5 + $0x90] sm:$0xff]
    %v5683 = vld [vmem:[#allocation5 + $0x98] sm:$0xff]
    %v5684 = vld [vmem:[#allocation5 + $0xa0] sm:$0xff]
    %v5685 = vld [vmem:[#allocation5 + $0xa8] sm:$0xff]
    %v5686 = vld [vmem:[#allocation5 + $0xb0] sm:$0xff]
    %v5687 = vld [vmem:[#allocation5 + $0xb8] sm:$0xff]
    %v5688 = vld [vmem:[#allocation5 + $0xc0] sm:$0xff]
    %v5689 = vld [vmem:[#allocation5 + $0xc8] sm:$0xff]
    %v5690 = vld [vmem:[#allocation5 + $0xd0] sm:$0xff]
    %v5691 = vld [vmem:[#allocation5 + $0xd8] sm:$0xff]
    %v5692 = vld [vmem:[#allocation5 + $0xe0] sm:$0xff]
    %v5693 = vld [vmem:[#allocation5 + $0xe8] sm:$0xff]
    %v5694 = vld [vmem:[#allocation5 + $0xf0] sm:$0xff]
    %v5695 = vld [vmem:[#allocation5 + $0xf8] sm:$0xff]
    %5728 = vrot.lane.b32.xlu0 %v5664, 125
    %v5729 = vpop.permute.xlu0 %5728
    %5730 = vrot.lane.b32.xlu0 %v5665, 125
    %v5731 = vpop.permute.xlu0 %5730
    %5732 = vrot.lane.b32.xlu0 %v5666, 125
    %v5733 = vpop.permute.xlu0 %5732
    %5734 = vrot.lane.b32.xlu0 %v5667, 125
    %v5735 = vpop.permute.xlu0 %5734
    %5736 = vrot.lane.b32.xlu0 %v5668, 125
    %v5737 = vpop.permute.xlu0 %5736
    %5738 = vrot.lane.b32.xlu0 %v5669, 125
    %v5739 = vpop.permute.xlu0 %5738
    %5740 = vrot.lane.b32.xlu0 %v5670, 125
    %v5741 = vpop.permute.xlu0 %5740
    %5742 = vrot.lane.b32.xlu0 %v5671, 125
    %v5743 = vpop.permute.xlu0 %5742
    %5744 = vrot.lane.b32.xlu0 %v5672, 125
    %v5745 = vpop.permute.xlu0 %5744
    %5746 = vrot.lane.b32.xlu0 %v5673, 125
    %v5747 = vpop.permute.xlu0 %5746
    %5748 = vrot.lane.b32.xlu0 %v5674, 125
    %v5749 = vpop.permute.xlu0 %5748
    %5750 = vrot.lane.b32.xlu0 %v5675, 125
    %v5751 = vpop.permute.xlu0 %5750
    %5752 = vrot.lane.b32.xlu0 %v5676, 125
    %v5753 = vpop.permute.xlu0 %5752
    %5754 = vrot.lane.b32.xlu0 %v5677, 125
    %v5755 = vpop.permute.xlu0 %5754
    %5756 = vrot.lane.b32.xlu0 %v5678, 125
    %v5757 = vpop.permute.xlu0 %5756
    %5758 = vrot.lane.b32.xlu0 %v5679, 125
    %v5759 = vpop.permute.xlu0 %5758
    %5760 = vrot.lane.b32.xlu0 %v5680, 125
    %v5761 = vpop.permute.xlu0 %5760
    %5762 = vrot.lane.b32.xlu0 %v5681, 125
    %v5763 = vpop.permute.xlu0 %5762
    %5764 = vrot.lane.b32.xlu0 %v5682, 125
    %v5765 = vpop.permute.xlu0 %5764
    %5766 = vrot.lane.b32.xlu0 %v5683, 125
    %v5767 = vpop.permute.xlu0 %5766
    %5768 = vrot.lane.b32.xlu0 %v5684, 125
    %v5769 = vpop.permute.xlu0 %5768
    %5770 = vrot.lane.b32.xlu0 %v5685, 125
    %v5771 = vpop.permute.xlu0 %5770
    %5772 = vrot.lane.b32.xlu0 %v5686, 125
    %v5773 = vpop.permute.xlu0 %5772
    %5774 = vrot.lane.b32.xlu0 %v5687, 125
    %v5775 = vpop.permute.xlu0 %5774
    %5776 = vrot.lane.b32.xlu0 %v5688, 125
    %v5777 = vpop.permute.xlu0 %5776
    %5778 = vrot.lane.b32.xlu0 %v5689, 125
    %v5779 = vpop.permute.xlu0 %5778
    %5780 = vrot.lane.b32.xlu0 %v5690, 125
    %v5781 = vpop.permute.xlu0 %5780
    %5782 = vrot.lane.b32.xlu0 %v5691, 125
    %v5783 = vpop.permute.xlu0 %5782
    %5784 = vrot.lane.b32.xlu0 %v5692, 125
    %v5785 = vpop.permute.xlu0 %5784
    %5786 = vrot.lane.b32.xlu0 %v5693, 125
    %v5787 = vpop.permute.xlu0 %5786
    %5788 = vrot.lane.b32.xlu0 %v5694, 125
    %v5789 = vpop.permute.xlu0 %5788
    %5790 = vrot.lane.b32.xlu0 %v5695, 125
    %v5791 = vpop.permute.xlu0 %5790
    %v5792 = vsel %vm142, %v5729, %v5731
    %v5793 = vsel %vm142, %v5733, %v5735
    %v5794 = vsel %vm142, %v5737, %v5739
    %v5795 = vsel %vm142, %v5741, %v5743
    %v5796 = vsel %vm142, %v5745, %v5747
    %v5797 = vsel %vm142, %v5749, %v5751
    %v5798 = vsel %vm142, %v5753, %v5755
    %v5799 = vsel %vm142, %v5757, %v5759
    %v5800 = vsel %vm142, %v5761, %v5763
    %v5801 = vsel %vm142, %v5765, %v5767
    %v5802 = vsel %vm142, %v5769, %v5771
    %v5803 = vsel %vm142, %v5773, %v5775
    %v5804 = vsel %vm142, %v5777, %v5779
    %v5805 = vsel %vm142, %v5781, %v5783
    %v5806 = vsel %vm142, %v5785, %v5787
    %v5807 = vsel %vm142, %v5789, %v5791
    %5824 = vst [vmem:[#allocation6 + $0x300] sm:$0xff] %v5792
    %5825 = vst [vmem:[#allocation6 + $0x310] sm:$0xff] %v5793
    %5826 = vst [vmem:[#allocation6 + $0x320] sm:$0xff] %v5794
    %5827 = vst [vmem:[#allocation6 + $0x330] sm:$0xff] %v5795
    %5828 = vst [vmem:[#allocation6 + $0x340] sm:$0xff] %v5796
    %5829 = vst [vmem:[#allocation6 + $0x350] sm:$0xff] %v5797
    %5830 = vst [vmem:[#allocation6 + $0x360] sm:$0xff] %v5798
    %5831 = vst [vmem:[#allocation6 + $0x370] sm:$0xff] %v5799
    %5832 = vst [vmem:[#allocation6 + $0x380] sm:$0xff] %v5800
    %5833 = vst [vmem:[#allocation6 + $0x390] sm:$0xff] %v5801
    %5834 = vst [vmem:[#allocation6 + $0x3a0] sm:$0xff] %v5802
    %5835 = vst [vmem:[#allocation6 + $0x3b0] sm:$0xff] %v5803
    %5836 = vst [vmem:[#allocation6 + $0x3c0] sm:$0xff] %v5804
    %5837 = vst [vmem:[#allocation6 + $0x3d0] sm:$0xff] %v5805
    %5838 = vst [vmem:[#allocation6 + $0x3e0] sm:$0xff] %v5806
    %5839 = vst [vmem:[#allocation6 + $0x3f0] sm:$0xff] %v5807
    %v5840 = vld [vmem:[#allocation5] sm:$0xff]
    %v5841 = vld [vmem:[#allocation5 + $0x8] sm:$0xff]
    %v5842 = vld [vmem:[#allocation5 + $0x10] sm:$0xff]
    %v5843 = vld [vmem:[#allocation5 + $0x18] sm:$0xff]
    %v5844 = vld [vmem:[#allocation5 + $0x20] sm:$0xff]
    %v5845 = vld [vmem:[#allocation5 + $0x28] sm:$0xff]
    %v5846 = vld [vmem:[#allocation5 + $0x30] sm:$0xff]
    %v5847 = vld [vmem:[#allocation5 + $0x38] sm:$0xff]
    %v5848 = vld [vmem:[#allocation5 + $0x40] sm:$0xff]
    %v5849 = vld [vmem:[#allocation5 + $0x48] sm:$0xff]
    %v5850 = vld [vmem:[#allocation5 + $0x50] sm:$0xff]
    %v5851 = vld [vmem:[#allocation5 + $0x58] sm:$0xff]
    %v5852 = vld [vmem:[#allocation5 + $0x60] sm:$0xff]
    %v5853 = vld [vmem:[#allocation5 + $0x68] sm:$0xff]
    %v5854 = vld [vmem:[#allocation5 + $0x70] sm:$0xff]
    %v5855 = vld [vmem:[#allocation5 + $0x78] sm:$0xff]
    %v5856 = vld [vmem:[#allocation5 + $0x80] sm:$0xff]
    %v5857 = vld [vmem:[#allocation5 + $0x88] sm:$0xff]
    %v5858 = vld [vmem:[#allocation5 + $0x90] sm:$0xff]
    %v5859 = vld [vmem:[#allocation5 + $0x98] sm:$0xff]
    %v5860 = vld [vmem:[#allocation5 + $0xa0] sm:$0xff]
    %v5861 = vld [vmem:[#allocation5 + $0xa8] sm:$0xff]
    %v5862 = vld [vmem:[#allocation5 + $0xb0] sm:$0xff]
    %v5863 = vld [vmem:[#allocation5 + $0xb8] sm:$0xff]
    %v5864 = vld [vmem:[#allocation5 + $0xc0] sm:$0xff]
    %v5865 = vld [vmem:[#allocation5 + $0xc8] sm:$0xff]
    %v5866 = vld [vmem:[#allocation5 + $0xd0] sm:$0xff]
    %v5867 = vld [vmem:[#allocation5 + $0xd8] sm:$0xff]
    %v5868 = vld [vmem:[#allocation5 + $0xe0] sm:$0xff]
    %v5869 = vld [vmem:[#allocation5 + $0xe8] sm:$0xff]
    %v5870 = vld [vmem:[#allocation5 + $0xf0] sm:$0xff]
    %v5871 = vld [vmem:[#allocation5 + $0xf8] sm:$0xff]
    %5904 = vrot.lane.b32.xlu0 %v5840, 124
    %v5905 = vpop.permute.xlu0 %5904
    %5906 = vrot.lane.b32.xlu0 %v5841, 124
    %v5907 = vpop.permute.xlu0 %5906
    %5908 = vrot.lane.b32.xlu0 %v5842, 124
    %v5909 = vpop.permute.xlu0 %5908
    %5910 = vrot.lane.b32.xlu0 %v5843, 124
    %v5911 = vpop.permute.xlu0 %5910
    %5912 = vrot.lane.b32.xlu0 %v5844, 124
    %v5913 = vpop.permute.xlu0 %5912
    %5914 = vrot.lane.b32.xlu0 %v5845, 124
    %v5915 = vpop.permute.xlu0 %5914
    %5916 = vrot.lane.b32.xlu0 %v5846, 124
    %v5917 = vpop.permute.xlu0 %5916
    %5918 = vrot.lane.b32.xlu0 %v5847, 124
    %v5919 = vpop.permute.xlu0 %5918
    %5920 = vrot.lane.b32.xlu0 %v5848, 124
    %v5921 = vpop.permute.xlu0 %5920
    %5922 = vrot.lane.b32.xlu0 %v5849, 124
    %v5923 = vpop.permute.xlu0 %5922
    %5924 = vrot.lane.b32.xlu0 %v5850, 124
    %v5925 = vpop.permute.xlu0 %5924
    %5926 = vrot.lane.b32.xlu0 %v5851, 124
    %v5927 = vpop.permute.xlu0 %5926
    %5928 = vrot.lane.b32.xlu0 %v5852, 124
    %v5929 = vpop.permute.xlu0 %5928
    %5930 = vrot.lane.b32.xlu0 %v5853, 124
    %v5931 = vpop.permute.xlu0 %5930
    %5932 = vrot.lane.b32.xlu0 %v5854, 124
    %v5933 = vpop.permute.xlu0 %5932
    %5934 = vrot.lane.b32.xlu0 %v5855, 124
    %v5935 = vpop.permute.xlu0 %5934
    %5936 = vrot.lane.b32.xlu0 %v5856, 124
    %v5937 = vpop.permute.xlu0 %5936
    %5938 = vrot.lane.b32.xlu0 %v5857, 124
    %v5939 = vpop.permute.xlu0 %5938
    %5940 = vrot.lane.b32.xlu0 %v5858, 124
    %v5941 = vpop.permute.xlu0 %5940
    %5942 = vrot.lane.b32.xlu0 %v5859, 124
    %v5943 = vpop.permute.xlu0 %5942
    %5944 = vrot.lane.b32.xlu0 %v5860, 124
    %v5945 = vpop.permute.xlu0 %5944
    %5946 = vrot.lane.b32.xlu0 %v5861, 124
    %v5947 = vpop.permute.xlu0 %5946
    %5948 = vrot.lane.b32.xlu0 %v5862, 124
    %v5949 = vpop.permute.xlu0 %5948
    %5950 = vrot.lane.b32.xlu0 %v5863, 124
    %v5951 = vpop.permute.xlu0 %5950
    %5952 = vrot.lane.b32.xlu0 %v5864, 124
    %v5953 = vpop.permute.xlu0 %5952
    %5954 = vrot.lane.b32.xlu0 %v5865, 124
    %v5955 = vpop.permute.xlu0 %5954
    %5956 = vrot.lane.b32.xlu0 %v5866, 124
    %v5957 = vpop.permute.xlu0 %5956
    %5958 = vrot.lane.b32.xlu0 %v5867, 124
    %v5959 = vpop.permute.xlu0 %5958
    %5960 = vrot.lane.b32.xlu0 %v5868, 124
    %v5961 = vpop.permute.xlu0 %5960
    %5962 = vrot.lane.b32.xlu0 %v5869, 124
    %v5963 = vpop.permute.xlu0 %5962
    %5964 = vrot.lane.b32.xlu0 %v5870, 124
    %v5965 = vpop.permute.xlu0 %5964
    %5966 = vrot.lane.b32.xlu0 %v5871, 124
    %v5967 = vpop.permute.xlu0 %5966
    %v5968 = vsel %vm154, %v5905, %v5907
    %v5969 = vsel %vm154, %v5909, %v5911
    %v5970 = vsel %vm154, %v5913, %v5915
    %v5971 = vsel %vm154, %v5917, %v5919
    %v5972 = vsel %vm154, %v5921, %v5923
    %v5973 = vsel %vm154, %v5925, %v5927
    %v5974 = vsel %vm154, %v5929, %v5931
    %v5975 = vsel %vm154, %v5933, %v5935
    %v5976 = vsel %vm154, %v5937, %v5939
    %v5977 = vsel %vm154, %v5941, %v5943
    %v5978 = vsel %vm154, %v5945, %v5947
    %v5979 = vsel %vm154, %v5949, %v5951
    %v5980 = vsel %vm154, %v5953, %v5955
    %v5981 = vsel %vm154, %v5957, %v5959
    %v5982 = vsel %vm154, %v5961, %v5963
    %v5983 = vsel %vm154, %v5965, %v5967
    %6000 = vst [vmem:[#allocation6 + $0x400] sm:$0xff] %v5968
    %6001 = vst [vmem:[#allocation6 + $0x410] sm:$0xff] %v5969
    %6002 = vst [vmem:[#allocation6 + $0x420] sm:$0xff] %v5970
    %6003 = vst [vmem:[#allocation6 + $0x430] sm:$0xff] %v5971
    %6004 = vst [vmem:[#allocation6 + $0x440] sm:$0xff] %v5972
    %6005 = vst [vmem:[#allocation6 + $0x450] sm:$0xff] %v5973
    %6006 = vst [vmem:[#allocation6 + $0x460] sm:$0xff] %v5974
    %6007 = vst [vmem:[#allocation6 + $0x470] sm:$0xff] %v5975
    %6008 = vst [vmem:[#allocation6 + $0x480] sm:$0xff] %v5976
    %6009 = vst [vmem:[#allocation6 + $0x490] sm:$0xff] %v5977
    %6010 = vst [vmem:[#allocation6 + $0x4a0] sm:$0xff] %v5978
    %6011 = vst [vmem:[#allocation6 + $0x4b0] sm:$0xff] %v5979
    %6012 = vst [vmem:[#allocation6 + $0x4c0] sm:$0xff] %v5980
    %6013 = vst [vmem:[#allocation6 + $0x4d0] sm:$0xff] %v5981
    %6014 = vst [vmem:[#allocation6 + $0x4e0] sm:$0xff] %v5982
    %6015 = vst [vmem:[#allocation6 + $0x4f0] sm:$0xff] %v5983
    %v6016 = vld [vmem:[#allocation5] sm:$0xff]
    %v6017 = vld [vmem:[#allocation5 + $0x8] sm:$0xff]
    %v6018 = vld [vmem:[#allocation5 + $0x10] sm:$0xff]
    %v6019 = vld [vmem:[#allocation5 + $0x18] sm:$0xff]
    %v6020 = vld [vmem:[#allocation5 + $0x20] sm:$0xff]
    %v6021 = vld [vmem:[#allocation5 + $0x28] sm:$0xff]
    %v6022 = vld [vmem:[#allocation5 + $0x30] sm:$0xff]
    %v6023 = vld [vmem:[#allocation5 + $0x38] sm:$0xff]
    %v6024 = vld [vmem:[#allocation5 + $0x40] sm:$0xff]
    %v6025 = vld [vmem:[#allocation5 + $0x48] sm:$0xff]
    %v6026 = vld [vmem:[#allocation5 + $0x50] sm:$0xff]
    %v6027 = vld [vmem:[#allocation5 + $0x58] sm:$0xff]
    %v6028 = vld [vmem:[#allocation5 + $0x60] sm:$0xff]
    %v6029 = vld [vmem:[#allocation5 + $0x68] sm:$0xff]
    %v6030 = vld [vmem:[#allocation5 + $0x70] sm:$0xff]
    %v6031 = vld [vmem:[#allocation5 + $0x78] sm:$0xff]
    %v6032 = vld [vmem:[#allocation5 + $0x80] sm:$0xff]
    %v6033 = vld [vmem:[#allocation5 + $0x88] sm:$0xff]
    %v6034 = vld [vmem:[#allocation5 + $0x90] sm:$0xff]
    %v6035 = vld [vmem:[#allocation5 + $0x98] sm:$0xff]
    %v6036 = vld [vmem:[#allocation5 + $0xa0] sm:$0xff]
    %v6037 = vld [vmem:[#allocation5 + $0xa8] sm:$0xff]
    %v6038 = vld [vmem:[#allocation5 + $0xb0] sm:$0xff]
    %v6039 = vld [vmem:[#allocation5 + $0xb8] sm:$0xff]
    %v6040 = vld [vmem:[#allocation5 + $0xc0] sm:$0xff]
    %v6041 = vld [vmem:[#allocation5 + $0xc8] sm:$0xff]
    %v6042 = vld [vmem:[#allocation5 + $0xd0] sm:$0xff]
    %v6043 = vld [vmem:[#allocation5 + $0xd8] sm:$0xff]
    %v6044 = vld [vmem:[#allocation5 + $0xe0] sm:$0xff]
    %v6045 = vld [vmem:[#allocation5 + $0xe8] sm:$0xff]
    %v6046 = vld [vmem:[#allocation5 + $0xf0] sm:$0xff]
    %v6047 = vld [vmem:[#allocation5 + $0xf8] sm:$0xff]
    %6080 = vrot.lane.b32.xlu0 %v6016, 123
    %v6081 = vpop.permute.xlu0 %6080
    %6082 = vrot.lane.b32.xlu0 %v6017, 123
    %v6083 = vpop.permute.xlu0 %6082
    %6084 = vrot.lane.b32.xlu0 %v6018, 123
    %v6085 = vpop.permute.xlu0 %6084
    %6086 = vrot.lane.b32.xlu0 %v6019, 123
    %v6087 = vpop.permute.xlu0 %6086
    %6088 = vrot.lane.b32.xlu0 %v6020, 123
    %v6089 = vpop.permute.xlu0 %6088
    %6090 = vrot.lane.b32.xlu0 %v6021, 123
    %v6091 = vpop.permute.xlu0 %6090
    %6092 = vrot.lane.b32.xlu0 %v6022, 123
    %v6093 = vpop.permute.xlu0 %6092
    %6094 = vrot.lane.b32.xlu0 %v6023, 123
    %v6095 = vpop.permute.xlu0 %6094
    %6096 = vrot.lane.b32.xlu0 %v6024, 123
    %v6097 = vpop.permute.xlu0 %6096
    %6098 = vrot.lane.b32.xlu0 %v6025, 123
    %v6099 = vpop.permute.xlu0 %6098
    %6100 = vrot.lane.b32.xlu0 %v6026, 123
    %v6101 = vpop.permute.xlu0 %6100
    %6102 = vrot.lane.b32.xlu0 %v6027, 123
    %v6103 = vpop.permute.xlu0 %6102
    %6104 = vrot.lane.b32.xlu0 %v6028, 123
    %v6105 = vpop.permute.xlu0 %6104
    %6106 = vrot.lane.b32.xlu0 %v6029, 123
    %v6107 = vpop.permute.xlu0 %6106
    %6108 = vrot.lane.b32.xlu0 %v6030, 123
    %v6109 = vpop.permute.xlu0 %6108
    %6110 = vrot.lane.b32.xlu0 %v6031, 123
    %v6111 = vpop.permute.xlu0 %6110
    %6112 = vrot.lane.b32.xlu0 %v6032, 123
    %v6113 = vpop.permute.xlu0 %6112
    %6114 = vrot.lane.b32.xlu0 %v6033, 123
    %v6115 = vpop.permute.xlu0 %6114
    %6116 = vrot.lane.b32.xlu0 %v6034, 123
    %v6117 = vpop.permute.xlu0 %6116
    %6118 = vrot.lane.b32.xlu0 %v6035, 123
    %v6119 = vpop.permute.xlu0 %6118
    %6120 = vrot.lane.b32.xlu0 %v6036, 123
    %v6121 = vpop.permute.xlu0 %6120
    %6122 = vrot.lane.b32.xlu0 %v6037, 123
    %v6123 = vpop.permute.xlu0 %6122
    %6124 = vrot.lane.b32.xlu0 %v6038, 123
    %v6125 = vpop.permute.xlu0 %6124
    %6126 = vrot.lane.b32.xlu0 %v6039, 123
    %v6127 = vpop.permute.xlu0 %6126
    %6128 = vrot.lane.b32.xlu0 %v6040, 123
    %v6129 = vpop.permute.xlu0 %6128
    %6130 = vrot.lane.b32.xlu0 %v6041, 123
    %v6131 = vpop.permute.xlu0 %6130
    %6132 = vrot.lane.b32.xlu0 %v6042, 123
    %v6133 = vpop.permute.xlu0 %6132
    %6134 = vrot.lane.b32.xlu0 %v6043, 123
    %v6135 = vpop.permute.xlu0 %6134
    %6136 = vrot.lane.b32.xlu0 %v6044, 123
    %v6137 = vpop.permute.xlu0 %6136
    %6138 = vrot.lane.b32.xlu0 %v6045, 123
    %v6139 = vpop.permute.xlu0 %6138
    %6140 = vrot.lane.b32.xlu0 %v6046, 123
    %v6141 = vpop.permute.xlu0 %6140
    %6142 = vrot.lane.b32.xlu0 %v6047, 123
    %v6143 = vpop.permute.xlu0 %6142
    %v6144 = vsel %vm166, %v6081, %v6083
    %v6145 = vsel %vm166, %v6085, %v6087
    %v6146 = vsel %vm166, %v6089, %v6091
    %v6147 = vsel %vm166, %v6093, %v6095
    %v6148 = vsel %vm166, %v6097, %v6099
    %v6149 = vsel %vm166, %v6101, %v6103
    %v6150 = vsel %vm166, %v6105, %v6107
    %v6151 = vsel %vm166, %v6109, %v6111
    %v6152 = vsel %vm166, %v6113, %v6115
    %v6153 = vsel %vm166, %v6117, %v6119
    %v6154 = vsel %vm166, %v6121, %v6123
    %v6155 = vsel %vm166, %v6125, %v6127
    %v6156 = vsel %vm166, %v6129, %v6131
    %v6157 = vsel %vm166, %v6133, %v6135
    %v6158 = vsel %vm166, %v6137, %v6139
    %v6159 = vsel %vm166, %v6141, %v6143
    %6176 = vst [vmem:[#allocation6 + $0x500] sm:$0xff] %v6144
    %6177 = vst [vmem:[#allocation6 + $0x510] sm:$0xff] %v6145
    %6178 = vst [vmem:[#allocation6 + $0x520] sm:$0xff] %v6146
    %6179 = vst [vmem:[#allocation6 + $0x530] sm:$0xff] %v6147
    %6180 = vst [vmem:[#allocation6 + $0x540] sm:$0xff] %v6148
    %6181 = vst [vmem:[#allocation6 + $0x550] sm:$0xff] %v6149
    %6182 = vst [vmem:[#allocation6 + $0x560] sm:$0xff] %v6150
    %6183 = vst [vmem:[#allocation6 + $0x570] sm:$0xff] %v6151
    %6184 = vst [vmem:[#allocation6 + $0x580] sm:$0xff] %v6152
    %6185 = vst [vmem:[#allocation6 + $0x590] sm:$0xff] %v6153
    %6186 = vst [vmem:[#allocation6 + $0x5a0] sm:$0xff] %v6154
    %6187 = vst [vmem:[#allocation6 + $0x5b0] sm:$0xff] %v6155
    %6188 = vst [vmem:[#allocation6 + $0x5c0] sm:$0xff] %v6156
    %6189 = vst [vmem:[#allocation6 + $0x5d0] sm:$0xff] %v6157
    %6190 = vst [vmem:[#allocation6 + $0x5e0] sm:$0xff] %v6158
    %6191 = vst [vmem:[#allocation6 + $0x5f0] sm:$0xff] %v6159
    %v6192 = vld [vmem:[#allocation5] sm:$0xff]
    %v6193 = vld [vmem:[#allocation5 + $0x8] sm:$0xff]
    %v6194 = vld [vmem:[#allocation5 + $0x10] sm:$0xff]
    %v6195 = vld [vmem:[#allocation5 + $0x18] sm:$0xff]
    %v6196 = vld [vmem:[#allocation5 + $0x20] sm:$0xff]
    %v6197 = vld [vmem:[#allocation5 + $0x28] sm:$0xff]
    %v6198 = vld [vmem:[#allocation5 + $0x30] sm:$0xff]
    %v6199 = vld [vmem:[#allocation5 + $0x38] sm:$0xff]
    %v6200 = vld [vmem:[#allocation5 + $0x40] sm:$0xff]
    %v6201 = vld [vmem:[#allocation5 + $0x48] sm:$0xff]
    %v6202 = vld [vmem:[#allocation5 + $0x50] sm:$0xff]
    %v6203 = vld [vmem:[#allocation5 + $0x58] sm:$0xff]
    %v6204 = vld [vmem:[#allocation5 + $0x60] sm:$0xff]
    %v6205 = vld [vmem:[#allocation5 + $0x68] sm:$0xff]
    %v6206 = vld [vmem:[#allocation5 + $0x70] sm:$0xff]
    %v6207 = vld [vmem:[#allocation5 + $0x78] sm:$0xff]
    %v6208 = vld [vmem:[#allocation5 + $0x80] sm:$0xff]
    %v6209 = vld [vmem:[#allocation5 + $0x88] sm:$0xff]
    %v6210 = vld [vmem:[#allocation5 + $0x90] sm:$0xff]
    %v6211 = vld [vmem:[#allocation5 + $0x98] sm:$0xff]
    %v6212 = vld [vmem:[#allocation5 + $0xa0] sm:$0xff]
    %v6213 = vld [vmem:[#allocation5 + $0xa8] sm:$0xff]
    %v6214 = vld [vmem:[#allocation5 + $0xb0] sm:$0xff]
    %v6215 = vld [vmem:[#allocation5 + $0xb8] sm:$0xff]
    %v6216 = vld [vmem:[#allocation5 + $0xc0] sm:$0xff]
    %v6217 = vld [vmem:[#allocation5 + $0xc8] sm:$0xff]
    %v6218 = vld [vmem:[#allocation5 + $0xd0] sm:$0xff]
    %v6219 = vld [vmem:[#allocation5 + $0xd8] sm:$0xff]
    %v6220 = vld [vmem:[#allocation5 + $0xe0] sm:$0xff]
    %v6221 = vld [vmem:[#allocation5 + $0xe8] sm:$0xff]
    %v6222 = vld [vmem:[#allocation5 + $0xf0] sm:$0xff]
    %v6223 = vld [vmem:[#allocation5 + $0xf8] sm:$0xff]
    %6256 = vrot.lane.b32.xlu0 %v6192, 122
    %v6257 = vpop.permute.xlu0 %6256
    %6258 = vrot.lane.b32.xlu0 %v6193, 122
    %v6259 = vpop.permute.xlu0 %6258
    %6260 = vrot.lane.b32.xlu0 %v6194, 122
    %v6261 = vpop.permute.xlu0 %6260
    %6262 = vrot.lane.b32.xlu0 %v6195, 122
    %v6263 = vpop.permute.xlu0 %6262
    %6264 = vrot.lane.b32.xlu0 %v6196, 122
    %v6265 = vpop.permute.xlu0 %6264
    %6266 = vrot.lane.b32.xlu0 %v6197, 122
    %v6267 = vpop.permute.xlu0 %6266
    %6268 = vrot.lane.b32.xlu0 %v6198, 122
    %v6269 = vpop.permute.xlu0 %6268
    %6270 = vrot.lane.b32.xlu0 %v6199, 122
    %v6271 = vpop.permute.xlu0 %6270
    %6272 = vrot.lane.b32.xlu0 %v6200, 122
    %v6273 = vpop.permute.xlu0 %6272
    %6274 = vrot.lane.b32.xlu0 %v6201, 122
    %v6275 = vpop.permute.xlu0 %6274
    %6276 = vrot.lane.b32.xlu0 %v6202, 122
    %v6277 = vpop.permute.xlu0 %6276
    %6278 = vrot.lane.b32.xlu0 %v6203, 122
    %v6279 = vpop.permute.xlu0 %6278
    %6280 = vrot.lane.b32.xlu0 %v6204, 122
    %v6281 = vpop.permute.xlu0 %6280
    %6282 = vrot.lane.b32.xlu0 %v6205, 122
    %v6283 = vpop.permute.xlu0 %6282
    %6284 = vrot.lane.b32.xlu0 %v6206, 122
    %v6285 = vpop.permute.xlu0 %6284
    %6286 = vrot.lane.b32.xlu0 %v6207, 122
    %v6287 = vpop.permute.xlu0 %6286
    %6288 = vrot.lane.b32.xlu0 %v6208, 122
    %v6289 = vpop.permute.xlu0 %6288
    %6290 = vrot.lane.b32.xlu0 %v6209, 122
    %v6291 = vpop.permute.xlu0 %6290
    %6292 = vrot.lane.b32.xlu0 %v6210, 122
    %v6293 = vpop.permute.xlu0 %6292
    %6294 = vrot.lane.b32.xlu0 %v6211, 122
    %v6295 = vpop.permute.xlu0 %6294
    %6296 = vrot.lane.b32.xlu0 %v6212, 122
    %v6297 = vpop.permute.xlu0 %6296
    %6298 = vrot.lane.b32.xlu0 %v6213, 122
    %v6299 = vpop.permute.xlu0 %6298
    %6300 = vrot.lane.b32.xlu0 %v6214, 122
    %v6301 = vpop.permute.xlu0 %6300
    %6302 = vrot.lane.b32.xlu0 %v6215, 122
    %v6303 = vpop.permute.xlu0 %6302
    %6304 = vrot.lane.b32.xlu0 %v6216, 122
    %v6305 = vpop.permute.xlu0 %6304
    %6306 = vrot.lane.b32.xlu0 %v6217, 122
    %v6307 = vpop.permute.xlu0 %6306
    %6308 = vrot.lane.b32.xlu0 %v6218, 122
    %v6309 = vpop.permute.xlu0 %6308
    %6310 = vrot.lane.b32.xlu0 %v6219, 122
    %v6311 = vpop.permute.xlu0 %6310
    %6312 = vrot.lane.b32.xlu0 %v6220, 122
    %v6313 = vpop.permute.xlu0 %6312
    %6314 = vrot.lane.b32.xlu0 %v6221, 122
    %v6315 = vpop.permute.xlu0 %6314
    %6316 = vrot.lane.b32.xlu0 %v6222, 122
    %v6317 = vpop.permute.xlu0 %6316
    %6318 = vrot.lane.b32.xlu0 %v6223, 122
    %v6319 = vpop.permute.xlu0 %6318
    %v6320 = vsel %vm178, %v6257, %v6259
    %v6321 = vsel %vm178, %v6261, %v6263
    %v6322 = vsel %vm178, %v6265, %v6267
    %v6323 = vsel %vm178, %v6269, %v6271
    %v6324 = vsel %vm178, %v6273, %v6275
    %v6325 = vsel %vm178, %v6277, %v6279
    %v6326 = vsel %vm178, %v6281, %v6283
    %v6327 = vsel %vm178, %v6285, %v6287
    %v6328 = vsel %vm178, %v6289, %v6291
    %v6329 = vsel %vm178, %v6293, %v6295
    %v6330 = vsel %vm178, %v6297, %v6299
    %v6331 = vsel %vm178, %v6301, %v6303
    %v6332 = vsel %vm178, %v6305, %v6307
    %v6333 = vsel %vm178, %v6309, %v6311
    %v6334 = vsel %vm178, %v6313, %v6315
    %v6335 = vsel %vm178, %v6317, %v6319
    %6352 = vst [vmem:[#allocation6 + $0x600] sm:$0xff] %v6320
    %6353 = vst [vmem:[#allocation6 + $0x610] sm:$0xff] %v6321
    %6354 = vst [vmem:[#allocation6 + $0x620] sm:$0xff] %v6322
    %6355 = vst [vmem:[#allocation6 + $0x630] sm:$0xff] %v6323
    %6356 = vst [vmem:[#allocation6 + $0x640] sm:$0xff] %v6324
    %6357 = vst [vmem:[#allocation6 + $0x650] sm:$0xff] %v6325
    %6358 = vst [vmem:[#allocation6 + $0x660] sm:$0xff] %v6326
    %6359 = vst [vmem:[#allocation6 + $0x670] sm:$0xff] %v6327
    %6360 = vst [vmem:[#allocation6 + $0x680] sm:$0xff] %v6328
    %6361 = vst [vmem:[#allocation6 + $0x690] sm:$0xff] %v6329
    %6362 = vst [vmem:[#allocation6 + $0x6a0] sm:$0xff] %v6330
    %6363 = vst [vmem:[#allocation6 + $0x6b0] sm:$0xff] %v6331
    %6364 = vst [vmem:[#allocation6 + $0x6c0] sm:$0xff] %v6332
    %6365 = vst [vmem:[#allocation6 + $0x6d0] sm:$0xff] %v6333
    %6366 = vst [vmem:[#allocation6 + $0x6e0] sm:$0xff] %v6334
    %6367 = vst [vmem:[#allocation6 + $0x6f0] sm:$0xff] %v6335
    %v6368 = vld [vmem:[#allocation5] sm:$0xff]
    %v6369 = vld [vmem:[#allocation5 + $0x8] sm:$0xff]
    %v6370 = vld [vmem:[#allocation5 + $0x10] sm:$0xff]
    %v6371 = vld [vmem:[#allocation5 + $0x18] sm:$0xff]
    %v6372 = vld [vmem:[#allocation5 + $0x20] sm:$0xff]
    %v6373 = vld [vmem:[#allocation5 + $0x28] sm:$0xff]
    %v6374 = vld [vmem:[#allocation5 + $0x30] sm:$0xff]
    %v6375 = vld [vmem:[#allocation5 + $0x38] sm:$0xff]
    %v6376 = vld [vmem:[#allocation5 + $0x40] sm:$0xff]
    %v6377 = vld [vmem:[#allocation5 + $0x48] sm:$0xff]
    %v6378 = vld [vmem:[#allocation5 + $0x50] sm:$0xff]
    %v6379 = vld [vmem:[#allocation5 + $0x58] sm:$0xff]
    %v6380 = vld [vmem:[#allocation5 + $0x60] sm:$0xff]
    %v6381 = vld [vmem:[#allocation5 + $0x68] sm:$0xff]
    %v6382 = vld [vmem:[#allocation5 + $0x70] sm:$0xff]
    %v6383 = vld [vmem:[#allocation5 + $0x78] sm:$0xff]
    %v6384 = vld [vmem:[#allocation5 + $0x80] sm:$0xff]
    %v6385 = vld [vmem:[#allocation5 + $0x88] sm:$0xff]
    %v6386 = vld [vmem:[#allocation5 + $0x90] sm:$0xff]
    %v6387 = vld [vmem:[#allocation5 + $0x98] sm:$0xff]
    %v6388 = vld [vmem:[#allocation5 + $0xa0] sm:$0xff]
    %v6389 = vld [vmem:[#allocation5 + $0xa8] sm:$0xff]
    %v6390 = vld [vmem:[#allocation5 + $0xb0] sm:$0xff]
    %v6391 = vld [vmem:[#allocation5 + $0xb8] sm:$0xff]
    %v6392 = vld [vmem:[#allocation5 + $0xc0] sm:$0xff]
    %v6393 = vld [vmem:[#allocation5 + $0xc8] sm:$0xff]
    %v6394 = vld [vmem:[#allocation5 + $0xd0] sm:$0xff]
    %v6395 = vld [vmem:[#allocation5 + $0xd8] sm:$0xff]
    %v6396 = vld [vmem:[#allocation5 + $0xe0] sm:$0xff]
    %v6397 = vld [vmem:[#allocation5 + $0xe8] sm:$0xff]
    %v6398 = vld [vmem:[#allocation5 + $0xf0] sm:$0xff]
    %v6399 = vld [vmem:[#allocation5 + $0xf8] sm:$0xff]
    %6432 = vrot.lane.b32.xlu0 %v6368, 121
    %v6433 = vpop.permute.xlu0 %6432
    %6434 = vrot.lane.b32.xlu0 %v6369, 121
    %v6435 = vpop.permute.xlu0 %6434
    %6436 = vrot.lane.b32.xlu0 %v6370, 121
    %v6437 = vpop.permute.xlu0 %6436
    %6438 = vrot.lane.b32.xlu0 %v6371, 121
    %v6439 = vpop.permute.xlu0 %6438
    %6440 = vrot.lane.b32.xlu0 %v6372, 121
    %v6441 = vpop.permute.xlu0 %6440
    %6442 = vrot.lane.b32.xlu0 %v6373, 121
    %v6443 = vpop.permute.xlu0 %6442
    %6444 = vrot.lane.b32.xlu0 %v6374, 121
    %v6445 = vpop.permute.xlu0 %6444
    %6446 = vrot.lane.b32.xlu0 %v6375, 121
    %v6447 = vpop.permute.xlu0 %6446
    %6448 = vrot.lane.b32.xlu0 %v6376, 121
    %v6449 = vpop.permute.xlu0 %6448
    %6450 = vrot.lane.b32.xlu0 %v6377, 121
    %v6451 = vpop.permute.xlu0 %6450
    %6452 = vrot.lane.b32.xlu0 %v6378, 121
    %v6453 = vpop.permute.xlu0 %6452
    %6454 = vrot.lane.b32.xlu0 %v6379, 121
    %v6455 = vpop.permute.xlu0 %6454
    %6456 = vrot.lane.b32.xlu0 %v6380, 121
    %v6457 = vpop.permute.xlu0 %6456
    %6458 = vrot.lane.b32.xlu0 %v6381, 121
    %v6459 = vpop.permute.xlu0 %6458
    %6460 = vrot.lane.b32.xlu0 %v6382, 121
    %v6461 = vpop.permute.xlu0 %6460
    %6462 = vrot.lane.b32.xlu0 %v6383, 121
    %v6463 = vpop.permute.xlu0 %6462
    %6464 = vrot.lane.b32.xlu0 %v6384, 121
    %v6465 = vpop.permute.xlu0 %6464
    %6466 = vrot.lane.b32.xlu0 %v6385, 121
    %v6467 = vpop.permute.xlu0 %6466
    %6468 = vrot.lane.b32.xlu0 %v6386, 121
    %v6469 = vpop.permute.xlu0 %6468
    %6470 = vrot.lane.b32.xlu0 %v6387, 121
    %v6471 = vpop.permute.xlu0 %6470
    %6472 = vrot.lane.b32.xlu0 %v6388, 121
    %v6473 = vpop.permute.xlu0 %6472
    %6474 = vrot.lane.b32.xlu0 %v6389, 121
    %v6475 = vpop.permute.xlu0 %6474
    %6476 = vrot.lane.b32.xlu0 %v6390, 121
    %v6477 = vpop.permute.xlu0 %6476
    %6478 = vrot.lane.b32.xlu0 %v6391, 121
    %v6479 = vpop.permute.xlu0 %6478
    %6480 = vrot.lane.b32.xlu0 %v6392, 121
    %v6481 = vpop.permute.xlu0 %6480
    %6482 = vrot.lane.b32.xlu0 %v6393, 121
    %v6483 = vpop.permute.xlu0 %6482
    %6484 = vrot.lane.b32.xlu0 %v6394, 121
    %v6485 = vpop.permute.xlu0 %6484
    %6486 = vrot.lane.b32.xlu0 %v6395, 121
    %v6487 = vpop.permute.xlu0 %6486
    %6488 = vrot.lane.b32.xlu0 %v6396, 121
    %v6489 = vpop.permute.xlu0 %6488
    %6490 = vrot.lane.b32.xlu0 %v6397, 121
    %v6491 = vpop.permute.xlu0 %6490
    %6492 = vrot.lane.b32.xlu0 %v6398, 121
    %v6493 = vpop.permute.xlu0 %6492
    %6494 = vrot.lane.b32.xlu0 %v6399, 121
    %v6495 = vpop.permute.xlu0 %6494
    %v6496 = vsel %vm190, %v6433, %v6435
    %v6497 = vsel %vm190, %v6437, %v6439
    %v6498 = vsel %vm190, %v6441, %v6443
    %v6499 = vsel %vm190, %v6445, %v6447
    %v6500 = vsel %vm190, %v6449, %v6451
    %v6501 = vsel %vm190, %v6453, %v6455
    %v6502 = vsel %vm190, %v6457, %v6459
    %v6503 = vsel %vm190, %v6461, %v6463
    %v6504 = vsel %vm190, %v6465, %v6467
    %v6505 = vsel %vm190, %v6469, %v6471
    %v6506 = vsel %vm190, %v6473, %v6475
    %v6507 = vsel %vm190, %v6477, %v6479
    %v6508 = vsel %vm190, %v6481, %v6483
    %v6509 = vsel %vm190, %v6485, %v6487
    %v6510 = vsel %vm190, %v6489, %v6491
    %v6511 = vsel %vm190, %v6493, %v6495
    %6528 = vst [vmem:[#allocation6 + $0x700] sm:$0xff] %v6496
    %6529 = vst [vmem:[#allocation6 + $0x710] sm:$0xff] %v6497
    %6530 = vst [vmem:[#allocation6 + $0x720] sm:$0xff] %v6498
    %6531 = vst [vmem:[#allocation6 + $0x730] sm:$0xff] %v6499
    %6532 = vst [vmem:[#allocation6 + $0x740] sm:$0xff] %v6500
    %6533 = vst [vmem:[#allocation6 + $0x750] sm:$0xff] %v6501
    %6534 = vst [vmem:[#allocation6 + $0x760] sm:$0xff] %v6502
    %6535 = vst [vmem:[#allocation6 + $0x770] sm:$0xff] %v6503
    %6536 = vst [vmem:[#allocation6 + $0x780] sm:$0xff] %v6504
    %6537 = vst [vmem:[#allocation6 + $0x790] sm:$0xff] %v6505
    %6538 = vst [vmem:[#allocation6 + $0x7a0] sm:$0xff] %v6506
    %6539 = vst [vmem:[#allocation6 + $0x7b0] sm:$0xff] %v6507
    %6540 = vst [vmem:[#allocation6 + $0x7c0] sm:$0xff] %v6508
    %6541 = vst [vmem:[#allocation6 + $0x7d0] sm:$0xff] %v6509
    %6542 = vst [vmem:[#allocation6 + $0x7e0] sm:$0xff] %v6510
    %6543 = vst [vmem:[#allocation6 + $0x7f0] sm:$0xff] %v6511
    %v6544 = vld [vmem:[%s5247] sm:$0xff]
    %v6545 = vld [vmem:[%s5247 + $0x10] sm:$0xff]
    %v6546 = vld [vmem:[%s5247 + $0x20] sm:$0xff]
    %v6547 = vld [vmem:[%s5247 + $0x30] sm:$0xff]
    %v6548 = vld [vmem:[%s5247 + $0x40] sm:$0xff]
    %v6549 = vld [vmem:[%s5247 + $0x50] sm:$0xff]
    %v6550 = vld [vmem:[%s5247 + $0x60] sm:$0xff]
    %v6551 = vld [vmem:[%s5247 + $0x70] sm:$0xff]
    %v6552 = vld [vmem:[%s5247 + $0x80] sm:$0xff]
    %v6553 = vld [vmem:[%s5247 + $0x90] sm:$0xff]
    %v6554 = vld [vmem:[%s5247 + $0xa0] sm:$0xff]
    %v6555 = vld [vmem:[%s5247 + $0xb0] sm:$0xff]
    %v6556 = vld [vmem:[%s5247 + $0xc0] sm:$0xff]
    %v6557 = vld [vmem:[%s5247 + $0xd0] sm:$0xff]
    %v6558 = vld [vmem:[%s5247 + $0xe0] sm:$0xff]
    %v6559 = vld [vmem:[%s5247 + $0xf0] sm:$0xff]
    %6560 = vst [vmem:[#allocation6 + $0x8] sm:$0xff] %v6544
    %6561 = vst [vmem:[#allocation6 + $0x18] sm:$0xff] %v6545
    %6562 = vst [vmem:[#allocation6 + $0x28] sm:$0xff] %v6546
    %6563 = vst [vmem:[#allocation6 + $0x38] sm:$0xff] %v6547
    %6564 = vst [vmem:[#allocation6 + $0x48] sm:$0xff] %v6548
    %6565 = vst [vmem:[#allocation6 + $0x58] sm:$0xff] %v6549
    %6566 = vst [vmem:[#allocation6 + $0x68] sm:$0xff] %v6550
    %6567 = vst [vmem:[#allocation6 + $0x78] sm:$0xff] %v6551
    %6568 = vst [vmem:[#allocation6 + $0x88] sm:$0xff] %v6552
    %6569 = vst [vmem:[#allocation6 + $0x98] sm:$0xff] %v6553
    %6570 = vst [vmem:[#allocation6 + $0xa8] sm:$0xff] %v6554
    %6571 = vst [vmem:[#allocation6 + $0xb8] sm:$0xff] %v6555
    %6572 = vst [vmem:[#allocation6 + $0xc8] sm:$0xff] %v6556
    %6573 = vst [vmem:[#allocation6 + $0xd8] sm:$0xff] %v6557
    %6574 = vst [vmem:[#allocation6 + $0xe8] sm:$0xff] %v6558
    %6575 = vst [vmem:[#allocation6 + $0xf8] sm:$0xff] %v6559
    %v6576 = vld [vmem:[%s5247] sm:$0xff]
    %v6577 = vld [vmem:[%s5247 + $0x8] sm:$0xff]
    %v6578 = vld [vmem:[%s5247 + $0x10] sm:$0xff]
    %v6579 = vld [vmem:[%s5247 + $0x18] sm:$0xff]
    %v6580 = vld [vmem:[%s5247 + $0x20] sm:$0xff]
    %v6581 = vld [vmem:[%s5247 + $0x28] sm:$0xff]
    %v6582 = vld [vmem:[%s5247 + $0x30] sm:$0xff]
    %v6583 = vld [vmem:[%s5247 + $0x38] sm:$0xff]
    %v6584 = vld [vmem:[%s5247 + $0x40] sm:$0xff]
    %v6585 = vld [vmem:[%s5247 + $0x48] sm:$0xff]
    %v6586 = vld [vmem:[%s5247 + $0x50] sm:$0xff]
    %v6587 = vld [vmem:[%s5247 + $0x58] sm:$0xff]
    %v6588 = vld [vmem:[%s5247 + $0x60] sm:$0xff]
    %v6589 = vld [vmem:[%s5247 + $0x68] sm:$0xff]
    %v6590 = vld [vmem:[%s5247 + $0x70] sm:$0xff]
    %v6591 = vld [vmem:[%s5247 + $0x78] sm:$0xff]
    %v6592 = vld [vmem:[%s5247 + $0x80] sm:$0xff]
    %v6593 = vld [vmem:[%s5247 + $0x88] sm:$0xff]
    %v6594 = vld [vmem:[%s5247 + $0x90] sm:$0xff]
    %v6595 = vld [vmem:[%s5247 + $0x98] sm:$0xff]
    %v6596 = vld [vmem:[%s5247 + $0xa0] sm:$0xff]
    %v6597 = vld [vmem:[%s5247 + $0xa8] sm:$0xff]
    %v6598 = vld [vmem:[%s5247 + $0xb0] sm:$0xff]
    %v6599 = vld [vmem:[%s5247 + $0xb8] sm:$0xff]
    %v6600 = vld [vmem:[%s5247 + $0xc0] sm:$0xff]
    %v6601 = vld [vmem:[%s5247 + $0xc8] sm:$0xff]
    %v6602 = vld [vmem:[%s5247 + $0xd0] sm:$0xff]
    %v6603 = vld [vmem:[%s5247 + $0xd8] sm:$0xff]
    %v6604 = vld [vmem:[%s5247 + $0xe0] sm:$0xff]
    %v6605 = vld [vmem:[%s5247 + $0xe8] sm:$0xff]
    %v6606 = vld [vmem:[%s5247 + $0xf0] sm:$0xff]
    %v6607 = vld [vmem:[%s5247 + $0xf8] sm:$0xff]
    %6640 = vrot.lane.b32.xlu0 %v6576, 127
    %v6641 = vpop.permute.xlu0 %6640
    %6642 = vrot.lane.b32.xlu0 %v6577, 127
    %v6643 = vpop.permute.xlu0 %6642
    %6644 = vrot.lane.b32.xlu0 %v6578, 127
    %v6645 = vpop.permute.xlu0 %6644
    %6646 = vrot.lane.b32.xlu0 %v6579, 127
    %v6647 = vpop.permute.xlu0 %6646
    %6648 = vrot.lane.b32.xlu0 %v6580, 127
    %v6649 = vpop.permute.xlu0 %6648
    %6650 = vrot.lane.b32.xlu0 %v6581, 127
    %v6651 = vpop.permute.xlu0 %6650
    %6652 = vrot.lane.b32.xlu0 %v6582, 127
    %v6653 = vpop.permute.xlu0 %6652
    %6654 = vrot.lane.b32.xlu0 %v6583, 127
    %v6655 = vpop.permute.xlu0 %6654
    %6656 = vrot.lane.b32.xlu0 %v6584, 127
    %v6657 = vpop.permute.xlu0 %6656
    %6658 = vrot.lane.b32.xlu0 %v6585, 127
    %v6659 = vpop.permute.xlu0 %6658
    %6660 = vrot.lane.b32.xlu0 %v6586, 127
    %v6661 = vpop.permute.xlu0 %6660
    %6662 = vrot.lane.b32.xlu0 %v6587, 127
    %v6663 = vpop.permute.xlu0 %6662
    %6664 = vrot.lane.b32.xlu0 %v6588, 127
    %v6665 = vpop.permute.xlu0 %6664
    %6666 = vrot.lane.b32.xlu0 %v6589, 127
    %v6667 = vpop.permute.xlu0 %6666
    %6668 = vrot.lane.b32.xlu0 %v6590, 127
    %v6669 = vpop.permute.xlu0 %6668
    %6670 = vrot.lane.b32.xlu0 %v6591, 127
    %v6671 = vpop.permute.xlu0 %6670
    %6672 = vrot.lane.b32.xlu0 %v6592, 127
    %v6673 = vpop.permute.xlu0 %6672
    %6674 = vrot.lane.b32.xlu0 %v6593, 127
    %v6675 = vpop.permute.xlu0 %6674
    %6676 = vrot.lane.b32.xlu0 %v6594, 127
    %v6677 = vpop.permute.xlu0 %6676
    %6678 = vrot.lane.b32.xlu0 %v6595, 127
    %v6679 = vpop.permute.xlu0 %6678
    %6680 = vrot.lane.b32.xlu0 %v6596, 127
    %v6681 = vpop.permute.xlu0 %6680
    %6682 = vrot.lane.b32.xlu0 %v6597, 127
    %v6683 = vpop.permute.xlu0 %6682
    %6684 = vrot.lane.b32.xlu0 %v6598, 127
    %v6685 = vpop.permute.xlu0 %6684
    %6686 = vrot.lane.b32.xlu0 %v6599, 127
    %v6687 = vpop.permute.xlu0 %6686
    %6688 = vrot.lane.b32.xlu0 %v6600, 127
    %v6689 = vpop.permute.xlu0 %6688
    %6690 = vrot.lane.b32.xlu0 %v6601, 127
    %v6691 = vpop.permute.xlu0 %6690
    %6692 = vrot.lane.b32.xlu0 %v6602, 127
    %v6693 = vpop.permute.xlu0 %6692
    %6694 = vrot.lane.b32.xlu0 %v6603, 127
    %v6695 = vpop.permute.xlu0 %6694
    %6696 = vrot.lane.b32.xlu0 %v6604, 127
    %v6697 = vpop.permute.xlu0 %6696
    %6698 = vrot.lane.b32.xlu0 %v6605, 127
    %v6699 = vpop.permute.xlu0 %6698
    %6700 = vrot.lane.b32.xlu0 %v6606, 127
    %v6701 = vpop.permute.xlu0 %6700
    %6702 = vrot.lane.b32.xlu0 %v6607, 127
    %v6703 = vpop.permute.xlu0 %6702
    %v6704 = vsel %vm118, %v6641, %v6643
    %v6705 = vsel %vm118, %v6645, %v6647
    %v6706 = vsel %vm118, %v6649, %v6651
    %v6707 = vsel %vm118, %v6653, %v6655
    %v6708 = vsel %vm118, %v6657, %v6659
    %v6709 = vsel %vm118, %v6661, %v6663
    %v6710 = vsel %vm118, %v6665, %v6667
    %v6711 = vsel %vm118, %v6669, %v6671
    %v6712 = vsel %vm118, %v6673, %v6675
    %v6713 = vsel %vm118, %v6677, %v6679
    %v6714 = vsel %vm118, %v6681, %v6683
    %v6715 = vsel %vm118, %v6685, %v6687
    %v6716 = vsel %vm118, %v6689, %v6691
    %v6717 = vsel %vm118, %v6693, %v6695
    %v6718 = vsel %vm118, %v6697, %v6699
    %v6719 = vsel %vm118, %v6701, %v6703
    %6736 = vst [vmem:[#allocation6 + $0x108] sm:$0xff] %v6704
    %6737 = vst [vmem:[#allocation6 + $0x118] sm:$0xff] %v6705
    %6738 = vst [vmem:[#allocation6 + $0x128] sm:$0xff] %v6706
    %6739 = vst [vmem:[#allocation6 + $0x138] sm:$0xff] %v6707
    %6740 = vst [vmem:[#allocation6 + $0x148] sm:$0xff] %v6708
    %6741 = vst [vmem:[#allocation6 + $0x158] sm:$0xff] %v6709
    %6742 = vst [vmem:[#allocation6 + $0x168] sm:$0xff] %v6710
    %6743 = vst [vmem:[#allocation6 + $0x178] sm:$0xff] %v6711
    %6744 = vst [vmem:[#allocation6 + $0x188] sm:$0xff] %v6712
    %6745 = vst [vmem:[#allocation6 + $0x198] sm:$0xff] %v6713
    %6746 = vst [vmem:[#allocation6 + $0x1a8] sm:$0xff] %v6714
    %6747 = vst [vmem:[#allocation6 + $0x1b8] sm:$0xff] %v6715
    %6748 = vst [vmem:[#allocation6 + $0x1c8] sm:$0xff] %v6716
    %6749 = vst [vmem:[#allocation6 + $0x1d8] sm:$0xff] %v6717
    %6750 = vst [vmem:[#allocation6 + $0x1e8] sm:$0xff] %v6718
    %6751 = vst [vmem:[#allocation6 + $0x1f8] sm:$0xff] %v6719
    %v6752 = vld [vmem:[%s5247] sm:$0xff]
    %v6753 = vld [vmem:[%s5247 + $0x8] sm:$0xff]
    %v6754 = vld [vmem:[%s5247 + $0x10] sm:$0xff]
    %v6755 = vld [vmem:[%s5247 + $0x18] sm:$0xff]
    %v6756 = vld [vmem:[%s5247 + $0x20] sm:$0xff]
    %v6757 = vld [vmem:[%s5247 + $0x28] sm:$0xff]
    %v6758 = vld [vmem:[%s5247 + $0x30] sm:$0xff]
    %v6759 = vld [vmem:[%s5247 + $0x38] sm:$0xff]
    %v6760 = vld [vmem:[%s5247 + $0x40] sm:$0xff]
    %v6761 = vld [vmem:[%s5247 + $0x48] sm:$0xff]
    %v6762 = vld [vmem:[%s5247 + $0x50] sm:$0xff]
    %v6763 = vld [vmem:[%s5247 + $0x58] sm:$0xff]
    %v6764 = vld [vmem:[%s5247 + $0x60] sm:$0xff]
    %v6765 = vld [vmem:[%s5247 + $0x68] sm:$0xff]
    %v6766 = vld [vmem:[%s5247 + $0x70] sm:$0xff]
    %v6767 = vld [vmem:[%s5247 + $0x78] sm:$0xff]
    %v6768 = vld [vmem:[%s5247 + $0x80] sm:$0xff]
    %v6769 = vld [vmem:[%s5247 + $0x88] sm:$0xff]
    %v6770 = vld [vmem:[%s5247 + $0x90] sm:$0xff]
    %v6771 = vld [vmem:[%s5247 + $0x98] sm:$0xff]
    %v6772 = vld [vmem:[%s5247 + $0xa0] sm:$0xff]
    %v6773 = vld [vmem:[%s5247 + $0xa8] sm:$0xff]
    %v6774 = vld [vmem:[%s5247 + $0xb0] sm:$0xff]
    %v6775 = vld [vmem:[%s5247 + $0xb8] sm:$0xff]
    %v6776 = vld [vmem:[%s5247 + $0xc0] sm:$0xff]
    %v6777 = vld [vmem:[%s5247 + $0xc8] sm:$0xff]
    %v6778 = vld [vmem:[%s5247 + $0xd0] sm:$0xff]
    %v6779 = vld [vmem:[%s5247 + $0xd8] sm:$0xff]
    %v6780 = vld [vmem:[%s5247 + $0xe0] sm:$0xff]
    %v6781 = vld [vmem:[%s5247 + $0xe8] sm:$0xff]
    %v6782 = vld [vmem:[%s5247 + $0xf0] sm:$0xff]
    %v6783 = vld [vmem:[%s5247 + $0xf8] sm:$0xff]
    %6816 = vrot.lane.b32.xlu0 %v6752, 126
    %v6817 = vpop.permute.xlu0 %6816
    %6818 = vrot.lane.b32.xlu0 %v6753, 126
    %v6819 = vpop.permute.xlu0 %6818
    %6820 = vrot.lane.b32.xlu0 %v6754, 126
    %v6821 = vpop.permute.xlu0 %6820
    %6822 = vrot.lane.b32.xlu0 %v6755, 126
    %v6823 = vpop.permute.xlu0 %6822
    %6824 = vrot.lane.b32.xlu0 %v6756, 126
    %v6825 = vpop.permute.xlu0 %6824
    %6826 = vrot.lane.b32.xlu0 %v6757, 126
    %v6827 = vpop.permute.xlu0 %6826
    %6828 = vrot.lane.b32.xlu0 %v6758, 126
    %v6829 = vpop.permute.xlu0 %6828
    %6830 = vrot.lane.b32.xlu0 %v6759, 126
    %v6831 = vpop.permute.xlu0 %6830
    %6832 = vrot.lane.b32.xlu0 %v6760, 126
    %v6833 = vpop.permute.xlu0 %6832
    %6834 = vrot.lane.b32.xlu0 %v6761, 126
    %v6835 = vpop.permute.xlu0 %6834
    %6836 = vrot.lane.b32.xlu0 %v6762, 126
    %v6837 = vpop.permute.xlu0 %6836
    %6838 = vrot.lane.b32.xlu0 %v6763, 126
    %v6839 = vpop.permute.xlu0 %6838
    %6840 = vrot.lane.b32.xlu0 %v6764, 126
    %v6841 = vpop.permute.xlu0 %6840
    %6842 = vrot.lane.b32.xlu0 %v6765, 126
    %v6843 = vpop.permute.xlu0 %6842
    %6844 = vrot.lane.b32.xlu0 %v6766, 126
    %v6845 = vpop.permute.xlu0 %6844
    %6846 = vrot.lane.b32.xlu0 %v6767, 126
    %v6847 = vpop.permute.xlu0 %6846
    %6848 = vrot.lane.b32.xlu0 %v6768, 126
    %v6849 = vpop.permute.xlu0 %6848
    %6850 = vrot.lane.b32.xlu0 %v6769, 126
    %v6851 = vpop.permute.xlu0 %6850
    %6852 = vrot.lane.b32.xlu0 %v6770, 126
    %v6853 = vpop.permute.xlu0 %6852
    %6854 = vrot.lane.b32.xlu0 %v6771, 126
    %v6855 = vpop.permute.xlu0 %6854
    %6856 = vrot.lane.b32.xlu0 %v6772, 126
    %v6857 = vpop.permute.xlu0 %6856
    %6858 = vrot.lane.b32.xlu0 %v6773, 126
    %v6859 = vpop.permute.xlu0 %6858
    %6860 = vrot.lane.b32.xlu0 %v6774, 126
    %v6861 = vpop.permute.xlu0 %6860
    %6862 = vrot.lane.b32.xlu0 %v6775, 126
    %v6863 = vpop.permute.xlu0 %6862
    %6864 = vrot.lane.b32.xlu0 %v6776, 126
    %v6865 = vpop.permute.xlu0 %6864
    %6866 = vrot.lane.b32.xlu0 %v6777, 126
    %v6867 = vpop.permute.xlu0 %6866
    %6868 = vrot.lane.b32.xlu0 %v6778, 126
    %v6869 = vpop.permute.xlu0 %6868
    %6870 = vrot.lane.b32.xlu0 %v6779, 126
    %v6871 = vpop.permute.xlu0 %6870
    %6872 = vrot.lane.b32.xlu0 %v6780, 126
    %v6873 = vpop.permute.xlu0 %6872
    %6874 = vrot.lane.b32.xlu0 %v6781, 126
    %v6875 = vpop.permute.xlu0 %6874
    %6876 = vrot.lane.b32.xlu0 %v6782, 126
    %v6877 = vpop.permute.xlu0 %6876
    %6878 = vrot.lane.b32.xlu0 %v6783, 126
    %v6879 = vpop.permute.xlu0 %6878
    %v6880 = vsel %vm130, %v6817, %v6819
    %v6881 = vsel %vm130, %v6821, %v6823
    %v6882 = vsel %vm130, %v6825, %v6827
    %v6883 = vsel %vm130, %v6829, %v6831
    %v6884 = vsel %vm130, %v6833, %v6835
    %v6885 = vsel %vm130, %v6837, %v6839
    %v6886 = vsel %vm130, %v6841, %v6843
    %v6887 = vsel %vm130, %v6845, %v6847
    %v6888 = vsel %vm130, %v6849, %v6851
    %v6889 = vsel %vm130, %v6853, %v6855
    %v6890 = vsel %vm130, %v6857, %v6859
    %v6891 = vsel %vm130, %v6861, %v6863
    %v6892 = vsel %vm130, %v6865, %v6867
    %v6893 = vsel %vm130, %v6869, %v6871
    %v6894 = vsel %vm130, %v6873, %v6875
    %v6895 = vsel %vm130, %v6877, %v6879
    %6912 = vst [vmem:[#allocation6 + $0x208] sm:$0xff] %v6880
    %6913 = vst [vmem:[#allocation6 + $0x218] sm:$0xff] %v6881
    %6914 = vst [vmem:[#allocation6 + $0x228] sm:$0xff] %v6882
    %6915 = vst [vmem:[#allocation6 + $0x238] sm:$0xff] %v6883
    %6916 = vst [vmem:[#allocation6 + $0x248] sm:$0xff] %v6884
    %6917 = vst [vmem:[#allocation6 + $0x258] sm:$0xff] %v6885
    %6918 = vst [vmem:[#allocation6 + $0x268] sm:$0xff] %v6886
    %6919 = vst [vmem:[#allocation6 + $0x278] sm:$0xff] %v6887
    %6920 = vst [vmem:[#allocation6 + $0x288] sm:$0xff] %v6888
    %6921 = vst [vmem:[#allocation6 + $0x298] sm:$0xff] %v6889
    %6922 = vst [vmem:[#allocation6 + $0x2a8] sm:$0xff] %v6890
    %6923 = vst [vmem:[#allocation6 + $0x2b8] sm:$0xff] %v6891
    %6924 = vst [vmem:[#allocation6 + $0x2c8] sm:$0xff] %v6892
    %6925 = vst [vmem:[#allocation6 + $0x2d8] sm:$0xff] %v6893
    %6926 = vst [vmem:[#allocation6 + $0x2e8] sm:$0xff] %v6894
    %6927 = vst [vmem:[#allocation6 + $0x2f8] sm:$0xff] %v6895
    %v6928 = vld [vmem:[%s5247] sm:$0xff]
    %v6929 = vld [vmem:[%s5247 + $0x8] sm:$0xff]
    %v6930 = vld [vmem:[%s5247 + $0x10] sm:$0xff]
    %v6931 = vld [vmem:[%s5247 + $0x18] sm:$0xff]
    %v6932 = vld [vmem:[%s5247 + $0x20] sm:$0xff]
    %v6933 = vld [vmem:[%s5247 + $0x28] sm:$0xff]
    %v6934 = vld [vmem:[%s5247 + $0x30] sm:$0xff]
    %v6935 = vld [vmem:[%s5247 + $0x38] sm:$0xff]
    %v6936 = vld [vmem:[%s5247 + $0x40] sm:$0xff]
    %v6937 = vld [vmem:[%s5247 + $0x48] sm:$0xff]
    %v6938 = vld [vmem:[%s5247 + $0x50] sm:$0xff]
    %v6939 = vld [vmem:[%s5247 + $0x58] sm:$0xff]
    %v6940 = vld [vmem:[%s5247 + $0x60] sm:$0xff]
    %v6941 = vld [vmem:[%s5247 + $0x68] sm:$0xff]
    %v6942 = vld [vmem:[%s5247 + $0x70] sm:$0xff]
    %v6943 = vld [vmem:[%s5247 + $0x78] sm:$0xff]
    %v6944 = vld [vmem:[%s5247 + $0x80] sm:$0xff]
    %v6945 = vld [vmem:[%s5247 + $0x88] sm:$0xff]
    %v6946 = vld [vmem:[%s5247 + $0x90] sm:$0xff]
    %v6947 = vld [vmem:[%s5247 + $0x98] sm:$0xff]
    %v6948 = vld [vmem:[%s5247 + $0xa0] sm:$0xff]
    %v6949 = vld [vmem:[%s5247 + $0xa8] sm:$0xff]
    %v6950 = vld [vmem:[%s5247 + $0xb0] sm:$0xff]
    %v6951 = vld [vmem:[%s5247 + $0xb8] sm:$0xff]
    %v6952 = vld [vmem:[%s5247 + $0xc0] sm:$0xff]
    %v6953 = vld [vmem:[%s5247 + $0xc8] sm:$0xff]
    %v6954 = vld [vmem:[%s5247 + $0xd0] sm:$0xff]
    %v6955 = vld [vmem:[%s5247 + $0xd8] sm:$0xff]
    %v6956 = vld [vmem:[%s5247 + $0xe0] sm:$0xff]
    %v6957 = vld [vmem:[%s5247 + $0xe8] sm:$0xff]
    %v6958 = vld [vmem:[%s5247 + $0xf0] sm:$0xff]
    %v6959 = vld [vmem:[%s5247 + $0xf8] sm:$0xff]
    %6992 = vrot.lane.b32.xlu0 %v6928, 125
    %v6993 = vpop.permute.xlu0 %6992
    %6994 = vrot.lane.b32.xlu0 %v6929, 125
    %v6995 = vpop.permute.xlu0 %6994
    %6996 = vrot.lane.b32.xlu0 %v6930, 125
    %v6997 = vpop.permute.xlu0 %6996
    %6998 = vrot.lane.b32.xlu0 %v6931, 125
    %v6999 = vpop.permute.xlu0 %6998
    %7000 = vrot.lane.b32.xlu0 %v6932, 125
    %v7001 = vpop.permute.xlu0 %7000
    %7002 = vrot.lane.b32.xlu0 %v6933, 125
    %v7003 = vpop.permute.xlu0 %7002
    %7004 = vrot.lane.b32.xlu0 %v6934, 125
    %v7005 = vpop.permute.xlu0 %7004
    %7006 = vrot.lane.b32.xlu0 %v6935, 125
    %v7007 = vpop.permute.xlu0 %7006
    %7008 = vrot.lane.b32.xlu0 %v6936, 125
    %v7009 = vpop.permute.xlu0 %7008
    %7010 = vrot.lane.b32.xlu0 %v6937, 125
    %v7011 = vpop.permute.xlu0 %7010
    %7012 = vrot.lane.b32.xlu0 %v6938, 125
    %v7013 = vpop.permute.xlu0 %7012
    %7014 = vrot.lane.b32.xlu0 %v6939, 125
    %v7015 = vpop.permute.xlu0 %7014
    %7016 = vrot.lane.b32.xlu0 %v6940, 125
    %v7017 = vpop.permute.xlu0 %7016
    %7018 = vrot.lane.b32.xlu0 %v6941, 125
    %v7019 = vpop.permute.xlu0 %7018
    %7020 = vrot.lane.b32.xlu0 %v6942, 125
    %v7021 = vpop.permute.xlu0 %7020
    %7022 = vrot.lane.b32.xlu0 %v6943, 125
    %v7023 = vpop.permute.xlu0 %7022
    %7024 = vrot.lane.b32.xlu0 %v6944, 125
    %v7025 = vpop.permute.xlu0 %7024
    %7026 = vrot.lane.b32.xlu0 %v6945, 125
    %v7027 = vpop.permute.xlu0 %7026
    %7028 = vrot.lane.b32.xlu0 %v6946, 125
    %v7029 = vpop.permute.xlu0 %7028
    %7030 = vrot.lane.b32.xlu0 %v6947, 125
    %v7031 = vpop.permute.xlu0 %7030
    %7032 = vrot.lane.b32.xlu0 %v6948, 125
    %v7033 = vpop.permute.xlu0 %7032
    %7034 = vrot.lane.b32.xlu0 %v6949, 125
    %v7035 = vpop.permute.xlu0 %7034
    %7036 = vrot.lane.b32.xlu0 %v6950, 125
    %v7037 = vpop.permute.xlu0 %7036
    %7038 = vrot.lane.b32.xlu0 %v6951, 125
    %v7039 = vpop.permute.xlu0 %7038
    %7040 = vrot.lane.b32.xlu0 %v6952, 125
    %v7041 = vpop.permute.xlu0 %7040
    %7042 = vrot.lane.b32.xlu0 %v6953, 125
    %v7043 = vpop.permute.xlu0 %7042
    %7044 = vrot.lane.b32.xlu0 %v6954, 125
    %v7045 = vpop.permute.xlu0 %7044
    %7046 = vrot.lane.b32.xlu0 %v6955, 125
    %v7047 = vpop.permute.xlu0 %7046
    %7048 = vrot.lane.b32.xlu0 %v6956, 125
    %v7049 = vpop.permute.xlu0 %7048
    %7050 = vrot.lane.b32.xlu0 %v6957, 125
    %v7051 = vpop.permute.xlu0 %7050
    %7052 = vrot.lane.b32.xlu0 %v6958, 125
    %v7053 = vpop.permute.xlu0 %7052
    %7054 = vrot.lane.b32.xlu0 %v6959, 125
    %v7055 = vpop.permute.xlu0 %7054
    %v7056 = vsel %vm142, %v6993, %v6995
    %v7057 = vsel %vm142, %v6997, %v6999
    %v7058 = vsel %vm142, %v7001, %v7003
    %v7059 = vsel %vm142, %v7005, %v7007
    %v7060 = vsel %vm142, %v7009, %v7011
    %v7061 = vsel %vm142, %v7013, %v7015
    %v7062 = vsel %vm142, %v7017, %v7019
    %v7063 = vsel %vm142, %v7021, %v7023
    %v7064 = vsel %vm142, %v7025, %v7027
    %v7065 = vsel %vm142, %v7029, %v7031
    %v7066 = vsel %vm142, %v7033, %v7035
    %v7067 = vsel %vm142, %v7037, %v7039
    %v7068 = vsel %vm142, %v7041, %v7043
    %v7069 = vsel %vm142, %v7045, %v7047
    %v7070 = vsel %vm142, %v7049, %v7051
    %v7071 = vsel %vm142, %v7053, %v7055
    %7088 = vst [vmem:[#allocation6 + $0x308] sm:$0xff] %v7056
    %7089 = vst [vmem:[#allocation6 + $0x318] sm:$0xff] %v7057
    %7090 = vst [vmem:[#allocation6 + $0x328] sm:$0xff] %v7058
    %7091 = vst [vmem:[#allocation6 + $0x338] sm:$0xff] %v7059
    %7092 = vst [vmem:[#allocation6 + $0x348] sm:$0xff] %v7060
    %7093 = vst [vmem:[#allocation6 + $0x358] sm:$0xff] %v7061
    %7094 = vst [vmem:[#allocation6 + $0x368] sm:$0xff] %v7062
    %7095 = vst [vmem:[#allocation6 + $0x378] sm:$0xff] %v7063
    %7096 = vst [vmem:[#allocation6 + $0x388] sm:$0xff] %v7064
    %7097 = vst [vmem:[#allocation6 + $0x398] sm:$0xff] %v7065
    %7098 = vst [vmem:[#allocation6 + $0x3a8] sm:$0xff] %v7066
    %7099 = vst [vmem:[#allocation6 + $0x3b8] sm:$0xff] %v7067
    %7100 = vst [vmem:[#allocation6 + $0x3c8] sm:$0xff] %v7068
    %7101 = vst [vmem:[#allocation6 + $0x3d8] sm:$0xff] %v7069
    %7102 = vst [vmem:[#allocation6 + $0x3e8] sm:$0xff] %v7070
    %7103 = vst [vmem:[#allocation6 + $0x3f8] sm:$0xff] %v7071
    %v7104 = vld [vmem:[%s5247] sm:$0xff]
    %v7105 = vld [vmem:[%s5247 + $0x8] sm:$0xff]
    %v7106 = vld [vmem:[%s5247 + $0x10] sm:$0xff]
    %v7107 = vld [vmem:[%s5247 + $0x18] sm:$0xff]
    %v7108 = vld [vmem:[%s5247 + $0x20] sm:$0xff]
    %v7109 = vld [vmem:[%s5247 + $0x28] sm:$0xff]
    %v7110 = vld [vmem:[%s5247 + $0x30] sm:$0xff]
    %v7111 = vld [vmem:[%s5247 + $0x38] sm:$0xff]
    %v7112 = vld [vmem:[%s5247 + $0x40] sm:$0xff]
    %v7113 = vld [vmem:[%s5247 + $0x48] sm:$0xff]
    %v7114 = vld [vmem:[%s5247 + $0x50] sm:$0xff]
    %v7115 = vld [vmem:[%s5247 + $0x58] sm:$0xff]
    %v7116 = vld [vmem:[%s5247 + $0x60] sm:$0xff]
    %v7117 = vld [vmem:[%s5247 + $0x68] sm:$0xff]
    %v7118 = vld [vmem:[%s5247 + $0x70] sm:$0xff]
    %v7119 = vld [vmem:[%s5247 + $0x78] sm:$0xff]
    %v7120 = vld [vmem:[%s5247 + $0x80] sm:$0xff]
    %v7121 = vld [vmem:[%s5247 + $0x88] sm:$0xff]
    %v7122 = vld [vmem:[%s5247 + $0x90] sm:$0xff]
    %v7123 = vld [vmem:[%s5247 + $0x98] sm:$0xff]
    %v7124 = vld [vmem:[%s5247 + $0xa0] sm:$0xff]
    %v7125 = vld [vmem:[%s5247 + $0xa8] sm:$0xff]
    %v7126 = vld [vmem:[%s5247 + $0xb0] sm:$0xff]
    %v7127 = vld [vmem:[%s5247 + $0xb8] sm:$0xff]
    %v7128 = vld [vmem:[%s5247 + $0xc0] sm:$0xff]
    %v7129 = vld [vmem:[%s5247 + $0xc8] sm:$0xff]
    %v7130 = vld [vmem:[%s5247 + $0xd0] sm:$0xff]
    %v7131 = vld [vmem:[%s5247 + $0xd8] sm:$0xff]
    %v7132 = vld [vmem:[%s5247 + $0xe0] sm:$0xff]
    %v7133 = vld [vmem:[%s5247 + $0xe8] sm:$0xff]
    %v7134 = vld [vmem:[%s5247 + $0xf0] sm:$0xff]
    %v7135 = vld [vmem:[%s5247 + $0xf8] sm:$0xff]
    %7168 = vrot.lane.b32.xlu0 %v7104, 124
    %v7169 = vpop.permute.xlu0 %7168
    %7170 = vrot.lane.b32.xlu0 %v7105, 124
    %v7171 = vpop.permute.xlu0 %7170
    %7172 = vrot.lane.b32.xlu0 %v7106, 124
    %v7173 = vpop.permute.xlu0 %7172
    %7174 = vrot.lane.b32.xlu0 %v7107, 124
    %v7175 = vpop.permute.xlu0 %7174
    %7176 = vrot.lane.b32.xlu0 %v7108, 124
    %v7177 = vpop.permute.xlu0 %7176
    %7178 = vrot.lane.b32.xlu0 %v7109, 124
    %v7179 = vpop.permute.xlu0 %7178
    %7180 = vrot.lane.b32.xlu0 %v7110, 124
    %v7181 = vpop.permute.xlu0 %7180
    %7182 = vrot.lane.b32.xlu0 %v7111, 124
    %v7183 = vpop.permute.xlu0 %7182
    %7184 = vrot.lane.b32.xlu0 %v7112, 124
    %v7185 = vpop.permute.xlu0 %7184
    %7186 = vrot.lane.b32.xlu0 %v7113, 124
    %v7187 = vpop.permute.xlu0 %7186
    %7188 = vrot.lane.b32.xlu0 %v7114, 124
    %v7189 = vpop.permute.xlu0 %7188
    %7190 = vrot.lane.b32.xlu0 %v7115, 124
    %v7191 = vpop.permute.xlu0 %7190
    %7192 = vrot.lane.b32.xlu0 %v7116, 124
    %v7193 = vpop.permute.xlu0 %7192
    %7194 = vrot.lane.b32.xlu0 %v7117, 124
    %v7195 = vpop.permute.xlu0 %7194
    %7196 = vrot.lane.b32.xlu0 %v7118, 124
    %v7197 = vpop.permute.xlu0 %7196
    %7198 = vrot.lane.b32.xlu0 %v7119, 124
    %v7199 = vpop.permute.xlu0 %7198
    %7200 = vrot.lane.b32.xlu0 %v7120, 124
    %v7201 = vpop.permute.xlu0 %7200
    %7202 = vrot.lane.b32.xlu0 %v7121, 124
    %v7203 = vpop.permute.xlu0 %7202
    %7204 = vrot.lane.b32.xlu0 %v7122, 124
    %v7205 = vpop.permute.xlu0 %7204
    %7206 = vrot.lane.b32.xlu0 %v7123, 124
    %v7207 = vpop.permute.xlu0 %7206
    %7208 = vrot.lane.b32.xlu0 %v7124, 124
    %v7209 = vpop.permute.xlu0 %7208
    %7210 = vrot.lane.b32.xlu0 %v7125, 124
    %v7211 = vpop.permute.xlu0 %7210
    %7212 = vrot.lane.b32.xlu0 %v7126, 124
    %v7213 = vpop.permute.xlu0 %7212
    %7214 = vrot.lane.b32.xlu0 %v7127, 124
    %v7215 = vpop.permute.xlu0 %7214
    %7216 = vrot.lane.b32.xlu0 %v7128, 124
    %v7217 = vpop.permute.xlu0 %7216
    %7218 = vrot.lane.b32.xlu0 %v7129, 124
    %v7219 = vpop.permute.xlu0 %7218
    %7220 = vrot.lane.b32.xlu0 %v7130, 124
    %v7221 = vpop.permute.xlu0 %7220
    %7222 = vrot.lane.b32.xlu0 %v7131, 124
    %v7223 = vpop.permute.xlu0 %7222
    %7224 = vrot.lane.b32.xlu0 %v7132, 124
    %v7225 = vpop.permute.xlu0 %7224
    %7226 = vrot.lane.b32.xlu0 %v7133, 124
    %v7227 = vpop.permute.xlu0 %7226
    %7228 = vrot.lane.b32.xlu0 %v7134, 124
    %v7229 = vpop.permute.xlu0 %7228
    %7230 = vrot.lane.b32.xlu0 %v7135, 124
    %v7231 = vpop.permute.xlu0 %7230
    %v7232 = vsel %vm154, %v7169, %v7171
    %v7233 = vsel %vm154, %v7173, %v7175
    %v7234 = vsel %vm154, %v7177, %v7179
    %v7235 = vsel %vm154, %v7181, %v7183
    %v7236 = vsel %vm154, %v7185, %v7187
    %v7237 = vsel %vm154, %v7189, %v7191
    %v7238 = vsel %vm154, %v7193, %v7195
    %v7239 = vsel %vm154, %v7197, %v7199
    %v7240 = vsel %vm154, %v7201, %v7203
    %v7241 = vsel %vm154, %v7205, %v7207
    %v7242 = vsel %vm154, %v7209, %v7211
    %v7243 = vsel %vm154, %v7213, %v7215
    %v7244 = vsel %vm154, %v7217, %v7219
    %v7245 = vsel %vm154, %v7221, %v7223
    %v7246 = vsel %vm154, %v7225, %v7227
    %v7247 = vsel %vm154, %v7229, %v7231
    %7264 = vst [vmem:[#allocation6 + $0x408] sm:$0xff] %v7232
    %7265 = vst [vmem:[#allocation6 + $0x418] sm:$0xff] %v7233
    %7266 = vst [vmem:[#allocation6 + $0x428] sm:$0xff] %v7234
    %7267 = vst [vmem:[#allocation6 + $0x438] sm:$0xff] %v7235
    %7268 = vst [vmem:[#allocation6 + $0x448] sm:$0xff] %v7236
    %7269 = vst [vmem:[#allocation6 + $0x458] sm:$0xff] %v7237
    %7270 = vst [vmem:[#allocation6 + $0x468] sm:$0xff] %v7238
    %7271 = vst [vmem:[#allocation6 + $0x478] sm:$0xff] %v7239
    %7272 = vst [vmem:[#allocation6 + $0x488] sm:$0xff] %v7240
    %7273 = vst [vmem:[#allocation6 + $0x498] sm:$0xff] %v7241
    %7274 = vst [vmem:[#allocation6 + $0x4a8] sm:$0xff] %v7242
    %7275 = vst [vmem:[#allocation6 + $0x4b8] sm:$0xff] %v7243
    %7276 = vst [vmem:[#allocation6 + $0x4c8] sm:$0xff] %v7244
    %7277 = vst [vmem:[#allocation6 + $0x4d8] sm:$0xff] %v7245
    %7278 = vst [vmem:[#allocation6 + $0x4e8] sm:$0xff] %v7246
    %7279 = vst [vmem:[#allocation6 + $0x4f8] sm:$0xff] %v7247
    %v7280 = vld [vmem:[%s5247] sm:$0xff]
    %v7281 = vld [vmem:[%s5247 + $0x8] sm:$0xff]
    %v7282 = vld [vmem:[%s5247 + $0x10] sm:$0xff]
    %v7283 = vld [vmem:[%s5247 + $0x18] sm:$0xff]
    %v7284 = vld [vmem:[%s5247 + $0x20] sm:$0xff]
    %v7285 = vld [vmem:[%s5247 + $0x28] sm:$0xff]
    %v7286 = vld [vmem:[%s5247 + $0x30] sm:$0xff]
    %v7287 = vld [vmem:[%s5247 + $0x38] sm:$0xff]
    %v7288 = vld [vmem:[%s5247 + $0x40] sm:$0xff]
    %v7289 = vld [vmem:[%s5247 + $0x48] sm:$0xff]
    %v7290 = vld [vmem:[%s5247 + $0x50] sm:$0xff]
    %v7291 = vld [vmem:[%s5247 + $0x58] sm:$0xff]
    %v7292 = vld [vmem:[%s5247 + $0x60] sm:$0xff]
    %v7293 = vld [vmem:[%s5247 + $0x68] sm:$0xff]
    %v7294 = vld [vmem:[%s5247 + $0x70] sm:$0xff]
    %v7295 = vld [vmem:[%s5247 + $0x78] sm:$0xff]
    %v7296 = vld [vmem:[%s5247 + $0x80] sm:$0xff]
    %v7297 = vld [vmem:[%s5247 + $0x88] sm:$0xff]
    %v7298 = vld [vmem:[%s5247 + $0x90] sm:$0xff]
    %v7299 = vld [vmem:[%s5247 + $0x98] sm:$0xff]
    %v7300 = vld [vmem:[%s5247 + $0xa0] sm:$0xff]
    %v7301 = vld [vmem:[%s5247 + $0xa8] sm:$0xff]
    %v7302 = vld [vmem:[%s5247 + $0xb0] sm:$0xff]
    %v7303 = vld [vmem:[%s5247 + $0xb8] sm:$0xff]
    %v7304 = vld [vmem:[%s5247 + $0xc0] sm:$0xff]
    %v7305 = vld [vmem:[%s5247 + $0xc8] sm:$0xff]
    %v7306 = vld [vmem:[%s5247 + $0xd0] sm:$0xff]
    %v7307 = vld [vmem:[%s5247 + $0xd8] sm:$0xff]
    %v7308 = vld [vmem:[%s5247 + $0xe0] sm:$0xff]
    %v7309 = vld [vmem:[%s5247 + $0xe8] sm:$0xff]
    %v7310 = vld [vmem:[%s5247 + $0xf0] sm:$0xff]
    %v7311 = vld [vmem:[%s5247 + $0xf8] sm:$0xff]
    %7344 = vrot.lane.b32.xlu0 %v7280, 123
    %v7345 = vpop.permute.xlu0 %7344
    %7346 = vrot.lane.b32.xlu0 %v7281, 123
    %v7347 = vpop.permute.xlu0 %7346
    %7348 = vrot.lane.b32.xlu0 %v7282, 123
    %v7349 = vpop.permute.xlu0 %7348
    %7350 = vrot.lane.b32.xlu0 %v7283, 123
    %v7351 = vpop.permute.xlu0 %7350
    %7352 = vrot.lane.b32.xlu0 %v7284, 123
    %v7353 = vpop.permute.xlu0 %7352
    %7354 = vrot.lane.b32.xlu0 %v7285, 123
    %v7355 = vpop.permute.xlu0 %7354
    %7356 = vrot.lane.b32.xlu0 %v7286, 123
    %v7357 = vpop.permute.xlu0 %7356
    %7358 = vrot.lane.b32.xlu0 %v7287, 123
    %v7359 = vpop.permute.xlu0 %7358
    %7360 = vrot.lane.b32.xlu0 %v7288, 123
    %v7361 = vpop.permute.xlu0 %7360
    %7362 = vrot.lane.b32.xlu0 %v7289, 123
    %v7363 = vpop.permute.xlu0 %7362
    %7364 = vrot.lane.b32.xlu0 %v7290, 123
    %v7365 = vpop.permute.xlu0 %7364
    %7366 = vrot.lane.b32.xlu0 %v7291, 123
    %v7367 = vpop.permute.xlu0 %7366
    %7368 = vrot.lane.b32.xlu0 %v7292, 123
    %v7369 = vpop.permute.xlu0 %7368
    %7370 = vrot.lane.b32.xlu0 %v7293, 123
    %v7371 = vpop.permute.xlu0 %7370
    %7372 = vrot.lane.b32.xlu0 %v7294, 123
    %v7373 = vpop.permute.xlu0 %7372
    %7374 = vrot.lane.b32.xlu0 %v7295, 123
    %v7375 = vpop.permute.xlu0 %7374
    %7376 = vrot.lane.b32.xlu0 %v7296, 123
    %v7377 = vpop.permute.xlu0 %7376
    %7378 = vrot.lane.b32.xlu0 %v7297, 123
    %v7379 = vpop.permute.xlu0 %7378
    %7380 = vrot.lane.b32.xlu0 %v7298, 123
    %v7381 = vpop.permute.xlu0 %7380
    %7382 = vrot.lane.b32.xlu0 %v7299, 123
    %v7383 = vpop.permute.xlu0 %7382
    %7384 = vrot.lane.b32.xlu0 %v7300, 123
    %v7385 = vpop.permute.xlu0 %7384
    %7386 = vrot.lane.b32.xlu0 %v7301, 123
    %v7387 = vpop.permute.xlu0 %7386
    %7388 = vrot.lane.b32.xlu0 %v7302, 123
    %v7389 = vpop.permute.xlu0 %7388
    %7390 = vrot.lane.b32.xlu0 %v7303, 123
    %v7391 = vpop.permute.xlu0 %7390
    %7392 = vrot.lane.b32.xlu0 %v7304, 123
    %v7393 = vpop.permute.xlu0 %7392
    %7394 = vrot.lane.b32.xlu0 %v7305, 123
    %v7395 = vpop.permute.xlu0 %7394
    %7396 = vrot.lane.b32.xlu0 %v7306, 123
    %v7397 = vpop.permute.xlu0 %7396
    %7398 = vrot.lane.b32.xlu0 %v7307, 123
    %v7399 = vpop.permute.xlu0 %7398
    %7400 = vrot.lane.b32.xlu0 %v7308, 123
    %v7401 = vpop.permute.xlu0 %7400
    %7402 = vrot.lane.b32.xlu0 %v7309, 123
    %v7403 = vpop.permute.xlu0 %7402
    %7404 = vrot.lane.b32.xlu0 %v7310, 123
    %v7405 = vpop.permute.xlu0 %7404
    %7406 = vrot.lane.b32.xlu0 %v7311, 123
    %v7407 = vpop.permute.xlu0 %7406
    %v7408 = vsel %vm166, %v7345, %v7347
    %v7409 = vsel %vm166, %v7349, %v7351
    %v7410 = vsel %vm166, %v7353, %v7355
    %v7411 = vsel %vm166, %v7357, %v7359
    %v7412 = vsel %vm166, %v7361, %v7363
    %v7413 = vsel %vm166, %v7365, %v7367
    %v7414 = vsel %vm166, %v7369, %v7371
    %v7415 = vsel %vm166, %v7373, %v7375
    %v7416 = vsel %vm166, %v7377, %v7379
    %v7417 = vsel %vm166, %v7381, %v7383
    %v7418 = vsel %vm166, %v7385, %v7387
    %v7419 = vsel %vm166, %v7389, %v7391
    %v7420 = vsel %vm166, %v7393, %v7395
    %v7421 = vsel %vm166, %v7397, %v7399
    %v7422 = vsel %vm166, %v7401, %v7403
    %v7423 = vsel %vm166, %v7405, %v7407
    %7440 = vst [vmem:[#allocation6 + $0x508] sm:$0xff] %v7408
    %7441 = vst [vmem:[#allocation6 + $0x518] sm:$0xff] %v7409
    %7442 = vst [vmem:[#allocation6 + $0x528] sm:$0xff] %v7410
    %7443 = vst [vmem:[#allocation6 + $0x538] sm:$0xff] %v7411
    %7444 = vst [vmem:[#allocation6 + $0x548] sm:$0xff] %v7412
    %7445 = vst [vmem:[#allocation6 + $0x558] sm:$0xff] %v7413
    %7446 = vst [vmem:[#allocation6 + $0x568] sm:$0xff] %v7414
    %7447 = vst [vmem:[#allocation6 + $0x578] sm:$0xff] %v7415
    %7448 = vst [vmem:[#allocation6 + $0x588] sm:$0xff] %v7416
    %7449 = vst [vmem:[#allocation6 + $0x598] sm:$0xff] %v7417
    %7450 = vst [vmem:[#allocation6 + $0x5a8] sm:$0xff] %v7418
    %7451 = vst [vmem:[#allocation6 + $0x5b8] sm:$0xff] %v7419
    %7452 = vst [vmem:[#allocation6 + $0x5c8] sm:$0xff] %v7420
    %7453 = vst [vmem:[#allocation6 + $0x5d8] sm:$0xff] %v7421
    %7454 = vst [vmem:[#allocation6 + $0x5e8] sm:$0xff] %v7422
    %7455 = vst [vmem:[#allocation6 + $0x5f8] sm:$0xff] %v7423
    %v7456 = vld [vmem:[%s5247] sm:$0xff]
    %v7457 = vld [vmem:[%s5247 + $0x8] sm:$0xff]
    %v7458 = vld [vmem:[%s5247 + $0x10] sm:$0xff]
    %v7459 = vld [vmem:[%s5247 + $0x18] sm:$0xff]
    %v7460 = vld [vmem:[%s5247 + $0x20] sm:$0xff]
    %v7461 = vld [vmem:[%s5247 + $0x28] sm:$0xff]
    %v7462 = vld [vmem:[%s5247 + $0x30] sm:$0xff]
    %v7463 = vld [vmem:[%s5247 + $0x38] sm:$0xff]
    %v7464 = vld [vmem:[%s5247 + $0x40] sm:$0xff]
    %v7465 = vld [vmem:[%s5247 + $0x48] sm:$0xff]
    %v7466 = vld [vmem:[%s5247 + $0x50] sm:$0xff]
    %v7467 = vld [vmem:[%s5247 + $0x58] sm:$0xff]
    %v7468 = vld [vmem:[%s5247 + $0x60] sm:$0xff]
    %v7469 = vld [vmem:[%s5247 + $0x68] sm:$0xff]
    %v7470 = vld [vmem:[%s5247 + $0x70] sm:$0xff]
    %v7471 = vld [vmem:[%s5247 + $0x78] sm:$0xff]
    %v7472 = vld [vmem:[%s5247 + $0x80] sm:$0xff]
    %v7473 = vld [vmem:[%s5247 + $0x88] sm:$0xff]
    %v7474 = vld [vmem:[%s5247 + $0x90] sm:$0xff]
    %v7475 = vld [vmem:[%s5247 + $0x98] sm:$0xff]
    %v7476 = vld [vmem:[%s5247 + $0xa0] sm:$0xff]
    %v7477 = vld [vmem:[%s5247 + $0xa8] sm:$0xff]
    %v7478 = vld [vmem:[%s5247 + $0xb0] sm:$0xff]
    %v7479 = vld [vmem:[%s5247 + $0xb8] sm:$0xff]
    %v7480 = vld [vmem:[%s5247 + $0xc0] sm:$0xff]
    %v7481 = vld [vmem:[%s5247 + $0xc8] sm:$0xff]
    %v7482 = vld [vmem:[%s5247 + $0xd0] sm:$0xff]
    %v7483 = vld [vmem:[%s5247 + $0xd8] sm:$0xff]
    %v7484 = vld [vmem:[%s5247 + $0xe0] sm:$0xff]
    %v7485 = vld [vmem:[%s5247 + $0xe8] sm:$0xff]
    %v7486 = vld [vmem:[%s5247 + $0xf0] sm:$0xff]
    %v7487 = vld [vmem:[%s5247 + $0xf8] sm:$0xff]
    %7520 = vrot.lane.b32.xlu0 %v7456, 122
    %v7521 = vpop.permute.xlu0 %7520
    %7522 = vrot.lane.b32.xlu0 %v7457, 122
    %v7523 = vpop.permute.xlu0 %7522
    %7524 = vrot.lane.b32.xlu0 %v7458, 122
    %v7525 = vpop.permute.xlu0 %7524
    %7526 = vrot.lane.b32.xlu0 %v7459, 122
    %v7527 = vpop.permute.xlu0 %7526
    %7528 = vrot.lane.b32.xlu0 %v7460, 122
    %v7529 = vpop.permute.xlu0 %7528
    %7530 = vrot.lane.b32.xlu0 %v7461, 122
    %v7531 = vpop.permute.xlu0 %7530
    %7532 = vrot.lane.b32.xlu0 %v7462, 122
    %v7533 = vpop.permute.xlu0 %7532
    %7534 = vrot.lane.b32.xlu0 %v7463, 122
    %v7535 = vpop.permute.xlu0 %7534
    %7536 = vrot.lane.b32.xlu0 %v7464, 122
    %v7537 = vpop.permute.xlu0 %7536
    %7538 = vrot.lane.b32.xlu0 %v7465, 122
    %v7539 = vpop.permute.xlu0 %7538
    %7540 = vrot.lane.b32.xlu0 %v7466, 122
    %v7541 = vpop.permute.xlu0 %7540
    %7542 = vrot.lane.b32.xlu0 %v7467, 122
    %v7543 = vpop.permute.xlu0 %7542
    %7544 = vrot.lane.b32.xlu0 %v7468, 122
    %v7545 = vpop.permute.xlu0 %7544
    %7546 = vrot.lane.b32.xlu0 %v7469, 122
    %v7547 = vpop.permute.xlu0 %7546
    %7548 = vrot.lane.b32.xlu0 %v7470, 122
    %v7549 = vpop.permute.xlu0 %7548
    %7550 = vrot.lane.b32.xlu0 %v7471, 122
    %v7551 = vpop.permute.xlu0 %7550
    %7552 = vrot.lane.b32.xlu0 %v7472, 122
    %v7553 = vpop.permute.xlu0 %7552
    %7554 = vrot.lane.b32.xlu0 %v7473, 122
    %v7555 = vpop.permute.xlu0 %7554
    %7556 = vrot.lane.b32.xlu0 %v7474, 122
    %v7557 = vpop.permute.xlu0 %7556
    %7558 = vrot.lane.b32.xlu0 %v7475, 122
    %v7559 = vpop.permute.xlu0 %7558
    %7560 = vrot.lane.b32.xlu0 %v7476, 122
    %v7561 = vpop.permute.xlu0 %7560
    %7562 = vrot.lane.b32.xlu0 %v7477, 122
    %v7563 = vpop.permute.xlu0 %7562
    %7564 = vrot.lane.b32.xlu0 %v7478, 122
    %v7565 = vpop.permute.xlu0 %7564
    %7566 = vrot.lane.b32.xlu0 %v7479, 122
    %v7567 = vpop.permute.xlu0 %7566
    %7568 = vrot.lane.b32.xlu0 %v7480, 122
    %v7569 = vpop.permute.xlu0 %7568
    %7570 = vrot.lane.b32.xlu0 %v7481, 122
    %v7571 = vpop.permute.xlu0 %7570
    %7572 = vrot.lane.b32.xlu0 %v7482, 122
    %v7573 = vpop.permute.xlu0 %7572
    %7574 = vrot.lane.b32.xlu0 %v7483, 122
    %v7575 = vpop.permute.xlu0 %7574
    %7576 = vrot.lane.b32.xlu0 %v7484, 122
    %v7577 = vpop.permute.xlu0 %7576
    %7578 = vrot.lane.b32.xlu0 %v7485, 122
    %v7579 = vpop.permute.xlu0 %7578
    %7580 = vrot.lane.b32.xlu0 %v7486, 122
    %v7581 = vpop.permute.xlu0 %7580
    %7582 = vrot.lane.b32.xlu0 %v7487, 122
    %v7583 = vpop.permute.xlu0 %7582
    %v7584 = vsel %vm178, %v7521, %v7523
    %v7585 = vsel %vm178, %v7525, %v7527
    %v7586 = vsel %vm178, %v7529, %v7531
    %v7587 = vsel %vm178, %v7533, %v7535
    %v7588 = vsel %vm178, %v7537, %v7539
    %v7589 = vsel %vm178, %v7541, %v7543
    %v7590 = vsel %vm178, %v7545, %v7547
    %v7591 = vsel %vm178, %v7549, %v7551
    %v7592 = vsel %vm178, %v7553, %v7555
    %v7593 = vsel %vm178, %v7557, %v7559
    %v7594 = vsel %vm178, %v7561, %v7563
    %v7595 = vsel %vm178, %v7565, %v7567
    %v7596 = vsel %vm178, %v7569, %v7571
    %v7597 = vsel %vm178, %v7573, %v7575
    %v7598 = vsel %vm178, %v7577, %v7579
    %v7599 = vsel %vm178, %v7581, %v7583
    %7616 = vst [vmem:[#allocation6 + $0x608] sm:$0xff] %v7584
    %7617 = vst [vmem:[#allocation6 + $0x618] sm:$0xff] %v7585
    %7618 = vst [vmem:[#allocation6 + $0x628] sm:$0xff] %v7586
    %7619 = vst [vmem:[#allocation6 + $0x638] sm:$0xff] %v7587
    %7620 = vst [vmem:[#allocation6 + $0x648] sm:$0xff] %v7588
    %7621 = vst [vmem:[#allocation6 + $0x658] sm:$0xff] %v7589
    %7622 = vst [vmem:[#allocation6 + $0x668] sm:$0xff] %v7590
    %7623 = vst [vmem:[#allocation6 + $0x678] sm:$0xff] %v7591
    %7624 = vst [vmem:[#allocation6 + $0x688] sm:$0xff] %v7592
    %7625 = vst [vmem:[#allocation6 + $0x698] sm:$0xff] %v7593
    %7626 = vst [vmem:[#allocation6 + $0x6a8] sm:$0xff] %v7594
    %7627 = vst [vmem:[#allocation6 + $0x6b8] sm:$0xff] %v7595
    %7628 = vst [vmem:[#allocation6 + $0x6c8] sm:$0xff] %v7596
    %7629 = vst [vmem:[#allocation6 + $0x6d8] sm:$0xff] %v7597
    %7630 = vst [vmem:[#allocation6 + $0x6e8] sm:$0xff] %v7598
    %7631 = vst [vmem:[#allocation6 + $0x6f8] sm:$0xff] %v7599
    %v7632 = vld [vmem:[%s5247] sm:$0xff]
    %v7633 = vld [vmem:[%s5247 + $0x8] sm:$0xff]
    %v7634 = vld [vmem:[%s5247 + $0x10] sm:$0xff]
    %v7635 = vld [vmem:[%s5247 + $0x18] sm:$0xff]
    %v7636 = vld [vmem:[%s5247 + $0x20] sm:$0xff]
    %v7637 = vld [vmem:[%s5247 + $0x28] sm:$0xff]
    %v7638 = vld [vmem:[%s5247 + $0x30] sm:$0xff]
    %v7639 = vld [vmem:[%s5247 + $0x38] sm:$0xff]
    %v7640 = vld [vmem:[%s5247 + $0x40] sm:$0xff]
    %v7641 = vld [vmem:[%s5247 + $0x48] sm:$0xff]
    %v7642 = vld [vmem:[%s5247 + $0x50] sm:$0xff]
    %v7643 = vld [vmem:[%s5247 + $0x58] sm:$0xff]
    %v7644 = vld [vmem:[%s5247 + $0x60] sm:$0xff]
    %v7645 = vld [vmem:[%s5247 + $0x68] sm:$0xff]
    %v7646 = vld [vmem:[%s5247 + $0x70] sm:$0xff]
    %v7647 = vld [vmem:[%s5247 + $0x78] sm:$0xff]
    %v7648 = vld [vmem:[%s5247 + $0x80] sm:$0xff]
    %v7649 = vld [vmem:[%s5247 + $0x88] sm:$0xff]
    %v7650 = vld [vmem:[%s5247 + $0x90] sm:$0xff]
    %v7651 = vld [vmem:[%s5247 + $0x98] sm:$0xff]
    %v7652 = vld [vmem:[%s5247 + $0xa0] sm:$0xff]
    %v7653 = vld [vmem:[%s5247 + $0xa8] sm:$0xff]
    %v7654 = vld [vmem:[%s5247 + $0xb0] sm:$0xff]
    %v7655 = vld [vmem:[%s5247 + $0xb8] sm:$0xff]
    %v7656 = vld [vmem:[%s5247 + $0xc0] sm:$0xff]
    %v7657 = vld [vmem:[%s5247 + $0xc8] sm:$0xff]
    %v7658 = vld [vmem:[%s5247 + $0xd0] sm:$0xff]
    %v7659 = vld [vmem:[%s5247 + $0xd8] sm:$0xff]
    %v7660 = vld [vmem:[%s5247 + $0xe0] sm:$0xff]
    %v7661 = vld [vmem:[%s5247 + $0xe8] sm:$0xff]
    %v7662 = vld [vmem:[%s5247 + $0xf0] sm:$0xff]
    %v7663 = vld [vmem:[%s5247 + $0xf8] sm:$0xff]
    %7696 = vrot.lane.b32.xlu0 %v7632, 121
    %v7697 = vpop.permute.xlu0 %7696
    %7698 = vrot.lane.b32.xlu0 %v7633, 121
    %v7699 = vpop.permute.xlu0 %7698
    %7700 = vrot.lane.b32.xlu0 %v7634, 121
    %v7701 = vpop.permute.xlu0 %7700
    %7702 = vrot.lane.b32.xlu0 %v7635, 121
    %v7703 = vpop.permute.xlu0 %7702
    %7704 = vrot.lane.b32.xlu0 %v7636, 121
    %v7705 = vpop.permute.xlu0 %7704
    %7706 = vrot.lane.b32.xlu0 %v7637, 121
    %v7707 = vpop.permute.xlu0 %7706
    %7708 = vrot.lane.b32.xlu0 %v7638, 121
    %v7709 = vpop.permute.xlu0 %7708
    %7710 = vrot.lane.b32.xlu0 %v7639, 121
    %v7711 = vpop.permute.xlu0 %7710
    %7712 = vrot.lane.b32.xlu0 %v7640, 121
    %v7713 = vpop.permute.xlu0 %7712
    %7714 = vrot.lane.b32.xlu0 %v7641, 121
    %v7715 = vpop.permute.xlu0 %7714
    %7716 = vrot.lane.b32.xlu0 %v7642, 121
    %v7717 = vpop.permute.xlu0 %7716
    %7718 = vrot.lane.b32.xlu0 %v7643, 121
    %v7719 = vpop.permute.xlu0 %7718
    %7720 = vrot.lane.b32.xlu0 %v7644, 121
    %v7721 = vpop.permute.xlu0 %7720
    %7722 = vrot.lane.b32.xlu0 %v7645, 121
    %v7723 = vpop.permute.xlu0 %7722
    %7724 = vrot.lane.b32.xlu0 %v7646, 121
    %v7725 = vpop.permute.xlu0 %7724
    %7726 = vrot.lane.b32.xlu0 %v7647, 121
    %v7727 = vpop.permute.xlu0 %7726
    %7728 = vrot.lane.b32.xlu0 %v7648, 121
    %v7729 = vpop.permute.xlu0 %7728
    %7730 = vrot.lane.b32.xlu0 %v7649, 121
    %v7731 = vpop.permute.xlu0 %7730
    %7732 = vrot.lane.b32.xlu0 %v7650, 121
    %v7733 = vpop.permute.xlu0 %7732
    %7734 = vrot.lane.b32.xlu0 %v7651, 121
    %v7735 = vpop.permute.xlu0 %7734
    %7736 = vrot.lane.b32.xlu0 %v7652, 121
    %v7737 = vpop.permute.xlu0 %7736
    %7738 = vrot.lane.b32.xlu0 %v7653, 121
    %v7739 = vpop.permute.xlu0 %7738
    %7740 = vrot.lane.b32.xlu0 %v7654, 121
    %v7741 = vpop.permute.xlu0 %7740
    %7742 = vrot.lane.b32.xlu0 %v7655, 121
    %v7743 = vpop.permute.xlu0 %7742
    %7744 = vrot.lane.b32.xlu0 %v7656, 121
    %v7745 = vpop.permute.xlu0 %7744
    %7746 = vrot.lane.b32.xlu0 %v7657, 121
    %v7747 = vpop.permute.xlu0 %7746
    %7748 = vrot.lane.b32.xlu0 %v7658, 121
    %v7749 = vpop.permute.xlu0 %7748
    %7750 = vrot.lane.b32.xlu0 %v7659, 121
    %v7751 = vpop.permute.xlu0 %7750
    %7752 = vrot.lane.b32.xlu0 %v7660, 121
    %v7753 = vpop.permute.xlu0 %7752
    %7754 = vrot.lane.b32.xlu0 %v7661, 121
    %v7755 = vpop.permute.xlu0 %7754
    %7756 = vrot.lane.b32.xlu0 %v7662, 121
    %v7757 = vpop.permute.xlu0 %7756
    %7758 = vrot.lane.b32.xlu0 %v7663, 121
    %v7759 = vpop.permute.xlu0 %7758
    %v7760 = vsel %vm190, %v7697, %v7699
    %v7761 = vsel %vm190, %v7701, %v7703
    %v7762 = vsel %vm190, %v7705, %v7707
    %v7763 = vsel %vm190, %v7709, %v7711
    %v7764 = vsel %vm190, %v7713, %v7715
    %v7765 = vsel %vm190, %v7717, %v7719
    %v7766 = vsel %vm190, %v7721, %v7723
    %v7767 = vsel %vm190, %v7725, %v7727
    %v7768 = vsel %vm190, %v7729, %v7731
    %v7769 = vsel %vm190, %v7733, %v7735
    %v7770 = vsel %vm190, %v7737, %v7739
    %v7771 = vsel %vm190, %v7741, %v7743
    %v7772 = vsel %vm190, %v7745, %v7747
    %v7773 = vsel %vm190, %v7749, %v7751
    %v7774 = vsel %vm190, %v7753, %v7755
    %v7775 = vsel %vm190, %v7757, %v7759
    %7792 = vst [vmem:[#allocation6 + $0x708] sm:$0xff] %v7760
    %7793 = vst [vmem:[#allocation6 + $0x718] sm:$0xff] %v7761
    %7794 = vst [vmem:[#allocation6 + $0x728] sm:$0xff] %v7762
    %7795 = vst [vmem:[#allocation6 + $0x738] sm:$0xff] %v7763
    %7796 = vst [vmem:[#allocation6 + $0x748] sm:$0xff] %v7764
    %7797 = vst [vmem:[#allocation6 + $0x758] sm:$0xff] %v7765
    %7798 = vst [vmem:[#allocation6 + $0x768] sm:$0xff] %v7766
    %7799 = vst [vmem:[#allocation6 + $0x778] sm:$0xff] %v7767
    %7800 = vst [vmem:[#allocation6 + $0x788] sm:$0xff] %v7768
    %7801 = vst [vmem:[#allocation6 + $0x798] sm:$0xff] %v7769
    %7802 = vst [vmem:[#allocation6 + $0x7a8] sm:$0xff] %v7770
    %7803 = vst [vmem:[#allocation6 + $0x7b8] sm:$0xff] %v7771
    %7804 = vst [vmem:[#allocation6 + $0x7c8] sm:$0xff] %v7772
    %7805 = vst [vmem:[#allocation6 + $0x7d8] sm:$0xff] %v7773
    %7806 = vst [vmem:[#allocation6 + $0x7e8] sm:$0xff] %v7774
    %7807 = vst [vmem:[#allocation6 + $0x7f8] sm:$0xff] %v7775
    %v7808 = vld [vmem:[#allocation12] sm:$0xff]
    %v7809 = vld [vmem:[#allocation12 + $0x8] sm:$0xff]
    %v7810 = vld [vmem:[#allocation12 + $0x10] sm:$0xff]
    %v7811 = vld [vmem:[#allocation12 + $0x18] sm:$0xff]
    %v7812 = vld [vmem:[#allocation12 + $0x20] sm:$0xff]
    %v7813 = vld [vmem:[#allocation12 + $0x28] sm:$0xff]
    %v7814 = vld [vmem:[#allocation12 + $0x30] sm:$0xff]
    %v7815 = vld [vmem:[#allocation12 + $0x38] sm:$0xff]
    %v7816 = vld [vmem:[#allocation12 + $0x40] sm:$0xff]
    %v7817 = vld [vmem:[#allocation12 + $0x48] sm:$0xff]
    %v7818 = vld [vmem:[#allocation12 + $0x50] sm:$0xff]
    %v7819 = vld [vmem:[#allocation12 + $0x58] sm:$0xff]
    %v7820 = vld [vmem:[#allocation12 + $0x60] sm:$0xff]
    %v7821 = vld [vmem:[#allocation12 + $0x68] sm:$0xff]
    %v7822 = vld [vmem:[#allocation12 + $0x70] sm:$0xff]
    %v7823 = vld [vmem:[#allocation12 + $0x78] sm:$0xff]
    %v7824 = vld [vmem:[#allocation12 + $0x80] sm:$0xff]
    %v7825 = vld [vmem:[#allocation12 + $0x88] sm:$0xff]
    %v7826 = vld [vmem:[#allocation12 + $0x90] sm:$0xff]
    %v7827 = vld [vmem:[#allocation12 + $0x98] sm:$0xff]
    %v7828 = vld [vmem:[#allocation12 + $0xa0] sm:$0xff]
    %v7829 = vld [vmem:[#allocation12 + $0xa8] sm:$0xff]
    %v7830 = vld [vmem:[#allocation12 + $0xb0] sm:$0xff]
    %v7831 = vld [vmem:[#allocation12 + $0xb8] sm:$0xff]
    %v7832 = vld [vmem:[#allocation12 + $0xc0] sm:$0xff]
    %v7833 = vld [vmem:[#allocation12 + $0xc8] sm:$0xff]
    %v7834 = vld [vmem:[#allocation12 + $0xd0] sm:$0xff]
    %v7835 = vld [vmem:[#allocation12 + $0xd8] sm:$0xff]
    %v7836 = vld [vmem:[#allocation12 + $0xe0] sm:$0xff]
    %v7837 = vld [vmem:[#allocation12 + $0xe8] sm:$0xff]
    %v7838 = vld [vmem:[#allocation12 + $0xf0] sm:$0xff]
    %v7839 = vld [vmem:[#allocation12 + $0xf8] sm:$0xff]
    %v7840 = vld [vmem:[#allocation6] sm:$0xff]
    %v7841 = vld [vmem:[#allocation6 + $0x8] sm:$0xff]
    %v7842 = vld [vmem:[#allocation6 + $0x10] sm:$0xff]
    %v7843 = vld [vmem:[#allocation6 + $0x18] sm:$0xff]
    %v7844 = vld [vmem:[#allocation6 + $0x20] sm:$0xff]
    %v7845 = vld [vmem:[#allocation6 + $0x28] sm:$0xff]
    %v7846 = vld [vmem:[#allocation6 + $0x30] sm:$0xff]
    %v7847 = vld [vmem:[#allocation6 + $0x38] sm:$0xff]
    %v7848 = vld [vmem:[#allocation6 + $0x40] sm:$0xff]
    %v7849 = vld [vmem:[#allocation6 + $0x48] sm:$0xff]
    %v7850 = vld [vmem:[#allocation6 + $0x50] sm:$0xff]
    %v7851 = vld [vmem:[#allocation6 + $0x58] sm:$0xff]
    %v7852 = vld [vmem:[#allocation6 + $0x60] sm:$0xff]
    %v7853 = vld [vmem:[#allocation6 + $0x68] sm:$0xff]
    %v7854 = vld [vmem:[#allocation6 + $0x70] sm:$0xff]
    %v7855 = vld [vmem:[#allocation6 + $0x78] sm:$0xff]
    %v7856 = vld [vmem:[#allocation6 + $0x80] sm:$0xff]
    %v7857 = vld [vmem:[#allocation6 + $0x88] sm:$0xff]
    %v7858 = vld [vmem:[#allocation6 + $0x90] sm:$0xff]
    %v7859 = vld [vmem:[#allocation6 + $0x98] sm:$0xff]
    %v7860 = vld [vmem:[#allocation6 + $0xa0] sm:$0xff]
    %v7861 = vld [vmem:[#allocation6 + $0xa8] sm:$0xff]
    %v7862 = vld [vmem:[#allocation6 + $0xb0] sm:$0xff]
    %v7863 = vld [vmem:[#allocation6 + $0xb8] sm:$0xff]
    %v7864 = vld [vmem:[#allocation6 + $0xc0] sm:$0xff]
    %v7865 = vld [vmem:[#allocation6 + $0xc8] sm:$0xff]
    %v7866 = vld [vmem:[#allocation6 + $0xd0] sm:$0xff]
    %v7867 = vld [vmem:[#allocation6 + $0xd8] sm:$0xff]
    %v7868 = vld [vmem:[#allocation6 + $0xe0] sm:$0xff]
    %v7869 = vld [vmem:[#allocation6 + $0xe8] sm:$0xff]
    %v7870 = vld [vmem:[#allocation6 + $0xf0] sm:$0xff]
    %v7871 = vld [vmem:[#allocation6 + $0xf8] sm:$0xff]
    %v7872 = vld [vmem:[#allocation6 + $0x100] sm:$0xff]
    %v7873 = vld [vmem:[#allocation6 + $0x108] sm:$0xff]
    %v7874 = vld [vmem:[#allocation6 + $0x110] sm:$0xff]
    %v7875 = vld [vmem:[#allocation6 + $0x118] sm:$0xff]
    %v7876 = vld [vmem:[#allocation6 + $0x120] sm:$0xff]
    %v7877 = vld [vmem:[#allocation6 + $0x128] sm:$0xff]
    %v7878 = vld [vmem:[#allocation6 + $0x130] sm:$0xff]
    %v7879 = vld [vmem:[#allocation6 + $0x138] sm:$0xff]
    %v7880 = vld [vmem:[#allocation6 + $0x140] sm:$0xff]
    %v7881 = vld [vmem:[#allocation6 + $0x148] sm:$0xff]
    %v7882 = vld [vmem:[#allocation6 + $0x150] sm:$0xff]
    %v7883 = vld [vmem:[#allocation6 + $0x158] sm:$0xff]
    %v7884 = vld [vmem:[#allocation6 + $0x160] sm:$0xff]
    %v7885 = vld [vmem:[#allocation6 + $0x168] sm:$0xff]
    %v7886 = vld [vmem:[#allocation6 + $0x170] sm:$0xff]
    %v7887 = vld [vmem:[#allocation6 + $0x178] sm:$0xff]
    %v7888 = vld [vmem:[#allocation6 + $0x180] sm:$0xff]
    %v7889 = vld [vmem:[#allocation6 + $0x188] sm:$0xff]
    %v7890 = vld [vmem:[#allocation6 + $0x190] sm:$0xff]
    %v7891 = vld [vmem:[#allocation6 + $0x198] sm:$0xff]
    %v7892 = vld [vmem:[#allocation6 + $0x1a0] sm:$0xff]
    %v7893 = vld [vmem:[#allocation6 + $0x1a8] sm:$0xff]
    %v7894 = vld [vmem:[#allocation6 + $0x1b0] sm:$0xff]
    %v7895 = vld [vmem:[#allocation6 + $0x1b8] sm:$0xff]
    %v7896 = vld [vmem:[#allocation6 + $0x1c0] sm:$0xff]
    %v7897 = vld [vmem:[#allocation6 + $0x1c8] sm:$0xff]
    %v7898 = vld [vmem:[#allocation6 + $0x1d0] sm:$0xff]
    %v7899 = vld [vmem:[#allocation6 + $0x1d8] sm:$0xff]
    %v7900 = vld [vmem:[#allocation6 + $0x1e0] sm:$0xff]
    %v7901 = vld [vmem:[#allocation6 + $0x1e8] sm:$0xff]
    %v7902 = vld [vmem:[#allocation6 + $0x1f0] sm:$0xff]
    %v7903 = vld [vmem:[#allocation6 + $0x1f8] sm:$0xff]
    %v7904 = vld [vmem:[#allocation6 + $0x200] sm:$0xff]
    %v7905 = vld [vmem:[#allocation6 + $0x208] sm:$0xff]
    %v7906 = vld [vmem:[#allocation6 + $0x210] sm:$0xff]
    %v7907 = vld [vmem:[#allocation6 + $0x218] sm:$0xff]
    %v7908 = vld [vmem:[#allocation6 + $0x220] sm:$0xff]
    %v7909 = vld [vmem:[#allocation6 + $0x228] sm:$0xff]
    %v7910 = vld [vmem:[#allocation6 + $0x230] sm:$0xff]
    %v7911 = vld [vmem:[#allocation6 + $0x238] sm:$0xff]
    %v7912 = vld [vmem:[#allocation6 + $0x240] sm:$0xff]
    %v7913 = vld [vmem:[#allocation6 + $0x248] sm:$0xff]
    %v7914 = vld [vmem:[#allocation6 + $0x250] sm:$0xff]
    %v7915 = vld [vmem:[#allocation6 + $0x258] sm:$0xff]
    %v7916 = vld [vmem:[#allocation6 + $0x260] sm:$0xff]
    %v7917 = vld [vmem:[#allocation6 + $0x268] sm:$0xff]
    %v7918 = vld [vmem:[#allocation6 + $0x270] sm:$0xff]
    %v7919 = vld [vmem:[#allocation6 + $0x278] sm:$0xff]
    %v7920 = vld [vmem:[#allocation6 + $0x280] sm:$0xff]
    %v7921 = vld [vmem:[#allocation6 + $0x288] sm:$0xff]
    %v7922 = vld [vmem:[#allocation6 + $0x290] sm:$0xff]
    %v7923 = vld [vmem:[#allocation6 + $0x298] sm:$0xff]
    %v7924 = vld [vmem:[#allocation6 + $0x2a0] sm:$0xff]
    %v7925 = vld [vmem:[#allocation6 + $0x2a8] sm:$0xff]
    %v7926 = vld [vmem:[#allocation6 + $0x2b0] sm:$0xff]
    %v7927 = vld [vmem:[#allocation6 + $0x2b8] sm:$0xff]
    %v7928 = vld [vmem:[#allocation6 + $0x2c0] sm:$0xff]
    %v7929 = vld [vmem:[#allocation6 + $0x2c8] sm:$0xff]
    %v7930 = vld [vmem:[#allocation6 + $0x2d0] sm:$0xff]
    %v7931 = vld [vmem:[#allocation6 + $0x2d8] sm:$0xff]
    %v7932 = vld [vmem:[#allocation6 + $0x2e0] sm:$0xff]
    %v7933 = vld [vmem:[#allocation6 + $0x2e8] sm:$0xff]
    %v7934 = vld [vmem:[#allocation6 + $0x2f0] sm:$0xff]
    %v7935 = vld [vmem:[#allocation6 + $0x2f8] sm:$0xff]
    %v7936 = vld [vmem:[#allocation6 + $0x300] sm:$0xff]
    %v7937 = vld [vmem:[#allocation6 + $0x308] sm:$0xff]
    %v7938 = vld [vmem:[#allocation6 + $0x310] sm:$0xff]
    %v7939 = vld [vmem:[#allocation6 + $0x318] sm:$0xff]
    %v7940 = vld [vmem:[#allocation6 + $0x320] sm:$0xff]
    %v7941 = vld [vmem:[#allocation6 + $0x328] sm:$0xff]
    %v7942 = vld [vmem:[#allocation6 + $0x330] sm:$0xff]
    %v7943 = vld [vmem:[#allocation6 + $0x338] sm:$0xff]
    %v7944 = vld [vmem:[#allocation6 + $0x340] sm:$0xff]
    %v7945 = vld [vmem:[#allocation6 + $0x348] sm:$0xff]
    %v7946 = vld [vmem:[#allocation6 + $0x350] sm:$0xff]
    %v7947 = vld [vmem:[#allocation6 + $0x358] sm:$0xff]
    %v7948 = vld [vmem:[#allocation6 + $0x360] sm:$0xff]
    %v7949 = vld [vmem:[#allocation6 + $0x368] sm:$0xff]
    %v7950 = vld [vmem:[#allocation6 + $0x370] sm:$0xff]
    %v7951 = vld [vmem:[#allocation6 + $0x378] sm:$0xff]
    %v7952 = vld [vmem:[#allocation6 + $0x380] sm:$0xff]
    %v7953 = vld [vmem:[#allocation6 + $0x388] sm:$0xff]
    %v7954 = vld [vmem:[#allocation6 + $0x390] sm:$0xff]
    %v7955 = vld [vmem:[#allocation6 + $0x398] sm:$0xff]
    %v7956 = vld [vmem:[#allocation6 + $0x3a0] sm:$0xff]
    %v7957 = vld [vmem:[#allocation6 + $0x3a8] sm:$0xff]
    %v7958 = vld [vmem:[#allocation6 + $0x3b0] sm:$0xff]
    %v7959 = vld [vmem:[#allocation6 + $0x3b8] sm:$0xff]
    %v7960 = vld [vmem:[#allocation6 + $0x3c0] sm:$0xff]
    %v7961 = vld [vmem:[#allocation6 + $0x3c8] sm:$0xff]
    %v7962 = vld [vmem:[#allocation6 + $0x3d0] sm:$0xff]
    %v7963 = vld [vmem:[#allocation6 + $0x3d8] sm:$0xff]
    %v7964 = vld [vmem:[#allocation6 + $0x3e0] sm:$0xff]
    %v7965 = vld [vmem:[#allocation6 + $0x3e8] sm:$0xff]
    %v7966 = vld [vmem:[#allocation6 + $0x3f0] sm:$0xff]
    %v7967 = vld [vmem:[#allocation6 + $0x3f8] sm:$0xff]
    %v7968 = vld [vmem:[#allocation6 + $0x400] sm:$0xff]
    %v7969 = vld [vmem:[#allocation6 + $0x408] sm:$0xff]
    %v7970 = vld [vmem:[#allocation6 + $0x410] sm:$0xff]
    %v7971 = vld [vmem:[#allocation6 + $0x418] sm:$0xff]
    %v7972 = vld [vmem:[#allocation6 + $0x420] sm:$0xff]
    %v7973 = vld [vmem:[#allocation6 + $0x428] sm:$0xff]
    %v7974 = vld [vmem:[#allocation6 + $0x430] sm:$0xff]
    %v7975 = vld [vmem:[#allocation6 + $0x438] sm:$0xff]
    %v7976 = vld [vmem:[#allocation6 + $0x440] sm:$0xff]
    %v7977 = vld [vmem:[#allocation6 + $0x448] sm:$0xff]
    %v7978 = vld [vmem:[#allocation6 + $0x450] sm:$0xff]
    %v7979 = vld [vmem:[#allocation6 + $0x458] sm:$0xff]
    %v7980 = vld [vmem:[#allocation6 + $0x460] sm:$0xff]
    %v7981 = vld [vmem:[#allocation6 + $0x468] sm:$0xff]
    %v7982 = vld [vmem:[#allocation6 + $0x470] sm:$0xff]
    %v7983 = vld [vmem:[#allocation6 + $0x478] sm:$0xff]
    %v7984 = vld [vmem:[#allocation6 + $0x480] sm:$0xff]
    %v7985 = vld [vmem:[#allocation6 + $0x488] sm:$0xff]
    %v7986 = vld [vmem:[#allocation6 + $0x490] sm:$0xff]
    %v7987 = vld [vmem:[#allocation6 + $0x498] sm:$0xff]
    %v7988 = vld [vmem:[#allocation6 + $0x4a0] sm:$0xff]
    %v7989 = vld [vmem:[#allocation6 + $0x4a8] sm:$0xff]
    %v7990 = vld [vmem:[#allocation6 + $0x4b0] sm:$0xff]
    %v7991 = vld [vmem:[#allocation6 + $0x4b8] sm:$0xff]
    %v7992 = vld [vmem:[#allocation6 + $0x4c0] sm:$0xff]
    %v7993 = vld [vmem:[#allocation6 + $0x4c8] sm:$0xff]
    %v7994 = vld [vmem:[#allocation6 + $0x4d0] sm:$0xff]
    %v7995 = vld [vmem:[#allocation6 + $0x4d8] sm:$0xff]
    %v7996 = vld [vmem:[#allocation6 + $0x4e0] sm:$0xff]
    %v7997 = vld [vmem:[#allocation6 + $0x4e8] sm:$0xff]
    %v7998 = vld [vmem:[#allocation6 + $0x4f0] sm:$0xff]
    %v7999 = vld [vmem:[#allocation6 + $0x4f8] sm:$0xff]
    %v8000 = vld [vmem:[#allocation6 + $0x500] sm:$0xff]
    %v8001 = vld [vmem:[#allocation6 + $0x508] sm:$0xff]
    %v8002 = vld [vmem:[#allocation6 + $0x510] sm:$0xff]
    %v8003 = vld [vmem:[#allocation6 + $0x518] sm:$0xff]
    %v8004 = vld [vmem:[#allocation6 + $0x520] sm:$0xff]
    %v8005 = vld [vmem:[#allocation6 + $0x528] sm:$0xff]
    %v8006 = vld [vmem:[#allocation6 + $0x530] sm:$0xff]
    %v8007 = vld [vmem:[#allocation6 + $0x538] sm:$0xff]
    %v8008 = vld [vmem:[#allocation6 + $0x540] sm:$0xff]
    %v8009 = vld [vmem:[#allocation6 + $0x548] sm:$0xff]
    %v8010 = vld [vmem:[#allocation6 + $0x550] sm:$0xff]
    %v8011 = vld [vmem:[#allocation6 + $0x558] sm:$0xff]
    %v8012 = vld [vmem:[#allocation6 + $0x560] sm:$0xff]
    %v8013 = vld [vmem:[#allocation6 + $0x568] sm:$0xff]
    %v8014 = vld [vmem:[#allocation6 + $0x570] sm:$0xff]
    %v8015 = vld [vmem:[#allocation6 + $0x578] sm:$0xff]
    %v8016 = vld [vmem:[#allocation6 + $0x580] sm:$0xff]
    %v8017 = vld [vmem:[#allocation6 + $0x588] sm:$0xff]
    %v8018 = vld [vmem:[#allocation6 + $0x590] sm:$0xff]
    %v8019 = vld [vmem:[#allocation6 + $0x598] sm:$0xff]
    %v8020 = vld [vmem:[#allocation6 + $0x5a0] sm:$0xff]
    %v8021 = vld [vmem:[#allocation6 + $0x5a8] sm:$0xff]
    %v8022 = vld [vmem:[#allocation6 + $0x5b0] sm:$0xff]
    %v8023 = vld [vmem:[#allocation6 + $0x5b8] sm:$0xff]
    %v8024 = vld [vmem:[#allocation6 + $0x5c0] sm:$0xff]
    %v8025 = vld [vmem:[#allocation6 + $0x5c8] sm:$0xff]
    %v8026 = vld [vmem:[#allocation6 + $0x5d0] sm:$0xff]
    %v8027 = vld [vmem:[#allocation6 + $0x5d8] sm:$0xff]
    %v8028 = vld [vmem:[#allocation6 + $0x5e0] sm:$0xff]
    %v8029 = vld [vmem:[#allocation6 + $0x5e8] sm:$0xff]
    %v8030 = vld [vmem:[#allocation6 + $0x5f0] sm:$0xff]
    %v8031 = vld [vmem:[#allocation6 + $0x5f8] sm:$0xff]
    %v8032 = vld [vmem:[#allocation6 + $0x600] sm:$0xff]
    %v8033 = vld [vmem:[#allocation6 + $0x608] sm:$0xff]
    %v8034 = vld [vmem:[#allocation6 + $0x610] sm:$0xff]
    %v8035 = vld [vmem:[#allocation6 + $0x618] sm:$0xff]
    %v8036 = vld [vmem:[#allocation6 + $0x620] sm:$0xff]
    %v8037 = vld [vmem:[#allocation6 + $0x628] sm:$0xff]
    %v8038 = vld [vmem:[#allocation6 + $0x630] sm:$0xff]
    %v8039 = vld [vmem:[#allocation6 + $0x638] sm:$0xff]
    %v8040 = vld [vmem:[#allocation6 + $0x640] sm:$0xff]
    %v8041 = vld [vmem:[#allocation6 + $0x648] sm:$0xff]
    %v8042 = vld [vmem:[#allocation6 + $0x650] sm:$0xff]
    %v8043 = vld [vmem:[#allocation6 + $0x658] sm:$0xff]
    %v8044 = vld [vmem:[#allocation6 + $0x660] sm:$0xff]
    %v8045 = vld [vmem:[#allocation6 + $0x668] sm:$0xff]
    %v8046 = vld [vmem:[#allocation6 + $0x670] sm:$0xff]
    %v8047 = vld [vmem:[#allocation6 + $0x678] sm:$0xff]
    %v8048 = vld [vmem:[#allocation6 + $0x680] sm:$0xff]
    %v8049 = vld [vmem:[#allocation6 + $0x688] sm:$0xff]
    %v8050 = vld [vmem:[#allocation6 + $0x690] sm:$0xff]
    %v8051 = vld [vmem:[#allocation6 + $0x698] sm:$0xff]
    %v8052 = vld [vmem:[#allocation6 + $0x6a0] sm:$0xff]
    %v8053 = vld [vmem:[#allocation6 + $0x6a8] sm:$0xff]
    %v8054 = vld [vmem:[#allocation6 + $0x6b0] sm:$0xff]
    %v8055 = vld [vmem:[#allocation6 + $0x6b8] sm:$0xff]
    %v8056 = vld [vmem:[#allocation6 + $0x6c0] sm:$0xff]
    %v8057 = vld [vmem:[#allocation6 + $0x6c8] sm:$0xff]
    %v8058 = vld [vmem:[#allocation6 + $0x6d0] sm:$0xff]
    %v8059 = vld [vmem:[#allocation6 + $0x6d8] sm:$0xff]
    %v8060 = vld [vmem:[#allocation6 + $0x6e0] sm:$0xff]
    %v8061 = vld [vmem:[#allocation6 + $0x6e8] sm:$0xff]
    %v8062 = vld [vmem:[#allocation6 + $0x6f0] sm:$0xff]
    %v8063 = vld [vmem:[#allocation6 + $0x6f8] sm:$0xff]
    %v8064 = vld [vmem:[#allocation6 + $0x700] sm:$0xff]
    %v8065 = vld [vmem:[#allocation6 + $0x708] sm:$0xff]
    %v8066 = vld [vmem:[#allocation6 + $0x710] sm:$0xff]
    %v8067 = vld [vmem:[#allocation6 + $0x718] sm:$0xff]
    %v8068 = vld [vmem:[#allocation6 + $0x720] sm:$0xff]
    %v8069 = vld [vmem:[#allocation6 + $0x728] sm:$0xff]
    %v8070 = vld [vmem:[#allocation6 + $0x730] sm:$0xff]
    %v8071 = vld [vmem:[#allocation6 + $0x738] sm:$0xff]
    %v8072 = vld [vmem:[#allocation6 + $0x740] sm:$0xff]
    %v8073 = vld [vmem:[#allocation6 + $0x748] sm:$0xff]
    %v8074 = vld [vmem:[#allocation6 + $0x750] sm:$0xff]
    %v8075 = vld [vmem:[#allocation6 + $0x758] sm:$0xff]
    %v8076 = vld [vmem:[#allocation6 + $0x760] sm:$0xff]
    %v8077 = vld [vmem:[#allocation6 + $0x768] sm:$0xff]
    %v8078 = vld [vmem:[#allocation6 + $0x770] sm:$0xff]
    %v8079 = vld [vmem:[#allocation6 + $0x778] sm:$0xff]
    %v8080 = vld [vmem:[#allocation6 + $0x780] sm:$0xff]
    %v8081 = vld [vmem:[#allocation6 + $0x788] sm:$0xff]
    %v8082 = vld [vmem:[#allocation6 + $0x790] sm:$0xff]
    %v8083 = vld [vmem:[#allocation6 + $0x798] sm:$0xff]
    %v8084 = vld [vmem:[#allocation6 + $0x7a0] sm:$0xff]
    %v8085 = vld [vmem:[#allocation6 + $0x7a8] sm:$0xff]
    %v8086 = vld [vmem:[#allocation6 + $0x7b0] sm:$0xff]
    %v8087 = vld [vmem:[#allocation6 + $0x7b8] sm:$0xff]
    %v8088 = vld [vmem:[#allocation6 + $0x7c0] sm:$0xff]
    %v8089 = vld [vmem:[#allocation6 + $0x7c8] sm:$0xff]
    %v8090 = vld [vmem:[#allocation6 + $0x7d0] sm:$0xff]
    %v8091 = vld [vmem:[#allocation6 + $0x7d8] sm:$0xff]
    %v8092 = vld [vmem:[#allocation6 + $0x7e0] sm:$0xff]
    %v8093 = vld [vmem:[#allocation6 + $0x7e8] sm:$0xff]
    %v8094 = vld [vmem:[#allocation6 + $0x7f0] sm:$0xff]
    %v8095 = vld [vmem:[#allocation6 + $0x7f8] sm:$0xff]
    %v8096 = vld [vmem:[%s8] sm:$0xff]
    %v8097 = vld [vmem:[%s8 + $0x8] sm:$0xff]
    %v8098 = vld [vmem:[%s8 + $0x10] sm:$0xff]
    %v8099 = vld [vmem:[%s8 + $0x18] sm:$0xff]
    %8101 = vset.pattern.permute.xlu0 0
    %8102 = vperm.xlu0 %8101, %v8096
    %v8103 = vpop.permute.xlu0 %8102
    %8106 = vset.pattern.permute.xlu0 0
    %8107 = vperm.xlu0 %8106, %v8097
    %v8108 = vpop.permute.xlu0 %8107
    %8111 = vset.pattern.permute.xlu0 0
    %8112 = vperm.xlu0 %8111, %v8098
    %v8113 = vpop.permute.xlu0 %8112
    %8116 = vset.pattern.permute.xlu0 0
    %8117 = vperm.xlu0 %8116, %v8099
    %v8118 = vpop.permute.xlu0 %8117
    %8120 = vmatprep.subr.mxu0 %v7841
    %8121 = vmatpush1.msra.mxu0 %v7840
    %8122 = vmatprep.subr.mxu0 %v7843
    %8123 = vmatpush1.msra.mxu0 %v7842
    %8124 = vmatprep.subr.mxu0 %v7845
    %8125 = vmatpush1.msra.mxu0 %v7844
    %8126 = vmatprep.subr.mxu0 %v7847
    %8127 = vmatpush1.msra.mxu0 %v7846
    %8128 = vmatprep.subr.mxu0 %v7849
    %8129 = vmatpush1.msra.mxu0 %v7848
    %8130 = vmatprep.subr.mxu0 %v7851
    %8131 = vmatpush1.msra.mxu0 %v7850
    %8132 = vmatprep.subr.mxu0 %v7853
    %8133 = vmatpush1.msra.mxu0 %v7852
    %8134 = vmatprep.subr.mxu0 %v7855
    %8135 = vmatpush1.msra.mxu0 %v7854
    %8136 = vmatprep.subr.mxu0 %v7857
    %8137 = vmatpush1.msra.mxu0 %v7856
    %8138 = vmatprep.subr.mxu0 %v7859
    %8139 = vmatpush1.msra.mxu0 %v7858
    %8140 = vmatprep.subr.mxu0 %v7861
    %8141 = vmatpush1.msra.mxu0 %v7860
    %8142 = vmatprep.subr.mxu0 %v7863
    %8143 = vmatpush1.msra.mxu0 %v7862
    %8144 = vmatprep.subr.mxu0 %v7865
    %8145 = vmatpush1.msra.mxu0 %v7864
    %8146 = vmatprep.subr.mxu0 %v7867
    %8147 = vmatpush1.msra.mxu0 %v7866
    %8148 = vmatprep.subr.mxu0 %v7869
    %8149 = vmatpush1.msra.mxu0 %v7868
    %8150 = vmatprep.subr.mxu0 %v7871
    %8151 = vmatpush1.msra.mxu0 %v7870
    %8152 = vmatprep.subr.mxu0 %v7873
    %8153 = vmatpush1.msra.mxu0 %v7872
    %8154 = vmatprep.subr.mxu0 %v7875
    %8155 = vmatpush1.msra.mxu0 %v7874
    %8156 = vmatprep.subr.mxu0 %v7877
    %8157 = vmatpush1.msra.mxu0 %v7876
    %8158 = vmatprep.subr.mxu0 %v7879
    %8159 = vmatpush1.msra.mxu0 %v7878
    %8160 = vmatprep.subr.mxu0 %v7881
    %8161 = vmatpush1.msra.mxu0 %v7880
    %8162 = vmatprep.subr.mxu0 %v7883
    %8163 = vmatpush1.msra.mxu0 %v7882
    %8164 = vmatprep.subr.mxu0 %v7885
    %8165 = vmatpush1.msra.mxu0 %v7884
    %8166 = vmatprep.subr.mxu0 %v7887
    %8167 = vmatpush1.msra.mxu0 %v7886
    %8168 = vmatprep.subr.mxu0 %v7889
    %8169 = vmatpush1.msra.mxu0 %v7888
    %8170 = vmatprep.subr.mxu0 %v7891
    %8171 = vmatpush1.msra.mxu0 %v7890
    %8172 = vmatprep.subr.mxu0 %v7893
    %8173 = vmatpush1.msra.mxu0 %v7892
    %8174 = vmatprep.subr.mxu0 %v7895
    %8175 = vmatpush1.msra.mxu0 %v7894
    %8176 = vmatprep.subr.mxu0 %v7897
    %8177 = vmatpush1.msra.mxu0 %v7896
    %8178 = vmatprep.subr.mxu0 %v7899
    %8179 = vmatpush1.msra.mxu0 %v7898
    %8180 = vmatprep.subr.mxu0 %v7901
    %8181 = vmatpush1.msra.mxu0 %v7900
    %8182 = vmatprep.subr.mxu0 %v7903
    %8183 = vmatpush1.msra.mxu0 %v7902
    %8184 = vmatprep.mubr.f32.mxu0 %v7809
    %8185 = vmatmul.mubr.f32.gmra.mrb[0].mxu0 %v7808
    %v8186 = vpop.f32.mrb[0].mxu0
    %v8187 = vadd.f32 %v8103, %v8186
    %v8188 = vpop.f32.mrb[0].mxu0
    %v8189 = vadd.f32 %v8103, %v8188
    %8190 = vmatprep.mubr.f32.mxu0 %v7817
    %8191 = vmatmul.mubr.f32.gmra.mrb[0].mxu0 %v7816
    %v8192 = vpop.f32.mrb[0].mxu0
    %v8193 = vadd.f32 %v8108, %v8192
    %v8194 = vpop.f32.mrb[0].mxu0
    %v8195 = vadd.f32 %v8108, %v8194
    %8196 = vmatprep.mubr.f32.mxu0 %v7825
    %8197 = vmatmul.mubr.f32.gmra.mrb[0].mxu0 %v7824
    %v8198 = vpop.f32.mrb[0].mxu0
    %v8199 = vadd.f32 %v8113, %v8198
    %v8200 = vpop.f32.mrb[0].mxu0
    %v8201 = vadd.f32 %v8113, %v8200
    %8202 = vmatprep.mubr.f32.mxu0 %v7833
    %8203 = vmatmul.mubr.f32.gmra.mrb[0].mxu0 %v7832
    %v8204 = vpop.f32.mrb[0].mxu0
    %v8205 = vadd.f32 %v8118, %v8204
    %v8206 = vpop.f32.mrb[0].mxu0
    %v8207 = vadd.f32 %v8118, %v8206
    %8208 = vdwg.mxu0
    %8209 = vmatprep.subr.mxu0 %v7905
    %8210 = vmatpush1.msra.mxu0 %v7904
    %8211 = vmatprep.subr.mxu0 %v7907
    %8212 = vmatpush1.msra.mxu0 %v7906
    %8213 = vmatprep.subr.mxu0 %v7909
    %8214 = vmatpush1.msra.mxu0 %v7908
    %8215 = vmatprep.subr.mxu0 %v7911
    %8216 = vmatpush1.msra.mxu0 %v7910
    %8217 = vmatprep.subr.mxu0 %v7913
    %8218 = vmatpush1.msra.mxu0 %v7912
    %8219 = vmatprep.subr.mxu0 %v7915
    %8220 = vmatpush1.msra.mxu0 %v7914
    %8221 = vmatprep.subr.mxu0 %v7917
    %8222 = vmatpush1.msra.mxu0 %v7916
    %8223 = vmatprep.subr.mxu0 %v7919
    %8224 = vmatpush1.msra.mxu0 %v7918
    %8225 = vmatprep.subr.mxu0 %v7921
    %8226 = vmatpush1.msra.mxu0 %v7920
    %8227 = vmatprep.subr.mxu0 %v7923
    %8228 = vmatpush1.msra.mxu0 %v7922
    %8229 = vmatprep.subr.mxu0 %v7925
    %8230 = vmatpush1.msra.mxu0 %v7924
    %8231 = vmatprep.subr.mxu0 %v7927
    %8232 = vmatpush1.msra.mxu0 %v7926
    %8233 = vmatprep.subr.mxu0 %v7929
    %8234 = vmatpush1.msra.mxu0 %v7928
    %8235 = vmatprep.subr.mxu0 %v7931
    %8236 = vmatpush1.msra.mxu0 %v7930
    %8237 = vmatprep.subr.mxu0 %v7933
    %8238 = vmatpush1.msra.mxu0 %v7932
    %8239 = vmatprep.subr.mxu0 %v7935
    %8240 = vmatpush1.msra.mxu0 %v7934
    %8241 = vmatprep.subr.mxu0 %v7937
    %8242 = vmatpush1.msra.mxu0 %v7936
    %8243 = vmatprep.subr.mxu0 %v7939
    %8244 = vmatpush1.msra.mxu0 %v7938
    %8245 = vmatprep.subr.mxu0 %v7941
    %8246 = vmatpush1.msra.mxu0 %v7940
    %8247 = vmatprep.subr.mxu0 %v7943
    %8248 = vmatpush1.msra.mxu0 %v7942
    %8249 = vmatprep.subr.mxu0 %v7945
    %8250 = vmatpush1.msra.mxu0 %v7944
    %8251 = vmatprep.subr.mxu0 %v7947
    %8252 = vmatpush1.msra.mxu0 %v7946
    %8253 = vmatprep.subr.mxu0 %v7949
    %8254 = vmatpush1.msra.mxu0 %v7948
    %8255 = vmatprep.subr.mxu0 %v7951
    %8256 = vmatpush1.msra.mxu0 %v7950
    %8257 = vmatprep.subr.mxu0 %v7953
    %8258 = vmatpush1.msra.mxu0 %v7952
    %8259 = vmatprep.subr.mxu0 %v7955
    %8260 = vmatpush1.msra.mxu0 %v7954
    %8261 = vmatprep.subr.mxu0 %v7957
    %8262 = vmatpush1.msra.mxu0 %v7956
    %8263 = vmatprep.subr.mxu0 %v7959
    %8264 = vmatpush1.msra.mxu0 %v7958
    %8265 = vmatprep.subr.mxu0 %v7961
    %8266 = vmatpush1.msra.mxu0 %v7960
    %8267 = vmatprep.subr.mxu0 %v7963
    %8268 = vmatpush1.msra.mxu0 %v7962
    %8269 = vmatprep.subr.mxu0 %v7965
    %8270 = vmatpush1.msra.mxu0 %v7964
    %8271 = vmatprep.subr.mxu0 %v7967
    %8272 = vmatpush1.msra.mxu0 %v7966
    %8273 = vmatprep.mubr.f32.mxu0 %v7811
    %8274 = vmatmul.mubr.f32.gmra.mrb[0].mxu0 %v7810
    %v8275 = vpop.f32.mrb[0].mxu0
    %v8276 = vadd.f32 %v8187, %v8275
    %v8277 = vpop.f32.mrb[0].mxu0
    %v8278 = vadd.f32 %v8189, %v8277
    %8279 = vmatprep.mubr.f32.mxu0 %v7819
    %8280 = vmatmul.mubr.f32.gmra.mrb[0].mxu0 %v7818
    %v8281 = vpop.f32.mrb[0].mxu0
    %v8282 = vadd.f32 %v8193, %v8281
    %v8283 = vpop.f32.mrb[0].mxu0
    %v8284 = vadd.f32 %v8195, %v8283
    %8285 = vmatprep.mubr.f32.mxu0 %v7827
    %8286 = vmatmul.mubr.f32.gmra.mrb[0].mxu0 %v7826
    %v8287 = vpop.f32.mrb[0].mxu0
    %v8288 = vadd.f32 %v8199, %v8287
    %v8289 = vpop.f32.mrb[0].mxu0
    %v8290 = vadd.f32 %v8201, %v8289
    %8291 = vmatprep.mubr.f32.mxu0 %v7835
    %8292 = vmatmul.mubr.f32.gmra.mrb[0].mxu0 %v7834
    %v8293 = vpop.f32.mrb[0].mxu0
    %v8294 = vadd.f32 %v8205, %v8293
    %v8295 = vpop.f32.mrb[0].mxu0
    %v8296 = vadd.f32 %v8207, %v8295
    %8297 = vdwg.mxu0
    %8298 = vmatprep.subr.mxu0 %v7969
    %8299 = vmatpush1.msra.mxu0 %v7968
    %8300 = vmatprep.subr.mxu0 %v7971
    %8301 = vmatpush1.msra.mxu0 %v7970
    %8302 = vmatprep.subr.mxu0 %v7973
    %8303 = vmatpush1.msra.mxu0 %v7972
    %8304 = vmatprep.subr.mxu0 %v7975
    %8305 = vmatpush1.msra.mxu0 %v7974
    %8306 = vmatprep.subr.mxu0 %v7977
    %8307 = vmatpush1.msra.mxu0 %v7976
    %8308 = vmatprep.subr.mxu0 %v7979
    %8309 = vmatpush1.msra.mxu0 %v7978
    %8310 = vmatprep.subr.mxu0 %v7981
    %8311 = vmatpush1.msra.mxu0 %v7980
    %8312 = vmatprep.subr.mxu0 %v7983
    %8313 = vmatpush1.msra.mxu0 %v7982
    %8314 = vmatprep.subr.mxu0 %v7985
    %8315 = vmatpush1.msra.mxu0 %v7984
    %8316 = vmatprep.subr.mxu0 %v7987
    %8317 = vmatpush1.msra.mxu0 %v7986
    %8318 = vmatprep.subr.mxu0 %v7989
    %8319 = vmatpush1.msra.mxu0 %v7988
    %8320 = vmatprep.subr.mxu0 %v7991
    %8321 = vmatpush1.msra.mxu0 %v7990
    %8322 = vmatprep.subr.mxu0 %v7993
    %8323 = vmatpush1.msra.mxu0 %v7992
    %8324 = vmatprep.subr.mxu0 %v7995
    %8325 = vmatpush1.msra.mxu0 %v7994
    %8326 = vmatprep.subr.mxu0 %v7997
    %8327 = vmatpush1.msra.mxu0 %v7996
    %8328 = vmatprep.subr.mxu0 %v7999
    %8329 = vmatpush1.msra.mxu0 %v7998
    %8330 = vmatprep.subr.mxu0 %v8001
    %8331 = vmatpush1.msra.mxu0 %v8000
    %8332 = vmatprep.subr.mxu0 %v8003
    %8333 = vmatpush1.msra.mxu0 %v8002
    %8334 = vmatprep.subr.mxu0 %v8005
    %8335 = vmatpush1.msra.mxu0 %v8004
    %8336 = vmatprep.subr.mxu0 %v8007
    %8337 = vmatpush1.msra.mxu0 %v8006
    %8338 = vmatprep.subr.mxu0 %v8009
    %8339 = vmatpush1.msra.mxu0 %v8008
    %8340 = vmatprep.subr.mxu0 %v8011
    %8341 = vmatpush1.msra.mxu0 %v8010
    %8342 = vmatprep.subr.mxu0 %v8013
    %8343 = vmatpush1.msra.mxu0 %v8012
    %8344 = vmatprep.subr.mxu0 %v8015
    %8345 = vmatpush1.msra.mxu0 %v8014
    %8346 = vmatprep.subr.mxu0 %v8017
    %8347 = vmatpush1.msra.mxu0 %v8016
    %8348 = vmatprep.subr.mxu0 %v8019
    %8349 = vmatpush1.msra.mxu0 %v8018
    %8350 = vmatprep.subr.mxu0 %v8021
    %8351 = vmatpush1.msra.mxu0 %v8020
    %8352 = vmatprep.subr.mxu0 %v8023
    %8353 = vmatpush1.msra.mxu0 %v8022
    %8354 = vmatprep.subr.mxu0 %v8025
    %8355 = vmatpush1.msra.mxu0 %v8024
    %8356 = vmatprep.subr.mxu0 %v8027
    %8357 = vmatpush1.msra.mxu0 %v8026
    %8358 = vmatprep.subr.mxu0 %v8029
    %8359 = vmatpush1.msra.mxu0 %v8028
    %8360 = vmatprep.subr.mxu0 %v8031
    %8361 = vmatpush1.msra.mxu0 %v8030
    %8362 = vmatprep.mubr.f32.mxu0 %v7813
    %8363 = vmatmul.mubr.f32.gmra.mrb[0].mxu0 %v7812
    %v8364 = vpop.f32.mrb[0].mxu0
    %v8365 = vadd.f32 %v8276, %v8364
    %v8366 = vpop.f32.mrb[0].mxu0
    %v8367 = vadd.f32 %v8278, %v8366
    %8368 = vmatprep.mubr.f32.mxu0 %v7821
    %8369 = vmatmul.mubr.f32.gmra.mrb[0].mxu0 %v7820
    %v8370 = vpop.f32.mrb[0].mxu0
    %v8371 = vadd.f32 %v8282, %v8370
    %v8372 = vpop.f32.mrb[0].mxu0
    %v8373 = vadd.f32 %v8284, %v8372
    %8374 = vmatprep.mubr.f32.mxu0 %v7829
    %8375 = vmatmul.mubr.f32.gmra.mrb[0].mxu0 %v7828
    %v8376 = vpop.f32.mrb[0].mxu0
    %v8377 = vadd.f32 %v8288, %v8376
    %v8378 = vpop.f32.mrb[0].mxu0
    %v8379 = vadd.f32 %v8290, %v8378
    %8380 = vmatprep.mubr.f32.mxu0 %v7837
    %8381 = vmatmul.mubr.f32.gmra.mrb[0].mxu0 %v7836
    %v8382 = vpop.f32.mrb[0].mxu0
    %v8383 = vadd.f32 %v8294, %v8382
    %v8384 = vpop.f32.mrb[0].mxu0
    %v8385 = vadd.f32 %v8296, %v8384
    %8386 = vdwg.mxu0
    %8387 = vmatprep.subr.mxu0 %v8033
    %8388 = vmatpush1.msra.mxu0 %v8032
    %8389 = vmatprep.subr.mxu0 %v8035
    %8390 = vmatpush1.msra.mxu0 %v8034
    %8391 = vmatprep.subr.mxu0 %v8037
    %8392 = vmatpush1.msra.mxu0 %v8036
    %8393 = vmatprep.subr.mxu0 %v8039
    %8394 = vmatpush1.msra.mxu0 %v8038
    %8395 = vmatprep.subr.mxu0 %v8041
    %8396 = vmatpush1.msra.mxu0 %v8040
    %8397 = vmatprep.subr.mxu0 %v8043
    %8398 = vmatpush1.msra.mxu0 %v8042
    %8399 = vmatprep.subr.mxu0 %v8045
    %8400 = vmatpush1.msra.mxu0 %v8044
    %8401 = vmatprep.subr.mxu0 %v8047
    %8402 = vmatpush1.msra.mxu0 %v8046
    %8403 = vmatprep.subr.mxu0 %v8049
    %8404 = vmatpush1.msra.mxu0 %v8048
    %8405 = vmatprep.subr.mxu0 %v8051
    %8406 = vmatpush1.msra.mxu0 %v8050
    %8407 = vmatprep.subr.mxu0 %v8053
    %8408 = vmatpush1.msra.mxu0 %v8052
    %8409 = vmatprep.subr.mxu0 %v8055
    %8410 = vmatpush1.msra.mxu0 %v8054
    %8411 = vmatprep.subr.mxu0 %v8057
    %8412 = vmatpush1.msra.mxu0 %v8056
    %8413 = vmatprep.subr.mxu0 %v8059
    %8414 = vmatpush1.msra.mxu0 %v8058
    %8415 = vmatprep.subr.mxu0 %v8061
    %8416 = vmatpush1.msra.mxu0 %v8060
    %8417 = vmatprep.subr.mxu0 %v8063
    %8418 = vmatpush1.msra.mxu0 %v8062
    %8419 = vmatprep.subr.mxu0 %v8065
    %8420 = vmatpush1.msra.mxu0 %v8064
    %8421 = vmatprep.subr.mxu0 %v8067
    %8422 = vmatpush1.msra.mxu0 %v8066
    %8423 = vmatprep.subr.mxu0 %v8069
    %8424 = vmatpush1.msra.mxu0 %v8068
    %8425 = vmatprep.subr.mxu0 %v8071
    %8426 = vmatpush1.msra.mxu0 %v8070
    %8427 = vmatprep.subr.mxu0 %v8073
    %8428 = vmatpush1.msra.mxu0 %v8072
    %8429 = vmatprep.subr.mxu0 %v8075
    %8430 = vmatpush1.msra.mxu0 %v8074
    %8431 = vmatprep.subr.mxu0 %v8077
    %8432 = vmatpush1.msra.mxu0 %v8076
    %8433 = vmatprep.subr.mxu0 %v8079
    %8434 = vmatpush1.msra.mxu0 %v8078
    %8435 = vmatprep.subr.mxu0 %v8081
    %8436 = vmatpush1.msra.mxu0 %v8080
    %8437 = vmatprep.subr.mxu0 %v8083
    %8438 = vmatpush1.msra.mxu0 %v8082
    %8439 = vmatprep.subr.mxu0 %v8085
    %8440 = vmatpush1.msra.mxu0 %v8084
    %8441 = vmatprep.subr.mxu0 %v8087
    %8442 = vmatpush1.msra.mxu0 %v8086
    %8443 = vmatprep.subr.mxu0 %v8089
    %8444 = vmatpush1.msra.mxu0 %v8088
    %8445 = vmatprep.subr.mxu0 %v8091
    %8446 = vmatpush1.msra.mxu0 %v8090
    %8447 = vmatprep.subr.mxu0 %v8093
    %8448 = vmatpush1.msra.mxu0 %v8092
    %8449 = vmatprep.subr.mxu0 %v8095
    %8450 = vmatpush1.msra.mxu0 %v8094
    %8451 = vmatprep.mubr.f32.mxu0 %v7815
    %8452 = vmatmul.mubr.f32.gmra.mrb[0].mxu0 %v7814
    %v8453 = vpop.f32.mrb[0].mxu0
    %v8454 = vadd.f32 %v8365, %v8453
    %v8455 = vpop.f32.mrb[0].mxu0
    %v8456 = vadd.f32 %v8367, %v8455
    %8457 = vmatprep.mubr.f32.mxu0 %v7823
    %8458 = vmatmul.mubr.f32.gmra.mrb[0].mxu0 %v7822
    %v8459 = vpop.f32.mrb[0].mxu0
    %v8460 = vadd.f32 %v8371, %v8459
    %v8461 = vpop.f32.mrb[0].mxu0
    %v8462 = vadd.f32 %v8373, %v8461
    %8463 = vmatprep.mubr.f32.mxu0 %v7831
    %8464 = vmatmul.mubr.f32.gmra.mrb[0].mxu0 %v7830
    %v8465 = vpop.f32.mrb[0].mxu0
    %v8466 = vadd.f32 %v8377, %v8465
    %v8467 = vpop.f32.mrb[0].mxu0
    %v8468 = vadd.f32 %v8379, %v8467
    %8469 = vmatprep.mubr.f32.mxu0 %v7839
    %8470 = vmatmul.mubr.f32.gmra.mrb[0].mxu0 %v7838
    %v8471 = vpop.f32.mrb[0].mxu0
    %v8472 = vadd.f32 %v8383, %v8471
    %v8473 = vpop.f32.mrb[0].mxu0
    %v8474 = vadd.f32 %v8385, %v8473
    %8475 = vdwg.mxu0
    %vm8476 = vcmp.ge.f32.partialorder %v8454, 0.0
    %vm8477 = vcmp.ge.f32.partialorder %v8456, 0.0
    %vm8478 = vcmp.ge.f32.partialorder %v8460, 0.0
    %vm8479 = vcmp.ge.f32.partialorder %v8462, 0.0
    %vm8480 = vcmp.ge.f32.partialorder %v8466, 0.0
    %vm8481 = vcmp.ge.f32.partialorder %v8468, 0.0
    %vm8482 = vcmp.ge.f32.partialorder %v8472, 0.0
    %vm8483 = vcmp.ge.f32.partialorder %v8474, 0.0
    %v8484 = vmul.f32 %v8454, 0.01
    %v8485 = vmul.f32 %v8456, 0.01
    %v8486 = vmul.f32 %v8460, 0.01
    %v8487 = vmul.f32 %v8462, 0.01
    %v8488 = vmul.f32 %v8466, 0.01
    %v8489 = vmul.f32 %v8468, 0.01
    %v8490 = vmul.f32 %v8472, 0.01
    %v8491 = vmul.f32 %v8474, 0.01
    %v8492 = vsel %vm8476, %v8454, %v8484
    %v8493 = vsel %vm8477, %v8456, %v8485
    %v8494 = vsel %vm8478, %v8460, %v8486
    %v8495 = vsel %vm8479, %v8462, %v8487
    %v8496 = vsel %vm8480, %v8466, %v8488
    %v8497 = vsel %vm8481, %v8468, %v8489
    %v8498 = vsel %vm8482, %v8472, %v8490
    %v8499 = vsel %vm8483, %v8474, %v8491
    %8500 = vmax.xlane.f32.xlu0 %v8492
    %v8501 = vpop.xlane.xlu0 %8500
    %8502 = vmax.xlane.f32.xlu0 %v8494
    %v8503 = vpop.xlane.xlu0 %8502
    %8504 = vmax.xlane.f32.xlu0 %v8496
    %v8505 = vpop.xlane.xlu0 %8504
    %8506 = vmax.xlane.f32.xlu0 %v8498
    %v8507 = vpop.xlane.xlu0 %8506
    %8508 = vmax.xlane.f32.xlu0 %v8493
    %v8509 = vpop.xlane.xlu0 %8508
    %8510 = vmax.xlane.f32.xlu0 %v8495
    %v8511 = vpop.xlane.xlu0 %8510
    %8512 = vmax.xlane.f32.xlu0 %v8497
    %v8513 = vpop.xlane.xlu0 %8512
    %8514 = vmax.xlane.f32.xlu0 %v8499
    %v8515 = vpop.xlane.xlu0 %8514
    %vm8516 = vcmask 7168
    %v8517 = vsel %vm8516, %v8501, %v8509
    %v8518 = vsel %vm8516, %v8503, %v8511
    %v8519 = vsel %vm8516, %v8505, %v8513
    %v8520 = vsel %vm8516, %v8507, %v8515
    %v8521 = vmul.f32 %v8517, %v8517
    %v8522 = vmul.f32 %v8518, %v8518
    %v8523 = vmul.f32 %v8519, %v8519
    %v8524 = vmul.f32 %v8520, %v8520
    %vm8525 = vcmask 15360
    %v8526 = vsel %vm8525, %v8521, 0.0
    %v8527 = vsel %vm8525, %v8522, 0.0
    %v8528 = vadd.f32 %v8526, %v8527
    %v8529 = vsel %vm8525, %v8523, 0.0
    %v8530 = vadd.f32 %v8528, %v8529
    %v8531 = vsel %vm8525, %v8524, 0.0
    %v8532 = vadd.f32 %v8530, %v8531
    %v8533 = vrot.slane %v8532, 4
    %v8534 = vadd.f32 %v8532, %v8533
    %v8535 = vrot.slane %v8534, 2
    %v8536 = vadd.f32 %v8534, %v8535
    %v8537 = vrot.slane %v8536, 1
    %v8538 = vadd.f32 %v8536, %v8537
    %v8539 = vrsqrt.pop %v8538
    %v8540 = vmul.f32 %v8538, %v8539
    %vm8541 = vcmp.eq.f32.partialorder %v8538, inf
    %v8542 = vsel %vm8541, %v8538, %v8540
    %vm8543 = vcmp.eq.f32.partialorder %v8538, 0.0
    %v8544 = vand.u32 %v8538, 2147483648
    %v8545 = vsel %vm8543, %v8544, %v8542
    %v8546 = vadd.f32 %v8545, 1e-05
    %v8547 = vrcp.pop %v8546
    %v8548 = vmul.f32 %v8517, %v8547
    %v8549 = vmul.f32 %v8518, %v8547
    %v8550 = vmul.f32 %v8519, %v8547
    %v8551 = vmul.f32 %v8520, %v8547
    %8552 = vst.msk [vmem:[%s9] sm:$0xff] %vm8525, %v8548
    %8553 = vst.msk [vmem:[%s9 + $0x8] sm:$0xff] %vm8525, %v8549
    %8554 = vst.msk [vmem:[%s9 + $0x10] sm:$0xff] %vm8525, %v8550
    %8555 = vst.msk [vmem:[%s9 + $0x18] sm:$0xff] %vm8525, %v8551
    // Predicated region
    $region54: #{tpu_custom_call.1} parent=1 // pred_check
      _
    $region55: #{tpu_custom_call.1} parent=1 // pred_check_branch
      %8557 = sbr.rel (0) target = $region57
    $region56: #{tpu_custom_call.1} parent=1 // pred_region
      _
    $region57: #{tpu_custom_call.1} parent=1 // pred_fallthru
      _
    // Predicated region
    $region58: #{tpu_custom_call.1} parent=1 // pred_check
      _
    $region59: #{tpu_custom_call.1} parent=1 // pred_check_branch
      %8559 = sbr.rel (0) target = $region61
    $region60: #{tpu_custom_call.1} parent=1 // pred_region
      _
    $region61: #{tpu_custom_call.1} parent=1 // pred_fallthru
      _
    %8560 = vsyncpa [#allocation8], 1
    %8561 = vsyncpa [#allocation10], 1
    %8562 = vsyncpa [#allocation13], 1

</llo_original>
